<compile_context>
chip_gen: v7x
topology: tpu7x:2x2x1
jax: 0.10.0
libtpu: 0.0.40
codegen_flags: <defaults>
</compile_context>

<pallas_src>
import jax
import jax.numpy as jnp
from jax.experimental import pallas as pl
from jax.experimental.pallas import tpu as pltpu

C_IN = 2048    # Baseline.in_planes
C_MID = 128    # attention bottleneck width
BN_EPS = 1e-5  # nn.BatchNorm1d default


def _largest_aligned_divisor(n, cap, align):
    """Largest divisor t of n with t <= cap and t % align == 0.  Requires align | n.

    Falls back to `align` (the minimum viable, always a divisor) if nothing larger fits.
    """
    cap = max(align, min(cap, n))
    start = cap - cap % align
    for t in range(start, align - 1, -align):
        if n % t == 0:
            return t
    return align


def _vmem_capacity_bytes():
    """Physical VMEM of the local TPU; conservative (v7x) default if query fails."""
    try:
        return int(pltpu.get_tpu_info().vmem_capacity_bytes)
    except Exception:
        return 64 << 20


def _head_kernel(x_ref, w1_ref, b1_ref, w2_ref, b2_ref, sc_ref, sh_ref,
                 pos_ref, neg_ref, acc_ref):
    k = pl.program_id(1)

    @pl.when(k == 0)
    def _():
        acc_ref[...] = jnp.zeros_like(acc_ref)

    # Partial spatial sum for GAP, accumulated in f32 (input stays native dtype).
    xb = x_ref[...]
    if xb.dtype != jnp.float32:
        xb = xb.astype(jnp.float32)
    acc_ref[...] += jnp.sum(xb, axis=1)

    @pl.when(k == pl.num_programs(1) - 1)
    def _():
        acc = acc_ref[...]                       # = HW * GAP (1/HW folded into w1, sc)
        # Attention head: 1x1 convs on a (B, C, 1, 1) tensor == matmuls on (TB, C).
        h = jnp.dot(acc, w1_ref[...], preferred_element_type=jnp.float32) + b1_ref[...]
        h = jnp.maximum(h, 0.0)                                          # ReLU
        m = jnp.dot(h, w2_ref[...], preferred_element_type=jnp.float32) + b2_ref[...]
        m = jax.nn.sigmoid(m)                                            # Sigmoid
        sc = sc_ref[...]                          # bn_gamma / sqrt(var+eps) / HW
        sh = sh_ref[...]                          # bn_beta - mean * gamma / sqrt(var+eps)
        pos_ref[...] = (acc * (1.0 + m) * sc + sh).astype(pos_ref.dtype)
        neg_ref[...] = (acc * (1.0 - m) * sc + sh).astype(neg_ref.dtype)


@jax.jit
def baseline_head(feat_nhwc, w1, b1, w2, b2, bn_gamma, bn_beta, bn_mean, bn_var):
    """feat_nhwc: (B, H, W, C) backbone feature map, channels-last (f32 or bf16).

    Returns (bn(pos), bn(neg)), each (B, C) float32.
    """
    B, H, W, C = feat_nhwc.shape
    assert C == C_IN
    HW = H * W
    inv_hw = 1.0 / float(HW)
    x = feat_nhwc.reshape(B, HW, C)                    # free: already channels-last

    itemsize = jnp.dtype(x.dtype).itemsize
    sub_align = max(8, 32 // itemsize)                 # 8 (f32), 16 (bf16), 32 (int8)

    # Pad B to a multiple of 8 (f32 output sublane) and HW to the input's sublane
    # packing so every block is (8,128)-legal and tiles can never exceed the budget.
    # Padded spatial rows are zeros -> GAP sum unaffected; padded batch rows sliced off.
    B_pad = -(-B // 8) * 8
    HW_pad = -(-HW // sub_align) * sub_align
    if (B_pad, HW_pad) != (B, HW):
        x = jnp.pad(x, ((0, B_pad - B), (0, HW_pad - HW), (0, 0)))

    # Batch tile: <= 64 rows, and nb >= 2 whenever possible so the "parallel" batch
    # axis spans both v7x TensorCores.
    cap_tb = min(64, B_pad // 2) if B_pad >= 16 else B_pad
    TB = _largest_aligned_divisor(B_pad, cap_tb, 8)
    # TODO(synk): for B_pad == 8 on v7x one TensorCore idles; splitting the HW
    # reduction across cores (two partial accumulators + combine) is not implemented.

    # Generation-aware VMEM budget for the double-buffered x stream.
    if _vmem_capacity_bytes() >= (100 << 20):          # v5e / v6e: 128 MiB physical
        x_budget, vmem_limit = 72 << 20, 100 << 20
    else:                                              # v7x: 64 MiB physical
        x_budget, vmem_limit = 24 << 20, 48 << 20
    # Per-element VMEM: 2 pipeline buffers of the native dtype, plus an f32 copy for
    # the upcast feeding the reduction when the input is sub-32-bit.
    bytes_per_elem = 2 * itemsize + (4 if itemsize < 4 else 0)
    thw_cap = max(sub_align, x_budget // (TB * C * bytes_per_elem))
    THW = _largest_aligned_divisor(HW_pad, thw_cap, sub_align)
    nb, nk = B_pad // TB, HW_pad // THW

    # Fold BatchNorm1d (eval) into scale/shift; fold 1/HW into w1 and the BN scale so
    # the epilogue works directly on the raw spatial-sum accumulator.
    inv_std = 1.0 / jnp.sqrt(bn_var.astype(jnp.float32) + BN_EPS)
    g32 = bn_gamma.astype(jnp.float32)
    bn_scale = (g32 * inv_std * inv_hw).reshape(1, C)
    bn_shift = (bn_beta.astype(jnp.float32)
                - bn_mean.astype(jnp.float32) * g32 * inv_std).reshape(1, C)
    w1_s = w1.astype(jnp.float32) * inv_hw
    w2_f = w2.astype(jnp.float32)
    b1_ = b1.reshape(1, C_MID).astype(jnp.float32)
    b2_ = b2.reshape(1, C).astype(jnp.float32)

    cost = pl.CostEstimate(
        flops=B_pad * HW_pad * C + 4 * B_pad * C * C_MID + 8 * B_pad * C,
        transcendentals=B_pad * C,
        bytes_accessed=(B_pad * HW_pad * C * itemsize
                        + 2 * B_pad * C * 4
                        + 2 * C * C_MID * 4),
    )

    pos, neg = pl.pallas_call(
        _head_kernel,
        out_shape=(jax.ShapeDtypeStruct((B_pad, C), jnp.float32),
                   jax.ShapeDtypeStruct((B_pad, C), jnp.float32)),
        grid_spec=pltpu.PrefetchScalarGridSpec(
            num_scalar_prefetch=0,
            grid=(nb, nk),                                            # reduction last
            in_specs=[
                pl.BlockSpec((TB, THW, C), lambda i, k: (i, k, 0)),   # x stream
                pl.BlockSpec((C, C_MID),   lambda i, k: (0, 0)),      # w1/HW (resident)
                pl.BlockSpec((1, C_MID),   lambda i, k: (0, 0)),      # b1
                pl.BlockSpec((C_MID, C),   lambda i, k: (0, 0)),      # w2 (resident)
                pl.BlockSpec((1, C),       lambda i, k: (0, 0)),      # b2
                pl.BlockSpec((1, C),       lambda i, k: (0, 0)),      # bn scale / HW
                pl.BlockSpec((1, C),       lambda i, k: (0, 0)),      # bn shift
            ],
            out_specs=[
                pl.BlockSpec((TB, C), lambda i, k: (i, 0)),           # bn(pos)
                pl.BlockSpec((TB, C), lambda i, k: (i, 0)),           # bn(neg)
            ],
            scratch_shapes=[pltpu.VMEM((TB, C), jnp.float32)],        # GAP accumulator
        ),
        compiler_params=pltpu.CompilerParams(
            dimension_semantics=("parallel", "arbitrary"),
            vmem_limit_bytes=vmem_limit,
        ),
        cost_estimate=cost,
    )(x, w1_s, b1_, w2_f, b2_, bn_scale, bn_shift)

    if B_pad != B:
        pos, neg = pos[:B], neg[:B]
    return pos, neg


def _reference(feat_nhwc, w1, b1, w2, b2, bn_gamma, bn_beta, bn_mean, bn_var):
    """Pure-JAX reference mirroring the PyTorch eval forward."""
    g = jnp.mean(feat_nhwc.astype(jnp.float32), axis=(1, 2))    # GAP -> (B, C)
    h = jnp.maximum(g @ w1 + b1, 0.0)                           # Conv1x1 + ReLU
    m = jax.nn.sigmoid(h @ w2 + b2)                             # Conv1x1 + Sigmoid
    pos = g * (1.0 + m)
    neg = g * (1.0 - m)

    def bn(v):
        return (v - bn_mean) / jnp.sqrt(bn_var + BN_EPS) * bn_gamma + bn_beta

    return bn(pos), bn(neg)


if __name__ == "__main__":
    key = jax.random.PRNGKey(0)
    k_feat, k_w1, k_w2, k_mean, k_var = jax.random.split(key, 5)

    # Small example backbone feature map, NHWC (channels-last).  B=4 exercises the
    # batch-padding path (B_pad=8); HW=512 exercises the multi-step spatial reduction.
    B, H, W = 4, 16, 32
    feat = jax.random.normal(k_feat, (B, H, W, C_IN), dtype=jnp.float32)

    # Deterministic parameters mirroring the PyTorch module's __init__:
    #   attention convs: kaiming_normal_(fan_in, a=0) -> N(0, sqrt(2/fan_in)), bias=0
    #   bottleneck BN  : weight=1, bias=0; running stats randomized to exercise the fold
    # (conv weight (out,in,1,1) stored transposed as (in,out) for the matmul)
    w1 = jax.random.normal(k_w1, (C_IN, C_MID), dtype=jnp.float32) * jnp.sqrt(2.0 / C_IN)
    b1 = jnp.zeros((C_MID,), dtype=jnp.float32)
    w2 = jax.random.normal(k_w2, (C_MID, C_IN), dtype=jnp.float32) * jnp.sqrt(2.0 / C_MID)
    b2 = jnp.zeros((C_IN,), dtype=jnp.float32)
    bn_gamma = jnp.ones((C_IN,), dtype=jnp.float32)
    bn_beta = jnp.zeros((C_IN,), dtype=jnp.float32)
    bn_mean = 0.1 * jax.random.normal(k_mean, (C_IN,), dtype=jnp.float32)
    bn_var = 1.0 + 0.1 * jax.random.uniform(k_var, (C_IN,), dtype=jnp.float32)

    # --- f32 streaming path ---
    pos, neg = baseline_head(feat, w1, b1, w2, b2, bn_gamma, bn_beta, bn_mean, bn_var)
    jax.block_until_ready((pos, neg))
    pos_ref, neg_ref = _reference(feat, w1, b1, w2, b2, bn_gamma, bn_beta, bn_mean, bn_var)
    assert pos.shape == (B, C_IN) and neg.shape == (B, C_IN)
    assert jnp.allclose(pos, pos_ref, rtol=2e-3, atol=2e-3)
    assert jnp.allclose(neg, neg_ref, rtol=2e-3, atol=2e-3)

    # --- bf16 streaming path (halves HBM traffic; f32 accumulation preserved) ---
    feat_bf16 = feat.astype(jnp.bfloat16)
    pos_b, neg_b = baseline_head(feat_bf16, w1, b1, w2, b2,
                                 bn_gamma, bn_beta, bn_mean, bn_var)
    jax.block_until_ready((pos_b, neg_b))
    pos_rb, neg_rb = _reference(feat_bf16.astype(jnp.float32), w1, b1, w2, b2,
                                bn_gamma, bn_beta, bn_mean, bn_var)
    assert jnp.allclose(pos_b, pos_rb, rtol=5e-3, atol=5e-3)
    assert jnp.allclose(neg_b, neg_rb, rtol=5e-3, atol=5e-3)

    print("KERNEL_OK")
</pallas_src>

<mosaic_0001>
module attributes {stable_mosaic.version = 11 : i64} {
  func.func @_head_kernel(%arg0: i32, %arg1: i32, %arg2: memref<8x128x2048xf32, #tpu.memory_space<vmem>>, %arg3: memref<2048x128xf32, #tpu.memory_space<vmem>>, %arg4: memref<1x128xf32, #tpu.memory_space<vmem>>, %arg5: memref<128x2048xf32, #tpu.memory_space<vmem>>, %arg6: memref<1x2048xf32, #tpu.memory_space<vmem>>, %arg7: memref<1x2048xf32, #tpu.memory_space<vmem>>, %arg8: memref<1x2048xf32, #tpu.memory_space<vmem>>, %arg9: memref<8x2048xf32, #tpu.memory_space<vmem>>, %arg10: memref<8x2048xf32, #tpu.memory_space<vmem>>, %arg11: memref<8x2048xf32, #tpu.memory_space<vmem>>) attributes {dimension_semantics = [#tpu.dimension_semantics<parallel>, #tpu.dimension_semantics<arbitrary>], iteration_bounds = array<i64: 1, 4>, scalar_prefetch = 0 : i64, scratch_operands = 1 : i64, tpu.core_type = #tpu.core_type<tc>, window_params = [{transform_indices = @transform_0, window_bounds = array<i64: 8, 128, 2048>}, {pipeline_mode = #tpu.pipeline_mode<synchronous>, transform_indices = @transform_1, window_bounds = array<i64: 2048, 128>}, {pipeline_mode = #tpu.pipeline_mode<synchronous>, transform_indices = @transform_2, window_bounds = array<i64: 1, 128>}, {pipeline_mode = #tpu.pipeline_mode<synchronous>, transform_indices = @transform_3, window_bounds = array<i64: 128, 2048>}, {pipeline_mode = #tpu.pipeline_mode<synchronous>, transform_indices = @transform_4, window_bounds = array<i64: 1, 2048>}, {pipeline_mode = #tpu.pipeline_mode<synchronous>, transform_indices = @transform_5, window_bounds = array<i64: 1, 2048>}, {pipeline_mode = #tpu.pipeline_mode<synchronous>, transform_indices = @transform_6, window_bounds = array<i64: 1, 2048>}, {transform_indices = @transform_7, window_bounds = array<i64: 8, 2048>}, {transform_indices = @transform_8, window_bounds = array<i64: 8, 2048>}]} {
    %c0_i32 = arith.constant 0 : i32
    %0 = arith.cmpi eq, %arg1, %c0_i32 : i32
    %1 = arith.extui %0 : i1 to i32
    %c0_i32_0 = arith.constant 0 : i32
    %2 = arith.cmpi ne, %1, %c0_i32_0 : i32
    scf.if %2 {
      %cst_8 = arith.constant 0.000000e+00 : f32
      %11 = vector.broadcast %cst_8 : f32 to vector<8x2048xf32>
      %c0_9 = arith.constant 0 : index
      %c0_10 = arith.constant 0 : index
      %12 = vector.load %arg11[%c0_9, %c0_10] : memref<8x2048xf32, #tpu.memory_space<vmem>>, vector<8x2048xf32>
      tpu.vector_store %arg11[%c0_9, %c0_10], %11 {strides = array<i32>} : memref<8x2048xf32, #tpu.memory_space<vmem>>, vector<8x2048xf32>,
    } else {
    }
    %c0 = arith.constant 0 : index
    %c0_1 = arith.constant 0 : index
    %c0_2 = arith.constant 0 : index
    %3 = vector.load %arg2[%c0, %c0_1, %c0_2] : memref<8x128x2048xf32, #tpu.memory_space<vmem>>, vector<8x128x2048xf32>
    %c0_3 = arith.constant 0 : index
    %c0_4 = arith.constant 0 : index
    %4 = vector.load %arg11[%c0_3, %c0_4] : memref<8x2048xf32, #tpu.memory_space<vmem>>, vector<8x2048xf32>
    %cst = arith.constant dense<0.000000e+00> : vector<8x2048xf32>
    %5 = vector.multi_reduction <add>, %3, %cst [1] : vector<8x128x2048xf32> to vector<8x2048xf32>
    %6 = arith.addf %4, %5 : vector<8x2048xf32>
    %c0_5 = arith.constant 0 : index
    %c0_6 = arith.constant 0 : index
    %7 = vector.load %arg11[%c0_5, %c0_6] : memref<8x2048xf32, #tpu.memory_space<vmem>>, vector<8x2048xf32>
    tpu.vector_store %arg11[%c0_5, %c0_6], %6 {strides = array<i32>} : memref<8x2048xf32, #tpu.memory_space<vmem>>, vector<8x2048xf32>,
    %c3_i32 = arith.constant 3 : i32
    %8 = arith.cmpi eq, %arg1, %c3_i32 : i32
    %9 = arith.extui %8 : i1 to i32
    %c0_i32_7 = arith.constant 0 : i32
    %10 = arith.cmpi ne, %9, %c0_i32_7 : i32
    scf.if %10 {
      %c0_8 = arith.constant 0 : index
      %c0_9 = arith.constant 0 : index
      %11 = vector.load %arg11[%c0_8, %c0_9] : memref<8x2048xf32, #tpu.memory_space<vmem>>, vector<8x2048xf32>
      %c0_10 = arith.constant 0 : index
      %c0_11 = arith.constant 0 : index
      %12 = vector.load %arg3[%c0_10, %c0_11] : memref<2048x128xf32, #tpu.memory_space<vmem>>, vector<2048x128xf32>
      %cst_12 = arith.constant dense<0.000000e+00> : vector<8x128xf32>
      %13 = tpu.matmul %11, %12, %cst_12 {dimension_numbers = #tpu.dot_dimension_numbers<[1], [0], [0], [1], [0, 0, 1, 1], [], []>} : vector<8x2048xf32>, vector<2048x128xf32>, vector<8x128xf32> -> vector<8x128xf32>
      %c0_13 = arith.constant 0 : index
      %c0_14 = arith.constant 0 : index
      %14 = vector.load %arg4[%c0_13, %c0_14] : memref<1x128xf32, #tpu.memory_space<vmem>>, vector<1x128xf32>
      %15 = vector.broadcast %14 : vector<1x128xf32> to vector<8x128xf32>
      %16 = arith.addf %13, %15 : vector<8x128xf32>
      %cst_15 = arith.constant 0.000000e+00 : f32
      %17 = vector.broadcast %cst_15 : f32 to vector<8x128xf32>
      %18 = arith.maximumf %16, %17 : vector<8x128xf32>
      %c0_16 = arith.constant 0 : index
      %c0_17 = arith.constant 0 : index
      %19 = vector.load %arg5[%c0_16, %c0_17] : memref<128x2048xf32, #tpu.memory_space<vmem>>, vector<128x2048xf32>
      %cst_18 = arith.constant dense<0.000000e+00> : vector<8x2048xf32>
      %20 = tpu.matmul %18, %19, %cst_18 {dimension_numbers = #tpu.dot_dimension_numbers<[1], [0], [0], [1], [0, 0, 1, 1], [], []>} : vector<8x128xf32>, vector<128x2048xf32>, vector<8x2048xf32> -> vector<8x2048xf32>
      %c0_19 = arith.constant 0 : index
      %c0_20 = arith.constant 0 : index
      %21 = vector.load %arg6[%c0_19, %c0_20] : memref<1x2048xf32, #tpu.memory_space<vmem>>, vector<1x2048xf32>
      %22 = vector.broadcast %21 : vector<1x2048xf32> to vector<8x2048xf32>
      %23 = arith.addf %20, %22 : vector<8x2048xf32>
      %24 = arith.negf %23 : vector<8x2048xf32>
      %25 = math.exp %24 : vector<8x2048xf32>
      %cst_21 = arith.constant 1.000000e+00 : f32
      %26 = vector.broadcast %cst_21 : f32 to vector<8x2048xf32>
      %27 = arith.addf %26, %25 : vector<8x2048xf32>
      %28 = arith.divf %26, %27 : vector<8x2048xf32>
      %c0_22 = arith.constant 0 : index
      %c0_23 = arith.constant 0 : index
      %29 = vector.load %arg7[%c0_22, %c0_23] : memref<1x2048xf32, #tpu.memory_space<vmem>>, vector<1x2048xf32>
      %c0_24 = arith.constant 0 : index
      %c0_25 = arith.constant 0 : index
      %30 = vector.load %arg8[%c0_24, %c0_25] : memref<1x2048xf32, #tpu.memory_space<vmem>>, vector<1x2048xf32>
      %cst_26 = arith.constant 1.000000e+00 : f32
      %31 = vector.broadcast %cst_26 : f32 to vector<8x2048xf32>
      %32 = arith.addf %31, %28 : vector<8x2048xf32>
      %33 = arith.mulf %11, %32 : vector<8x2048xf32>
      %34 = vector.broadcast %29 : vector<1x2048xf32> to vector<8x2048xf32>
      %35 = arith.mulf %33, %34 : vector<8x2048xf32>
      %36 = vector.broadcast %30 : vector<1x2048xf32> to vector<8x2048xf32>
      %37 = arith.addf %35, %36 : vector<8x2048xf32>
      %c0_27 = arith.constant 0 : index
      %c0_28 = arith.constant 0 : index
      %38 = vector.load %arg9[%c0_27, %c0_28] : memref<8x2048xf32, #tpu.memory_space<vmem>>, vector<8x2048xf32>
      tpu.vector_store %arg9[%c0_27, %c0_28], %37 {strides = array<i32>} : memref<8x2048xf32, #tpu.memory_space<vmem>>, vector<8x2048xf32>,
      %cst_29 = arith.constant 1.000000e+00 : f32
      %39 = vector.broadcast %cst_29 : f32 to vector<8x2048xf32>
      %40 = arith.subf %39, %28 : vector<8x2048xf32>
      %41 = arith.mulf %11, %40 : vector<8x2048xf32>
      %42 = vector.broadcast %29 : vector<1x2048xf32> to vector<8x2048xf32>
      %43 = arith.mulf %41, %42 : vector<8x2048xf32>
      %44 = vector.broadcast %30 : vector<1x2048xf32> to vector<8x2048xf32>
      %45 = arith.addf %43, %44 : vector<8x2048xf32>
      %c0_30 = arith.constant 0 : index
      %c0_31 = arith.constant 0 : index
      %46 = vector.load %arg10[%c0_30, %c0_31] : memref<8x2048xf32, #tpu.memory_space<vmem>>, vector<8x2048xf32>
      tpu.vector_store %arg10[%c0_30, %c0_31], %45 {strides = array<i32>} : memref<8x2048xf32, #tpu.memory_space<vmem>>, vector<8x2048xf32>,
    } else {
    }
    return
  }
  func.func @transform_0(%arg0: i32, %arg1: i32) -> (i32, i32, i32) {
    %c0_i32 = arith.constant 0 : i32
    %c0_i32_0 = arith.constant 0 : i32
    return %arg0, %arg1, %c0_i32 : i32, i32, i32
  }
  func.func @transform_1(%arg0: i32, %arg1: i32) -> (i32, i32) {
    %c0_i32 = arith.constant 0 : i32
    %c0_i32_0 = arith.constant 0 : i32
    %c0_i32_1 = arith.constant 0 : i32
    return %c0_i32, %c0_i32_0 : i32, i32
  }
  func.func @transform_2(%arg0: i32, %arg1: i32) -> (i32, i32) {
    %c0_i32 = arith.constant 0 : i32
    %c0_i32_0 = arith.constant 0 : i32
    %c0_i32_1 = arith.constant 0 : i32
    return %c0_i32, %c0_i32_0 : i32, i32
  }
  func.func @transform_3(%arg0: i32, %arg1: i32) -> (i32, i32) {
    %c0_i32 = arith.constant 0 : i32
    %c0_i32_0 = arith.constant 0 : i32
    %c0_i32_1 = arith.constant 0 : i32
    return %c0_i32, %c0_i32_0 : i32, i32
  }
  func.func @transform_4(%arg0: i32, %arg1: i32) -> (i32, i32) {
    %c0_i32 = arith.constant 0 : i32
    %c0_i32_0 = arith.constant 0 : i32
    %c0_i32_1 = arith.constant 0 : i32
    return %c0_i32, %c0_i32_0 : i32, i32
  }
  func.func @transform_5(%arg0: i32, %arg1: i32) -> (i32, i32) {
    %c0_i32 = arith.constant 0 : i32
    %c0_i32_0 = arith.constant 0 : i32
    %c0_i32_1 = arith.constant 0 : i32
    return %c0_i32, %c0_i32_0 : i32, i32
  }
  func.func @transform_6(%arg0: i32, %arg1: i32) -> (i32, i32) {
    %c0_i32 = arith.constant 0 : i32
    %c0_i32_0 = arith.constant 0 : i32
    %c0_i32_1 = arith.constant 0 : i32
    return %c0_i32, %c0_i32_0 : i32, i32
  }
  func.func @transform_7(%arg0: i32, %arg1: i32) -> (i32, i32) {
    %c0_i32 = arith.constant 0 : i32
    %c0_i32_0 = arith.constant 0 : i32
    return %arg0, %c0_i32 : i32, i32
  }
  func.func @transform_8(%arg0: i32, %arg1: i32) -> (i32, i32) {
    %c0_i32 = arith.constant 0 : i32
    %c0_i32_0 = arith.constant 0 : i32
    return %arg0, %c0_i32 : i32, i32
  }
}

</mosaic_0001>

<llo_original>
// kernel: baseline_head.1
$region0: #{baseline_head.1}
  #allocation0 [shape = 'u32[]', space=smem, size = 0x4, offset = 0x4, fixed_abs, tag = 'smem constant byte address 0x4 - core index']
  #allocation1 [shape = 'u32[144,128]{1,0:T(1,128)}', space=vmem, size = 0x12000, scoped, tag = 'internal scratch']
  #allocation2 [shape = 'f32[8,2048]{1,0:T(8,128)}', space=vmem, size = 0x10000, scoped, tag = 'scratch operand']
  #allocation5 [shape = 's32[]', space=sflag, size = 0x4, offset = 0, fixed_abs, tag = 'sflag constant byte address 0x0 - dummy sync flag']
  %s0 = inlined_call_operand.hbm [shape: f32[8,512,2048], index: 0, kind: input, shape index: {}]
  %s1 = inlined_call_operand.vmem [shape: f32[2048,128], index: 1, kind: input, shape index: {}]
  %s2 = inlined_call_operand.vmem [shape: f32[1,128], index: 2, kind: input, shape index: {}]
  %s3 = inlined_call_operand.vmem [shape: f32[128,2048], index: 3, kind: input, shape index: {}]
  %s4 = inlined_call_operand.vmem [shape: f32[1,2048], index: 4, kind: input, shape index: {}]
  %s5 = inlined_call_operand.vmem [shape: f32[1,2048], index: 5, kind: input, shape index: {}]
  %s6 = inlined_call_operand.vmem [shape: f32[1,2048], index: 6, kind: input, shape index: {}]
  %s7 = inlined_call_operand.vmem [shape: f32[8,2048], index: 7, kind: output, shape index: {0}]
  %s8 = inlined_call_operand.vmem [shape: f32[8,2048], index: 8, kind: output, shape index: {1}]
  %9 = xla_tuple %s7, %s8
  %s10 = sld [smem:[#allocation0]]
  $region81: #{baseline_head.1} parent=0
    _
  %s12 = ssub.s32 1, %s10
  %s13 = scalar_select 0, %s12, %s10
  $region1: #{baseline_head.1} parent=0
    #allocation3 [shape = 'u8[16777216]{0}', space=vmem, size = 0x1000000, scoped, tag = 'input window, operand 0']
    #allocation4 [shape = 's32[2]{0}', space=sflag, size = 0x8, scoped, tag = 'scoped memory for baseline_head.1']
    %14 = vsyncpa [#allocation4], 0
    %s15 = scalar_lea.sflag [#allocation4], 1
    %16 = vsyncpa %s15, 0
    loop: start=0, step=1, limit=6
    $region2: #{baseline_head.1} parent=1 // loop_pre_header
      _
    $region3: #{baseline_head.1} parent=1 // loop_header
      %s18 = sphi 0, %s22
      %p19 = scmp.ge.s32.totalorder %s18, 6
      %s25 = sphi 0, %s37
      %s26 = sphi 0, %s33
      %s27 = sphi 0, %s25
      %s28 = sphi 0, %s26
      %s29 = sphi 0, %s27
      %s30 = sphi 0, %s28
      %s42 = sphi 0, %s44
      %s45 = sphi 0, %s42
      %s46 = sphi 0, %s45
      %s62 = sphi 0, %s46
      %s66 = sphi 0, %s66
      %s68 = sphi 0, %s66
      %s69 = sphi 0, %s68
      %s83 = sphi 0, %s69
      %s87 = sphi 0, %s87
      %s89 = sphi 0, %s87
      %s90 = sphi 0, %s89
      %s104 = sphi 0, %s90
      %s108 = sphi 0, %s108
      %s110 = sphi 0, %s108
      %s111 = sphi 0, %s110
      %s125 = sphi 0, %s111
      %s129 = sphi 0, %s129
      %s131 = sphi 0, %s129
      %s132 = sphi 0, %s131
      %s146 = sphi 0, %s132
      %s150 = sphi 0, %s150
      %s152 = sphi 0, %s150
      %s153 = sphi 0, %s152
      %s167 = sphi 0, %s153
      %s171 = sphi 0, %s171
      %s173 = sphi 0, %s171
      %s174 = sphi 0, %s173
      %s188 = sphi 0, %s174
      %s194 = sphi 0, %s196
      %s197 = sphi 0, %s194
      %s198 = sphi 0, %s197
      %s214 = sphi 0, %s198
      %s220 = sphi 0, %s222
      %s223 = sphi 0, %s220
      %s224 = sphi 0, %s223
      %s240 = sphi 0, %s224
    $region4: #{baseline_head.1} parent=1 // loop_header_branch
      %21 = sbr.rel (%p19) target = $region8
    $region5: #{baseline_head.1} parent=1 // loop_body
      %s23 = ssub.s32 %s18, 1
      %s24 = ssub.s32 %s18, 2
      %s31 = sadd.s32 1, %s26
      %p32 = scmp.ge.s32.totalorder %s31, 4
      %s33 = scalar_select %p32, 0, %s31
      %s34 = sadd.s32 1, %s25
      %s35 = scalar_select %p32, %s34, %s25
      %p36 = scmp.ge.s32.totalorder %s35, 1
      %s37 = scalar_select %p36, 0, %s35
      %s38 = ssub.s32 %s25, %s37
      %s39 = ssub.s32 %s26, %s33
      %s40 = sor.u32 %s38, %s39
      %p41 = scmp.eq.s32.totalorder %s40, 0
      %s43 = sadd.s32 %s42, 1
      %s44 = scalar_select %p41, %s42, %s43
      %p47 = pneg %p41
      %p48 = scmp.eq.s32.totalorder %s18, 3
      %p49 = por %p47, %p48
      %p50 = scmp.ne.s32.totalorder %s42, %s45
      %p51 = scmp.eq.s32.totalorder %s18, 0
      %p52 = por %p50, %p51
      %p53 = scmp.ne.s32.totalorder %s42, %s45
      %p54 = scmp.eq.s32.totalorder %s23, 3
      %p55 = por %p53, %p54
      %p56 = scmp.ne.s32.totalorder %s45, %s46
      %p57 = scmp.eq.s32.totalorder %s23, 0
      %p58 = por %p56, %p57
      %p59 = scmp.ne.s32.totalorder %s45, %s46
      %p60 = scmp.eq.s32.totalorder %s24, 3
      %p61 = por %p59, %p60
      %p63 = scmp.ne.s32.totalorder %s46, %s62
      %p64 = scmp.eq.s32.totalorder %s24, 0
      %p65 = por %p63, %p64
      %s67 = sadd.s32 %s66, 1
      %p70 = scmp.eq.s32.totalorder %s18, 3
      %p71 = scmp.ne.s32.totalorder %s66, %s68
      %p72 = scmp.eq.s32.totalorder %s18, 0
      %p73 = por %p71, %p72
      %p74 = scmp.ne.s32.totalorder %s66, %s68
      %p75 = scmp.eq.s32.totalorder %s23, 3
      %p76 = por %p74, %p75
      %p77 = scmp.ne.s32.totalorder %s68, %s69
      %p78 = scmp.eq.s32.totalorder %s23, 0
      %p79 = por %p77, %p78
      %p80 = scmp.ne.s32.totalorder %s68, %s69
      %p81 = scmp.eq.s32.totalorder %s24, 3
      %p82 = por %p80, %p81
      %p84 = scmp.ne.s32.totalorder %s69, %s83
      %p85 = scmp.eq.s32.totalorder %s24, 0
      %p86 = por %p84, %p85
      %s88 = sadd.s32 %s87, 1
      %p91 = scmp.eq.s32.totalorder %s18, 3
      %p92 = scmp.ne.s32.totalorder %s87, %s89
      %p93 = scmp.eq.s32.totalorder %s18, 0
      %p94 = por %p92, %p93
      %p95 = scmp.ne.s32.totalorder %s87, %s89
      %p96 = scmp.eq.s32.totalorder %s23, 3
      %p97 = por %p95, %p96
      %p98 = scmp.ne.s32.totalorder %s89, %s90
      %p99 = scmp.eq.s32.totalorder %s23, 0
      %p100 = por %p98, %p99
      %p101 = scmp.ne.s32.totalorder %s89, %s90
      %p102 = scmp.eq.s32.totalorder %s24, 3
      %p103 = por %p101, %p102
      %p105 = scmp.ne.s32.totalorder %s90, %s104
      %p106 = scmp.eq.s32.totalorder %s24, 0
      %p107 = por %p105, %p106
      %s109 = sadd.s32 %s108, 1
      %p112 = scmp.eq.s32.totalorder %s18, 3
      %p113 = scmp.ne.s32.totalorder %s108, %s110
      %p114 = scmp.eq.s32.totalorder %s18, 0
      %p115 = por %p113, %p114
      %p116 = scmp.ne.s32.totalorder %s108, %s110
      %p117 = scmp.eq.s32.totalorder %s23, 3
      %p118 = por %p116, %p117
      %p119 = scmp.ne.s32.totalorder %s110, %s111
      %p120 = scmp.eq.s32.totalorder %s23, 0
      %p121 = por %p119, %p120
      %p122 = scmp.ne.s32.totalorder %s110, %s111
      %p123 = scmp.eq.s32.totalorder %s24, 3
      %p124 = por %p122, %p123
      %p126 = scmp.ne.s32.totalorder %s111, %s125
      %p127 = scmp.eq.s32.totalorder %s24, 0
      %p128 = por %p126, %p127
      %s130 = sadd.s32 %s129, 1
      %p133 = scmp.eq.s32.totalorder %s18, 3
      %p134 = scmp.ne.s32.totalorder %s129, %s131
      %p135 = scmp.eq.s32.totalorder %s18, 0
      %p136 = por %p134, %p135
      %p137 = scmp.ne.s32.totalorder %s129, %s131
      %p138 = scmp.eq.s32.totalorder %s23, 3
      %p139 = por %p137, %p138
      %p140 = scmp.ne.s32.totalorder %s131, %s132
      %p141 = scmp.eq.s32.totalorder %s23, 0
      %p142 = por %p140, %p141
      %p143 = scmp.ne.s32.totalorder %s131, %s132
      %p144 = scmp.eq.s32.totalorder %s24, 3
      %p145 = por %p143, %p144
      %p147 = scmp.ne.s32.totalorder %s132, %s146
      %p148 = scmp.eq.s32.totalorder %s24, 0
      %p149 = por %p147, %p148
      %s151 = sadd.s32 %s150, 1
      %p154 = scmp.eq.s32.totalorder %s18, 3
      %p155 = scmp.ne.s32.totalorder %s150, %s152
      %p156 = scmp.eq.s32.totalorder %s18, 0
      %p157 = por %p155, %p156
      %p158 = scmp.ne.s32.totalorder %s150, %s152
      %p159 = scmp.eq.s32.totalorder %s23, 3
      %p160 = por %p158, %p159
      %p161 = scmp.ne.s32.totalorder %s152, %s153
      %p162 = scmp.eq.s32.totalorder %s23, 0
      %p163 = por %p161, %p162
      %p164 = scmp.ne.s32.totalorder %s152, %s153
      %p165 = scmp.eq.s32.totalorder %s24, 3
      %p166 = por %p164, %p165
      %p168 = scmp.ne.s32.totalorder %s153, %s167
      %p169 = scmp.eq.s32.totalorder %s24, 0
      %p170 = por %p168, %p169
      %s172 = sadd.s32 %s171, 1
      %p175 = scmp.eq.s32.totalorder %s18, 3
      %p176 = scmp.ne.s32.totalorder %s171, %s173
      %p177 = scmp.eq.s32.totalorder %s18, 0
      %p178 = por %p176, %p177
      %p179 = scmp.ne.s32.totalorder %s171, %s173
      %p180 = scmp.eq.s32.totalorder %s23, 3
      %p181 = por %p179, %p180
      %p182 = scmp.ne.s32.totalorder %s173, %s174
      %p183 = scmp.eq.s32.totalorder %s23, 0
      %p184 = por %p182, %p183
      %p185 = scmp.ne.s32.totalorder %s173, %s174
      %p186 = scmp.eq.s32.totalorder %s24, 3
      %p187 = por %p185, %p186
      %p189 = scmp.ne.s32.totalorder %s174, %s188
      %p190 = scmp.eq.s32.totalorder %s24, 0
      %p191 = por %p189, %p190
      %s192 = ssub.s32 %s25, %s37
      %p193 = scmp.eq.s32.totalorder %s192, 0
      %s195 = sadd.s32 %s194, 1
      %s196 = scalar_select %p193, %s194, %s195
      %p199 = pneg %p193
      %p200 = scmp.eq.s32.totalorder %s18, 3
      %p201 = por %p199, %p200
      %p202 = scmp.ne.s32.totalorder %s194, %s197
      %p203 = scmp.eq.s32.totalorder %s18, 0
      %p204 = por %p202, %p203
      %p205 = scmp.ne.s32.totalorder %s194, %s197
      %p206 = scmp.eq.s32.totalorder %s23, 3
      %p207 = por %p205, %p206
      %p208 = scmp.ne.s32.totalorder %s197, %s198
      %p209 = scmp.eq.s32.totalorder %s23, 0
      %p210 = por %p208, %p209
      %p211 = scmp.ne.s32.totalorder %s197, %s198
      %p212 = scmp.eq.s32.totalorder %s24, 3
      %p213 = por %p211, %p212
      %p215 = scmp.ne.s32.totalorder %s198, %s214
      %p216 = scmp.eq.s32.totalorder %s24, 0
      %p217 = por %p215, %p216
      %s218 = ssub.s32 %s25, %s37
      %p219 = scmp.eq.s32.totalorder %s218, 0
      %s221 = sadd.s32 %s220, 1
      %s222 = scalar_select %p219, %s220, %s221
      %p225 = pneg %p219
      %p226 = scmp.eq.s32.totalorder %s18, 3
      %p227 = por %p225, %p226
      %p228 = scmp.ne.s32.totalorder %s220, %s223
      %p229 = scmp.eq.s32.totalorder %s18, 0
      %p230 = por %p228, %p229
      %p231 = scmp.ne.s32.totalorder %s220, %s223
      %p232 = scmp.eq.s32.totalorder %s23, 3
      %p233 = por %p231, %p232
      %p234 = scmp.ne.s32.totalorder %s223, %s224
      %p235 = scmp.eq.s32.totalorder %s23, 0
      %p236 = por %p234, %p235
      %p237 = scmp.ne.s32.totalorder %s223, %s224
      %p238 = scmp.eq.s32.totalorder %s24, 3
      %p239 = por %p237, %p238
      %p241 = scmp.ne.s32.totalorder %s224, %s240
      %p242 = scmp.eq.s32.totalorder %s24, 0
      %p243 = por %p241, %p242
      %p244 = scmp.le.s32.totalorder 1, %s18
      %p245 = scmp.lt.s32.totalorder %s18, 5
      %p246 = pnand %p244, %p245
      %p247 = pneg %p246
      // Predicated region
      $region9: #{baseline_head.1} parent=5 // pred_check
        _
      $region10: #{baseline_head.1} parent=5 // pred_check_branch
        %249 = sbr.rel (%p246) target = $region12
      $region11: #{baseline_head.1} parent=5 // pred_region
        %s250 = ssub.s32 %s18, 1
        // Predicated region
        $region13: #{baseline_head.1} parent=11 // pred_check
          %p251 = pneg %p79
        $region14: #{baseline_head.1} parent=11 // pred_check_branch
          %253 = sbr.rel (%p251) target = $region16
        $region15: #{baseline_head.1} parent=11 // pred_region
          _
        $region16: #{baseline_head.1} parent=11 // pred_fallthru
          _
        // Predicated region
        $region17: #{baseline_head.1} parent=11 // pred_check
          %p254 = pneg %p100
        $region18: #{baseline_head.1} parent=11 // pred_check_branch
          %256 = sbr.rel (%p254) target = $region20
        $region19: #{baseline_head.1} parent=11 // pred_region
          _
        $region20: #{baseline_head.1} parent=11 // pred_fallthru
          _
        // Predicated region
        $region21: #{baseline_head.1} parent=11 // pred_check
          %p257 = pneg %p121
        $region22: #{baseline_head.1} parent=11 // pred_check_branch
          %259 = sbr.rel (%p257) target = $region24
        $region23: #{baseline_head.1} parent=11 // pred_region
          _
        $region24: #{baseline_head.1} parent=11 // pred_fallthru
          _
        // Predicated region
        $region25: #{baseline_head.1} parent=11 // pred_check
          %p260 = pneg %p142
        $region26: #{baseline_head.1} parent=11 // pred_check_branch
          %262 = sbr.rel (%p260) target = $region28
        $region27: #{baseline_head.1} parent=11 // pred_region
          _
        $region28: #{baseline_head.1} parent=11 // pred_fallthru
          _
        // Predicated region
        $region29: #{baseline_head.1} parent=11 // pred_check
          %p263 = pneg %p163
        $region30: #{baseline_head.1} parent=11 // pred_check_branch
          %265 = sbr.rel (%p263) target = $region32
        $region31: #{baseline_head.1} parent=11 // pred_region
          _
        $region32: #{baseline_head.1} parent=11 // pred_fallthru
          _
        // Predicated region
        $region33: #{baseline_head.1} parent=11 // pred_check
          %p266 = pneg %p184
        $region34: #{baseline_head.1} parent=11 // pred_check_branch
          %268 = sbr.rel (%p266) target = $region36
        $region35: #{baseline_head.1} parent=11 // pred_region
          _
        $region36: #{baseline_head.1} parent=11 // pred_fallthru
          _
      $region12: #{baseline_head.1} parent=5 // pred_fallthru
        _
      %p269 = scmp.lt.s32.totalorder %s18, 4
      // Predicated region
      $region37: #{baseline_head.1} parent=5 // pred_check
        %p270 = pneg %p269
      $region38: #{baseline_head.1} parent=5 // pred_check_branch
        %272 = sbr.rel (%p270) target = $region40
      $region39: #{baseline_head.1} parent=5 // pred_region
        // Predicated region
        $region41: #{baseline_head.1} parent=39 // pred_check
          %p273 = pneg %p52
        $region42: #{baseline_head.1} parent=39 // pred_check_branch
          %275 = sbr.rel (%p273) target = $region44
        $region43: #{baseline_head.1} parent=39 // pred_region
          #allocation6 [shape = 'u32[6]{0}', space=smem, size = 0x18, scoped, tag = 'DMA stride descriptor']
          %s276 = sand.u32 %s42, 1
          %s277 = scalar_lea.sflag [#allocation4], %s276
          %s278 = sand.u32 %s42, 1
          %s279 = smul.addr %s278, 16384
          %s280 = scalar_lea.vmem [#allocation3], %s279
          %s281 = smul.u32 8, %s25
          %s282 = smul.u32 16, %s26
          %s284 = ssub.s32 262144, 262144
          %285 = vsyncadd %s277, %s284
          %s286 = smul.addr %s282, 16
          %s287 = smul.addr %s281, 1024
          %s288 = sadd.s32 %s286, %s287
          %s289 = smul.addr %s288, 128
          %s290 = scalar_lea.hbm %s0, %s289
          %s292 = sshll.u32 1, 14
          %s293 = sxor.u32 4294967295, %s292
          %s295 = sld [smem:[#allocation0]]
          %s296 = sadd.s32 2, %s295
          %s298 = sshll.u32 7, 26
          %s299 = sxor.u32 4294967295, %s298
          %s300 = sand.u32 0, %s299
          %s301 = sshll.u32 %s296, 26
          %s302 = sor.u32 %s300, %s301
          %s303 = sshll.u32 %s280, 4
          %s304 = int_to_ptr.vmem [resolvable:$true] %s303
          %310 = sst [smem:[#allocation6]] 131072
          %s311 = scalar_lea.smem [#allocation6], 1
          %312 = sst [smem:[%s311]] 32768
          %s313 = scalar_lea.smem [#allocation6], 2
          %314 = sst [smem:[%s313]] 16
          %s315 = scalar_lea.smem [#allocation6], 3
          %316 = sst [smem:[%s315]] 2048
          %s317 = scalar_lea.smem [#allocation6], 4
          %318 = sst [smem:[%s317]] 2048
          %s319 = scalar_lea.smem [#allocation6], 5
          %320 = sst [smem:[%s319]] 128
          %322 = dma.general %s290, 262144, %s304, %s277, [#allocation5], [#allocation6], %s302, 0
        $region44: #{baseline_head.1} parent=39 // pred_fallthru
          _
      $region40: #{baseline_head.1} parent=5 // pred_fallthru
        _
      %p323 = scmp.le.s32.totalorder 1, %s18
      %p324 = scmp.lt.s32.totalorder %s18, 5
      %p325 = pnand %p323, %p324
      %p326 = pneg %p325
      // Predicated region
      $region45: #{baseline_head.1} parent=5 // pred_check
        _
      $region46: #{baseline_head.1} parent=5 // pred_check_branch
        %328 = sbr.rel (%p325) target = $region48
      $region47: #{baseline_head.1} parent=5 // pred_region
        %s329 = ssub.s32 %s18, 1
        %s330 = sand.u32 %s45, 1
        %s331 = scalar_lea.sflag [#allocation4], %s330
        %s332 = sand.u32 %s45, 1
        %s333 = smul.addr %s332, 16384
        %s334 = scalar_lea.vmem [#allocation3], %s333
        // Predicated region
        $region49: #{baseline_head.1} parent=47 // pred_check
          %p335 = pneg %p58
        $region50: #{baseline_head.1} parent=47 // pred_check_branch
          %337 = sbr.rel (%p335) target = $region52
        $region51: #{baseline_head.1} parent=47 // pred_region
          %338 = dma.done %s331, 262144
        $region52: #{baseline_head.1} parent=47 // pred_fallthru
          _
        %s339 = sand.u32 %s45, 1
        %s340 = scalar_lea.sflag [#allocation4], %s339
        %s341 = sand.u32 %s45, 1
        %s342 = smul.addr %s341, 16384
        %s343 = scalar_lea.vmem [#allocation3], %s342
        %p344 = pneg %p58
        %p345 = pneg %p55
        %p346 = pneg %p79
        %p347 = pneg %p76
        %p348 = pneg %p100
        %p349 = pneg %p97
        %p350 = pneg %p121
        %p351 = pneg %p118
        %p352 = pneg %p142
        %p353 = pneg %p139
        %p354 = pneg %p163
        %p355 = pneg %p160
        %p356 = pneg %p184
        %p357 = pneg %p181
        %p358 = pneg %p210
        %p359 = pneg %p207
        %p360 = scmp.lt.s32.totalorder %s27, 0
        %s361 = scalar_select %p360, %s27, 0
        %s362 = smul.addr %s361, 16
        %s363 = smul.addr %s362, 8
        %s364 = scalar_lea.vmem %s7, %s363
        %p365 = pneg %p236
        %p366 = pneg %p233
        %p367 = scmp.lt.s32.totalorder %s27, 0
        %s368 = scalar_select %p367, %s27, 0
        %s369 = smul.addr %s368, 16
        %s370 = smul.addr %s369, 8
        %s371 = scalar_lea.vmem %s8, %s370
        %s372 = smul.u32 8, %s27
        %s373 = smul.u32 16, %s28
        %p374 = scmp.lt.s32.totalorder %s27, 0
        %s375 = scalar_select %p374, %s27, 0
        %s376 = smul.addr %s375, 16
        %s377 = smul.addr %s376, 8
        %s378 = scalar_lea.vmem %s7, %s377
        %p379 = scmp.lt.s32.totalorder %s27, 0
        %s380 = scalar_select %p379, %s27, 0
        %s381 = smul.addr %s380, 16
        %s382 = smul.addr %s381, 8
        %s383 = scalar_lea.vmem %s8, %s382
        %p384 = scmp.eq.s32.totalorder %s28, 0
        // Predicated region
        $region53: #{baseline_head.1} parent=47 // pred_check
          %p385 = pneg %p384
        $region54: #{baseline_head.1} parent=47 // pred_check_branch
          %387 = sbr.rel (%p385) target = $region56
        $region55: #{baseline_head.1} parent=47 // pred_region
          %388 = vst [vmem:[#allocation2] sm:$0xff] 0.0
          %389 = vst [vmem:[#allocation2 + $0x8] sm:$0xff] 0.0
          %390 = vst [vmem:[#allocation2 + $0x10] sm:$0xff] 0.0
          %391 = vst [vmem:[#allocation2 + $0x18] sm:$0xff] 0.0
          %392 = vst [vmem:[#allocation2 + $0x20] sm:$0xff] 0.0
          %393 = vst [vmem:[#allocation2 + $0x28] sm:$0xff] 0.0
          %394 = vst [vmem:[#allocation2 + $0x30] sm:$0xff] 0.0
          %395 = vst [vmem:[#allocation2 + $0x38] sm:$0xff] 0.0
          %396 = vst [vmem:[#allocation2 + $0x40] sm:$0xff] 0.0
          %397 = vst [vmem:[#allocation2 + $0x48] sm:$0xff] 0.0
          %398 = vst [vmem:[#allocation2 + $0x50] sm:$0xff] 0.0
          %399 = vst [vmem:[#allocation2 + $0x58] sm:$0xff] 0.0
          %400 = vst [vmem:[#allocation2 + $0x60] sm:$0xff] 0.0
          %401 = vst [vmem:[#allocation2 + $0x68] sm:$0xff] 0.0
          %402 = vst [vmem:[#allocation2 + $0x70] sm:$0xff] 0.0
          %403 = vst [vmem:[#allocation2 + $0x78] sm:$0xff] 0.0
        $region56: #{baseline_head.1} parent=47 // pred_fallthru
          _
        %v404 = vld [vmem:[%s334] sm:$0xff]
        %v405 = vld [vmem:[%s334 + $0x8] sm:$0xff]
        %v406 = vld [vmem:[%s334 + $0x10] sm:$0xff]
        %v407 = vld [vmem:[%s334 + $0x18] sm:$0xff]
        %v408 = vld [vmem:[%s334 + $0x20] sm:$0xff]
        %v409 = vld [vmem:[%s334 + $0x28] sm:$0xff]
        %v410 = vld [vmem:[%s334 + $0x30] sm:$0xff]
        %v411 = vld [vmem:[%s334 + $0x38] sm:$0xff]
        %v412 = vld [vmem:[%s334 + $0x40] sm:$0xff]
        %v413 = vld [vmem:[%s334 + $0x48] sm:$0xff]
        %v414 = vld [vmem:[%s334 + $0x50] sm:$0xff]
        %v415 = vld [vmem:[%s334 + $0x58] sm:$0xff]
        %v416 = vld [vmem:[%s334 + $0x60] sm:$0xff]
        %v417 = vld [vmem:[%s334 + $0x68] sm:$0xff]
        %v418 = vld [vmem:[%s334 + $0x70] sm:$0xff]
        %v419 = vld [vmem:[%s334 + $0x78] sm:$0xff]
        %v420 = vld [vmem:[%s334 + $0x80] sm:$0xff]
        %v421 = vld [vmem:[%s334 + $0x88] sm:$0xff]
        %v422 = vld [vmem:[%s334 + $0x90] sm:$0xff]
        %v423 = vld [vmem:[%s334 + $0x98] sm:$0xff]
        %v424 = vld [vmem:[%s334 + $0xa0] sm:$0xff]
        %v425 = vld [vmem:[%s334 + $0xa8] sm:$0xff]
        %v426 = vld [vmem:[%s334 + $0xb0] sm:$0xff]
        %v427 = vld [vmem:[%s334 + $0xb8] sm:$0xff]
        %v428 = vld [vmem:[%s334 + $0xc0] sm:$0xff]
        %v429 = vld [vmem:[%s334 + $0xc8] sm:$0xff]
        %v430 = vld [vmem:[%s334 + $0xd0] sm:$0xff]
        %v431 = vld [vmem:[%s334 + $0xd8] sm:$0xff]
        %v432 = vld [vmem:[%s334 + $0xe0] sm:$0xff]
        %v433 = vld [vmem:[%s334 + $0xe8] sm:$0xff]
        %v434 = vld [vmem:[%s334 + $0xf0] sm:$0xff]
        %v435 = vld [vmem:[%s334 + $0xf8] sm:$0xff]
        %v436 = vld [vmem:[%s334 + $0x100] sm:$0xff]
        %v437 = vld [vmem:[%s334 + $0x108] sm:$0xff]
        %v438 = vld [vmem:[%s334 + $0x110] sm:$0xff]
        %v439 = vld [vmem:[%s334 + $0x118] sm:$0xff]
        %v440 = vld [vmem:[%s334 + $0x120] sm:$0xff]
        %v441 = vld [vmem:[%s334 + $0x128] sm:$0xff]
        %v442 = vld [vmem:[%s334 + $0x130] sm:$0xff]
        %v443 = vld [vmem:[%s334 + $0x138] sm:$0xff]
        %v444 = vld [vmem:[%s334 + $0x140] sm:$0xff]
        %v445 = vld [vmem:[%s334 + $0x148] sm:$0xff]
        %v446 = vld [vmem:[%s334 + $0x150] sm:$0xff]
        %v447 = vld [vmem:[%s334 + $0x158] sm:$0xff]
        %v448 = vld [vmem:[%s334 + $0x160] sm:$0xff]
        %v449 = vld [vmem:[%s334 + $0x168] sm:$0xff]
        %v450 = vld [vmem:[%s334 + $0x170] sm:$0xff]
        %v451 = vld [vmem:[%s334 + $0x178] sm:$0xff]
        %v452 = vld [vmem:[%s334 + $0x180] sm:$0xff]
        %v453 = vld [vmem:[%s334 + $0x188] sm:$0xff]
        %v454 = vld [vmem:[%s334 + $0x190] sm:$0xff]
        %v455 = vld [vmem:[%s334 + $0x198] sm:$0xff]
        %v456 = vld [vmem:[%s334 + $0x1a0] sm:$0xff]
        %v457 = vld [vmem:[%s334 + $0x1a8] sm:$0xff]
        %v458 = vld [vmem:[%s334 + $0x1b0] sm:$0xff]
        %v459 = vld [vmem:[%s334 + $0x1b8] sm:$0xff]
        %v460 = vld [vmem:[%s334 + $0x1c0] sm:$0xff]
        %v461 = vld [vmem:[%s334 + $0x1c8] sm:$0xff]
        %v462 = vld [vmem:[%s334 + $0x1d0] sm:$0xff]
        %v463 = vld [vmem:[%s334 + $0x1d8] sm:$0xff]
        %v464 = vld [vmem:[%s334 + $0x1e0] sm:$0xff]
        %v465 = vld [vmem:[%s334 + $0x1e8] sm:$0xff]
        %v466 = vld [vmem:[%s334 + $0x1f0] sm:$0xff]
        %v467 = vld [vmem:[%s334 + $0x1f8] sm:$0xff]
        %v468 = vld [vmem:[%s334 + $0x200] sm:$0xff]
        %v469 = vld [vmem:[%s334 + $0x208] sm:$0xff]
        %v470 = vld [vmem:[%s334 + $0x210] sm:$0xff]
        %v471 = vld [vmem:[%s334 + $0x218] sm:$0xff]
        %v472 = vld [vmem:[%s334 + $0x220] sm:$0xff]
        %v473 = vld [vmem:[%s334 + $0x228] sm:$0xff]
        %v474 = vld [vmem:[%s334 + $0x230] sm:$0xff]
        %v475 = vld [vmem:[%s334 + $0x238] sm:$0xff]
        %v476 = vld [vmem:[%s334 + $0x240] sm:$0xff]
        %v477 = vld [vmem:[%s334 + $0x248] sm:$0xff]
        %v478 = vld [vmem:[%s334 + $0x250] sm:$0xff]
        %v479 = vld [vmem:[%s334 + $0x258] sm:$0xff]
        %v480 = vld [vmem:[%s334 + $0x260] sm:$0xff]
        %v481 = vld [vmem:[%s334 + $0x268] sm:$0xff]
        %v482 = vld [vmem:[%s334 + $0x270] sm:$0xff]
        %v483 = vld [vmem:[%s334 + $0x278] sm:$0xff]
        %v484 = vld [vmem:[%s334 + $0x280] sm:$0xff]
        %v485 = vld [vmem:[%s334 + $0x288] sm:$0xff]
        %v486 = vld [vmem:[%s334 + $0x290] sm:$0xff]
        %v487 = vld [vmem:[%s334 + $0x298] sm:$0xff]
        %v488 = vld [vmem:[%s334 + $0x2a0] sm:$0xff]
        %v489 = vld [vmem:[%s334 + $0x2a8] sm:$0xff]
        %v490 = vld [vmem:[%s334 + $0x2b0] sm:$0xff]
        %v491 = vld [vmem:[%s334 + $0x2b8] sm:$0xff]
        %v492 = vld [vmem:[%s334 + $0x2c0] sm:$0xff]
        %v493 = vld [vmem:[%s334 + $0x2c8] sm:$0xff]
        %v494 = vld [vmem:[%s334 + $0x2d0] sm:$0xff]
        %v495 = vld [vmem:[%s334 + $0x2d8] sm:$0xff]
        %v496 = vld [vmem:[%s334 + $0x2e0] sm:$0xff]
        %v497 = vld [vmem:[%s334 + $0x2e8] sm:$0xff]
        %v498 = vld [vmem:[%s334 + $0x2f0] sm:$0xff]
        %v499 = vld [vmem:[%s334 + $0x2f8] sm:$0xff]
        %v500 = vld [vmem:[%s334 + $0x300] sm:$0xff]
        %v501 = vld [vmem:[%s334 + $0x308] sm:$0xff]
        %v502 = vld [vmem:[%s334 + $0x310] sm:$0xff]
        %v503 = vld [vmem:[%s334 + $0x318] sm:$0xff]
        %v504 = vld [vmem:[%s334 + $0x320] sm:$0xff]
        %v505 = vld [vmem:[%s334 + $0x328] sm:$0xff]
        %v506 = vld [vmem:[%s334 + $0x330] sm:$0xff]
        %v507 = vld [vmem:[%s334 + $0x338] sm:$0xff]
        %v508 = vld [vmem:[%s334 + $0x340] sm:$0xff]
        %v509 = vld [vmem:[%s334 + $0x348] sm:$0xff]
        %v510 = vld [vmem:[%s334 + $0x350] sm:$0xff]
        %v511 = vld [vmem:[%s334 + $0x358] sm:$0xff]
        %v512 = vld [vmem:[%s334 + $0x360] sm:$0xff]
        %v513 = vld [vmem:[%s334 + $0x368] sm:$0xff]
        %v514 = vld [vmem:[%s334 + $0x370] sm:$0xff]
        %v515 = vld [vmem:[%s334 + $0x378] sm:$0xff]
        %v516 = vld [vmem:[%s334 + $0x380] sm:$0xff]
        %v517 = vld [vmem:[%s334 + $0x388] sm:$0xff]
        %v518 = vld [vmem:[%s334 + $0x390] sm:$0xff]
        %v519 = vld [vmem:[%s334 + $0x398] sm:$0xff]
        %v520 = vld [vmem:[%s334 + $0x3a0] sm:$0xff]
        %v521 = vld [vmem:[%s334 + $0x3a8] sm:$0xff]
        %v522 = vld [vmem:[%s334 + $0x3b0] sm:$0xff]
        %v523 = vld [vmem:[%s334 + $0x3b8] sm:$0xff]
        %v524 = vld [vmem:[%s334 + $0x3c0] sm:$0xff]
        %v525 = vld [vmem:[%s334 + $0x3c8] sm:$0xff]
        %v526 = vld [vmem:[%s334 + $0x3d0] sm:$0xff]
        %v527 = vld [vmem:[%s334 + $0x3d8] sm:$0xff]
        %v528 = vld [vmem:[%s334 + $0x3e0] sm:$0xff]
        %v529 = vld [vmem:[%s334 + $0x3e8] sm:$0xff]
        %v530 = vld [vmem:[%s334 + $0x3f0] sm:$0xff]
        %v531 = vld [vmem:[%s334 + $0x3f8] sm:$0xff]
        %v532 = vld [vmem:[%s334 + $0x400] sm:$0xff]
        %v533 = vld [vmem:[%s334 + $0x408] sm:$0xff]
        %v534 = vld [vmem:[%s334 + $0x410] sm:$0xff]
        %v535 = vld [vmem:[%s334 + $0x418] sm:$0xff]
        %v536 = vld [vmem:[%s334 + $0x420] sm:$0xff]
        %v537 = vld [vmem:[%s334 + $0x428] sm:$0xff]
        %v538 = vld [vmem:[%s334 + $0x430] sm:$0xff]
        %v539 = vld [vmem:[%s334 + $0x438] sm:$0xff]
        %v540 = vld [vmem:[%s334 + $0x440] sm:$0xff]
        %v541 = vld [vmem:[%s334 + $0x448] sm:$0xff]
        %v542 = vld [vmem:[%s334 + $0x450] sm:$0xff]
        %v543 = vld [vmem:[%s334 + $0x458] sm:$0xff]
        %v544 = vld [vmem:[%s334 + $0x460] sm:$0xff]
        %v545 = vld [vmem:[%s334 + $0x468] sm:$0xff]
        %v546 = vld [vmem:[%s334 + $0x470] sm:$0xff]
        %v547 = vld [vmem:[%s334 + $0x478] sm:$0xff]
        %v548 = vld [vmem:[%s334 + $0x480] sm:$0xff]
        %v549 = vld [vmem:[%s334 + $0x488] sm:$0xff]
        %v550 = vld [vmem:[%s334 + $0x490] sm:$0xff]
        %v551 = vld [vmem:[%s334 + $0x498] sm:$0xff]
        %v552 = vld [vmem:[%s334 + $0x4a0] sm:$0xff]
        %v553 = vld [vmem:[%s334 + $0x4a8] sm:$0xff]
        %v554 = vld [vmem:[%s334 + $0x4b0] sm:$0xff]
        %v555 = vld [vmem:[%s334 + $0x4b8] sm:$0xff]
        %v556 = vld [vmem:[%s334 + $0x4c0] sm:$0xff]
        %v557 = vld [vmem:[%s334 + $0x4c8] sm:$0xff]
        %v558 = vld [vmem:[%s334 + $0x4d0] sm:$0xff]
        %v559 = vld [vmem:[%s334 + $0x4d8] sm:$0xff]
        %v560 = vld [vmem:[%s334 + $0x4e0] sm:$0xff]
        %v561 = vld [vmem:[%s334 + $0x4e8] sm:$0xff]
        %v562 = vld [vmem:[%s334 + $0x4f0] sm:$0xff]
        %v563 = vld [vmem:[%s334 + $0x4f8] sm:$0xff]
        %v564 = vld [vmem:[%s334 + $0x500] sm:$0xff]
        %v565 = vld [vmem:[%s334 + $0x508] sm:$0xff]
        %v566 = vld [vmem:[%s334 + $0x510] sm:$0xff]
        %v567 = vld [vmem:[%s334 + $0x518] sm:$0xff]
        %v568 = vld [vmem:[%s334 + $0x520] sm:$0xff]
        %v569 = vld [vmem:[%s334 + $0x528] sm:$0xff]
        %v570 = vld [vmem:[%s334 + $0x530] sm:$0xff]
        %v571 = vld [vmem:[%s334 + $0x538] sm:$0xff]
        %v572 = vld [vmem:[%s334 + $0x540] sm:$0xff]
        %v573 = vld [vmem:[%s334 + $0x548] sm:$0xff]
        %v574 = vld [vmem:[%s334 + $0x550] sm:$0xff]
        %v575 = vld [vmem:[%s334 + $0x558] sm:$0xff]
        %v576 = vld [vmem:[%s334 + $0x560] sm:$0xff]
        %v577 = vld [vmem:[%s334 + $0x568] sm:$0xff]
        %v578 = vld [vmem:[%s334 + $0x570] sm:$0xff]
        %v579 = vld [vmem:[%s334 + $0x578] sm:$0xff]
        %v580 = vld [vmem:[%s334 + $0x580] sm:$0xff]
        %v581 = vld [vmem:[%s334 + $0x588] sm:$0xff]
        %v582 = vld [vmem:[%s334 + $0x590] sm:$0xff]
        %v583 = vld [vmem:[%s334 + $0x598] sm:$0xff]
        %v584 = vld [vmem:[%s334 + $0x5a0] sm:$0xff]
        %v585 = vld [vmem:[%s334 + $0x5a8] sm:$0xff]
        %v586 = vld [vmem:[%s334 + $0x5b0] sm:$0xff]
        %v587 = vld [vmem:[%s334 + $0x5b8] sm:$0xff]
        %v588 = vld [vmem:[%s334 + $0x5c0] sm:$0xff]
        %v589 = vld [vmem:[%s334 + $0x5c8] sm:$0xff]
        %v590 = vld [vmem:[%s334 + $0x5d0] sm:$0xff]
        %v591 = vld [vmem:[%s334 + $0x5d8] sm:$0xff]
        %v592 = vld [vmem:[%s334 + $0x5e0] sm:$0xff]
        %v593 = vld [vmem:[%s334 + $0x5e8] sm:$0xff]
        %v594 = vld [vmem:[%s334 + $0x5f0] sm:$0xff]
        %v595 = vld [vmem:[%s334 + $0x5f8] sm:$0xff]
        %v596 = vld [vmem:[%s334 + $0x600] sm:$0xff]
        %v597 = vld [vmem:[%s334 + $0x608] sm:$0xff]
        %v598 = vld [vmem:[%s334 + $0x610] sm:$0xff]
        %v599 = vld [vmem:[%s334 + $0x618] sm:$0xff]
        %v600 = vld [vmem:[%s334 + $0x620] sm:$0xff]
        %v601 = vld [vmem:[%s334 + $0x628] sm:$0xff]
        %v602 = vld [vmem:[%s334 + $0x630] sm:$0xff]
        %v603 = vld [vmem:[%s334 + $0x638] sm:$0xff]
        %v604 = vld [vmem:[%s334 + $0x640] sm:$0xff]
        %v605 = vld [vmem:[%s334 + $0x648] sm:$0xff]
        %v606 = vld [vmem:[%s334 + $0x650] sm:$0xff]
        %v607 = vld [vmem:[%s334 + $0x658] sm:$0xff]
        %v608 = vld [vmem:[%s334 + $0x660] sm:$0xff]
        %v609 = vld [vmem:[%s334 + $0x668] sm:$0xff]
        %v610 = vld [vmem:[%s334 + $0x670] sm:$0xff]
        %v611 = vld [vmem:[%s334 + $0x678] sm:$0xff]
        %v612 = vld [vmem:[%s334 + $0x680] sm:$0xff]
        %v613 = vld [vmem:[%s334 + $0x688] sm:$0xff]
        %v614 = vld [vmem:[%s334 + $0x690] sm:$0xff]
        %v615 = vld [vmem:[%s334 + $0x698] sm:$0xff]
        %v616 = vld [vmem:[%s334 + $0x6a0] sm:$0xff]
        %v617 = vld [vmem:[%s334 + $0x6a8] sm:$0xff]
        %v618 = vld [vmem:[%s334 + $0x6b0] sm:$0xff]
        %v619 = vld [vmem:[%s334 + $0x6b8] sm:$0xff]
        %v620 = vld [vmem:[%s334 + $0x6c0] sm:$0xff]
        %v621 = vld [vmem:[%s334 + $0x6c8] sm:$0xff]
        %v622 = vld [vmem:[%s334 + $0x6d0] sm:$0xff]
        %v623 = vld [vmem:[%s334 + $0x6d8] sm:$0xff]
        %v624 = vld [vmem:[%s334 + $0x6e0] sm:$0xff]
        %v625 = vld [vmem:[%s334 + $0x6e8] sm:$0xff]
        %v626 = vld [vmem:[%s334 + $0x6f0] sm:$0xff]
        %v627 = vld [vmem:[%s334 + $0x6f8] sm:$0xff]
        %v628 = vld [vmem:[%s334 + $0x700] sm:$0xff]
        %v629 = vld [vmem:[%s334 + $0x708] sm:$0xff]
        %v630 = vld [vmem:[%s334 + $0x710] sm:$0xff]
        %v631 = vld [vmem:[%s334 + $0x718] sm:$0xff]
        %v632 = vld [vmem:[%s334 + $0x720] sm:$0xff]
        %v633 = vld [vmem:[%s334 + $0x728] sm:$0xff]
        %v634 = vld [vmem:[%s334 + $0x730] sm:$0xff]
        %v635 = vld [vmem:[%s334 + $0x738] sm:$0xff]
        %v636 = vld [vmem:[%s334 + $0x740] sm:$0xff]
        %v637 = vld [vmem:[%s334 + $0x748] sm:$0xff]
        %v638 = vld [vmem:[%s334 + $0x750] sm:$0xff]
        %v639 = vld [vmem:[%s334 + $0x758] sm:$0xff]
        %v640 = vld [vmem:[%s334 + $0x760] sm:$0xff]
        %v641 = vld [vmem:[%s334 + $0x768] sm:$0xff]
        %v642 = vld [vmem:[%s334 + $0x770] sm:$0xff]
        %v643 = vld [vmem:[%s334 + $0x778] sm:$0xff]
        %v644 = vld [vmem:[%s334 + $0x780] sm:$0xff]
        %v645 = vld [vmem:[%s334 + $0x788] sm:$0xff]
        %v646 = vld [vmem:[%s334 + $0x790] sm:$0xff]
        %v647 = vld [vmem:[%s334 + $0x798] sm:$0xff]
        %v648 = vld [vmem:[%s334 + $0x7a0] sm:$0xff]
        %v649 = vld [vmem:[%s334 + $0x7a8] sm:$0xff]
        %v650 = vld [vmem:[%s334 + $0x7b0] sm:$0xff]
        %v651 = vld [vmem:[%s334 + $0x7b8] sm:$0xff]
        %v652 = vld [vmem:[%s334 + $0x7c0] sm:$0xff]
        %v653 = vld [vmem:[%s334 + $0x7c8] sm:$0xff]
        %v654 = vld [vmem:[%s334 + $0x7d0] sm:$0xff]
        %v655 = vld [vmem:[%s334 + $0x7d8] sm:$0xff]
        %v656 = vld [vmem:[%s334 + $0x7e0] sm:$0xff]
        %v657 = vld [vmem:[%s334 + $0x7e8] sm:$0xff]
        %v658 = vld [vmem:[%s334 + $0x7f0] sm:$0xff]
        %v659 = vld [vmem:[%s334 + $0x7f8] sm:$0xff]
        %v660 = vld [vmem:[%s334 + $0x800] sm:$0xff]
        %v661 = vld [vmem:[%s334 + $0x808] sm:$0xff]
        %v662 = vld [vmem:[%s334 + $0x810] sm:$0xff]
        %v663 = vld [vmem:[%s334 + $0x818] sm:$0xff]
        %v664 = vld [vmem:[%s334 + $0x820] sm:$0xff]
        %v665 = vld [vmem:[%s334 + $0x828] sm:$0xff]
        %v666 = vld [vmem:[%s334 + $0x830] sm:$0xff]
        %v667 = vld [vmem:[%s334 + $0x838] sm:$0xff]
        %v668 = vld [vmem:[%s334 + $0x840] sm:$0xff]
        %v669 = vld [vmem:[%s334 + $0x848] sm:$0xff]
        %v670 = vld [vmem:[%s334 + $0x850] sm:$0xff]
        %v671 = vld [vmem:[%s334 + $0x858] sm:$0xff]
        %v672 = vld [vmem:[%s334 + $0x860] sm:$0xff]
        %v673 = vld [vmem:[%s334 + $0x868] sm:$0xff]
        %v674 = vld [vmem:[%s334 + $0x870] sm:$0xff]
        %v675 = vld [vmem:[%s334 + $0x878] sm:$0xff]
        %v676 = vld [vmem:[%s334 + $0x880] sm:$0xff]
        %v677 = vld [vmem:[%s334 + $0x888] sm:$0xff]
        %v678 = vld [vmem:[%s334 + $0x890] sm:$0xff]
        %v679 = vld [vmem:[%s334 + $0x898] sm:$0xff]
        %v680 = vld [vmem:[%s334 + $0x8a0] sm:$0xff]
        %v681 = vld [vmem:[%s334 + $0x8a8] sm:$0xff]
        %v682 = vld [vmem:[%s334 + $0x8b0] sm:$0xff]
        %v683 = vld [vmem:[%s334 + $0x8b8] sm:$0xff]
        %v684 = vld [vmem:[%s334 + $0x8c0] sm:$0xff]
        %v685 = vld [vmem:[%s334 + $0x8c8] sm:$0xff]
        %v686 = vld [vmem:[%s334 + $0x8d0] sm:$0xff]
        %v687 = vld [vmem:[%s334 + $0x8d8] sm:$0xff]
        %v688 = vld [vmem:[%s334 + $0x8e0] sm:$0xff]
        %v689 = vld [vmem:[%s334 + $0x8e8] sm:$0xff]
        %v690 = vld [vmem:[%s334 + $0x8f0] sm:$0xff]
        %v691 = vld [vmem:[%s334 + $0x8f8] sm:$0xff]
        %v692 = vld [vmem:[%s334 + $0x900] sm:$0xff]
        %v693 = vld [vmem:[%s334 + $0x908] sm:$0xff]
        %v694 = vld [vmem:[%s334 + $0x910] sm:$0xff]
        %v695 = vld [vmem:[%s334 + $0x918] sm:$0xff]
        %v696 = vld [vmem:[%s334 + $0x920] sm:$0xff]
        %v697 = vld [vmem:[%s334 + $0x928] sm:$0xff]
        %v698 = vld [vmem:[%s334 + $0x930] sm:$0xff]
        %v699 = vld [vmem:[%s334 + $0x938] sm:$0xff]
        %v700 = vld [vmem:[%s334 + $0x940] sm:$0xff]
        %v701 = vld [vmem:[%s334 + $0x948] sm:$0xff]
        %v702 = vld [vmem:[%s334 + $0x950] sm:$0xff]
        %v703 = vld [vmem:[%s334 + $0x958] sm:$0xff]
        %v704 = vld [vmem:[%s334 + $0x960] sm:$0xff]
        %v705 = vld [vmem:[%s334 + $0x968] sm:$0xff]
        %v706 = vld [vmem:[%s334 + $0x970] sm:$0xff]
        %v707 = vld [vmem:[%s334 + $0x978] sm:$0xff]
        %v708 = vld [vmem:[%s334 + $0x980] sm:$0xff]
        %v709 = vld [vmem:[%s334 + $0x988] sm:$0xff]
        %v710 = vld [vmem:[%s334 + $0x990] sm:$0xff]
        %v711 = vld [vmem:[%s334 + $0x998] sm:$0xff]
        %v712 = vld [vmem:[%s334 + $0x9a0] sm:$0xff]
        %v713 = vld [vmem:[%s334 + $0x9a8] sm:$0xff]
        %v714 = vld [vmem:[%s334 + $0x9b0] sm:$0xff]
        %v715 = vld [vmem:[%s334 + $0x9b8] sm:$0xff]
        %v716 = vld [vmem:[%s334 + $0x9c0] sm:$0xff]
        %v717 = vld [vmem:[%s334 + $0x9c8] sm:$0xff]
        %v718 = vld [vmem:[%s334 + $0x9d0] sm:$0xff]
        %v719 = vld [vmem:[%s334 + $0x9d8] sm:$0xff]
        %v720 = vld [vmem:[%s334 + $0x9e0] sm:$0xff]
        %v721 = vld [vmem:[%s334 + $0x9e8] sm:$0xff]
        %v722 = vld [vmem:[%s334 + $0x9f0] sm:$0xff]
        %v723 = vld [vmem:[%s334 + $0x9f8] sm:$0xff]
        %v724 = vld [vmem:[%s334 + $0xa00] sm:$0xff]
        %v725 = vld [vmem:[%s334 + $0xa08] sm:$0xff]
        %v726 = vld [vmem:[%s334 + $0xa10] sm:$0xff]
        %v727 = vld [vmem:[%s334 + $0xa18] sm:$0xff]
        %v728 = vld [vmem:[%s334 + $0xa20] sm:$0xff]
        %v729 = vld [vmem:[%s334 + $0xa28] sm:$0xff]
        %v730 = vld [vmem:[%s334 + $0xa30] sm:$0xff]
        %v731 = vld [vmem:[%s334 + $0xa38] sm:$0xff]
        %v732 = vld [vmem:[%s334 + $0xa40] sm:$0xff]
        %v733 = vld [vmem:[%s334 + $0xa48] sm:$0xff]
        %v734 = vld [vmem:[%s334 + $0xa50] sm:$0xff]
        %v735 = vld [vmem:[%s334 + $0xa58] sm:$0xff]
        %v736 = vld [vmem:[%s334 + $0xa60] sm:$0xff]
        %v737 = vld [vmem:[%s334 + $0xa68] sm:$0xff]
        %v738 = vld [vmem:[%s334 + $0xa70] sm:$0xff]
        %v739 = vld [vmem:[%s334 + $0xa78] sm:$0xff]
        %v740 = vld [vmem:[%s334 + $0xa80] sm:$0xff]
        %v741 = vld [vmem:[%s334 + $0xa88] sm:$0xff]
        %v742 = vld [vmem:[%s334 + $0xa90] sm:$0xff]
        %v743 = vld [vmem:[%s334 + $0xa98] sm:$0xff]
        %v744 = vld [vmem:[%s334 + $0xaa0] sm:$0xff]
        %v745 = vld [vmem:[%s334 + $0xaa8] sm:$0xff]
        %v746 = vld [vmem:[%s334 + $0xab0] sm:$0xff]
        %v747 = vld [vmem:[%s334 + $0xab8] sm:$0xff]
        %v748 = vld [vmem:[%s334 + $0xac0] sm:$0xff]
        %v749 = vld [vmem:[%s334 + $0xac8] sm:$0xff]
        %v750 = vld [vmem:[%s334 + $0xad0] sm:$0xff]
        %v751 = vld [vmem:[%s334 + $0xad8] sm:$0xff]
        %v752 = vld [vmem:[%s334 + $0xae0] sm:$0xff]
        %v753 = vld [vmem:[%s334 + $0xae8] sm:$0xff]
        %v754 = vld [vmem:[%s334 + $0xaf0] sm:$0xff]
        %v755 = vld [vmem:[%s334 + $0xaf8] sm:$0xff]
        %v756 = vld [vmem:[%s334 + $0xb00] sm:$0xff]
        %v757 = vld [vmem:[%s334 + $0xb08] sm:$0xff]
        %v758 = vld [vmem:[%s334 + $0xb10] sm:$0xff]
        %v759 = vld [vmem:[%s334 + $0xb18] sm:$0xff]
        %v760 = vld [vmem:[%s334 + $0xb20] sm:$0xff]
        %v761 = vld [vmem:[%s334 + $0xb28] sm:$0xff]
        %v762 = vld [vmem:[%s334 + $0xb30] sm:$0xff]
        %v763 = vld [vmem:[%s334 + $0xb38] sm:$0xff]
        %v764 = vld [vmem:[%s334 + $0xb40] sm:$0xff]
        %v765 = vld [vmem:[%s334 + $0xb48] sm:$0xff]
        %v766 = vld [vmem:[%s334 + $0xb50] sm:$0xff]
        %v767 = vld [vmem:[%s334 + $0xb58] sm:$0xff]
        %v768 = vld [vmem:[%s334 + $0xb60] sm:$0xff]
        %v769 = vld [vmem:[%s334 + $0xb68] sm:$0xff]
        %v770 = vld [vmem:[%s334 + $0xb70] sm:$0xff]
        %v771 = vld [vmem:[%s334 + $0xb78] sm:$0xff]
        %v772 = vld [vmem:[%s334 + $0xb80] sm:$0xff]
        %v773 = vld [vmem:[%s334 + $0xb88] sm:$0xff]
        %v774 = vld [vmem:[%s334 + $0xb90] sm:$0xff]
        %v775 = vld [vmem:[%s334 + $0xb98] sm:$0xff]
        %v776 = vld [vmem:[%s334 + $0xba0] sm:$0xff]
        %v777 = vld [vmem:[%s334 + $0xba8] sm:$0xff]
        %v778 = vld [vmem:[%s334 + $0xbb0] sm:$0xff]
        %v779 = vld [vmem:[%s334 + $0xbb8] sm:$0xff]
        %v780 = vld [vmem:[%s334 + $0xbc0] sm:$0xff]
        %v781 = vld [vmem:[%s334 + $0xbc8] sm:$0xff]
        %v782 = vld [vmem:[%s334 + $0xbd0] sm:$0xff]
        %v783 = vld [vmem:[%s334 + $0xbd8] sm:$0xff]
        %v784 = vld [vmem:[%s334 + $0xbe0] sm:$0xff]
        %v785 = vld [vmem:[%s334 + $0xbe8] sm:$0xff]
        %v786 = vld [vmem:[%s334 + $0xbf0] sm:$0xff]
        %v787 = vld [vmem:[%s334 + $0xbf8] sm:$0xff]
        %v788 = vld [vmem:[%s334 + $0xc00] sm:$0xff]
        %v789 = vld [vmem:[%s334 + $0xc08] sm:$0xff]
        %v790 = vld [vmem:[%s334 + $0xc10] sm:$0xff]
        %v791 = vld [vmem:[%s334 + $0xc18] sm:$0xff]
        %v792 = vld [vmem:[%s334 + $0xc20] sm:$0xff]
        %v793 = vld [vmem:[%s334 + $0xc28] sm:$0xff]
        %v794 = vld [vmem:[%s334 + $0xc30] sm:$0xff]
        %v795 = vld [vmem:[%s334 + $0xc38] sm:$0xff]
        %v796 = vld [vmem:[%s334 + $0xc40] sm:$0xff]
        %v797 = vld [vmem:[%s334 + $0xc48] sm:$0xff]
        %v798 = vld [vmem:[%s334 + $0xc50] sm:$0xff]
        %v799 = vld [vmem:[%s334 + $0xc58] sm:$0xff]
        %v800 = vld [vmem:[%s334 + $0xc60] sm:$0xff]
        %v801 = vld [vmem:[%s334 + $0xc68] sm:$0xff]
        %v802 = vld [vmem:[%s334 + $0xc70] sm:$0xff]
        %v803 = vld [vmem:[%s334 + $0xc78] sm:$0xff]
        %v804 = vld [vmem:[%s334 + $0xc80] sm:$0xff]
        %v805 = vld [vmem:[%s334 + $0xc88] sm:$0xff]
        %v806 = vld [vmem:[%s334 + $0xc90] sm:$0xff]
        %v807 = vld [vmem:[%s334 + $0xc98] sm:$0xff]
        %v808 = vld [vmem:[%s334 + $0xca0] sm:$0xff]
        %v809 = vld [vmem:[%s334 + $0xca8] sm:$0xff]
        %v810 = vld [vmem:[%s334 + $0xcb0] sm:$0xff]
        %v811 = vld [vmem:[%s334 + $0xcb8] sm:$0xff]
        %v812 = vld [vmem:[%s334 + $0xcc0] sm:$0xff]
        %v813 = vld [vmem:[%s334 + $0xcc8] sm:$0xff]
        %v814 = vld [vmem:[%s334 + $0xcd0] sm:$0xff]
        %v815 = vld [vmem:[%s334 + $0xcd8] sm:$0xff]
        %v816 = vld [vmem:[%s334 + $0xce0] sm:$0xff]
        %v817 = vld [vmem:[%s334 + $0xce8] sm:$0xff]
        %v818 = vld [vmem:[%s334 + $0xcf0] sm:$0xff]
        %v819 = vld [vmem:[%s334 + $0xcf8] sm:$0xff]
        %v820 = vld [vmem:[%s334 + $0xd00] sm:$0xff]
        %v821 = vld [vmem:[%s334 + $0xd08] sm:$0xff]
        %v822 = vld [vmem:[%s334 + $0xd10] sm:$0xff]
        %v823 = vld [vmem:[%s334 + $0xd18] sm:$0xff]
        %v824 = vld [vmem:[%s334 + $0xd20] sm:$0xff]
        %v825 = vld [vmem:[%s334 + $0xd28] sm:$0xff]
        %v826 = vld [vmem:[%s334 + $0xd30] sm:$0xff]
        %v827 = vld [vmem:[%s334 + $0xd38] sm:$0xff]
        %v828 = vld [vmem:[%s334 + $0xd40] sm:$0xff]
        %v829 = vld [vmem:[%s334 + $0xd48] sm:$0xff]
        %v830 = vld [vmem:[%s334 + $0xd50] sm:$0xff]
        %v831 = vld [vmem:[%s334 + $0xd58] sm:$0xff]
        %v832 = vld [vmem:[%s334 + $0xd60] sm:$0xff]
        %v833 = vld [vmem:[%s334 + $0xd68] sm:$0xff]
        %v834 = vld [vmem:[%s334 + $0xd70] sm:$0xff]
        %v835 = vld [vmem:[%s334 + $0xd78] sm:$0xff]
        %v836 = vld [vmem:[%s334 + $0xd80] sm:$0xff]
        %v837 = vld [vmem:[%s334 + $0xd88] sm:$0xff]
        %v838 = vld [vmem:[%s334 + $0xd90] sm:$0xff]
        %v839 = vld [vmem:[%s334 + $0xd98] sm:$0xff]
        %v840 = vld [vmem:[%s334 + $0xda0] sm:$0xff]
        %v841 = vld [vmem:[%s334 + $0xda8] sm:$0xff]
        %v842 = vld [vmem:[%s334 + $0xdb0] sm:$0xff]
        %v843 = vld [vmem:[%s334 + $0xdb8] sm:$0xff]
        %v844 = vld [vmem:[%s334 + $0xdc0] sm:$0xff]
        %v845 = vld [vmem:[%s334 + $0xdc8] sm:$0xff]
        %v846 = vld [vmem:[%s334 + $0xdd0] sm:$0xff]
        %v847 = vld [vmem:[%s334 + $0xdd8] sm:$0xff]
        %v848 = vld [vmem:[%s334 + $0xde0] sm:$0xff]
        %v849 = vld [vmem:[%s334 + $0xde8] sm:$0xff]
        %v850 = vld [vmem:[%s334 + $0xdf0] sm:$0xff]
        %v851 = vld [vmem:[%s334 + $0xdf8] sm:$0xff]
        %v852 = vld [vmem:[%s334 + $0xe00] sm:$0xff]
        %v853 = vld [vmem:[%s334 + $0xe08] sm:$0xff]
        %v854 = vld [vmem:[%s334 + $0xe10] sm:$0xff]
        %v855 = vld [vmem:[%s334 + $0xe18] sm:$0xff]
        %v856 = vld [vmem:[%s334 + $0xe20] sm:$0xff]
        %v857 = vld [vmem:[%s334 + $0xe28] sm:$0xff]
        %v858 = vld [vmem:[%s334 + $0xe30] sm:$0xff]
        %v859 = vld [vmem:[%s334 + $0xe38] sm:$0xff]
        %v860 = vld [vmem:[%s334 + $0xe40] sm:$0xff]
        %v861 = vld [vmem:[%s334 + $0xe48] sm:$0xff]
        %v862 = vld [vmem:[%s334 + $0xe50] sm:$0xff]
        %v863 = vld [vmem:[%s334 + $0xe58] sm:$0xff]
        %v864 = vld [vmem:[%s334 + $0xe60] sm:$0xff]
        %v865 = vld [vmem:[%s334 + $0xe68] sm:$0xff]
        %v866 = vld [vmem:[%s334 + $0xe70] sm:$0xff]
        %v867 = vld [vmem:[%s334 + $0xe78] sm:$0xff]
        %v868 = vld [vmem:[%s334 + $0xe80] sm:$0xff]
        %v869 = vld [vmem:[%s334 + $0xe88] sm:$0xff]
        %v870 = vld [vmem:[%s334 + $0xe90] sm:$0xff]
        %v871 = vld [vmem:[%s334 + $0xe98] sm:$0xff]
        %v872 = vld [vmem:[%s334 + $0xea0] sm:$0xff]
        %v873 = vld [vmem:[%s334 + $0xea8] sm:$0xff]
        %v874 = vld [vmem:[%s334 + $0xeb0] sm:$0xff]
        %v875 = vld [vmem:[%s334 + $0xeb8] sm:$0xff]
        %v876 = vld [vmem:[%s334 + $0xec0] sm:$0xff]
        %v877 = vld [vmem:[%s334 + $0xec8] sm:$0xff]
        %v878 = vld [vmem:[%s334 + $0xed0] sm:$0xff]
        %v879 = vld [vmem:[%s334 + $0xed8] sm:$0xff]
        %v880 = vld [vmem:[%s334 + $0xee0] sm:$0xff]
        %v881 = vld [vmem:[%s334 + $0xee8] sm:$0xff]
        %v882 = vld [vmem:[%s334 + $0xef0] sm:$0xff]
        %v883 = vld [vmem:[%s334 + $0xef8] sm:$0xff]
        %v884 = vld [vmem:[%s334 + $0xf00] sm:$0xff]
        %v885 = vld [vmem:[%s334 + $0xf08] sm:$0xff]
        %v886 = vld [vmem:[%s334 + $0xf10] sm:$0xff]
        %v887 = vld [vmem:[%s334 + $0xf18] sm:$0xff]
        %v888 = vld [vmem:[%s334 + $0xf20] sm:$0xff]
        %v889 = vld [vmem:[%s334 + $0xf28] sm:$0xff]
        %v890 = vld [vmem:[%s334 + $0xf30] sm:$0xff]
        %v891 = vld [vmem:[%s334 + $0xf38] sm:$0xff]
        %v892 = vld [vmem:[%s334 + $0xf40] sm:$0xff]
        %v893 = vld [vmem:[%s334 + $0xf48] sm:$0xff]
        %v894 = vld [vmem:[%s334 + $0xf50] sm:$0xff]
        %v895 = vld [vmem:[%s334 + $0xf58] sm:$0xff]
        %v896 = vld [vmem:[%s334 + $0xf60] sm:$0xff]
        %v897 = vld [vmem:[%s334 + $0xf68] sm:$0xff]
        %v898 = vld [vmem:[%s334 + $0xf70] sm:$0xff]
        %v899 = vld [vmem:[%s334 + $0xf78] sm:$0xff]
        %v900 = vld [vmem:[%s334 + $0xf80] sm:$0xff]
        %v901 = vld [vmem:[%s334 + $0xf88] sm:$0xff]
        %v902 = vld [vmem:[%s334 + $0xf90] sm:$0xff]
        %v903 = vld [vmem:[%s334 + $0xf98] sm:$0xff]
        %v904 = vld [vmem:[%s334 + $0xfa0] sm:$0xff]
        %v905 = vld [vmem:[%s334 + $0xfa8] sm:$0xff]
        %v906 = vld [vmem:[%s334 + $0xfb0] sm:$0xff]
        %v907 = vld [vmem:[%s334 + $0xfb8] sm:$0xff]
        %v908 = vld [vmem:[%s334 + $0xfc0] sm:$0xff]
        %v909 = vld [vmem:[%s334 + $0xfc8] sm:$0xff]
        %v910 = vld [vmem:[%s334 + $0xfd0] sm:$0xff]
        %v911 = vld [vmem:[%s334 + $0xfd8] sm:$0xff]
        %v912 = vld [vmem:[%s334 + $0xfe0] sm:$0xff]
        %v913 = vld [vmem:[%s334 + $0xfe8] sm:$0xff]
        %v914 = vld [vmem:[%s334 + $0xff0] sm:$0xff]
        %v915 = vld [vmem:[%s334 + $0xff8] sm:$0xff]
        %v916 = vld [vmem:[%s334 + $0x1000] sm:$0xff]
        %v917 = vld [vmem:[%s334 + $0x1008] sm:$0xff]
        %v918 = vld [vmem:[%s334 + $0x1010] sm:$0xff]
        %v919 = vld [vmem:[%s334 + $0x1018] sm:$0xff]
        %v920 = vld [vmem:[%s334 + $0x1020] sm:$0xff]
        %v921 = vld [vmem:[%s334 + $0x1028] sm:$0xff]
        %v922 = vld [vmem:[%s334 + $0x1030] sm:$0xff]
        %v923 = vld [vmem:[%s334 + $0x1038] sm:$0xff]
        %v924 = vld [vmem:[%s334 + $0x1040] sm:$0xff]
        %v925 = vld [vmem:[%s334 + $0x1048] sm:$0xff]
        %v926 = vld [vmem:[%s334 + $0x1050] sm:$0xff]
        %v927 = vld [vmem:[%s334 + $0x1058] sm:$0xff]
        %v928 = vld [vmem:[%s334 + $0x1060] sm:$0xff]
        %v929 = vld [vmem:[%s334 + $0x1068] sm:$0xff]
        %v930 = vld [vmem:[%s334 + $0x1070] sm:$0xff]
        %v931 = vld [vmem:[%s334 + $0x1078] sm:$0xff]
        %v932 = vld [vmem:[%s334 + $0x1080] sm:$0xff]
        %v933 = vld [vmem:[%s334 + $0x1088] sm:$0xff]
        %v934 = vld [vmem:[%s334 + $0x1090] sm:$0xff]
        %v935 = vld [vmem:[%s334 + $0x1098] sm:$0xff]
        %v936 = vld [vmem:[%s334 + $0x10a0] sm:$0xff]
        %v937 = vld [vmem:[%s334 + $0x10a8] sm:$0xff]
        %v938 = vld [vmem:[%s334 + $0x10b0] sm:$0xff]
        %v939 = vld [vmem:[%s334 + $0x10b8] sm:$0xff]
        %v940 = vld [vmem:[%s334 + $0x10c0] sm:$0xff]
        %v941 = vld [vmem:[%s334 + $0x10c8] sm:$0xff]
        %v942 = vld [vmem:[%s334 + $0x10d0] sm:$0xff]
        %v943 = vld [vmem:[%s334 + $0x10d8] sm:$0xff]
        %v944 = vld [vmem:[%s334 + $0x10e0] sm:$0xff]
        %v945 = vld [vmem:[%s334 + $0x10e8] sm:$0xff]
        %v946 = vld [vmem:[%s334 + $0x10f0] sm:$0xff]
        %v947 = vld [vmem:[%s334 + $0x10f8] sm:$0xff]
        %v948 = vld [vmem:[%s334 + $0x1100] sm:$0xff]
        %v949 = vld [vmem:[%s334 + $0x1108] sm:$0xff]
        %v950 = vld [vmem:[%s334 + $0x1110] sm:$0xff]
        %v951 = vld [vmem:[%s334 + $0x1118] sm:$0xff]
        %v952 = vld [vmem:[%s334 + $0x1120] sm:$0xff]
        %v953 = vld [vmem:[%s334 + $0x1128] sm:$0xff]
        %v954 = vld [vmem:[%s334 + $0x1130] sm:$0xff]
        %v955 = vld [vmem:[%s334 + $0x1138] sm:$0xff]
        %v956 = vld [vmem:[%s334 + $0x1140] sm:$0xff]
        %v957 = vld [vmem:[%s334 + $0x1148] sm:$0xff]
        %v958 = vld [vmem:[%s334 + $0x1150] sm:$0xff]
        %v959 = vld [vmem:[%s334 + $0x1158] sm:$0xff]
        %v960 = vld [vmem:[%s334 + $0x1160] sm:$0xff]
        %v961 = vld [vmem:[%s334 + $0x1168] sm:$0xff]
        %v962 = vld [vmem:[%s334 + $0x1170] sm:$0xff]
        %v963 = vld [vmem:[%s334 + $0x1178] sm:$0xff]
        %v964 = vld [vmem:[%s334 + $0x1180] sm:$0xff]
        %v965 = vld [vmem:[%s334 + $0x1188] sm:$0xff]
        %v966 = vld [vmem:[%s334 + $0x1190] sm:$0xff]
        %v967 = vld [vmem:[%s334 + $0x1198] sm:$0xff]
        %v968 = vld [vmem:[%s334 + $0x11a0] sm:$0xff]
        %v969 = vld [vmem:[%s334 + $0x11a8] sm:$0xff]
        %v970 = vld [vmem:[%s334 + $0x11b0] sm:$0xff]
        %v971 = vld [vmem:[%s334 + $0x11b8] sm:$0xff]
        %v972 = vld [vmem:[%s334 + $0x11c0] sm:$0xff]
        %v973 = vld [vmem:[%s334 + $0x11c8] sm:$0xff]
        %v974 = vld [vmem:[%s334 + $0x11d0] sm:$0xff]
        %v975 = vld [vmem:[%s334 + $0x11d8] sm:$0xff]
        %v976 = vld [vmem:[%s334 + $0x11e0] sm:$0xff]
        %v977 = vld [vmem:[%s334 + $0x11e8] sm:$0xff]
        %v978 = vld [vmem:[%s334 + $0x11f0] sm:$0xff]
        %v979 = vld [vmem:[%s334 + $0x11f8] sm:$0xff]
        %v980 = vld [vmem:[%s334 + $0x1200] sm:$0xff]
        %v981 = vld [vmem:[%s334 + $0x1208] sm:$0xff]
        %v982 = vld [vmem:[%s334 + $0x1210] sm:$0xff]
        %v983 = vld [vmem:[%s334 + $0x1218] sm:$0xff]
        %v984 = vld [vmem:[%s334 + $0x1220] sm:$0xff]
        %v985 = vld [vmem:[%s334 + $0x1228] sm:$0xff]
        %v986 = vld [vmem:[%s334 + $0x1230] sm:$0xff]
        %v987 = vld [vmem:[%s334 + $0x1238] sm:$0xff]
        %v988 = vld [vmem:[%s334 + $0x1240] sm:$0xff]
        %v989 = vld [vmem:[%s334 + $0x1248] sm:$0xff]
        %v990 = vld [vmem:[%s334 + $0x1250] sm:$0xff]
        %v991 = vld [vmem:[%s334 + $0x1258] sm:$0xff]
        %v992 = vld [vmem:[%s334 + $0x1260] sm:$0xff]
        %v993 = vld [vmem:[%s334 + $0x1268] sm:$0xff]
        %v994 = vld [vmem:[%s334 + $0x1270] sm:$0xff]
        %v995 = vld [vmem:[%s334 + $0x1278] sm:$0xff]
        %v996 = vld [vmem:[%s334 + $0x1280] sm:$0xff]
        %v997 = vld [vmem:[%s334 + $0x1288] sm:$0xff]
        %v998 = vld [vmem:[%s334 + $0x1290] sm:$0xff]
        %v999 = vld [vmem:[%s334 + $0x1298] sm:$0xff]
        %v1000 = vld [vmem:[%s334 + $0x12a0] sm:$0xff]
        %v1001 = vld [vmem:[%s334 + $0x12a8] sm:$0xff]
        %v1002 = vld [vmem:[%s334 + $0x12b0] sm:$0xff]
        %v1003 = vld [vmem:[%s334 + $0x12b8] sm:$0xff]
        %v1004 = vld [vmem:[%s334 + $0x12c0] sm:$0xff]
        %v1005 = vld [vmem:[%s334 + $0x12c8] sm:$0xff]
        %v1006 = vld [vmem:[%s334 + $0x12d0] sm:$0xff]
        %v1007 = vld [vmem:[%s334 + $0x12d8] sm:$0xff]
        %v1008 = vld [vmem:[%s334 + $0x12e0] sm:$0xff]
        %v1009 = vld [vmem:[%s334 + $0x12e8] sm:$0xff]
        %v1010 = vld [vmem:[%s334 + $0x12f0] sm:$0xff]
        %v1011 = vld [vmem:[%s334 + $0x12f8] sm:$0xff]
        %v1012 = vld [vmem:[%s334 + $0x1300] sm:$0xff]
        %v1013 = vld [vmem:[%s334 + $0x1308] sm:$0xff]
        %v1014 = vld [vmem:[%s334 + $0x1310] sm:$0xff]
        %v1015 = vld [vmem:[%s334 + $0x1318] sm:$0xff]
        %v1016 = vld [vmem:[%s334 + $0x1320] sm:$0xff]
        %v1017 = vld [vmem:[%s334 + $0x1328] sm:$0xff]
        %v1018 = vld [vmem:[%s334 + $0x1330] sm:$0xff]
        %v1019 = vld [vmem:[%s334 + $0x1338] sm:$0xff]
        %v1020 = vld [vmem:[%s334 + $0x1340] sm:$0xff]
        %v1021 = vld [vmem:[%s334 + $0x1348] sm:$0xff]
        %v1022 = vld [vmem:[%s334 + $0x1350] sm:$0xff]
        %v1023 = vld [vmem:[%s334 + $0x1358] sm:$0xff]
        %v1024 = vld [vmem:[%s334 + $0x1360] sm:$0xff]
        %v1025 = vld [vmem:[%s334 + $0x1368] sm:$0xff]
        %v1026 = vld [vmem:[%s334 + $0x1370] sm:$0xff]
        %v1027 = vld [vmem:[%s334 + $0x1378] sm:$0xff]
        %v1028 = vld [vmem:[%s334 + $0x1380] sm:$0xff]
        %v1029 = vld [vmem:[%s334 + $0x1388] sm:$0xff]
        %v1030 = vld [vmem:[%s334 + $0x1390] sm:$0xff]
        %v1031 = vld [vmem:[%s334 + $0x1398] sm:$0xff]
        %v1032 = vld [vmem:[%s334 + $0x13a0] sm:$0xff]
        %v1033 = vld [vmem:[%s334 + $0x13a8] sm:$0xff]
        %v1034 = vld [vmem:[%s334 + $0x13b0] sm:$0xff]
        %v1035 = vld [vmem:[%s334 + $0x13b8] sm:$0xff]
        %v1036 = vld [vmem:[%s334 + $0x13c0] sm:$0xff]
        %v1037 = vld [vmem:[%s334 + $0x13c8] sm:$0xff]
        %v1038 = vld [vmem:[%s334 + $0x13d0] sm:$0xff]
        %v1039 = vld [vmem:[%s334 + $0x13d8] sm:$0xff]
        %v1040 = vld [vmem:[%s334 + $0x13e0] sm:$0xff]
        %v1041 = vld [vmem:[%s334 + $0x13e8] sm:$0xff]
        %v1042 = vld [vmem:[%s334 + $0x13f0] sm:$0xff]
        %v1043 = vld [vmem:[%s334 + $0x13f8] sm:$0xff]
        %v1044 = vld [vmem:[%s334 + $0x1400] sm:$0xff]
        %v1045 = vld [vmem:[%s334 + $0x1408] sm:$0xff]
        %v1046 = vld [vmem:[%s334 + $0x1410] sm:$0xff]
        %v1047 = vld [vmem:[%s334 + $0x1418] sm:$0xff]
        %v1048 = vld [vmem:[%s334 + $0x1420] sm:$0xff]
        %v1049 = vld [vmem:[%s334 + $0x1428] sm:$0xff]
        %v1050 = vld [vmem:[%s334 + $0x1430] sm:$0xff]
        %v1051 = vld [vmem:[%s334 + $0x1438] sm:$0xff]
        %v1052 = vld [vmem:[%s334 + $0x1440] sm:$0xff]
        %v1053 = vld [vmem:[%s334 + $0x1448] sm:$0xff]
        %v1054 = vld [vmem:[%s334 + $0x1450] sm:$0xff]
        %v1055 = vld [vmem:[%s334 + $0x1458] sm:$0xff]
        %v1056 = vld [vmem:[%s334 + $0x1460] sm:$0xff]
        %v1057 = vld [vmem:[%s334 + $0x1468] sm:$0xff]
        %v1058 = vld [vmem:[%s334 + $0x1470] sm:$0xff]
        %v1059 = vld [vmem:[%s334 + $0x1478] sm:$0xff]
        %v1060 = vld [vmem:[%s334 + $0x1480] sm:$0xff]
        %v1061 = vld [vmem:[%s334 + $0x1488] sm:$0xff]
        %v1062 = vld [vmem:[%s334 + $0x1490] sm:$0xff]
        %v1063 = vld [vmem:[%s334 + $0x1498] sm:$0xff]
        %v1064 = vld [vmem:[%s334 + $0x14a0] sm:$0xff]
        %v1065 = vld [vmem:[%s334 + $0x14a8] sm:$0xff]
        %v1066 = vld [vmem:[%s334 + $0x14b0] sm:$0xff]
        %v1067 = vld [vmem:[%s334 + $0x14b8] sm:$0xff]
        %v1068 = vld [vmem:[%s334 + $0x14c0] sm:$0xff]
        %v1069 = vld [vmem:[%s334 + $0x14c8] sm:$0xff]
        %v1070 = vld [vmem:[%s334 + $0x14d0] sm:$0xff]
        %v1071 = vld [vmem:[%s334 + $0x14d8] sm:$0xff]
        %v1072 = vld [vmem:[%s334 + $0x14e0] sm:$0xff]
        %v1073 = vld [vmem:[%s334 + $0x14e8] sm:$0xff]
        %v1074 = vld [vmem:[%s334 + $0x14f0] sm:$0xff]
        %v1075 = vld [vmem:[%s334 + $0x14f8] sm:$0xff]
        %v1076 = vld [vmem:[%s334 + $0x1500] sm:$0xff]
        %v1077 = vld [vmem:[%s334 + $0x1508] sm:$0xff]
        %v1078 = vld [vmem:[%s334 + $0x1510] sm:$0xff]
        %v1079 = vld [vmem:[%s334 + $0x1518] sm:$0xff]
        %v1080 = vld [vmem:[%s334 + $0x1520] sm:$0xff]
        %v1081 = vld [vmem:[%s334 + $0x1528] sm:$0xff]
        %v1082 = vld [vmem:[%s334 + $0x1530] sm:$0xff]
        %v1083 = vld [vmem:[%s334 + $0x1538] sm:$0xff]
        %v1084 = vld [vmem:[%s334 + $0x1540] sm:$0xff]
        %v1085 = vld [vmem:[%s334 + $0x1548] sm:$0xff]
        %v1086 = vld [vmem:[%s334 + $0x1550] sm:$0xff]
        %v1087 = vld [vmem:[%s334 + $0x1558] sm:$0xff]
        %v1088 = vld [vmem:[%s334 + $0x1560] sm:$0xff]
        %v1089 = vld [vmem:[%s334 + $0x1568] sm:$0xff]
        %v1090 = vld [vmem:[%s334 + $0x1570] sm:$0xff]
        %v1091 = vld [vmem:[%s334 + $0x1578] sm:$0xff]
        %v1092 = vld [vmem:[%s334 + $0x1580] sm:$0xff]
        %v1093 = vld [vmem:[%s334 + $0x1588] sm:$0xff]
        %v1094 = vld [vmem:[%s334 + $0x1590] sm:$0xff]
        %v1095 = vld [vmem:[%s334 + $0x1598] sm:$0xff]
        %v1096 = vld [vmem:[%s334 + $0x15a0] sm:$0xff]
        %v1097 = vld [vmem:[%s334 + $0x15a8] sm:$0xff]
        %v1098 = vld [vmem:[%s334 + $0x15b0] sm:$0xff]
        %v1099 = vld [vmem:[%s334 + $0x15b8] sm:$0xff]
        %v1100 = vld [vmem:[%s334 + $0x15c0] sm:$0xff]
        %v1101 = vld [vmem:[%s334 + $0x15c8] sm:$0xff]
        %v1102 = vld [vmem:[%s334 + $0x15d0] sm:$0xff]
        %v1103 = vld [vmem:[%s334 + $0x15d8] sm:$0xff]
        %v1104 = vld [vmem:[%s334 + $0x15e0] sm:$0xff]
        %v1105 = vld [vmem:[%s334 + $0x15e8] sm:$0xff]
        %v1106 = vld [vmem:[%s334 + $0x15f0] sm:$0xff]
        %v1107 = vld [vmem:[%s334 + $0x15f8] sm:$0xff]
        %v1108 = vld [vmem:[%s334 + $0x1600] sm:$0xff]
        %v1109 = vld [vmem:[%s334 + $0x1608] sm:$0xff]
        %v1110 = vld [vmem:[%s334 + $0x1610] sm:$0xff]
        %v1111 = vld [vmem:[%s334 + $0x1618] sm:$0xff]
        %v1112 = vld [vmem:[%s334 + $0x1620] sm:$0xff]
        %v1113 = vld [vmem:[%s334 + $0x1628] sm:$0xff]
        %v1114 = vld [vmem:[%s334 + $0x1630] sm:$0xff]
        %v1115 = vld [vmem:[%s334 + $0x1638] sm:$0xff]
        %v1116 = vld [vmem:[%s334 + $0x1640] sm:$0xff]
        %v1117 = vld [vmem:[%s334 + $0x1648] sm:$0xff]
        %v1118 = vld [vmem:[%s334 + $0x1650] sm:$0xff]
        %v1119 = vld [vmem:[%s334 + $0x1658] sm:$0xff]
        %v1120 = vld [vmem:[%s334 + $0x1660] sm:$0xff]
        %v1121 = vld [vmem:[%s334 + $0x1668] sm:$0xff]
        %v1122 = vld [vmem:[%s334 + $0x1670] sm:$0xff]
        %v1123 = vld [vmem:[%s334 + $0x1678] sm:$0xff]
        %v1124 = vld [vmem:[%s334 + $0x1680] sm:$0xff]
        %v1125 = vld [vmem:[%s334 + $0x1688] sm:$0xff]
        %v1126 = vld [vmem:[%s334 + $0x1690] sm:$0xff]
        %v1127 = vld [vmem:[%s334 + $0x1698] sm:$0xff]
        %v1128 = vld [vmem:[%s334 + $0x16a0] sm:$0xff]
        %v1129 = vld [vmem:[%s334 + $0x16a8] sm:$0xff]
        %v1130 = vld [vmem:[%s334 + $0x16b0] sm:$0xff]
        %v1131 = vld [vmem:[%s334 + $0x16b8] sm:$0xff]
        %v1132 = vld [vmem:[%s334 + $0x16c0] sm:$0xff]
        %v1133 = vld [vmem:[%s334 + $0x16c8] sm:$0xff]
        %v1134 = vld [vmem:[%s334 + $0x16d0] sm:$0xff]
        %v1135 = vld [vmem:[%s334 + $0x16d8] sm:$0xff]
        %v1136 = vld [vmem:[%s334 + $0x16e0] sm:$0xff]
        %v1137 = vld [vmem:[%s334 + $0x16e8] sm:$0xff]
        %v1138 = vld [vmem:[%s334 + $0x16f0] sm:$0xff]
        %v1139 = vld [vmem:[%s334 + $0x16f8] sm:$0xff]
        %v1140 = vld [vmem:[%s334 + $0x1700] sm:$0xff]
        %v1141 = vld [vmem:[%s334 + $0x1708] sm:$0xff]
        %v1142 = vld [vmem:[%s334 + $0x1710] sm:$0xff]
        %v1143 = vld [vmem:[%s334 + $0x1718] sm:$0xff]
        %v1144 = vld [vmem:[%s334 + $0x1720] sm:$0xff]
        %v1145 = vld [vmem:[%s334 + $0x1728] sm:$0xff]
        %v1146 = vld [vmem:[%s334 + $0x1730] sm:$0xff]
        %v1147 = vld [vmem:[%s334 + $0x1738] sm:$0xff]
        %v1148 = vld [vmem:[%s334 + $0x1740] sm:$0xff]
        %v1149 = vld [vmem:[%s334 + $0x1748] sm:$0xff]
        %v1150 = vld [vmem:[%s334 + $0x1750] sm:$0xff]
        %v1151 = vld [vmem:[%s334 + $0x1758] sm:$0xff]
        %v1152 = vld [vmem:[%s334 + $0x1760] sm:$0xff]
        %v1153 = vld [vmem:[%s334 + $0x1768] sm:$0xff]
        %v1154 = vld [vmem:[%s334 + $0x1770] sm:$0xff]
        %v1155 = vld [vmem:[%s334 + $0x1778] sm:$0xff]
        %v1156 = vld [vmem:[%s334 + $0x1780] sm:$0xff]
        %v1157 = vld [vmem:[%s334 + $0x1788] sm:$0xff]
        %v1158 = vld [vmem:[%s334 + $0x1790] sm:$0xff]
        %v1159 = vld [vmem:[%s334 + $0x1798] sm:$0xff]
        %v1160 = vld [vmem:[%s334 + $0x17a0] sm:$0xff]
        %v1161 = vld [vmem:[%s334 + $0x17a8] sm:$0xff]
        %v1162 = vld [vmem:[%s334 + $0x17b0] sm:$0xff]
        %v1163 = vld [vmem:[%s334 + $0x17b8] sm:$0xff]
        %v1164 = vld [vmem:[%s334 + $0x17c0] sm:$0xff]
        %v1165 = vld [vmem:[%s334 + $0x17c8] sm:$0xff]
        %v1166 = vld [vmem:[%s334 + $0x17d0] sm:$0xff]
        %v1167 = vld [vmem:[%s334 + $0x17d8] sm:$0xff]
        %v1168 = vld [vmem:[%s334 + $0x17e0] sm:$0xff]
        %v1169 = vld [vmem:[%s334 + $0x17e8] sm:$0xff]
        %v1170 = vld [vmem:[%s334 + $0x17f0] sm:$0xff]
        %v1171 = vld [vmem:[%s334 + $0x17f8] sm:$0xff]
        %v1172 = vld [vmem:[%s334 + $0x1800] sm:$0xff]
        %v1173 = vld [vmem:[%s334 + $0x1808] sm:$0xff]
        %v1174 = vld [vmem:[%s334 + $0x1810] sm:$0xff]
        %v1175 = vld [vmem:[%s334 + $0x1818] sm:$0xff]
        %v1176 = vld [vmem:[%s334 + $0x1820] sm:$0xff]
        %v1177 = vld [vmem:[%s334 + $0x1828] sm:$0xff]
        %v1178 = vld [vmem:[%s334 + $0x1830] sm:$0xff]
        %v1179 = vld [vmem:[%s334 + $0x1838] sm:$0xff]
        %v1180 = vld [vmem:[%s334 + $0x1840] sm:$0xff]
        %v1181 = vld [vmem:[%s334 + $0x1848] sm:$0xff]
        %v1182 = vld [vmem:[%s334 + $0x1850] sm:$0xff]
        %v1183 = vld [vmem:[%s334 + $0x1858] sm:$0xff]
        %v1184 = vld [vmem:[%s334 + $0x1860] sm:$0xff]
        %v1185 = vld [vmem:[%s334 + $0x1868] sm:$0xff]
        %v1186 = vld [vmem:[%s334 + $0x1870] sm:$0xff]
        %v1187 = vld [vmem:[%s334 + $0x1878] sm:$0xff]
        %v1188 = vld [vmem:[%s334 + $0x1880] sm:$0xff]
        %v1189 = vld [vmem:[%s334 + $0x1888] sm:$0xff]
        %v1190 = vld [vmem:[%s334 + $0x1890] sm:$0xff]
        %v1191 = vld [vmem:[%s334 + $0x1898] sm:$0xff]
        %v1192 = vld [vmem:[%s334 + $0x18a0] sm:$0xff]
        %v1193 = vld [vmem:[%s334 + $0x18a8] sm:$0xff]
        %v1194 = vld [vmem:[%s334 + $0x18b0] sm:$0xff]
        %v1195 = vld [vmem:[%s334 + $0x18b8] sm:$0xff]
        %v1196 = vld [vmem:[%s334 + $0x18c0] sm:$0xff]
        %v1197 = vld [vmem:[%s334 + $0x18c8] sm:$0xff]
        %v1198 = vld [vmem:[%s334 + $0x18d0] sm:$0xff]
        %v1199 = vld [vmem:[%s334 + $0x18d8] sm:$0xff]
        %v1200 = vld [vmem:[%s334 + $0x18e0] sm:$0xff]
        %v1201 = vld [vmem:[%s334 + $0x18e8] sm:$0xff]
        %v1202 = vld [vmem:[%s334 + $0x18f0] sm:$0xff]
        %v1203 = vld [vmem:[%s334 + $0x18f8] sm:$0xff]
        %v1204 = vld [vmem:[%s334 + $0x1900] sm:$0xff]
        %v1205 = vld [vmem:[%s334 + $0x1908] sm:$0xff]
        %v1206 = vld [vmem:[%s334 + $0x1910] sm:$0xff]
        %v1207 = vld [vmem:[%s334 + $0x1918] sm:$0xff]
        %v1208 = vld [vmem:[%s334 + $0x1920] sm:$0xff]
        %v1209 = vld [vmem:[%s334 + $0x1928] sm:$0xff]
        %v1210 = vld [vmem:[%s334 + $0x1930] sm:$0xff]
        %v1211 = vld [vmem:[%s334 + $0x1938] sm:$0xff]
        %v1212 = vld [vmem:[%s334 + $0x1940] sm:$0xff]
        %v1213 = vld [vmem:[%s334 + $0x1948] sm:$0xff]
        %v1214 = vld [vmem:[%s334 + $0x1950] sm:$0xff]
        %v1215 = vld [vmem:[%s334 + $0x1958] sm:$0xff]
        %v1216 = vld [vmem:[%s334 + $0x1960] sm:$0xff]
        %v1217 = vld [vmem:[%s334 + $0x1968] sm:$0xff]
        %v1218 = vld [vmem:[%s334 + $0x1970] sm:$0xff]
        %v1219 = vld [vmem:[%s334 + $0x1978] sm:$0xff]
        %v1220 = vld [vmem:[%s334 + $0x1980] sm:$0xff]
        %v1221 = vld [vmem:[%s334 + $0x1988] sm:$0xff]
        %v1222 = vld [vmem:[%s334 + $0x1990] sm:$0xff]
        %v1223 = vld [vmem:[%s334 + $0x1998] sm:$0xff]
        %v1224 = vld [vmem:[%s334 + $0x19a0] sm:$0xff]
        %v1225 = vld [vmem:[%s334 + $0x19a8] sm:$0xff]
        %v1226 = vld [vmem:[%s334 + $0x19b0] sm:$0xff]
        %v1227 = vld [vmem:[%s334 + $0x19b8] sm:$0xff]
        %v1228 = vld [vmem:[%s334 + $0x19c0] sm:$0xff]
        %v1229 = vld [vmem:[%s334 + $0x19c8] sm:$0xff]
        %v1230 = vld [vmem:[%s334 + $0x19d0] sm:$0xff]
        %v1231 = vld [vmem:[%s334 + $0x19d8] sm:$0xff]
        %v1232 = vld [vmem:[%s334 + $0x19e0] sm:$0xff]
        %v1233 = vld [vmem:[%s334 + $0x19e8] sm:$0xff]
        %v1234 = vld [vmem:[%s334 + $0x19f0] sm:$0xff]
        %v1235 = vld [vmem:[%s334 + $0x19f8] sm:$0xff]
        %v1236 = vld [vmem:[%s334 + $0x1a00] sm:$0xff]
        %v1237 = vld [vmem:[%s334 + $0x1a08] sm:$0xff]
        %v1238 = vld [vmem:[%s334 + $0x1a10] sm:$0xff]
        %v1239 = vld [vmem:[%s334 + $0x1a18] sm:$0xff]
        %v1240 = vld [vmem:[%s334 + $0x1a20] sm:$0xff]
        %v1241 = vld [vmem:[%s334 + $0x1a28] sm:$0xff]
        %v1242 = vld [vmem:[%s334 + $0x1a30] sm:$0xff]
        %v1243 = vld [vmem:[%s334 + $0x1a38] sm:$0xff]
        %v1244 = vld [vmem:[%s334 + $0x1a40] sm:$0xff]
        %v1245 = vld [vmem:[%s334 + $0x1a48] sm:$0xff]
        %v1246 = vld [vmem:[%s334 + $0x1a50] sm:$0xff]
        %v1247 = vld [vmem:[%s334 + $0x1a58] sm:$0xff]
        %v1248 = vld [vmem:[%s334 + $0x1a60] sm:$0xff]
        %v1249 = vld [vmem:[%s334 + $0x1a68] sm:$0xff]
        %v1250 = vld [vmem:[%s334 + $0x1a70] sm:$0xff]
        %v1251 = vld [vmem:[%s334 + $0x1a78] sm:$0xff]
        %v1252 = vld [vmem:[%s334 + $0x1a80] sm:$0xff]
        %v1253 = vld [vmem:[%s334 + $0x1a88] sm:$0xff]
        %v1254 = vld [vmem:[%s334 + $0x1a90] sm:$0xff]
        %v1255 = vld [vmem:[%s334 + $0x1a98] sm:$0xff]
        %v1256 = vld [vmem:[%s334 + $0x1aa0] sm:$0xff]
        %v1257 = vld [vmem:[%s334 + $0x1aa8] sm:$0xff]
        %v1258 = vld [vmem:[%s334 + $0x1ab0] sm:$0xff]
        %v1259 = vld [vmem:[%s334 + $0x1ab8] sm:$0xff]
        %v1260 = vld [vmem:[%s334 + $0x1ac0] sm:$0xff]
        %v1261 = vld [vmem:[%s334 + $0x1ac8] sm:$0xff]
        %v1262 = vld [vmem:[%s334 + $0x1ad0] sm:$0xff]
        %v1263 = vld [vmem:[%s334 + $0x1ad8] sm:$0xff]
        %v1264 = vld [vmem:[%s334 + $0x1ae0] sm:$0xff]
        %v1265 = vld [vmem:[%s334 + $0x1ae8] sm:$0xff]
        %v1266 = vld [vmem:[%s334 + $0x1af0] sm:$0xff]
        %v1267 = vld [vmem:[%s334 + $0x1af8] sm:$0xff]
        %v1268 = vld [vmem:[%s334 + $0x1b00] sm:$0xff]
        %v1269 = vld [vmem:[%s334 + $0x1b08] sm:$0xff]
        %v1270 = vld [vmem:[%s334 + $0x1b10] sm:$0xff]
        %v1271 = vld [vmem:[%s334 + $0x1b18] sm:$0xff]
        %v1272 = vld [vmem:[%s334 + $0x1b20] sm:$0xff]
        %v1273 = vld [vmem:[%s334 + $0x1b28] sm:$0xff]
        %v1274 = vld [vmem:[%s334 + $0x1b30] sm:$0xff]
        %v1275 = vld [vmem:[%s334 + $0x1b38] sm:$0xff]
        %v1276 = vld [vmem:[%s334 + $0x1b40] sm:$0xff]
        %v1277 = vld [vmem:[%s334 + $0x1b48] sm:$0xff]
        %v1278 = vld [vmem:[%s334 + $0x1b50] sm:$0xff]
        %v1279 = vld [vmem:[%s334 + $0x1b58] sm:$0xff]
        %v1280 = vld [vmem:[%s334 + $0x1b60] sm:$0xff]
        %v1281 = vld [vmem:[%s334 + $0x1b68] sm:$0xff]
        %v1282 = vld [vmem:[%s334 + $0x1b70] sm:$0xff]
        %v1283 = vld [vmem:[%s334 + $0x1b78] sm:$0xff]
        %v1284 = vld [vmem:[%s334 + $0x1b80] sm:$0xff]
        %v1285 = vld [vmem:[%s334 + $0x1b88] sm:$0xff]
        %v1286 = vld [vmem:[%s334 + $0x1b90] sm:$0xff]
        %v1287 = vld [vmem:[%s334 + $0x1b98] sm:$0xff]
        %v1288 = vld [vmem:[%s334 + $0x1ba0] sm:$0xff]
        %v1289 = vld [vmem:[%s334 + $0x1ba8] sm:$0xff]
        %v1290 = vld [vmem:[%s334 + $0x1bb0] sm:$0xff]
        %v1291 = vld [vmem:[%s334 + $0x1bb8] sm:$0xff]
        %v1292 = vld [vmem:[%s334 + $0x1bc0] sm:$0xff]
        %v1293 = vld [vmem:[%s334 + $0x1bc8] sm:$0xff]
        %v1294 = vld [vmem:[%s334 + $0x1bd0] sm:$0xff]
        %v1295 = vld [vmem:[%s334 + $0x1bd8] sm:$0xff]
        %v1296 = vld [vmem:[%s334 + $0x1be0] sm:$0xff]
        %v1297 = vld [vmem:[%s334 + $0x1be8] sm:$0xff]
        %v1298 = vld [vmem:[%s334 + $0x1bf0] sm:$0xff]
        %v1299 = vld [vmem:[%s334 + $0x1bf8] sm:$0xff]
        %v1300 = vld [vmem:[%s334 + $0x1c00] sm:$0xff]
        %v1301 = vld [vmem:[%s334 + $0x1c08] sm:$0xff]
        %v1302 = vld [vmem:[%s334 + $0x1c10] sm:$0xff]
        %v1303 = vld [vmem:[%s334 + $0x1c18] sm:$0xff]
        %v1304 = vld [vmem:[%s334 + $0x1c20] sm:$0xff]
        %v1305 = vld [vmem:[%s334 + $0x1c28] sm:$0xff]
        %v1306 = vld [vmem:[%s334 + $0x1c30] sm:$0xff]
        %v1307 = vld [vmem:[%s334 + $0x1c38] sm:$0xff]
        %v1308 = vld [vmem:[%s334 + $0x1c40] sm:$0xff]
        %v1309 = vld [vmem:[%s334 + $0x1c48] sm:$0xff]
        %v1310 = vld [vmem:[%s334 + $0x1c50] sm:$0xff]
        %v1311 = vld [vmem:[%s334 + $0x1c58] sm:$0xff]
        %v1312 = vld [vmem:[%s334 + $0x1c60] sm:$0xff]
        %v1313 = vld [vmem:[%s334 + $0x1c68] sm:$0xff]
        %v1314 = vld [vmem:[%s334 + $0x1c70] sm:$0xff]
        %v1315 = vld [vmem:[%s334 + $0x1c78] sm:$0xff]
        %v1316 = vld [vmem:[%s334 + $0x1c80] sm:$0xff]
        %v1317 = vld [vmem:[%s334 + $0x1c88] sm:$0xff]
        %v1318 = vld [vmem:[%s334 + $0x1c90] sm:$0xff]
        %v1319 = vld [vmem:[%s334 + $0x1c98] sm:$0xff]
        %v1320 = vld [vmem:[%s334 + $0x1ca0] sm:$0xff]
        %v1321 = vld [vmem:[%s334 + $0x1ca8] sm:$0xff]
        %v1322 = vld [vmem:[%s334 + $0x1cb0] sm:$0xff]
        %v1323 = vld [vmem:[%s334 + $0x1cb8] sm:$0xff]
        %v1324 = vld [vmem:[%s334 + $0x1cc0] sm:$0xff]
        %v1325 = vld [vmem:[%s334 + $0x1cc8] sm:$0xff]
        %v1326 = vld [vmem:[%s334 + $0x1cd0] sm:$0xff]
        %v1327 = vld [vmem:[%s334 + $0x1cd8] sm:$0xff]
        %v1328 = vld [vmem:[%s334 + $0x1ce0] sm:$0xff]
        %v1329 = vld [vmem:[%s334 + $0x1ce8] sm:$0xff]
        %v1330 = vld [vmem:[%s334 + $0x1cf0] sm:$0xff]
        %v1331 = vld [vmem:[%s334 + $0x1cf8] sm:$0xff]
        %v1332 = vld [vmem:[%s334 + $0x1d00] sm:$0xff]
        %v1333 = vld [vmem:[%s334 + $0x1d08] sm:$0xff]
        %v1334 = vld [vmem:[%s334 + $0x1d10] sm:$0xff]
        %v1335 = vld [vmem:[%s334 + $0x1d18] sm:$0xff]
        %v1336 = vld [vmem:[%s334 + $0x1d20] sm:$0xff]
        %v1337 = vld [vmem:[%s334 + $0x1d28] sm:$0xff]
        %v1338 = vld [vmem:[%s334 + $0x1d30] sm:$0xff]
        %v1339 = vld [vmem:[%s334 + $0x1d38] sm:$0xff]
        %v1340 = vld [vmem:[%s334 + $0x1d40] sm:$0xff]
        %v1341 = vld [vmem:[%s334 + $0x1d48] sm:$0xff]
        %v1342 = vld [vmem:[%s334 + $0x1d50] sm:$0xff]
        %v1343 = vld [vmem:[%s334 + $0x1d58] sm:$0xff]
        %v1344 = vld [vmem:[%s334 + $0x1d60] sm:$0xff]
        %v1345 = vld [vmem:[%s334 + $0x1d68] sm:$0xff]
        %v1346 = vld [vmem:[%s334 + $0x1d70] sm:$0xff]
        %v1347 = vld [vmem:[%s334 + $0x1d78] sm:$0xff]
        %v1348 = vld [vmem:[%s334 + $0x1d80] sm:$0xff]
        %v1349 = vld [vmem:[%s334 + $0x1d88] sm:$0xff]
        %v1350 = vld [vmem:[%s334 + $0x1d90] sm:$0xff]
        %v1351 = vld [vmem:[%s334 + $0x1d98] sm:$0xff]
        %v1352 = vld [vmem:[%s334 + $0x1da0] sm:$0xff]
        %v1353 = vld [vmem:[%s334 + $0x1da8] sm:$0xff]
        %v1354 = vld [vmem:[%s334 + $0x1db0] sm:$0xff]
        %v1355 = vld [vmem:[%s334 + $0x1db8] sm:$0xff]
        %v1356 = vld [vmem:[%s334 + $0x1dc0] sm:$0xff]
        %v1357 = vld [vmem:[%s334 + $0x1dc8] sm:$0xff]
        %v1358 = vld [vmem:[%s334 + $0x1dd0] sm:$0xff]
        %v1359 = vld [vmem:[%s334 + $0x1dd8] sm:$0xff]
        %v1360 = vld [vmem:[%s334 + $0x1de0] sm:$0xff]
        %v1361 = vld [vmem:[%s334 + $0x1de8] sm:$0xff]
        %v1362 = vld [vmem:[%s334 + $0x1df0] sm:$0xff]
        %v1363 = vld [vmem:[%s334 + $0x1df8] sm:$0xff]
        %v1364 = vld [vmem:[%s334 + $0x1e00] sm:$0xff]
        %v1365 = vld [vmem:[%s334 + $0x1e08] sm:$0xff]
        %v1366 = vld [vmem:[%s334 + $0x1e10] sm:$0xff]
        %v1367 = vld [vmem:[%s334 + $0x1e18] sm:$0xff]
        %v1368 = vld [vmem:[%s334 + $0x1e20] sm:$0xff]
        %v1369 = vld [vmem:[%s334 + $0x1e28] sm:$0xff]
        %v1370 = vld [vmem:[%s334 + $0x1e30] sm:$0xff]
        %v1371 = vld [vmem:[%s334 + $0x1e38] sm:$0xff]
        %v1372 = vld [vmem:[%s334 + $0x1e40] sm:$0xff]
        %v1373 = vld [vmem:[%s334 + $0x1e48] sm:$0xff]
        %v1374 = vld [vmem:[%s334 + $0x1e50] sm:$0xff]
        %v1375 = vld [vmem:[%s334 + $0x1e58] sm:$0xff]
        %v1376 = vld [vmem:[%s334 + $0x1e60] sm:$0xff]
        %v1377 = vld [vmem:[%s334 + $0x1e68] sm:$0xff]
        %v1378 = vld [vmem:[%s334 + $0x1e70] sm:$0xff]
        %v1379 = vld [vmem:[%s334 + $0x1e78] sm:$0xff]
        %v1380 = vld [vmem:[%s334 + $0x1e80] sm:$0xff]
        %v1381 = vld [vmem:[%s334 + $0x1e88] sm:$0xff]
        %v1382 = vld [vmem:[%s334 + $0x1e90] sm:$0xff]
        %v1383 = vld [vmem:[%s334 + $0x1e98] sm:$0xff]
        %v1384 = vld [vmem:[%s334 + $0x1ea0] sm:$0xff]
        %v1385 = vld [vmem:[%s334 + $0x1ea8] sm:$0xff]
        %v1386 = vld [vmem:[%s334 + $0x1eb0] sm:$0xff]
        %v1387 = vld [vmem:[%s334 + $0x1eb8] sm:$0xff]
        %v1388 = vld [vmem:[%s334 + $0x1ec0] sm:$0xff]
        %v1389 = vld [vmem:[%s334 + $0x1ec8] sm:$0xff]
        %v1390 = vld [vmem:[%s334 + $0x1ed0] sm:$0xff]
        %v1391 = vld [vmem:[%s334 + $0x1ed8] sm:$0xff]
        %v1392 = vld [vmem:[%s334 + $0x1ee0] sm:$0xff]
        %v1393 = vld [vmem:[%s334 + $0x1ee8] sm:$0xff]
        %v1394 = vld [vmem:[%s334 + $0x1ef0] sm:$0xff]
        %v1395 = vld [vmem:[%s334 + $0x1ef8] sm:$0xff]
        %v1396 = vld [vmem:[%s334 + $0x1f00] sm:$0xff]
        %v1397 = vld [vmem:[%s334 + $0x1f08] sm:$0xff]
        %v1398 = vld [vmem:[%s334 + $0x1f10] sm:$0xff]
        %v1399 = vld [vmem:[%s334 + $0x1f18] sm:$0xff]
        %v1400 = vld [vmem:[%s334 + $0x1f20] sm:$0xff]
        %v1401 = vld [vmem:[%s334 + $0x1f28] sm:$0xff]
        %v1402 = vld [vmem:[%s334 + $0x1f30] sm:$0xff]
        %v1403 = vld [vmem:[%s334 + $0x1f38] sm:$0xff]
        %v1404 = vld [vmem:[%s334 + $0x1f40] sm:$0xff]
        %v1405 = vld [vmem:[%s334 + $0x1f48] sm:$0xff]
        %v1406 = vld [vmem:[%s334 + $0x1f50] sm:$0xff]
        %v1407 = vld [vmem:[%s334 + $0x1f58] sm:$0xff]
        %v1408 = vld [vmem:[%s334 + $0x1f60] sm:$0xff]
        %v1409 = vld [vmem:[%s334 + $0x1f68] sm:$0xff]
        %v1410 = vld [vmem:[%s334 + $0x1f70] sm:$0xff]
        %v1411 = vld [vmem:[%s334 + $0x1f78] sm:$0xff]
        %v1412 = vld [vmem:[%s334 + $0x1f80] sm:$0xff]
        %v1413 = vld [vmem:[%s334 + $0x1f88] sm:$0xff]
        %v1414 = vld [vmem:[%s334 + $0x1f90] sm:$0xff]
        %v1415 = vld [vmem:[%s334 + $0x1f98] sm:$0xff]
        %v1416 = vld [vmem:[%s334 + $0x1fa0] sm:$0xff]
        %v1417 = vld [vmem:[%s334 + $0x1fa8] sm:$0xff]
        %v1418 = vld [vmem:[%s334 + $0x1fb0] sm:$0xff]
        %v1419 = vld [vmem:[%s334 + $0x1fb8] sm:$0xff]
        %v1420 = vld [vmem:[%s334 + $0x1fc0] sm:$0xff]
        %v1421 = vld [vmem:[%s334 + $0x1fc8] sm:$0xff]
        %v1422 = vld [vmem:[%s334 + $0x1fd0] sm:$0xff]
        %v1423 = vld [vmem:[%s334 + $0x1fd8] sm:$0xff]
        %v1424 = vld [vmem:[%s334 + $0x1fe0] sm:$0xff]
        %v1425 = vld [vmem:[%s334 + $0x1fe8] sm:$0xff]
        %v1426 = vld [vmem:[%s334 + $0x1ff0] sm:$0xff]
        %v1427 = vld [vmem:[%s334 + $0x1ff8] sm:$0xff]
        %v1428 = vld [vmem:[%s334 + $0x2000] sm:$0xff]
        %v1429 = vld [vmem:[%s334 + $0x2008] sm:$0xff]
        %v1430 = vld [vmem:[%s334 + $0x2010] sm:$0xff]
        %v1431 = vld [vmem:[%s334 + $0x2018] sm:$0xff]
        %v1432 = vld [vmem:[%s334 + $0x2020] sm:$0xff]
        %v1433 = vld [vmem:[%s334 + $0x2028] sm:$0xff]
        %v1434 = vld [vmem:[%s334 + $0x2030] sm:$0xff]
        %v1435 = vld [vmem:[%s334 + $0x2038] sm:$0xff]
        %v1436 = vld [vmem:[%s334 + $0x2040] sm:$0xff]
        %v1437 = vld [vmem:[%s334 + $0x2048] sm:$0xff]
        %v1438 = vld [vmem:[%s334 + $0x2050] sm:$0xff]
        %v1439 = vld [vmem:[%s334 + $0x2058] sm:$0xff]
        %v1440 = vld [vmem:[%s334 + $0x2060] sm:$0xff]
        %v1441 = vld [vmem:[%s334 + $0x2068] sm:$0xff]
        %v1442 = vld [vmem:[%s334 + $0x2070] sm:$0xff]
        %v1443 = vld [vmem:[%s334 + $0x2078] sm:$0xff]
        %v1444 = vld [vmem:[%s334 + $0x2080] sm:$0xff]
        %v1445 = vld [vmem:[%s334 + $0x2088] sm:$0xff]
        %v1446 = vld [vmem:[%s334 + $0x2090] sm:$0xff]
        %v1447 = vld [vmem:[%s334 + $0x2098] sm:$0xff]
        %v1448 = vld [vmem:[%s334 + $0x20a0] sm:$0xff]
        %v1449 = vld [vmem:[%s334 + $0x20a8] sm:$0xff]
        %v1450 = vld [vmem:[%s334 + $0x20b0] sm:$0xff]
        %v1451 = vld [vmem:[%s334 + $0x20b8] sm:$0xff]
        %v1452 = vld [vmem:[%s334 + $0x20c0] sm:$0xff]
        %v1453 = vld [vmem:[%s334 + $0x20c8] sm:$0xff]
        %v1454 = vld [vmem:[%s334 + $0x20d0] sm:$0xff]
        %v1455 = vld [vmem:[%s334 + $0x20d8] sm:$0xff]
        %v1456 = vld [vmem:[%s334 + $0x20e0] sm:$0xff]
        %v1457 = vld [vmem:[%s334 + $0x20e8] sm:$0xff]
        %v1458 = vld [vmem:[%s334 + $0x20f0] sm:$0xff]
        %v1459 = vld [vmem:[%s334 + $0x20f8] sm:$0xff]
        %v1460 = vld [vmem:[%s334 + $0x2100] sm:$0xff]
        %v1461 = vld [vmem:[%s334 + $0x2108] sm:$0xff]
        %v1462 = vld [vmem:[%s334 + $0x2110] sm:$0xff]
        %v1463 = vld [vmem:[%s334 + $0x2118] sm:$0xff]
        %v1464 = vld [vmem:[%s334 + $0x2120] sm:$0xff]
        %v1465 = vld [vmem:[%s334 + $0x2128] sm:$0xff]
        %v1466 = vld [vmem:[%s334 + $0x2130] sm:$0xff]
        %v1467 = vld [vmem:[%s334 + $0x2138] sm:$0xff]
        %v1468 = vld [vmem:[%s334 + $0x2140] sm:$0xff]
        %v1469 = vld [vmem:[%s334 + $0x2148] sm:$0xff]
        %v1470 = vld [vmem:[%s334 + $0x2150] sm:$0xff]
        %v1471 = vld [vmem:[%s334 + $0x2158] sm:$0xff]
        %v1472 = vld [vmem:[%s334 + $0x2160] sm:$0xff]
        %v1473 = vld [vmem:[%s334 + $0x2168] sm:$0xff]
        %v1474 = vld [vmem:[%s334 + $0x2170] sm:$0xff]
        %v1475 = vld [vmem:[%s334 + $0x2178] sm:$0xff]
        %v1476 = vld [vmem:[%s334 + $0x2180] sm:$0xff]
        %v1477 = vld [vmem:[%s334 + $0x2188] sm:$0xff]
        %v1478 = vld [vmem:[%s334 + $0x2190] sm:$0xff]
        %v1479 = vld [vmem:[%s334 + $0x2198] sm:$0xff]
        %v1480 = vld [vmem:[%s334 + $0x21a0] sm:$0xff]
        %v1481 = vld [vmem:[%s334 + $0x21a8] sm:$0xff]
        %v1482 = vld [vmem:[%s334 + $0x21b0] sm:$0xff]
        %v1483 = vld [vmem:[%s334 + $0x21b8] sm:$0xff]
        %v1484 = vld [vmem:[%s334 + $0x21c0] sm:$0xff]
        %v1485 = vld [vmem:[%s334 + $0x21c8] sm:$0xff]
        %v1486 = vld [vmem:[%s334 + $0x21d0] sm:$0xff]
        %v1487 = vld [vmem:[%s334 + $0x21d8] sm:$0xff]
        %v1488 = vld [vmem:[%s334 + $0x21e0] sm:$0xff]
        %v1489 = vld [vmem:[%s334 + $0x21e8] sm:$0xff]
        %v1490 = vld [vmem:[%s334 + $0x21f0] sm:$0xff]
        %v1491 = vld [vmem:[%s334 + $0x21f8] sm:$0xff]
        %v1492 = vld [vmem:[%s334 + $0x2200] sm:$0xff]
        %v1493 = vld [vmem:[%s334 + $0x2208] sm:$0xff]
        %v1494 = vld [vmem:[%s334 + $0x2210] sm:$0xff]
        %v1495 = vld [vmem:[%s334 + $0x2218] sm:$0xff]
        %v1496 = vld [vmem:[%s334 + $0x2220] sm:$0xff]
        %v1497 = vld [vmem:[%s334 + $0x2228] sm:$0xff]
        %v1498 = vld [vmem:[%s334 + $0x2230] sm:$0xff]
        %v1499 = vld [vmem:[%s334 + $0x2238] sm:$0xff]
        %v1500 = vld [vmem:[%s334 + $0x2240] sm:$0xff]
        %v1501 = vld [vmem:[%s334 + $0x2248] sm:$0xff]
        %v1502 = vld [vmem:[%s334 + $0x2250] sm:$0xff]
        %v1503 = vld [vmem:[%s334 + $0x2258] sm:$0xff]
        %v1504 = vld [vmem:[%s334 + $0x2260] sm:$0xff]
        %v1505 = vld [vmem:[%s334 + $0x2268] sm:$0xff]
        %v1506 = vld [vmem:[%s334 + $0x2270] sm:$0xff]
        %v1507 = vld [vmem:[%s334 + $0x2278] sm:$0xff]
        %v1508 = vld [vmem:[%s334 + $0x2280] sm:$0xff]
        %v1509 = vld [vmem:[%s334 + $0x2288] sm:$0xff]
        %v1510 = vld [vmem:[%s334 + $0x2290] sm:$0xff]
        %v1511 = vld [vmem:[%s334 + $0x2298] sm:$0xff]
        %v1512 = vld [vmem:[%s334 + $0x22a0] sm:$0xff]
        %v1513 = vld [vmem:[%s334 + $0x22a8] sm:$0xff]
        %v1514 = vld [vmem:[%s334 + $0x22b0] sm:$0xff]
        %v1515 = vld [vmem:[%s334 + $0x22b8] sm:$0xff]
        %v1516 = vld [vmem:[%s334 + $0x22c0] sm:$0xff]
        %v1517 = vld [vmem:[%s334 + $0x22c8] sm:$0xff]
        %v1518 = vld [vmem:[%s334 + $0x22d0] sm:$0xff]
        %v1519 = vld [vmem:[%s334 + $0x22d8] sm:$0xff]
        %v1520 = vld [vmem:[%s334 + $0x22e0] sm:$0xff]
        %v1521 = vld [vmem:[%s334 + $0x22e8] sm:$0xff]
        %v1522 = vld [vmem:[%s334 + $0x22f0] sm:$0xff]
        %v1523 = vld [vmem:[%s334 + $0x22f8] sm:$0xff]
        %v1524 = vld [vmem:[%s334 + $0x2300] sm:$0xff]
        %v1525 = vld [vmem:[%s334 + $0x2308] sm:$0xff]
        %v1526 = vld [vmem:[%s334 + $0x2310] sm:$0xff]
        %v1527 = vld [vmem:[%s334 + $0x2318] sm:$0xff]
        %v1528 = vld [vmem:[%s334 + $0x2320] sm:$0xff]
        %v1529 = vld [vmem:[%s334 + $0x2328] sm:$0xff]
        %v1530 = vld [vmem:[%s334 + $0x2330] sm:$0xff]
        %v1531 = vld [vmem:[%s334 + $0x2338] sm:$0xff]
        %v1532 = vld [vmem:[%s334 + $0x2340] sm:$0xff]
        %v1533 = vld [vmem:[%s334 + $0x2348] sm:$0xff]
        %v1534 = vld [vmem:[%s334 + $0x2350] sm:$0xff]
        %v1535 = vld [vmem:[%s334 + $0x2358] sm:$0xff]
        %v1536 = vld [vmem:[%s334 + $0x2360] sm:$0xff]
        %v1537 = vld [vmem:[%s334 + $0x2368] sm:$0xff]
        %v1538 = vld [vmem:[%s334 + $0x2370] sm:$0xff]
        %v1539 = vld [vmem:[%s334 + $0x2378] sm:$0xff]
        %v1540 = vld [vmem:[%s334 + $0x2380] sm:$0xff]
        %v1541 = vld [vmem:[%s334 + $0x2388] sm:$0xff]
        %v1542 = vld [vmem:[%s334 + $0x2390] sm:$0xff]
        %v1543 = vld [vmem:[%s334 + $0x2398] sm:$0xff]
        %v1544 = vld [vmem:[%s334 + $0x23a0] sm:$0xff]
        %v1545 = vld [vmem:[%s334 + $0x23a8] sm:$0xff]
        %v1546 = vld [vmem:[%s334 + $0x23b0] sm:$0xff]
        %v1547 = vld [vmem:[%s334 + $0x23b8] sm:$0xff]
        %v1548 = vld [vmem:[%s334 + $0x23c0] sm:$0xff]
        %v1549 = vld [vmem:[%s334 + $0x23c8] sm:$0xff]
        %v1550 = vld [vmem:[%s334 + $0x23d0] sm:$0xff]
        %v1551 = vld [vmem:[%s334 + $0x23d8] sm:$0xff]
        %v1552 = vld [vmem:[%s334 + $0x23e0] sm:$0xff]
        %v1553 = vld [vmem:[%s334 + $0x23e8] sm:$0xff]
        %v1554 = vld [vmem:[%s334 + $0x23f0] sm:$0xff]
        %v1555 = vld [vmem:[%s334 + $0x23f8] sm:$0xff]
        %v1556 = vld [vmem:[%s334 + $0x2400] sm:$0xff]
        %v1557 = vld [vmem:[%s334 + $0x2408] sm:$0xff]
        %v1558 = vld [vmem:[%s334 + $0x2410] sm:$0xff]
        %v1559 = vld [vmem:[%s334 + $0x2418] sm:$0xff]
        %v1560 = vld [vmem:[%s334 + $0x2420] sm:$0xff]
        %v1561 = vld [vmem:[%s334 + $0x2428] sm:$0xff]
        %v1562 = vld [vmem:[%s334 + $0x2430] sm:$0xff]
        %v1563 = vld [vmem:[%s334 + $0x2438] sm:$0xff]
        %v1564 = vld [vmem:[%s334 + $0x2440] sm:$0xff]
        %v1565 = vld [vmem:[%s334 + $0x2448] sm:$0xff]
        %v1566 = vld [vmem:[%s334 + $0x2450] sm:$0xff]
        %v1567 = vld [vmem:[%s334 + $0x2458] sm:$0xff]
        %v1568 = vld [vmem:[%s334 + $0x2460] sm:$0xff]
        %v1569 = vld [vmem:[%s334 + $0x2468] sm:$0xff]
        %v1570 = vld [vmem:[%s334 + $0x2470] sm:$0xff]
        %v1571 = vld [vmem:[%s334 + $0x2478] sm:$0xff]
        %v1572 = vld [vmem:[%s334 + $0x2480] sm:$0xff]
        %v1573 = vld [vmem:[%s334 + $0x2488] sm:$0xff]
        %v1574 = vld [vmem:[%s334 + $0x2490] sm:$0xff]
        %v1575 = vld [vmem:[%s334 + $0x2498] sm:$0xff]
        %v1576 = vld [vmem:[%s334 + $0x24a0] sm:$0xff]
        %v1577 = vld [vmem:[%s334 + $0x24a8] sm:$0xff]
        %v1578 = vld [vmem:[%s334 + $0x24b0] sm:$0xff]
        %v1579 = vld [vmem:[%s334 + $0x24b8] sm:$0xff]
        %v1580 = vld [vmem:[%s334 + $0x24c0] sm:$0xff]
        %v1581 = vld [vmem:[%s334 + $0x24c8] sm:$0xff]
        %v1582 = vld [vmem:[%s334 + $0x24d0] sm:$0xff]
        %v1583 = vld [vmem:[%s334 + $0x24d8] sm:$0xff]
        %v1584 = vld [vmem:[%s334 + $0x24e0] sm:$0xff]
        %v1585 = vld [vmem:[%s334 + $0x24e8] sm:$0xff]
        %v1586 = vld [vmem:[%s334 + $0x24f0] sm:$0xff]
        %v1587 = vld [vmem:[%s334 + $0x24f8] sm:$0xff]
        %v1588 = vld [vmem:[%s334 + $0x2500] sm:$0xff]
        %v1589 = vld [vmem:[%s334 + $0x2508] sm:$0xff]
        %v1590 = vld [vmem:[%s334 + $0x2510] sm:$0xff]
        %v1591 = vld [vmem:[%s334 + $0x2518] sm:$0xff]
        %v1592 = vld [vmem:[%s334 + $0x2520] sm:$0xff]
        %v1593 = vld [vmem:[%s334 + $0x2528] sm:$0xff]
        %v1594 = vld [vmem:[%s334 + $0x2530] sm:$0xff]
        %v1595 = vld [vmem:[%s334 + $0x2538] sm:$0xff]
        %v1596 = vld [vmem:[%s334 + $0x2540] sm:$0xff]
        %v1597 = vld [vmem:[%s334 + $0x2548] sm:$0xff]
        %v1598 = vld [vmem:[%s334 + $0x2550] sm:$0xff]
        %v1599 = vld [vmem:[%s334 + $0x2558] sm:$0xff]
        %v1600 = vld [vmem:[%s334 + $0x2560] sm:$0xff]
        %v1601 = vld [vmem:[%s334 + $0x2568] sm:$0xff]
        %v1602 = vld [vmem:[%s334 + $0x2570] sm:$0xff]
        %v1603 = vld [vmem:[%s334 + $0x2578] sm:$0xff]
        %v1604 = vld [vmem:[%s334 + $0x2580] sm:$0xff]
        %v1605 = vld [vmem:[%s334 + $0x2588] sm:$0xff]
        %v1606 = vld [vmem:[%s334 + $0x2590] sm:$0xff]
        %v1607 = vld [vmem:[%s334 + $0x2598] sm:$0xff]
        %v1608 = vld [vmem:[%s334 + $0x25a0] sm:$0xff]
        %v1609 = vld [vmem:[%s334 + $0x25a8] sm:$0xff]
        %v1610 = vld [vmem:[%s334 + $0x25b0] sm:$0xff]
        %v1611 = vld [vmem:[%s334 + $0x25b8] sm:$0xff]
        %v1612 = vld [vmem:[%s334 + $0x25c0] sm:$0xff]
        %v1613 = vld [vmem:[%s334 + $0x25c8] sm:$0xff]
        %v1614 = vld [vmem:[%s334 + $0x25d0] sm:$0xff]
        %v1615 = vld [vmem:[%s334 + $0x25d8] sm:$0xff]
        %v1616 = vld [vmem:[%s334 + $0x25e0] sm:$0xff]
        %v1617 = vld [vmem:[%s334 + $0x25e8] sm:$0xff]
        %v1618 = vld [vmem:[%s334 + $0x25f0] sm:$0xff]
        %v1619 = vld [vmem:[%s334 + $0x25f8] sm:$0xff]
        %v1620 = vld [vmem:[%s334 + $0x2600] sm:$0xff]
        %v1621 = vld [vmem:[%s334 + $0x2608] sm:$0xff]
        %v1622 = vld [vmem:[%s334 + $0x2610] sm:$0xff]
        %v1623 = vld [vmem:[%s334 + $0x2618] sm:$0xff]
        %v1624 = vld [vmem:[%s334 + $0x2620] sm:$0xff]
        %v1625 = vld [vmem:[%s334 + $0x2628] sm:$0xff]
        %v1626 = vld [vmem:[%s334 + $0x2630] sm:$0xff]
        %v1627 = vld [vmem:[%s334 + $0x2638] sm:$0xff]
        %v1628 = vld [vmem:[%s334 + $0x2640] sm:$0xff]
        %v1629 = vld [vmem:[%s334 + $0x2648] sm:$0xff]
        %v1630 = vld [vmem:[%s334 + $0x2650] sm:$0xff]
        %v1631 = vld [vmem:[%s334 + $0x2658] sm:$0xff]
        %v1632 = vld [vmem:[%s334 + $0x2660] sm:$0xff]
        %v1633 = vld [vmem:[%s334 + $0x2668] sm:$0xff]
        %v1634 = vld [vmem:[%s334 + $0x2670] sm:$0xff]
        %v1635 = vld [vmem:[%s334 + $0x2678] sm:$0xff]
        %v1636 = vld [vmem:[%s334 + $0x2680] sm:$0xff]
        %v1637 = vld [vmem:[%s334 + $0x2688] sm:$0xff]
        %v1638 = vld [vmem:[%s334 + $0x2690] sm:$0xff]
        %v1639 = vld [vmem:[%s334 + $0x2698] sm:$0xff]
        %v1640 = vld [vmem:[%s334 + $0x26a0] sm:$0xff]
        %v1641 = vld [vmem:[%s334 + $0x26a8] sm:$0xff]
        %v1642 = vld [vmem:[%s334 + $0x26b0] sm:$0xff]
        %v1643 = vld [vmem:[%s334 + $0x26b8] sm:$0xff]
        %v1644 = vld [vmem:[%s334 + $0x26c0] sm:$0xff]
        %v1645 = vld [vmem:[%s334 + $0x26c8] sm:$0xff]
        %v1646 = vld [vmem:[%s334 + $0x26d0] sm:$0xff]
        %v1647 = vld [vmem:[%s334 + $0x26d8] sm:$0xff]
        %v1648 = vld [vmem:[%s334 + $0x26e0] sm:$0xff]
        %v1649 = vld [vmem:[%s334 + $0x26e8] sm:$0xff]
        %v1650 = vld [vmem:[%s334 + $0x26f0] sm:$0xff]
        %v1651 = vld [vmem:[%s334 + $0x26f8] sm:$0xff]
        %v1652 = vld [vmem:[%s334 + $0x2700] sm:$0xff]
        %v1653 = vld [vmem:[%s334 + $0x2708] sm:$0xff]
        %v1654 = vld [vmem:[%s334 + $0x2710] sm:$0xff]
        %v1655 = vld [vmem:[%s334 + $0x2718] sm:$0xff]
        %v1656 = vld [vmem:[%s334 + $0x2720] sm:$0xff]
        %v1657 = vld [vmem:[%s334 + $0x2728] sm:$0xff]
        %v1658 = vld [vmem:[%s334 + $0x2730] sm:$0xff]
        %v1659 = vld [vmem:[%s334 + $0x2738] sm:$0xff]
        %v1660 = vld [vmem:[%s334 + $0x2740] sm:$0xff]
        %v1661 = vld [vmem:[%s334 + $0x2748] sm:$0xff]
        %v1662 = vld [vmem:[%s334 + $0x2750] sm:$0xff]
        %v1663 = vld [vmem:[%s334 + $0x2758] sm:$0xff]
        %v1664 = vld [vmem:[%s334 + $0x2760] sm:$0xff]
        %v1665 = vld [vmem:[%s334 + $0x2768] sm:$0xff]
        %v1666 = vld [vmem:[%s334 + $0x2770] sm:$0xff]
        %v1667 = vld [vmem:[%s334 + $0x2778] sm:$0xff]
        %v1668 = vld [vmem:[%s334 + $0x2780] sm:$0xff]
        %v1669 = vld [vmem:[%s334 + $0x2788] sm:$0xff]
        %v1670 = vld [vmem:[%s334 + $0x2790] sm:$0xff]
        %v1671 = vld [vmem:[%s334 + $0x2798] sm:$0xff]
        %v1672 = vld [vmem:[%s334 + $0x27a0] sm:$0xff]
        %v1673 = vld [vmem:[%s334 + $0x27a8] sm:$0xff]
        %v1674 = vld [vmem:[%s334 + $0x27b0] sm:$0xff]
        %v1675 = vld [vmem:[%s334 + $0x27b8] sm:$0xff]
        %v1676 = vld [vmem:[%s334 + $0x27c0] sm:$0xff]
        %v1677 = vld [vmem:[%s334 + $0x27c8] sm:$0xff]
        %v1678 = vld [vmem:[%s334 + $0x27d0] sm:$0xff]
        %v1679 = vld [vmem:[%s334 + $0x27d8] sm:$0xff]
        %v1680 = vld [vmem:[%s334 + $0x27e0] sm:$0xff]
        %v1681 = vld [vmem:[%s334 + $0x27e8] sm:$0xff]
        %v1682 = vld [vmem:[%s334 + $0x27f0] sm:$0xff]
        %v1683 = vld [vmem:[%s334 + $0x27f8] sm:$0xff]
        %v1684 = vld [vmem:[%s334 + $0x2800] sm:$0xff]
        %v1685 = vld [vmem:[%s334 + $0x2808] sm:$0xff]
        %v1686 = vld [vmem:[%s334 + $0x2810] sm:$0xff]
        %v1687 = vld [vmem:[%s334 + $0x2818] sm:$0xff]
        %v1688 = vld [vmem:[%s334 + $0x2820] sm:$0xff]
        %v1689 = vld [vmem:[%s334 + $0x2828] sm:$0xff]
        %v1690 = vld [vmem:[%s334 + $0x2830] sm:$0xff]
        %v1691 = vld [vmem:[%s334 + $0x2838] sm:$0xff]
        %v1692 = vld [vmem:[%s334 + $0x2840] sm:$0xff]
        %v1693 = vld [vmem:[%s334 + $0x2848] sm:$0xff]
        %v1694 = vld [vmem:[%s334 + $0x2850] sm:$0xff]
        %v1695 = vld [vmem:[%s334 + $0x2858] sm:$0xff]
        %v1696 = vld [vmem:[%s334 + $0x2860] sm:$0xff]
        %v1697 = vld [vmem:[%s334 + $0x2868] sm:$0xff]
        %v1698 = vld [vmem:[%s334 + $0x2870] sm:$0xff]
        %v1699 = vld [vmem:[%s334 + $0x2878] sm:$0xff]
        %v1700 = vld [vmem:[%s334 + $0x2880] sm:$0xff]
        %v1701 = vld [vmem:[%s334 + $0x2888] sm:$0xff]
        %v1702 = vld [vmem:[%s334 + $0x2890] sm:$0xff]
        %v1703 = vld [vmem:[%s334 + $0x2898] sm:$0xff]
        %v1704 = vld [vmem:[%s334 + $0x28a0] sm:$0xff]
        %v1705 = vld [vmem:[%s334 + $0x28a8] sm:$0xff]
        %v1706 = vld [vmem:[%s334 + $0x28b0] sm:$0xff]
        %v1707 = vld [vmem:[%s334 + $0x28b8] sm:$0xff]
        %v1708 = vld [vmem:[%s334 + $0x28c0] sm:$0xff]
        %v1709 = vld [vmem:[%s334 + $0x28c8] sm:$0xff]
        %v1710 = vld [vmem:[%s334 + $0x28d0] sm:$0xff]
        %v1711 = vld [vmem:[%s334 + $0x28d8] sm:$0xff]
        %v1712 = vld [vmem:[%s334 + $0x28e0] sm:$0xff]
        %v1713 = vld [vmem:[%s334 + $0x28e8] sm:$0xff]
        %v1714 = vld [vmem:[%s334 + $0x28f0] sm:$0xff]
        %v1715 = vld [vmem:[%s334 + $0x28f8] sm:$0xff]
        %v1716 = vld [vmem:[%s334 + $0x2900] sm:$0xff]
        %v1717 = vld [vmem:[%s334 + $0x2908] sm:$0xff]
        %v1718 = vld [vmem:[%s334 + $0x2910] sm:$0xff]
        %v1719 = vld [vmem:[%s334 + $0x2918] sm:$0xff]
        %v1720 = vld [vmem:[%s334 + $0x2920] sm:$0xff]
        %v1721 = vld [vmem:[%s334 + $0x2928] sm:$0xff]
        %v1722 = vld [vmem:[%s334 + $0x2930] sm:$0xff]
        %v1723 = vld [vmem:[%s334 + $0x2938] sm:$0xff]
        %v1724 = vld [vmem:[%s334 + $0x2940] sm:$0xff]
        %v1725 = vld [vmem:[%s334 + $0x2948] sm:$0xff]
        %v1726 = vld [vmem:[%s334 + $0x2950] sm:$0xff]
        %v1727 = vld [vmem:[%s334 + $0x2958] sm:$0xff]
        %v1728 = vld [vmem:[%s334 + $0x2960] sm:$0xff]
        %v1729 = vld [vmem:[%s334 + $0x2968] sm:$0xff]
        %v1730 = vld [vmem:[%s334 + $0x2970] sm:$0xff]
        %v1731 = vld [vmem:[%s334 + $0x2978] sm:$0xff]
        %v1732 = vld [vmem:[%s334 + $0x2980] sm:$0xff]
        %v1733 = vld [vmem:[%s334 + $0x2988] sm:$0xff]
        %v1734 = vld [vmem:[%s334 + $0x2990] sm:$0xff]
        %v1735 = vld [vmem:[%s334 + $0x2998] sm:$0xff]
        %v1736 = vld [vmem:[%s334 + $0x29a0] sm:$0xff]
        %v1737 = vld [vmem:[%s334 + $0x29a8] sm:$0xff]
        %v1738 = vld [vmem:[%s334 + $0x29b0] sm:$0xff]
        %v1739 = vld [vmem:[%s334 + $0x29b8] sm:$0xff]
        %v1740 = vld [vmem:[%s334 + $0x29c0] sm:$0xff]
        %v1741 = vld [vmem:[%s334 + $0x29c8] sm:$0xff]
        %v1742 = vld [vmem:[%s334 + $0x29d0] sm:$0xff]
        %v1743 = vld [vmem:[%s334 + $0x29d8] sm:$0xff]
        %v1744 = vld [vmem:[%s334 + $0x29e0] sm:$0xff]
        %v1745 = vld [vmem:[%s334 + $0x29e8] sm:$0xff]
        %v1746 = vld [vmem:[%s334 + $0x29f0] sm:$0xff]
        %v1747 = vld [vmem:[%s334 + $0x29f8] sm:$0xff]
        %v1748 = vld [vmem:[%s334 + $0x2a00] sm:$0xff]
        %v1749 = vld [vmem:[%s334 + $0x2a08] sm:$0xff]
        %v1750 = vld [vmem:[%s334 + $0x2a10] sm:$0xff]
        %v1751 = vld [vmem:[%s334 + $0x2a18] sm:$0xff]
        %v1752 = vld [vmem:[%s334 + $0x2a20] sm:$0xff]
        %v1753 = vld [vmem:[%s334 + $0x2a28] sm:$0xff]
        %v1754 = vld [vmem:[%s334 + $0x2a30] sm:$0xff]
        %v1755 = vld [vmem:[%s334 + $0x2a38] sm:$0xff]
        %v1756 = vld [vmem:[%s334 + $0x2a40] sm:$0xff]
        %v1757 = vld [vmem:[%s334 + $0x2a48] sm:$0xff]
        %v1758 = vld [vmem:[%s334 + $0x2a50] sm:$0xff]
        %v1759 = vld [vmem:[%s334 + $0x2a58] sm:$0xff]
        %v1760 = vld [vmem:[%s334 + $0x2a60] sm:$0xff]
        %v1761 = vld [vmem:[%s334 + $0x2a68] sm:$0xff]
        %v1762 = vld [vmem:[%s334 + $0x2a70] sm:$0xff]
        %v1763 = vld [vmem:[%s334 + $0x2a78] sm:$0xff]
        %v1764 = vld [vmem:[%s334 + $0x2a80] sm:$0xff]
        %v1765 = vld [vmem:[%s334 + $0x2a88] sm:$0xff]
        %v1766 = vld [vmem:[%s334 + $0x2a90] sm:$0xff]
        %v1767 = vld [vmem:[%s334 + $0x2a98] sm:$0xff]
        %v1768 = vld [vmem:[%s334 + $0x2aa0] sm:$0xff]
        %v1769 = vld [vmem:[%s334 + $0x2aa8] sm:$0xff]
        %v1770 = vld [vmem:[%s334 + $0x2ab0] sm:$0xff]
        %v1771 = vld [vmem:[%s334 + $0x2ab8] sm:$0xff]
        %v1772 = vld [vmem:[%s334 + $0x2ac0] sm:$0xff]
        %v1773 = vld [vmem:[%s334 + $0x2ac8] sm:$0xff]
        %v1774 = vld [vmem:[%s334 + $0x2ad0] sm:$0xff]
        %v1775 = vld [vmem:[%s334 + $0x2ad8] sm:$0xff]
        %v1776 = vld [vmem:[%s334 + $0x2ae0] sm:$0xff]
        %v1777 = vld [vmem:[%s334 + $0x2ae8] sm:$0xff]
        %v1778 = vld [vmem:[%s334 + $0x2af0] sm:$0xff]
        %v1779 = vld [vmem:[%s334 + $0x2af8] sm:$0xff]
        %v1780 = vld [vmem:[%s334 + $0x2b00] sm:$0xff]
        %v1781 = vld [vmem:[%s334 + $0x2b08] sm:$0xff]
        %v1782 = vld [vmem:[%s334 + $0x2b10] sm:$0xff]
        %v1783 = vld [vmem:[%s334 + $0x2b18] sm:$0xff]
        %v1784 = vld [vmem:[%s334 + $0x2b20] sm:$0xff]
        %v1785 = vld [vmem:[%s334 + $0x2b28] sm:$0xff]
        %v1786 = vld [vmem:[%s334 + $0x2b30] sm:$0xff]
        %v1787 = vld [vmem:[%s334 + $0x2b38] sm:$0xff]
        %v1788 = vld [vmem:[%s334 + $0x2b40] sm:$0xff]
        %v1789 = vld [vmem:[%s334 + $0x2b48] sm:$0xff]
        %v1790 = vld [vmem:[%s334 + $0x2b50] sm:$0xff]
        %v1791 = vld [vmem:[%s334 + $0x2b58] sm:$0xff]
        %v1792 = vld [vmem:[%s334 + $0x2b60] sm:$0xff]
        %v1793 = vld [vmem:[%s334 + $0x2b68] sm:$0xff]
        %v1794 = vld [vmem:[%s334 + $0x2b70] sm:$0xff]
        %v1795 = vld [vmem:[%s334 + $0x2b78] sm:$0xff]
        %v1796 = vld [vmem:[%s334 + $0x2b80] sm:$0xff]
        %v1797 = vld [vmem:[%s334 + $0x2b88] sm:$0xff]
        %v1798 = vld [vmem:[%s334 + $0x2b90] sm:$0xff]
        %v1799 = vld [vmem:[%s334 + $0x2b98] sm:$0xff]
        %v1800 = vld [vmem:[%s334 + $0x2ba0] sm:$0xff]
        %v1801 = vld [vmem:[%s334 + $0x2ba8] sm:$0xff]
        %v1802 = vld [vmem:[%s334 + $0x2bb0] sm:$0xff]
        %v1803 = vld [vmem:[%s334 + $0x2bb8] sm:$0xff]
        %v1804 = vld [vmem:[%s334 + $0x2bc0] sm:$0xff]
        %v1805 = vld [vmem:[%s334 + $0x2bc8] sm:$0xff]
        %v1806 = vld [vmem:[%s334 + $0x2bd0] sm:$0xff]
        %v1807 = vld [vmem:[%s334 + $0x2bd8] sm:$0xff]
        %v1808 = vld [vmem:[%s334 + $0x2be0] sm:$0xff]
        %v1809 = vld [vmem:[%s334 + $0x2be8] sm:$0xff]
        %v1810 = vld [vmem:[%s334 + $0x2bf0] sm:$0xff]
        %v1811 = vld [vmem:[%s334 + $0x2bf8] sm:$0xff]
        %v1812 = vld [vmem:[%s334 + $0x2c00] sm:$0xff]
        %v1813 = vld [vmem:[%s334 + $0x2c08] sm:$0xff]
        %v1814 = vld [vmem:[%s334 + $0x2c10] sm:$0xff]
        %v1815 = vld [vmem:[%s334 + $0x2c18] sm:$0xff]
        %v1816 = vld [vmem:[%s334 + $0x2c20] sm:$0xff]
        %v1817 = vld [vmem:[%s334 + $0x2c28] sm:$0xff]
        %v1818 = vld [vmem:[%s334 + $0x2c30] sm:$0xff]
        %v1819 = vld [vmem:[%s334 + $0x2c38] sm:$0xff]
        %v1820 = vld [vmem:[%s334 + $0x2c40] sm:$0xff]
        %v1821 = vld [vmem:[%s334 + $0x2c48] sm:$0xff]
        %v1822 = vld [vmem:[%s334 + $0x2c50] sm:$0xff]
        %v1823 = vld [vmem:[%s334 + $0x2c58] sm:$0xff]
        %v1824 = vld [vmem:[%s334 + $0x2c60] sm:$0xff]
        %v1825 = vld [vmem:[%s334 + $0x2c68] sm:$0xff]
        %v1826 = vld [vmem:[%s334 + $0x2c70] sm:$0xff]
        %v1827 = vld [vmem:[%s334 + $0x2c78] sm:$0xff]
        %v1828 = vld [vmem:[%s334 + $0x2c80] sm:$0xff]
        %v1829 = vld [vmem:[%s334 + $0x2c88] sm:$0xff]
        %v1830 = vld [vmem:[%s334 + $0x2c90] sm:$0xff]
        %v1831 = vld [vmem:[%s334 + $0x2c98] sm:$0xff]
        %v1832 = vld [vmem:[%s334 + $0x2ca0] sm:$0xff]
        %v1833 = vld [vmem:[%s334 + $0x2ca8] sm:$0xff]
        %v1834 = vld [vmem:[%s334 + $0x2cb0] sm:$0xff]
        %v1835 = vld [vmem:[%s334 + $0x2cb8] sm:$0xff]
        %v1836 = vld [vmem:[%s334 + $0x2cc0] sm:$0xff]
        %v1837 = vld [vmem:[%s334 + $0x2cc8] sm:$0xff]
        %v1838 = vld [vmem:[%s334 + $0x2cd0] sm:$0xff]
        %v1839 = vld [vmem:[%s334 + $0x2cd8] sm:$0xff]
        %v1840 = vld [vmem:[%s334 + $0x2ce0] sm:$0xff]
        %v1841 = vld [vmem:[%s334 + $0x2ce8] sm:$0xff]
        %v1842 = vld [vmem:[%s334 + $0x2cf0] sm:$0xff]
        %v1843 = vld [vmem:[%s334 + $0x2cf8] sm:$0xff]
        %v1844 = vld [vmem:[%s334 + $0x2d00] sm:$0xff]
        %v1845 = vld [vmem:[%s334 + $0x2d08] sm:$0xff]
        %v1846 = vld [vmem:[%s334 + $0x2d10] sm:$0xff]
        %v1847 = vld [vmem:[%s334 + $0x2d18] sm:$0xff]
        %v1848 = vld [vmem:[%s334 + $0x2d20] sm:$0xff]
        %v1849 = vld [vmem:[%s334 + $0x2d28] sm:$0xff]
        %v1850 = vld [vmem:[%s334 + $0x2d30] sm:$0xff]
        %v1851 = vld [vmem:[%s334 + $0x2d38] sm:$0xff]
        %v1852 = vld [vmem:[%s334 + $0x2d40] sm:$0xff]
        %v1853 = vld [vmem:[%s334 + $0x2d48] sm:$0xff]
        %v1854 = vld [vmem:[%s334 + $0x2d50] sm:$0xff]
        %v1855 = vld [vmem:[%s334 + $0x2d58] sm:$0xff]
        %v1856 = vld [vmem:[%s334 + $0x2d60] sm:$0xff]
        %v1857 = vld [vmem:[%s334 + $0x2d68] sm:$0xff]
        %v1858 = vld [vmem:[%s334 + $0x2d70] sm:$0xff]
        %v1859 = vld [vmem:[%s334 + $0x2d78] sm:$0xff]
        %v1860 = vld [vmem:[%s334 + $0x2d80] sm:$0xff]
        %v1861 = vld [vmem:[%s334 + $0x2d88] sm:$0xff]
        %v1862 = vld [vmem:[%s334 + $0x2d90] sm:$0xff]
        %v1863 = vld [vmem:[%s334 + $0x2d98] sm:$0xff]
        %v1864 = vld [vmem:[%s334 + $0x2da0] sm:$0xff]
        %v1865 = vld [vmem:[%s334 + $0x2da8] sm:$0xff]
        %v1866 = vld [vmem:[%s334 + $0x2db0] sm:$0xff]
        %v1867 = vld [vmem:[%s334 + $0x2db8] sm:$0xff]
        %v1868 = vld [vmem:[%s334 + $0x2dc0] sm:$0xff]
        %v1869 = vld [vmem:[%s334 + $0x2dc8] sm:$0xff]
        %v1870 = vld [vmem:[%s334 + $0x2dd0] sm:$0xff]
        %v1871 = vld [vmem:[%s334 + $0x2dd8] sm:$0xff]
        %v1872 = vld [vmem:[%s334 + $0x2de0] sm:$0xff]
        %v1873 = vld [vmem:[%s334 + $0x2de8] sm:$0xff]
        %v1874 = vld [vmem:[%s334 + $0x2df0] sm:$0xff]
        %v1875 = vld [vmem:[%s334 + $0x2df8] sm:$0xff]
        %v1876 = vld [vmem:[%s334 + $0x2e00] sm:$0xff]
        %v1877 = vld [vmem:[%s334 + $0x2e08] sm:$0xff]
        %v1878 = vld [vmem:[%s334 + $0x2e10] sm:$0xff]
        %v1879 = vld [vmem:[%s334 + $0x2e18] sm:$0xff]
        %v1880 = vld [vmem:[%s334 + $0x2e20] sm:$0xff]
        %v1881 = vld [vmem:[%s334 + $0x2e28] sm:$0xff]
        %v1882 = vld [vmem:[%s334 + $0x2e30] sm:$0xff]
        %v1883 = vld [vmem:[%s334 + $0x2e38] sm:$0xff]
        %v1884 = vld [vmem:[%s334 + $0x2e40] sm:$0xff]
        %v1885 = vld [vmem:[%s334 + $0x2e48] sm:$0xff]
        %v1886 = vld [vmem:[%s334 + $0x2e50] sm:$0xff]
        %v1887 = vld [vmem:[%s334 + $0x2e58] sm:$0xff]
        %v1888 = vld [vmem:[%s334 + $0x2e60] sm:$0xff]
        %v1889 = vld [vmem:[%s334 + $0x2e68] sm:$0xff]
        %v1890 = vld [vmem:[%s334 + $0x2e70] sm:$0xff]
        %v1891 = vld [vmem:[%s334 + $0x2e78] sm:$0xff]
        %v1892 = vld [vmem:[%s334 + $0x2e80] sm:$0xff]
        %v1893 = vld [vmem:[%s334 + $0x2e88] sm:$0xff]
        %v1894 = vld [vmem:[%s334 + $0x2e90] sm:$0xff]
        %v1895 = vld [vmem:[%s334 + $0x2e98] sm:$0xff]
        %v1896 = vld [vmem:[%s334 + $0x2ea0] sm:$0xff]
        %v1897 = vld [vmem:[%s334 + $0x2ea8] sm:$0xff]
        %v1898 = vld [vmem:[%s334 + $0x2eb0] sm:$0xff]
        %v1899 = vld [vmem:[%s334 + $0x2eb8] sm:$0xff]
        %v1900 = vld [vmem:[%s334 + $0x2ec0] sm:$0xff]
        %v1901 = vld [vmem:[%s334 + $0x2ec8] sm:$0xff]
        %v1902 = vld [vmem:[%s334 + $0x2ed0] sm:$0xff]
        %v1903 = vld [vmem:[%s334 + $0x2ed8] sm:$0xff]
        %v1904 = vld [vmem:[%s334 + $0x2ee0] sm:$0xff]
        %v1905 = vld [vmem:[%s334 + $0x2ee8] sm:$0xff]
        %v1906 = vld [vmem:[%s334 + $0x2ef0] sm:$0xff]
        %v1907 = vld [vmem:[%s334 + $0x2ef8] sm:$0xff]
        %v1908 = vld [vmem:[%s334 + $0x2f00] sm:$0xff]
        %v1909 = vld [vmem:[%s334 + $0x2f08] sm:$0xff]
        %v1910 = vld [vmem:[%s334 + $0x2f10] sm:$0xff]
        %v1911 = vld [vmem:[%s334 + $0x2f18] sm:$0xff]
        %v1912 = vld [vmem:[%s334 + $0x2f20] sm:$0xff]
        %v1913 = vld [vmem:[%s334 + $0x2f28] sm:$0xff]
        %v1914 = vld [vmem:[%s334 + $0x2f30] sm:$0xff]
        %v1915 = vld [vmem:[%s334 + $0x2f38] sm:$0xff]
        %v1916 = vld [vmem:[%s334 + $0x2f40] sm:$0xff]
        %v1917 = vld [vmem:[%s334 + $0x2f48] sm:$0xff]
        %v1918 = vld [vmem:[%s334 + $0x2f50] sm:$0xff]
        %v1919 = vld [vmem:[%s334 + $0x2f58] sm:$0xff]
        %v1920 = vld [vmem:[%s334 + $0x2f60] sm:$0xff]
        %v1921 = vld [vmem:[%s334 + $0x2f68] sm:$0xff]
        %v1922 = vld [vmem:[%s334 + $0x2f70] sm:$0xff]
        %v1923 = vld [vmem:[%s334 + $0x2f78] sm:$0xff]
        %v1924 = vld [vmem:[%s334 + $0x2f80] sm:$0xff]
        %v1925 = vld [vmem:[%s334 + $0x2f88] sm:$0xff]
        %v1926 = vld [vmem:[%s334 + $0x2f90] sm:$0xff]
        %v1927 = vld [vmem:[%s334 + $0x2f98] sm:$0xff]
        %v1928 = vld [vmem:[%s334 + $0x2fa0] sm:$0xff]
        %v1929 = vld [vmem:[%s334 + $0x2fa8] sm:$0xff]
        %v1930 = vld [vmem:[%s334 + $0x2fb0] sm:$0xff]
        %v1931 = vld [vmem:[%s334 + $0x2fb8] sm:$0xff]
        %v1932 = vld [vmem:[%s334 + $0x2fc0] sm:$0xff]
        %v1933 = vld [vmem:[%s334 + $0x2fc8] sm:$0xff]
        %v1934 = vld [vmem:[%s334 + $0x2fd0] sm:$0xff]
        %v1935 = vld [vmem:[%s334 + $0x2fd8] sm:$0xff]
        %v1936 = vld [vmem:[%s334 + $0x2fe0] sm:$0xff]
        %v1937 = vld [vmem:[%s334 + $0x2fe8] sm:$0xff]
        %v1938 = vld [vmem:[%s334 + $0x2ff0] sm:$0xff]
        %v1939 = vld [vmem:[%s334 + $0x2ff8] sm:$0xff]
        %v1940 = vld [vmem:[%s334 + $0x3000] sm:$0xff]
        %v1941 = vld [vmem:[%s334 + $0x3008] sm:$0xff]
        %v1942 = vld [vmem:[%s334 + $0x3010] sm:$0xff]
        %v1943 = vld [vmem:[%s334 + $0x3018] sm:$0xff]
        %v1944 = vld [vmem:[%s334 + $0x3020] sm:$0xff]
        %v1945 = vld [vmem:[%s334 + $0x3028] sm:$0xff]
        %v1946 = vld [vmem:[%s334 + $0x3030] sm:$0xff]
        %v1947 = vld [vmem:[%s334 + $0x3038] sm:$0xff]
        %v1948 = vld [vmem:[%s334 + $0x3040] sm:$0xff]
        %v1949 = vld [vmem:[%s334 + $0x3048] sm:$0xff]
        %v1950 = vld [vmem:[%s334 + $0x3050] sm:$0xff]
        %v1951 = vld [vmem:[%s334 + $0x3058] sm:$0xff]
        %v1952 = vld [vmem:[%s334 + $0x3060] sm:$0xff]
        %v1953 = vld [vmem:[%s334 + $0x3068] sm:$0xff]
        %v1954 = vld [vmem:[%s334 + $0x3070] sm:$0xff]
        %v1955 = vld [vmem:[%s334 + $0x3078] sm:$0xff]
        %v1956 = vld [vmem:[%s334 + $0x3080] sm:$0xff]
        %v1957 = vld [vmem:[%s334 + $0x3088] sm:$0xff]
        %v1958 = vld [vmem:[%s334 + $0x3090] sm:$0xff]
        %v1959 = vld [vmem:[%s334 + $0x3098] sm:$0xff]
        %v1960 = vld [vmem:[%s334 + $0x30a0] sm:$0xff]
        %v1961 = vld [vmem:[%s334 + $0x30a8] sm:$0xff]
        %v1962 = vld [vmem:[%s334 + $0x30b0] sm:$0xff]
        %v1963 = vld [vmem:[%s334 + $0x30b8] sm:$0xff]
        %v1964 = vld [vmem:[%s334 + $0x30c0] sm:$0xff]
        %v1965 = vld [vmem:[%s334 + $0x30c8] sm:$0xff]
        %v1966 = vld [vmem:[%s334 + $0x30d0] sm:$0xff]
        %v1967 = vld [vmem:[%s334 + $0x30d8] sm:$0xff]
        %v1968 = vld [vmem:[%s334 + $0x30e0] sm:$0xff]
        %v1969 = vld [vmem:[%s334 + $0x30e8] sm:$0xff]
        %v1970 = vld [vmem:[%s334 + $0x30f0] sm:$0xff]
        %v1971 = vld [vmem:[%s334 + $0x30f8] sm:$0xff]
        %v1972 = vld [vmem:[%s334 + $0x3100] sm:$0xff]
        %v1973 = vld [vmem:[%s334 + $0x3108] sm:$0xff]
        %v1974 = vld [vmem:[%s334 + $0x3110] sm:$0xff]
        %v1975 = vld [vmem:[%s334 + $0x3118] sm:$0xff]
        %v1976 = vld [vmem:[%s334 + $0x3120] sm:$0xff]
        %v1977 = vld [vmem:[%s334 + $0x3128] sm:$0xff]
        %v1978 = vld [vmem:[%s334 + $0x3130] sm:$0xff]
        %v1979 = vld [vmem:[%s334 + $0x3138] sm:$0xff]
        %v1980 = vld [vmem:[%s334 + $0x3140] sm:$0xff]
        %v1981 = vld [vmem:[%s334 + $0x3148] sm:$0xff]
        %v1982 = vld [vmem:[%s334 + $0x3150] sm:$0xff]
        %v1983 = vld [vmem:[%s334 + $0x3158] sm:$0xff]
        %v1984 = vld [vmem:[%s334 + $0x3160] sm:$0xff]
        %v1985 = vld [vmem:[%s334 + $0x3168] sm:$0xff]
        %v1986 = vld [vmem:[%s334 + $0x3170] sm:$0xff]
        %v1987 = vld [vmem:[%s334 + $0x3178] sm:$0xff]
        %v1988 = vld [vmem:[%s334 + $0x3180] sm:$0xff]
        %v1989 = vld [vmem:[%s334 + $0x3188] sm:$0xff]
        %v1990 = vld [vmem:[%s334 + $0x3190] sm:$0xff]
        %v1991 = vld [vmem:[%s334 + $0x3198] sm:$0xff]
        %v1992 = vld [vmem:[%s334 + $0x31a0] sm:$0xff]
        %v1993 = vld [vmem:[%s334 + $0x31a8] sm:$0xff]
        %v1994 = vld [vmem:[%s334 + $0x31b0] sm:$0xff]
        %v1995 = vld [vmem:[%s334 + $0x31b8] sm:$0xff]
        %v1996 = vld [vmem:[%s334 + $0x31c0] sm:$0xff]
        %v1997 = vld [vmem:[%s334 + $0x31c8] sm:$0xff]
        %v1998 = vld [vmem:[%s334 + $0x31d0] sm:$0xff]
        %v1999 = vld [vmem:[%s334 + $0x31d8] sm:$0xff]
        %v2000 = vld [vmem:[%s334 + $0x31e0] sm:$0xff]
        %v2001 = vld [vmem:[%s334 + $0x31e8] sm:$0xff]
        %v2002 = vld [vmem:[%s334 + $0x31f0] sm:$0xff]
        %v2003 = vld [vmem:[%s334 + $0x31f8] sm:$0xff]
        %v2004 = vld [vmem:[%s334 + $0x3200] sm:$0xff]
        %v2005 = vld [vmem:[%s334 + $0x3208] sm:$0xff]
        %v2006 = vld [vmem:[%s334 + $0x3210] sm:$0xff]
        %v2007 = vld [vmem:[%s334 + $0x3218] sm:$0xff]
        %v2008 = vld [vmem:[%s334 + $0x3220] sm:$0xff]
        %v2009 = vld [vmem:[%s334 + $0x3228] sm:$0xff]
        %v2010 = vld [vmem:[%s334 + $0x3230] sm:$0xff]
        %v2011 = vld [vmem:[%s334 + $0x3238] sm:$0xff]
        %v2012 = vld [vmem:[%s334 + $0x3240] sm:$0xff]
        %v2013 = vld [vmem:[%s334 + $0x3248] sm:$0xff]
        %v2014 = vld [vmem:[%s334 + $0x3250] sm:$0xff]
        %v2015 = vld [vmem:[%s334 + $0x3258] sm:$0xff]
        %v2016 = vld [vmem:[%s334 + $0x3260] sm:$0xff]
        %v2017 = vld [vmem:[%s334 + $0x3268] sm:$0xff]
        %v2018 = vld [vmem:[%s334 + $0x3270] sm:$0xff]
        %v2019 = vld [vmem:[%s334 + $0x3278] sm:$0xff]
        %v2020 = vld [vmem:[%s334 + $0x3280] sm:$0xff]
        %v2021 = vld [vmem:[%s334 + $0x3288] sm:$0xff]
        %v2022 = vld [vmem:[%s334 + $0x3290] sm:$0xff]
        %v2023 = vld [vmem:[%s334 + $0x3298] sm:$0xff]
        %v2024 = vld [vmem:[%s334 + $0x32a0] sm:$0xff]
        %v2025 = vld [vmem:[%s334 + $0x32a8] sm:$0xff]
        %v2026 = vld [vmem:[%s334 + $0x32b0] sm:$0xff]
        %v2027 = vld [vmem:[%s334 + $0x32b8] sm:$0xff]
        %v2028 = vld [vmem:[%s334 + $0x32c0] sm:$0xff]
        %v2029 = vld [vmem:[%s334 + $0x32c8] sm:$0xff]
        %v2030 = vld [vmem:[%s334 + $0x32d0] sm:$0xff]
        %v2031 = vld [vmem:[%s334 + $0x32d8] sm:$0xff]
        %v2032 = vld [vmem:[%s334 + $0x32e0] sm:$0xff]
        %v2033 = vld [vmem:[%s334 + $0x32e8] sm:$0xff]
        %v2034 = vld [vmem:[%s334 + $0x32f0] sm:$0xff]
        %v2035 = vld [vmem:[%s334 + $0x32f8] sm:$0xff]
        %v2036 = vld [vmem:[%s334 + $0x3300] sm:$0xff]
        %v2037 = vld [vmem:[%s334 + $0x3308] sm:$0xff]
        %v2038 = vld [vmem:[%s334 + $0x3310] sm:$0xff]
        %v2039 = vld [vmem:[%s334 + $0x3318] sm:$0xff]
        %v2040 = vld [vmem:[%s334 + $0x3320] sm:$0xff]
        %v2041 = vld [vmem:[%s334 + $0x3328] sm:$0xff]
        %v2042 = vld [vmem:[%s334 + $0x3330] sm:$0xff]
        %v2043 = vld [vmem:[%s334 + $0x3338] sm:$0xff]
        %v2044 = vld [vmem:[%s334 + $0x3340] sm:$0xff]
        %v2045 = vld [vmem:[%s334 + $0x3348] sm:$0xff]
        %v2046 = vld [vmem:[%s334 + $0x3350] sm:$0xff]
        %v2047 = vld [vmem:[%s334 + $0x3358] sm:$0xff]
        %v2048 = vld [vmem:[%s334 + $0x3360] sm:$0xff]
        %v2049 = vld [vmem:[%s334 + $0x3368] sm:$0xff]
        %v2050 = vld [vmem:[%s334 + $0x3370] sm:$0xff]
        %v2051 = vld [vmem:[%s334 + $0x3378] sm:$0xff]
        %v2052 = vld [vmem:[%s334 + $0x3380] sm:$0xff]
        %v2053 = vld [vmem:[%s334 + $0x3388] sm:$0xff]
        %v2054 = vld [vmem:[%s334 + $0x3390] sm:$0xff]
        %v2055 = vld [vmem:[%s334 + $0x3398] sm:$0xff]
        %v2056 = vld [vmem:[%s334 + $0x33a0] sm:$0xff]
        %v2057 = vld [vmem:[%s334 + $0x33a8] sm:$0xff]
        %v2058 = vld [vmem:[%s334 + $0x33b0] sm:$0xff]
        %v2059 = vld [vmem:[%s334 + $0x33b8] sm:$0xff]
        %v2060 = vld [vmem:[%s334 + $0x33c0] sm:$0xff]
        %v2061 = vld [vmem:[%s334 + $0x33c8] sm:$0xff]
        %v2062 = vld [vmem:[%s334 + $0x33d0] sm:$0xff]
        %v2063 = vld [vmem:[%s334 + $0x33d8] sm:$0xff]
        %v2064 = vld [vmem:[%s334 + $0x33e0] sm:$0xff]
        %v2065 = vld [vmem:[%s334 + $0x33e8] sm:$0xff]
        %v2066 = vld [vmem:[%s334 + $0x33f0] sm:$0xff]
        %v2067 = vld [vmem:[%s334 + $0x33f8] sm:$0xff]
        %v2068 = vld [vmem:[%s334 + $0x3400] sm:$0xff]
        %v2069 = vld [vmem:[%s334 + $0x3408] sm:$0xff]
        %v2070 = vld [vmem:[%s334 + $0x3410] sm:$0xff]
        %v2071 = vld [vmem:[%s334 + $0x3418] sm:$0xff]
        %v2072 = vld [vmem:[%s334 + $0x3420] sm:$0xff]
        %v2073 = vld [vmem:[%s334 + $0x3428] sm:$0xff]
        %v2074 = vld [vmem:[%s334 + $0x3430] sm:$0xff]
        %v2075 = vld [vmem:[%s334 + $0x3438] sm:$0xff]
        %v2076 = vld [vmem:[%s334 + $0x3440] sm:$0xff]
        %v2077 = vld [vmem:[%s334 + $0x3448] sm:$0xff]
        %v2078 = vld [vmem:[%s334 + $0x3450] sm:$0xff]
        %v2079 = vld [vmem:[%s334 + $0x3458] sm:$0xff]
        %v2080 = vld [vmem:[%s334 + $0x3460] sm:$0xff]
        %v2081 = vld [vmem:[%s334 + $0x3468] sm:$0xff]
        %v2082 = vld [vmem:[%s334 + $0x3470] sm:$0xff]
        %v2083 = vld [vmem:[%s334 + $0x3478] sm:$0xff]
        %v2084 = vld [vmem:[%s334 + $0x3480] sm:$0xff]
        %v2085 = vld [vmem:[%s334 + $0x3488] sm:$0xff]
        %v2086 = vld [vmem:[%s334 + $0x3490] sm:$0xff]
        %v2087 = vld [vmem:[%s334 + $0x3498] sm:$0xff]
        %v2088 = vld [vmem:[%s334 + $0x34a0] sm:$0xff]
        %v2089 = vld [vmem:[%s334 + $0x34a8] sm:$0xff]
        %v2090 = vld [vmem:[%s334 + $0x34b0] sm:$0xff]
        %v2091 = vld [vmem:[%s334 + $0x34b8] sm:$0xff]
        %v2092 = vld [vmem:[%s334 + $0x34c0] sm:$0xff]
        %v2093 = vld [vmem:[%s334 + $0x34c8] sm:$0xff]
        %v2094 = vld [vmem:[%s334 + $0x34d0] sm:$0xff]
        %v2095 = vld [vmem:[%s334 + $0x34d8] sm:$0xff]
        %v2096 = vld [vmem:[%s334 + $0x34e0] sm:$0xff]
        %v2097 = vld [vmem:[%s334 + $0x34e8] sm:$0xff]
        %v2098 = vld [vmem:[%s334 + $0x34f0] sm:$0xff]
        %v2099 = vld [vmem:[%s334 + $0x34f8] sm:$0xff]
        %v2100 = vld [vmem:[%s334 + $0x3500] sm:$0xff]
        %v2101 = vld [vmem:[%s334 + $0x3508] sm:$0xff]
        %v2102 = vld [vmem:[%s334 + $0x3510] sm:$0xff]
        %v2103 = vld [vmem:[%s334 + $0x3518] sm:$0xff]
        %v2104 = vld [vmem:[%s334 + $0x3520] sm:$0xff]
        %v2105 = vld [vmem:[%s334 + $0x3528] sm:$0xff]
        %v2106 = vld [vmem:[%s334 + $0x3530] sm:$0xff]
        %v2107 = vld [vmem:[%s334 + $0x3538] sm:$0xff]
        %v2108 = vld [vmem:[%s334 + $0x3540] sm:$0xff]
        %v2109 = vld [vmem:[%s334 + $0x3548] sm:$0xff]
        %v2110 = vld [vmem:[%s334 + $0x3550] sm:$0xff]
        %v2111 = vld [vmem:[%s334 + $0x3558] sm:$0xff]
        %v2112 = vld [vmem:[%s334 + $0x3560] sm:$0xff]
        %v2113 = vld [vmem:[%s334 + $0x3568] sm:$0xff]
        %v2114 = vld [vmem:[%s334 + $0x3570] sm:$0xff]
        %v2115 = vld [vmem:[%s334 + $0x3578] sm:$0xff]
        %v2116 = vld [vmem:[%s334 + $0x3580] sm:$0xff]
        %v2117 = vld [vmem:[%s334 + $0x3588] sm:$0xff]
        %v2118 = vld [vmem:[%s334 + $0x3590] sm:$0xff]
        %v2119 = vld [vmem:[%s334 + $0x3598] sm:$0xff]
        %v2120 = vld [vmem:[%s334 + $0x35a0] sm:$0xff]
        %v2121 = vld [vmem:[%s334 + $0x35a8] sm:$0xff]
        %v2122 = vld [vmem:[%s334 + $0x35b0] sm:$0xff]
        %v2123 = vld [vmem:[%s334 + $0x35b8] sm:$0xff]
        %v2124 = vld [vmem:[%s334 + $0x35c0] sm:$0xff]
        %v2125 = vld [vmem:[%s334 + $0x35c8] sm:$0xff]
        %v2126 = vld [vmem:[%s334 + $0x35d0] sm:$0xff]
        %v2127 = vld [vmem:[%s334 + $0x35d8] sm:$0xff]
        %v2128 = vld [vmem:[%s334 + $0x35e0] sm:$0xff]
        %v2129 = vld [vmem:[%s334 + $0x35e8] sm:$0xff]
        %v2130 = vld [vmem:[%s334 + $0x35f0] sm:$0xff]
        %v2131 = vld [vmem:[%s334 + $0x35f8] sm:$0xff]
        %v2132 = vld [vmem:[%s334 + $0x3600] sm:$0xff]
        %v2133 = vld [vmem:[%s334 + $0x3608] sm:$0xff]
        %v2134 = vld [vmem:[%s334 + $0x3610] sm:$0xff]
        %v2135 = vld [vmem:[%s334 + $0x3618] sm:$0xff]
        %v2136 = vld [vmem:[%s334 + $0x3620] sm:$0xff]
        %v2137 = vld [vmem:[%s334 + $0x3628] sm:$0xff]
        %v2138 = vld [vmem:[%s334 + $0x3630] sm:$0xff]
        %v2139 = vld [vmem:[%s334 + $0x3638] sm:$0xff]
        %v2140 = vld [vmem:[%s334 + $0x3640] sm:$0xff]
        %v2141 = vld [vmem:[%s334 + $0x3648] sm:$0xff]
        %v2142 = vld [vmem:[%s334 + $0x3650] sm:$0xff]
        %v2143 = vld [vmem:[%s334 + $0x3658] sm:$0xff]
        %v2144 = vld [vmem:[%s334 + $0x3660] sm:$0xff]
        %v2145 = vld [vmem:[%s334 + $0x3668] sm:$0xff]
        %v2146 = vld [vmem:[%s334 + $0x3670] sm:$0xff]
        %v2147 = vld [vmem:[%s334 + $0x3678] sm:$0xff]
        %v2148 = vld [vmem:[%s334 + $0x3680] sm:$0xff]
        %v2149 = vld [vmem:[%s334 + $0x3688] sm:$0xff]
        %v2150 = vld [vmem:[%s334 + $0x3690] sm:$0xff]
        %v2151 = vld [vmem:[%s334 + $0x3698] sm:$0xff]
        %v2152 = vld [vmem:[%s334 + $0x36a0] sm:$0xff]
        %v2153 = vld [vmem:[%s334 + $0x36a8] sm:$0xff]
        %v2154 = vld [vmem:[%s334 + $0x36b0] sm:$0xff]
        %v2155 = vld [vmem:[%s334 + $0x36b8] sm:$0xff]
        %v2156 = vld [vmem:[%s334 + $0x36c0] sm:$0xff]
        %v2157 = vld [vmem:[%s334 + $0x36c8] sm:$0xff]
        %v2158 = vld [vmem:[%s334 + $0x36d0] sm:$0xff]
        %v2159 = vld [vmem:[%s334 + $0x36d8] sm:$0xff]
        %v2160 = vld [vmem:[%s334 + $0x36e0] sm:$0xff]
        %v2161 = vld [vmem:[%s334 + $0x36e8] sm:$0xff]
        %v2162 = vld [vmem:[%s334 + $0x36f0] sm:$0xff]
        %v2163 = vld [vmem:[%s334 + $0x36f8] sm:$0xff]
        %v2164 = vld [vmem:[%s334 + $0x3700] sm:$0xff]
        %v2165 = vld [vmem:[%s334 + $0x3708] sm:$0xff]
        %v2166 = vld [vmem:[%s334 + $0x3710] sm:$0xff]
        %v2167 = vld [vmem:[%s334 + $0x3718] sm:$0xff]
        %v2168 = vld [vmem:[%s334 + $0x3720] sm:$0xff]
        %v2169 = vld [vmem:[%s334 + $0x3728] sm:$0xff]
        %v2170 = vld [vmem:[%s334 + $0x3730] sm:$0xff]
        %v2171 = vld [vmem:[%s334 + $0x3738] sm:$0xff]
        %v2172 = vld [vmem:[%s334 + $0x3740] sm:$0xff]
        %v2173 = vld [vmem:[%s334 + $0x3748] sm:$0xff]
        %v2174 = vld [vmem:[%s334 + $0x3750] sm:$0xff]
        %v2175 = vld [vmem:[%s334 + $0x3758] sm:$0xff]
        %v2176 = vld [vmem:[%s334 + $0x3760] sm:$0xff]
        %v2177 = vld [vmem:[%s334 + $0x3768] sm:$0xff]
        %v2178 = vld [vmem:[%s334 + $0x3770] sm:$0xff]
        %v2179 = vld [vmem:[%s334 + $0x3778] sm:$0xff]
        %v2180 = vld [vmem:[%s334 + $0x3780] sm:$0xff]
        %v2181 = vld [vmem:[%s334 + $0x3788] sm:$0xff]
        %v2182 = vld [vmem:[%s334 + $0x3790] sm:$0xff]
        %v2183 = vld [vmem:[%s334 + $0x3798] sm:$0xff]
        %v2184 = vld [vmem:[%s334 + $0x37a0] sm:$0xff]
        %v2185 = vld [vmem:[%s334 + $0x37a8] sm:$0xff]
        %v2186 = vld [vmem:[%s334 + $0x37b0] sm:$0xff]
        %v2187 = vld [vmem:[%s334 + $0x37b8] sm:$0xff]
        %v2188 = vld [vmem:[%s334 + $0x37c0] sm:$0xff]
        %v2189 = vld [vmem:[%s334 + $0x37c8] sm:$0xff]
        %v2190 = vld [vmem:[%s334 + $0x37d0] sm:$0xff]
        %v2191 = vld [vmem:[%s334 + $0x37d8] sm:$0xff]
        %v2192 = vld [vmem:[%s334 + $0x37e0] sm:$0xff]
        %v2193 = vld [vmem:[%s334 + $0x37e8] sm:$0xff]
        %v2194 = vld [vmem:[%s334 + $0x37f0] sm:$0xff]
        %v2195 = vld [vmem:[%s334 + $0x37f8] sm:$0xff]
        %v2196 = vld [vmem:[%s334 + $0x3800] sm:$0xff]
        %v2197 = vld [vmem:[%s334 + $0x3808] sm:$0xff]
        %v2198 = vld [vmem:[%s334 + $0x3810] sm:$0xff]
        %v2199 = vld [vmem:[%s334 + $0x3818] sm:$0xff]
        %v2200 = vld [vmem:[%s334 + $0x3820] sm:$0xff]
        %v2201 = vld [vmem:[%s334 + $0x3828] sm:$0xff]
        %v2202 = vld [vmem:[%s334 + $0x3830] sm:$0xff]
        %v2203 = vld [vmem:[%s334 + $0x3838] sm:$0xff]
        %v2204 = vld [vmem:[%s334 + $0x3840] sm:$0xff]
        %v2205 = vld [vmem:[%s334 + $0x3848] sm:$0xff]
        %v2206 = vld [vmem:[%s334 + $0x3850] sm:$0xff]
        %v2207 = vld [vmem:[%s334 + $0x3858] sm:$0xff]
        %v2208 = vld [vmem:[%s334 + $0x3860] sm:$0xff]
        %v2209 = vld [vmem:[%s334 + $0x3868] sm:$0xff]
        %v2210 = vld [vmem:[%s334 + $0x3870] sm:$0xff]
        %v2211 = vld [vmem:[%s334 + $0x3878] sm:$0xff]
        %v2212 = vld [vmem:[%s334 + $0x3880] sm:$0xff]
        %v2213 = vld [vmem:[%s334 + $0x3888] sm:$0xff]
        %v2214 = vld [vmem:[%s334 + $0x3890] sm:$0xff]
        %v2215 = vld [vmem:[%s334 + $0x3898] sm:$0xff]
        %v2216 = vld [vmem:[%s334 + $0x38a0] sm:$0xff]
        %v2217 = vld [vmem:[%s334 + $0x38a8] sm:$0xff]
        %v2218 = vld [vmem:[%s334 + $0x38b0] sm:$0xff]
        %v2219 = vld [vmem:[%s334 + $0x38b8] sm:$0xff]
        %v2220 = vld [vmem:[%s334 + $0x38c0] sm:$0xff]
        %v2221 = vld [vmem:[%s334 + $0x38c8] sm:$0xff]
        %v2222 = vld [vmem:[%s334 + $0x38d0] sm:$0xff]
        %v2223 = vld [vmem:[%s334 + $0x38d8] sm:$0xff]
        %v2224 = vld [vmem:[%s334 + $0x38e0] sm:$0xff]
        %v2225 = vld [vmem:[%s334 + $0x38e8] sm:$0xff]
        %v2226 = vld [vmem:[%s334 + $0x38f0] sm:$0xff]
        %v2227 = vld [vmem:[%s334 + $0x38f8] sm:$0xff]
        %v2228 = vld [vmem:[%s334 + $0x3900] sm:$0xff]
        %v2229 = vld [vmem:[%s334 + $0x3908] sm:$0xff]
        %v2230 = vld [vmem:[%s334 + $0x3910] sm:$0xff]
        %v2231 = vld [vmem:[%s334 + $0x3918] sm:$0xff]
        %v2232 = vld [vmem:[%s334 + $0x3920] sm:$0xff]
        %v2233 = vld [vmem:[%s334 + $0x3928] sm:$0xff]
        %v2234 = vld [vmem:[%s334 + $0x3930] sm:$0xff]
        %v2235 = vld [vmem:[%s334 + $0x3938] sm:$0xff]
        %v2236 = vld [vmem:[%s334 + $0x3940] sm:$0xff]
        %v2237 = vld [vmem:[%s334 + $0x3948] sm:$0xff]
        %v2238 = vld [vmem:[%s334 + $0x3950] sm:$0xff]
        %v2239 = vld [vmem:[%s334 + $0x3958] sm:$0xff]
        %v2240 = vld [vmem:[%s334 + $0x3960] sm:$0xff]
        %v2241 = vld [vmem:[%s334 + $0x3968] sm:$0xff]
        %v2242 = vld [vmem:[%s334 + $0x3970] sm:$0xff]
        %v2243 = vld [vmem:[%s334 + $0x3978] sm:$0xff]
        %v2244 = vld [vmem:[%s334 + $0x3980] sm:$0xff]
        %v2245 = vld [vmem:[%s334 + $0x3988] sm:$0xff]
        %v2246 = vld [vmem:[%s334 + $0x3990] sm:$0xff]
        %v2247 = vld [vmem:[%s334 + $0x3998] sm:$0xff]
        %v2248 = vld [vmem:[%s334 + $0x39a0] sm:$0xff]
        %v2249 = vld [vmem:[%s334 + $0x39a8] sm:$0xff]
        %v2250 = vld [vmem:[%s334 + $0x39b0] sm:$0xff]
        %v2251 = vld [vmem:[%s334 + $0x39b8] sm:$0xff]
        %v2252 = vld [vmem:[%s334 + $0x39c0] sm:$0xff]
        %v2253 = vld [vmem:[%s334 + $0x39c8] sm:$0xff]
        %v2254 = vld [vmem:[%s334 + $0x39d0] sm:$0xff]
        %v2255 = vld [vmem:[%s334 + $0x39d8] sm:$0xff]
        %v2256 = vld [vmem:[%s334 + $0x39e0] sm:$0xff]
        %v2257 = vld [vmem:[%s334 + $0x39e8] sm:$0xff]
        %v2258 = vld [vmem:[%s334 + $0x39f0] sm:$0xff]
        %v2259 = vld [vmem:[%s334 + $0x39f8] sm:$0xff]
        %v2260 = vld [vmem:[%s334 + $0x3a00] sm:$0xff]
        %v2261 = vld [vmem:[%s334 + $0x3a08] sm:$0xff]
        %v2262 = vld [vmem:[%s334 + $0x3a10] sm:$0xff]
        %v2263 = vld [vmem:[%s334 + $0x3a18] sm:$0xff]
        %v2264 = vld [vmem:[%s334 + $0x3a20] sm:$0xff]
        %v2265 = vld [vmem:[%s334 + $0x3a28] sm:$0xff]
        %v2266 = vld [vmem:[%s334 + $0x3a30] sm:$0xff]
        %v2267 = vld [vmem:[%s334 + $0x3a38] sm:$0xff]
        %v2268 = vld [vmem:[%s334 + $0x3a40] sm:$0xff]
        %v2269 = vld [vmem:[%s334 + $0x3a48] sm:$0xff]
        %v2270 = vld [vmem:[%s334 + $0x3a50] sm:$0xff]
        %v2271 = vld [vmem:[%s334 + $0x3a58] sm:$0xff]
        %v2272 = vld [vmem:[%s334 + $0x3a60] sm:$0xff]
        %v2273 = vld [vmem:[%s334 + $0x3a68] sm:$0xff]
        %v2274 = vld [vmem:[%s334 + $0x3a70] sm:$0xff]
        %v2275 = vld [vmem:[%s334 + $0x3a78] sm:$0xff]
        %v2276 = vld [vmem:[%s334 + $0x3a80] sm:$0xff]
        %v2277 = vld [vmem:[%s334 + $0x3a88] sm:$0xff]
        %v2278 = vld [vmem:[%s334 + $0x3a90] sm:$0xff]
        %v2279 = vld [vmem:[%s334 + $0x3a98] sm:$0xff]
        %v2280 = vld [vmem:[%s334 + $0x3aa0] sm:$0xff]
        %v2281 = vld [vmem:[%s334 + $0x3aa8] sm:$0xff]
        %v2282 = vld [vmem:[%s334 + $0x3ab0] sm:$0xff]
        %v2283 = vld [vmem:[%s334 + $0x3ab8] sm:$0xff]
        %v2284 = vld [vmem:[%s334 + $0x3ac0] sm:$0xff]
        %v2285 = vld [vmem:[%s334 + $0x3ac8] sm:$0xff]
        %v2286 = vld [vmem:[%s334 + $0x3ad0] sm:$0xff]
        %v2287 = vld [vmem:[%s334 + $0x3ad8] sm:$0xff]
        %v2288 = vld [vmem:[%s334 + $0x3ae0] sm:$0xff]
        %v2289 = vld [vmem:[%s334 + $0x3ae8] sm:$0xff]
        %v2290 = vld [vmem:[%s334 + $0x3af0] sm:$0xff]
        %v2291 = vld [vmem:[%s334 + $0x3af8] sm:$0xff]
        %v2292 = vld [vmem:[%s334 + $0x3b00] sm:$0xff]
        %v2293 = vld [vmem:[%s334 + $0x3b08] sm:$0xff]
        %v2294 = vld [vmem:[%s334 + $0x3b10] sm:$0xff]
        %v2295 = vld [vmem:[%s334 + $0x3b18] sm:$0xff]
        %v2296 = vld [vmem:[%s334 + $0x3b20] sm:$0xff]
        %v2297 = vld [vmem:[%s334 + $0x3b28] sm:$0xff]
        %v2298 = vld [vmem:[%s334 + $0x3b30] sm:$0xff]
        %v2299 = vld [vmem:[%s334 + $0x3b38] sm:$0xff]
        %v2300 = vld [vmem:[%s334 + $0x3b40] sm:$0xff]
        %v2301 = vld [vmem:[%s334 + $0x3b48] sm:$0xff]
        %v2302 = vld [vmem:[%s334 + $0x3b50] sm:$0xff]
        %v2303 = vld [vmem:[%s334 + $0x3b58] sm:$0xff]
        %v2304 = vld [vmem:[%s334 + $0x3b60] sm:$0xff]
        %v2305 = vld [vmem:[%s334 + $0x3b68] sm:$0xff]
        %v2306 = vld [vmem:[%s334 + $0x3b70] sm:$0xff]
        %v2307 = vld [vmem:[%s334 + $0x3b78] sm:$0xff]
        %v2308 = vld [vmem:[%s334 + $0x3b80] sm:$0xff]
        %v2309 = vld [vmem:[%s334 + $0x3b88] sm:$0xff]
        %v2310 = vld [vmem:[%s334 + $0x3b90] sm:$0xff]
        %v2311 = vld [vmem:[%s334 + $0x3b98] sm:$0xff]
        %v2312 = vld [vmem:[%s334 + $0x3ba0] sm:$0xff]
        %v2313 = vld [vmem:[%s334 + $0x3ba8] sm:$0xff]
        %v2314 = vld [vmem:[%s334 + $0x3bb0] sm:$0xff]
        %v2315 = vld [vmem:[%s334 + $0x3bb8] sm:$0xff]
        %v2316 = vld [vmem:[%s334 + $0x3bc0] sm:$0xff]
        %v2317 = vld [vmem:[%s334 + $0x3bc8] sm:$0xff]
        %v2318 = vld [vmem:[%s334 + $0x3bd0] sm:$0xff]
        %v2319 = vld [vmem:[%s334 + $0x3bd8] sm:$0xff]
        %v2320 = vld [vmem:[%s334 + $0x3be0] sm:$0xff]
        %v2321 = vld [vmem:[%s334 + $0x3be8] sm:$0xff]
        %v2322 = vld [vmem:[%s334 + $0x3bf0] sm:$0xff]
        %v2323 = vld [vmem:[%s334 + $0x3bf8] sm:$0xff]
        %v2324 = vld [vmem:[%s334 + $0x3c00] sm:$0xff]
        %v2325 = vld [vmem:[%s334 + $0x3c08] sm:$0xff]
        %v2326 = vld [vmem:[%s334 + $0x3c10] sm:$0xff]
        %v2327 = vld [vmem:[%s334 + $0x3c18] sm:$0xff]
        %v2328 = vld [vmem:[%s334 + $0x3c20] sm:$0xff]
        %v2329 = vld [vmem:[%s334 + $0x3c28] sm:$0xff]
        %v2330 = vld [vmem:[%s334 + $0x3c30] sm:$0xff]
        %v2331 = vld [vmem:[%s334 + $0x3c38] sm:$0xff]
        %v2332 = vld [vmem:[%s334 + $0x3c40] sm:$0xff]
        %v2333 = vld [vmem:[%s334 + $0x3c48] sm:$0xff]
        %v2334 = vld [vmem:[%s334 + $0x3c50] sm:$0xff]
        %v2335 = vld [vmem:[%s334 + $0x3c58] sm:$0xff]
        %v2336 = vld [vmem:[%s334 + $0x3c60] sm:$0xff]
        %v2337 = vld [vmem:[%s334 + $0x3c68] sm:$0xff]
        %v2338 = vld [vmem:[%s334 + $0x3c70] sm:$0xff]
        %v2339 = vld [vmem:[%s334 + $0x3c78] sm:$0xff]
        %v2340 = vld [vmem:[%s334 + $0x3c80] sm:$0xff]
        %v2341 = vld [vmem:[%s334 + $0x3c88] sm:$0xff]
        %v2342 = vld [vmem:[%s334 + $0x3c90] sm:$0xff]
        %v2343 = vld [vmem:[%s334 + $0x3c98] sm:$0xff]
        %v2344 = vld [vmem:[%s334 + $0x3ca0] sm:$0xff]
        %v2345 = vld [vmem:[%s334 + $0x3ca8] sm:$0xff]
        %v2346 = vld [vmem:[%s334 + $0x3cb0] sm:$0xff]
        %v2347 = vld [vmem:[%s334 + $0x3cb8] sm:$0xff]
        %v2348 = vld [vmem:[%s334 + $0x3cc0] sm:$0xff]
        %v2349 = vld [vmem:[%s334 + $0x3cc8] sm:$0xff]
        %v2350 = vld [vmem:[%s334 + $0x3cd0] sm:$0xff]
        %v2351 = vld [vmem:[%s334 + $0x3cd8] sm:$0xff]
        %v2352 = vld [vmem:[%s334 + $0x3ce0] sm:$0xff]
        %v2353 = vld [vmem:[%s334 + $0x3ce8] sm:$0xff]
        %v2354 = vld [vmem:[%s334 + $0x3cf0] sm:$0xff]
        %v2355 = vld [vmem:[%s334 + $0x3cf8] sm:$0xff]
        %v2356 = vld [vmem:[%s334 + $0x3d00] sm:$0xff]
        %v2357 = vld [vmem:[%s334 + $0x3d08] sm:$0xff]
        %v2358 = vld [vmem:[%s334 + $0x3d10] sm:$0xff]
        %v2359 = vld [vmem:[%s334 + $0x3d18] sm:$0xff]
        %v2360 = vld [vmem:[%s334 + $0x3d20] sm:$0xff]
        %v2361 = vld [vmem:[%s334 + $0x3d28] sm:$0xff]
        %v2362 = vld [vmem:[%s334 + $0x3d30] sm:$0xff]
        %v2363 = vld [vmem:[%s334 + $0x3d38] sm:$0xff]
        %v2364 = vld [vmem:[%s334 + $0x3d40] sm:$0xff]
        %v2365 = vld [vmem:[%s334 + $0x3d48] sm:$0xff]
        %v2366 = vld [vmem:[%s334 + $0x3d50] sm:$0xff]
        %v2367 = vld [vmem:[%s334 + $0x3d58] sm:$0xff]
        %v2368 = vld [vmem:[%s334 + $0x3d60] sm:$0xff]
        %v2369 = vld [vmem:[%s334 + $0x3d68] sm:$0xff]
        %v2370 = vld [vmem:[%s334 + $0x3d70] sm:$0xff]
        %v2371 = vld [vmem:[%s334 + $0x3d78] sm:$0xff]
        %v2372 = vld [vmem:[%s334 + $0x3d80] sm:$0xff]
        %v2373 = vld [vmem:[%s334 + $0x3d88] sm:$0xff]
        %v2374 = vld [vmem:[%s334 + $0x3d90] sm:$0xff]
        %v2375 = vld [vmem:[%s334 + $0x3d98] sm:$0xff]
        %v2376 = vld [vmem:[%s334 + $0x3da0] sm:$0xff]
        %v2377 = vld [vmem:[%s334 + $0x3da8] sm:$0xff]
        %v2378 = vld [vmem:[%s334 + $0x3db0] sm:$0xff]
        %v2379 = vld [vmem:[%s334 + $0x3db8] sm:$0xff]
        %v2380 = vld [vmem:[%s334 + $0x3dc0] sm:$0xff]
        %v2381 = vld [vmem:[%s334 + $0x3dc8] sm:$0xff]
        %v2382 = vld [vmem:[%s334 + $0x3dd0] sm:$0xff]
        %v2383 = vld [vmem:[%s334 + $0x3dd8] sm:$0xff]
        %v2384 = vld [vmem:[%s334 + $0x3de0] sm:$0xff]
        %v2385 = vld [vmem:[%s334 + $0x3de8] sm:$0xff]
        %v2386 = vld [vmem:[%s334 + $0x3df0] sm:$0xff]
        %v2387 = vld [vmem:[%s334 + $0x3df8] sm:$0xff]
        %v2388 = vld [vmem:[%s334 + $0x3e00] sm:$0xff]
        %v2389 = vld [vmem:[%s334 + $0x3e08] sm:$0xff]
        %v2390 = vld [vmem:[%s334 + $0x3e10] sm:$0xff]
        %v2391 = vld [vmem:[%s334 + $0x3e18] sm:$0xff]
        %v2392 = vld [vmem:[%s334 + $0x3e20] sm:$0xff]
        %v2393 = vld [vmem:[%s334 + $0x3e28] sm:$0xff]
        %v2394 = vld [vmem:[%s334 + $0x3e30] sm:$0xff]
        %v2395 = vld [vmem:[%s334 + $0x3e38] sm:$0xff]
        %v2396 = vld [vmem:[%s334 + $0x3e40] sm:$0xff]
        %v2397 = vld [vmem:[%s334 + $0x3e48] sm:$0xff]
        %v2398 = vld [vmem:[%s334 + $0x3e50] sm:$0xff]
        %v2399 = vld [vmem:[%s334 + $0x3e58] sm:$0xff]
        %v2400 = vld [vmem:[%s334 + $0x3e60] sm:$0xff]
        %v2401 = vld [vmem:[%s334 + $0x3e68] sm:$0xff]
        %v2402 = vld [vmem:[%s334 + $0x3e70] sm:$0xff]
        %v2403 = vld [vmem:[%s334 + $0x3e78] sm:$0xff]
        %v2404 = vld [vmem:[%s334 + $0x3e80] sm:$0xff]
        %v2405 = vld [vmem:[%s334 + $0x3e88] sm:$0xff]
        %v2406 = vld [vmem:[%s334 + $0x3e90] sm:$0xff]
        %v2407 = vld [vmem:[%s334 + $0x3e98] sm:$0xff]
        %v2408 = vld [vmem:[%s334 + $0x3ea0] sm:$0xff]
        %v2409 = vld [vmem:[%s334 + $0x3ea8] sm:$0xff]
        %v2410 = vld [vmem:[%s334 + $0x3eb0] sm:$0xff]
        %v2411 = vld [vmem:[%s334 + $0x3eb8] sm:$0xff]
        %v2412 = vld [vmem:[%s334 + $0x3ec0] sm:$0xff]
        %v2413 = vld [vmem:[%s334 + $0x3ec8] sm:$0xff]
        %v2414 = vld [vmem:[%s334 + $0x3ed0] sm:$0xff]
        %v2415 = vld [vmem:[%s334 + $0x3ed8] sm:$0xff]
        %v2416 = vld [vmem:[%s334 + $0x3ee0] sm:$0xff]
        %v2417 = vld [vmem:[%s334 + $0x3ee8] sm:$0xff]
        %v2418 = vld [vmem:[%s334 + $0x3ef0] sm:$0xff]
        %v2419 = vld [vmem:[%s334 + $0x3ef8] sm:$0xff]
        %v2420 = vld [vmem:[%s334 + $0x3f00] sm:$0xff]
        %v2421 = vld [vmem:[%s334 + $0x3f08] sm:$0xff]
        %v2422 = vld [vmem:[%s334 + $0x3f10] sm:$0xff]
        %v2423 = vld [vmem:[%s334 + $0x3f18] sm:$0xff]
        %v2424 = vld [vmem:[%s334 + $0x3f20] sm:$0xff]
        %v2425 = vld [vmem:[%s334 + $0x3f28] sm:$0xff]
        %v2426 = vld [vmem:[%s334 + $0x3f30] sm:$0xff]
        %v2427 = vld [vmem:[%s334 + $0x3f38] sm:$0xff]
        %v2428 = vld [vmem:[%s334 + $0x3f40] sm:$0xff]
        %v2429 = vld [vmem:[%s334 + $0x3f48] sm:$0xff]
        %v2430 = vld [vmem:[%s334 + $0x3f50] sm:$0xff]
        %v2431 = vld [vmem:[%s334 + $0x3f58] sm:$0xff]
        %v2432 = vld [vmem:[%s334 + $0x3f60] sm:$0xff]
        %v2433 = vld [vmem:[%s334 + $0x3f68] sm:$0xff]
        %v2434 = vld [vmem:[%s334 + $0x3f70] sm:$0xff]
        %v2435 = vld [vmem:[%s334 + $0x3f78] sm:$0xff]
        %v2436 = vld [vmem:[%s334 + $0x3f80] sm:$0xff]
        %v2437 = vld [vmem:[%s334 + $0x3f88] sm:$0xff]
        %v2438 = vld [vmem:[%s334 + $0x3f90] sm:$0xff]
        %v2439 = vld [vmem:[%s334 + $0x3f98] sm:$0xff]
        %v2440 = vld [vmem:[%s334 + $0x3fa0] sm:$0xff]
        %v2441 = vld [vmem:[%s334 + $0x3fa8] sm:$0xff]
        %v2442 = vld [vmem:[%s334 + $0x3fb0] sm:$0xff]
        %v2443 = vld [vmem:[%s334 + $0x3fb8] sm:$0xff]
        %v2444 = vld [vmem:[%s334 + $0x3fc0] sm:$0xff]
        %v2445 = vld [vmem:[%s334 + $0x3fc8] sm:$0xff]
        %v2446 = vld [vmem:[%s334 + $0x3fd0] sm:$0xff]
        %v2447 = vld [vmem:[%s334 + $0x3fd8] sm:$0xff]
        %v2448 = vld [vmem:[%s334 + $0x3fe0] sm:$0xff]
        %v2449 = vld [vmem:[%s334 + $0x3fe8] sm:$0xff]
        %v2450 = vld [vmem:[%s334 + $0x3ff0] sm:$0xff]
        %v2451 = vld [vmem:[%s334 + $0x3ff8] sm:$0xff]
        %v2452 = vld [vmem:[#allocation2] sm:$0xff]
        %v2453 = vld [vmem:[#allocation2 + $0x8] sm:$0xff]
        %v2454 = vld [vmem:[#allocation2 + $0x10] sm:$0xff]
        %v2455 = vld [vmem:[#allocation2 + $0x18] sm:$0xff]
        %v2456 = vld [vmem:[#allocation2 + $0x20] sm:$0xff]
        %v2457 = vld [vmem:[#allocation2 + $0x28] sm:$0xff]
        %v2458 = vld [vmem:[#allocation2 + $0x30] sm:$0xff]
        %v2459 = vld [vmem:[#allocation2 + $0x38] sm:$0xff]
        %v2460 = vld [vmem:[#allocation2 + $0x40] sm:$0xff]
        %v2461 = vld [vmem:[#allocation2 + $0x48] sm:$0xff]
        %v2462 = vld [vmem:[#allocation2 + $0x50] sm:$0xff]
        %v2463 = vld [vmem:[#allocation2 + $0x58] sm:$0xff]
        %v2464 = vld [vmem:[#allocation2 + $0x60] sm:$0xff]
        %v2465 = vld [vmem:[#allocation2 + $0x68] sm:$0xff]
        %v2466 = vld [vmem:[#allocation2 + $0x70] sm:$0xff]
        %v2467 = vld [vmem:[#allocation2 + $0x78] sm:$0xff]
        %v2468 = vadd.f32 %v404, %v420
        %v2469 = vadd.f32 %v2468, %v436
        %v2470 = vadd.f32 %v2469, %v452
        %v2471 = vadd.f32 %v2470, %v468
        %v2472 = vadd.f32 %v2471, %v484
        %v2473 = vadd.f32 %v2472, %v500
        %v2474 = vadd.f32 %v2473, %v516
        %v2475 = vadd.f32 %v2474, %v532
        %v2476 = vadd.f32 %v2475, %v548
        %v2477 = vadd.f32 %v2476, %v564
        %v2478 = vadd.f32 %v2477, %v580
        %v2479 = vadd.f32 %v2478, %v596
        %v2480 = vadd.f32 %v2479, %v612
        %v2481 = vadd.f32 %v2480, %v628
        %v2482 = vadd.f32 %v2481, %v644
        %v2483 = vrot.slane %v2482, 4
        %v2484 = vadd.f32 %v2482, %v2483
        %v2485 = vrot.slane %v2484, 2
        %v2486 = vadd.f32 %v2484, %v2485
        %v2487 = vrot.slane %v2486, 1
        %v2488 = vadd.f32 %v2486, %v2487
        %v2489 = vadd.f32 %v405, %v421
        %v2490 = vadd.f32 %v2489, %v437
        %v2491 = vadd.f32 %v2490, %v453
        %v2492 = vadd.f32 %v2491, %v469
        %v2493 = vadd.f32 %v2492, %v485
        %v2494 = vadd.f32 %v2493, %v501
        %v2495 = vadd.f32 %v2494, %v517
        %v2496 = vadd.f32 %v2495, %v533
        %v2497 = vadd.f32 %v2496, %v549
        %v2498 = vadd.f32 %v2497, %v565
        %v2499 = vadd.f32 %v2498, %v581
        %v2500 = vadd.f32 %v2499, %v597
        %v2501 = vadd.f32 %v2500, %v613
        %v2502 = vadd.f32 %v2501, %v629
        %v2503 = vadd.f32 %v2502, %v645
        %v2504 = vrot.slane %v2503, 4
        %v2505 = vadd.f32 %v2503, %v2504
        %v2506 = vrot.slane %v2505, 2
        %v2507 = vadd.f32 %v2505, %v2506
        %v2508 = vrot.slane %v2507, 1
        %v2509 = vadd.f32 %v2507, %v2508
        %v2510 = vadd.f32 %v406, %v422
        %v2511 = vadd.f32 %v2510, %v438
        %v2512 = vadd.f32 %v2511, %v454
        %v2513 = vadd.f32 %v2512, %v470
        %v2514 = vadd.f32 %v2513, %v486
        %v2515 = vadd.f32 %v2514, %v502
        %v2516 = vadd.f32 %v2515, %v518
        %v2517 = vadd.f32 %v2516, %v534
        %v2518 = vadd.f32 %v2517, %v550
        %v2519 = vadd.f32 %v2518, %v566
        %v2520 = vadd.f32 %v2519, %v582
        %v2521 = vadd.f32 %v2520, %v598
        %v2522 = vadd.f32 %v2521, %v614
        %v2523 = vadd.f32 %v2522, %v630
        %v2524 = vadd.f32 %v2523, %v646
        %v2525 = vrot.slane %v2524, 4
        %v2526 = vadd.f32 %v2524, %v2525
        %v2527 = vrot.slane %v2526, 2
        %v2528 = vadd.f32 %v2526, %v2527
        %v2529 = vrot.slane %v2528, 1
        %v2530 = vadd.f32 %v2528, %v2529
        %v2531 = vadd.f32 %v407, %v423
        %v2532 = vadd.f32 %v2531, %v439
        %v2533 = vadd.f32 %v2532, %v455
        %v2534 = vadd.f32 %v2533, %v471
        %v2535 = vadd.f32 %v2534, %v487
        %v2536 = vadd.f32 %v2535, %v503
        %v2537 = vadd.f32 %v2536, %v519
        %v2538 = vadd.f32 %v2537, %v535
        %v2539 = vadd.f32 %v2538, %v551
        %v2540 = vadd.f32 %v2539, %v567
        %v2541 = vadd.f32 %v2540, %v583
        %v2542 = vadd.f32 %v2541, %v599
        %v2543 = vadd.f32 %v2542, %v615
        %v2544 = vadd.f32 %v2543, %v631
        %v2545 = vadd.f32 %v2544, %v647
        %v2546 = vrot.slane %v2545, 4
        %v2547 = vadd.f32 %v2545, %v2546
        %v2548 = vrot.slane %v2547, 2
        %v2549 = vadd.f32 %v2547, %v2548
        %v2550 = vrot.slane %v2549, 1
        %v2551 = vadd.f32 %v2549, %v2550
        %v2552 = vadd.f32 %v408, %v424
        %v2553 = vadd.f32 %v2552, %v440
        %v2554 = vadd.f32 %v2553, %v456
        %v2555 = vadd.f32 %v2554, %v472
        %v2556 = vadd.f32 %v2555, %v488
        %v2557 = vadd.f32 %v2556, %v504
        %v2558 = vadd.f32 %v2557, %v520
        %v2559 = vadd.f32 %v2558, %v536
        %v2560 = vadd.f32 %v2559, %v552
        %v2561 = vadd.f32 %v2560, %v568
        %v2562 = vadd.f32 %v2561, %v584
        %v2563 = vadd.f32 %v2562, %v600
        %v2564 = vadd.f32 %v2563, %v616
        %v2565 = vadd.f32 %v2564, %v632
        %v2566 = vadd.f32 %v2565, %v648
        %v2567 = vrot.slane %v2566, 4
        %v2568 = vadd.f32 %v2566, %v2567
        %v2569 = vrot.slane %v2568, 2
        %v2570 = vadd.f32 %v2568, %v2569
        %v2571 = vrot.slane %v2570, 1
        %v2572 = vadd.f32 %v2570, %v2571
        %v2573 = vadd.f32 %v409, %v425
        %v2574 = vadd.f32 %v2573, %v441
        %v2575 = vadd.f32 %v2574, %v457
        %v2576 = vadd.f32 %v2575, %v473
        %v2577 = vadd.f32 %v2576, %v489
        %v2578 = vadd.f32 %v2577, %v505
        %v2579 = vadd.f32 %v2578, %v521
        %v2580 = vadd.f32 %v2579, %v537
        %v2581 = vadd.f32 %v2580, %v553
        %v2582 = vadd.f32 %v2581, %v569
        %v2583 = vadd.f32 %v2582, %v585
        %v2584 = vadd.f32 %v2583, %v601
        %v2585 = vadd.f32 %v2584, %v617
        %v2586 = vadd.f32 %v2585, %v633
        %v2587 = vadd.f32 %v2586, %v649
        %v2588 = vrot.slane %v2587, 4
        %v2589 = vadd.f32 %v2587, %v2588
        %v2590 = vrot.slane %v2589, 2
        %v2591 = vadd.f32 %v2589, %v2590
        %v2592 = vrot.slane %v2591, 1
        %v2593 = vadd.f32 %v2591, %v2592
        %v2594 = vadd.f32 %v410, %v426
        %v2595 = vadd.f32 %v2594, %v442
        %v2596 = vadd.f32 %v2595, %v458
        %v2597 = vadd.f32 %v2596, %v474
        %v2598 = vadd.f32 %v2597, %v490
        %v2599 = vadd.f32 %v2598, %v506
        %v2600 = vadd.f32 %v2599, %v522
        %v2601 = vadd.f32 %v2600, %v538
        %v2602 = vadd.f32 %v2601, %v554
        %v2603 = vadd.f32 %v2602, %v570
        %v2604 = vadd.f32 %v2603, %v586
        %v2605 = vadd.f32 %v2604, %v602
        %v2606 = vadd.f32 %v2605, %v618
        %v2607 = vadd.f32 %v2606, %v634
        %v2608 = vadd.f32 %v2607, %v650
        %v2609 = vrot.slane %v2608, 4
        %v2610 = vadd.f32 %v2608, %v2609
        %v2611 = vrot.slane %v2610, 2
        %v2612 = vadd.f32 %v2610, %v2611
        %v2613 = vrot.slane %v2612, 1
        %v2614 = vadd.f32 %v2612, %v2613
        %v2615 = vadd.f32 %v411, %v427
        %v2616 = vadd.f32 %v2615, %v443
        %v2617 = vadd.f32 %v2616, %v459
        %v2618 = vadd.f32 %v2617, %v475
        %v2619 = vadd.f32 %v2618, %v491
        %v2620 = vadd.f32 %v2619, %v507
        %v2621 = vadd.f32 %v2620, %v523
        %v2622 = vadd.f32 %v2621, %v539
        %v2623 = vadd.f32 %v2622, %v555
        %v2624 = vadd.f32 %v2623, %v571
        %v2625 = vadd.f32 %v2624, %v587
        %v2626 = vadd.f32 %v2625, %v603
        %v2627 = vadd.f32 %v2626, %v619
        %v2628 = vadd.f32 %v2627, %v635
        %v2629 = vadd.f32 %v2628, %v651
        %v2630 = vrot.slane %v2629, 4
        %v2631 = vadd.f32 %v2629, %v2630
        %v2632 = vrot.slane %v2631, 2
        %v2633 = vadd.f32 %v2631, %v2632
        %v2634 = vrot.slane %v2633, 1
        %v2635 = vadd.f32 %v2633, %v2634
        %v2636 = vadd.f32 %v412, %v428
        %v2637 = vadd.f32 %v2636, %v444
        %v2638 = vadd.f32 %v2637, %v460
        %v2639 = vadd.f32 %v2638, %v476
        %v2640 = vadd.f32 %v2639, %v492
        %v2641 = vadd.f32 %v2640, %v508
        %v2642 = vadd.f32 %v2641, %v524
        %v2643 = vadd.f32 %v2642, %v540
        %v2644 = vadd.f32 %v2643, %v556
        %v2645 = vadd.f32 %v2644, %v572
        %v2646 = vadd.f32 %v2645, %v588
        %v2647 = vadd.f32 %v2646, %v604
        %v2648 = vadd.f32 %v2647, %v620
        %v2649 = vadd.f32 %v2648, %v636
        %v2650 = vadd.f32 %v2649, %v652
        %v2651 = vrot.slane %v2650, 4
        %v2652 = vadd.f32 %v2650, %v2651
        %v2653 = vrot.slane %v2652, 2
        %v2654 = vadd.f32 %v2652, %v2653
        %v2655 = vrot.slane %v2654, 1
        %v2656 = vadd.f32 %v2654, %v2655
        %v2657 = vadd.f32 %v413, %v429
        %v2658 = vadd.f32 %v2657, %v445
        %v2659 = vadd.f32 %v2658, %v461
        %v2660 = vadd.f32 %v2659, %v477
        %v2661 = vadd.f32 %v2660, %v493
        %v2662 = vadd.f32 %v2661, %v509
        %v2663 = vadd.f32 %v2662, %v525
        %v2664 = vadd.f32 %v2663, %v541
        %v2665 = vadd.f32 %v2664, %v557
        %v2666 = vadd.f32 %v2665, %v573
        %v2667 = vadd.f32 %v2666, %v589
        %v2668 = vadd.f32 %v2667, %v605
        %v2669 = vadd.f32 %v2668, %v621
        %v2670 = vadd.f32 %v2669, %v637
        %v2671 = vadd.f32 %v2670, %v653
        %v2672 = vrot.slane %v2671, 4
        %v2673 = vadd.f32 %v2671, %v2672
        %v2674 = vrot.slane %v2673, 2
        %v2675 = vadd.f32 %v2673, %v2674
        %v2676 = vrot.slane %v2675, 1
        %v2677 = vadd.f32 %v2675, %v2676
        %v2678 = vadd.f32 %v414, %v430
        %v2679 = vadd.f32 %v2678, %v446
        %v2680 = vadd.f32 %v2679, %v462
        %v2681 = vadd.f32 %v2680, %v478
        %v2682 = vadd.f32 %v2681, %v494
        %v2683 = vadd.f32 %v2682, %v510
        %v2684 = vadd.f32 %v2683, %v526
        %v2685 = vadd.f32 %v2684, %v542
        %v2686 = vadd.f32 %v2685, %v558
        %v2687 = vadd.f32 %v2686, %v574
        %v2688 = vadd.f32 %v2687, %v590
        %v2689 = vadd.f32 %v2688, %v606
        %v2690 = vadd.f32 %v2689, %v622
        %v2691 = vadd.f32 %v2690, %v638
        %v2692 = vadd.f32 %v2691, %v654
        %v2693 = vrot.slane %v2692, 4
        %v2694 = vadd.f32 %v2692, %v2693
        %v2695 = vrot.slane %v2694, 2
        %v2696 = vadd.f32 %v2694, %v2695
        %v2697 = vrot.slane %v2696, 1
        %v2698 = vadd.f32 %v2696, %v2697
        %v2699 = vadd.f32 %v415, %v431
        %v2700 = vadd.f32 %v2699, %v447
        %v2701 = vadd.f32 %v2700, %v463
        %v2702 = vadd.f32 %v2701, %v479
        %v2703 = vadd.f32 %v2702, %v495
        %v2704 = vadd.f32 %v2703, %v511
        %v2705 = vadd.f32 %v2704, %v527
        %v2706 = vadd.f32 %v2705, %v543
        %v2707 = vadd.f32 %v2706, %v559
        %v2708 = vadd.f32 %v2707, %v575
        %v2709 = vadd.f32 %v2708, %v591
        %v2710 = vadd.f32 %v2709, %v607
        %v2711 = vadd.f32 %v2710, %v623
        %v2712 = vadd.f32 %v2711, %v639
        %v2713 = vadd.f32 %v2712, %v655
        %v2714 = vrot.slane %v2713, 4
        %v2715 = vadd.f32 %v2713, %v2714
        %v2716 = vrot.slane %v2715, 2
        %v2717 = vadd.f32 %v2715, %v2716
        %v2718 = vrot.slane %v2717, 1
        %v2719 = vadd.f32 %v2717, %v2718
        %v2720 = vadd.f32 %v416, %v432
        %v2721 = vadd.f32 %v2720, %v448
        %v2722 = vadd.f32 %v2721, %v464
        %v2723 = vadd.f32 %v2722, %v480
        %v2724 = vadd.f32 %v2723, %v496
        %v2725 = vadd.f32 %v2724, %v512
        %v2726 = vadd.f32 %v2725, %v528
        %v2727 = vadd.f32 %v2726, %v544
        %v2728 = vadd.f32 %v2727, %v560
        %v2729 = vadd.f32 %v2728, %v576
        %v2730 = vadd.f32 %v2729, %v592
        %v2731 = vadd.f32 %v2730, %v608
        %v2732 = vadd.f32 %v2731, %v624
        %v2733 = vadd.f32 %v2732, %v640
        %v2734 = vadd.f32 %v2733, %v656
        %v2735 = vrot.slane %v2734, 4
        %v2736 = vadd.f32 %v2734, %v2735
        %v2737 = vrot.slane %v2736, 2
        %v2738 = vadd.f32 %v2736, %v2737
        %v2739 = vrot.slane %v2738, 1
        %v2740 = vadd.f32 %v2738, %v2739
        %v2741 = vadd.f32 %v417, %v433
        %v2742 = vadd.f32 %v2741, %v449
        %v2743 = vadd.f32 %v2742, %v465
        %v2744 = vadd.f32 %v2743, %v481
        %v2745 = vadd.f32 %v2744, %v497
        %v2746 = vadd.f32 %v2745, %v513
        %v2747 = vadd.f32 %v2746, %v529
        %v2748 = vadd.f32 %v2747, %v545
        %v2749 = vadd.f32 %v2748, %v561
        %v2750 = vadd.f32 %v2749, %v577
        %v2751 = vadd.f32 %v2750, %v593
        %v2752 = vadd.f32 %v2751, %v609
        %v2753 = vadd.f32 %v2752, %v625
        %v2754 = vadd.f32 %v2753, %v641
        %v2755 = vadd.f32 %v2754, %v657
        %v2756 = vrot.slane %v2755, 4
        %v2757 = vadd.f32 %v2755, %v2756
        %v2758 = vrot.slane %v2757, 2
        %v2759 = vadd.f32 %v2757, %v2758
        %v2760 = vrot.slane %v2759, 1
        %v2761 = vadd.f32 %v2759, %v2760
        %v2762 = vadd.f32 %v418, %v434
        %v2763 = vadd.f32 %v2762, %v450
        %v2764 = vadd.f32 %v2763, %v466
        %v2765 = vadd.f32 %v2764, %v482
        %v2766 = vadd.f32 %v2765, %v498
        %v2767 = vadd.f32 %v2766, %v514
        %v2768 = vadd.f32 %v2767, %v530
        %v2769 = vadd.f32 %v2768, %v546
        %v2770 = vadd.f32 %v2769, %v562
        %v2771 = vadd.f32 %v2770, %v578
        %v2772 = vadd.f32 %v2771, %v594
        %v2773 = vadd.f32 %v2772, %v610
        %v2774 = vadd.f32 %v2773, %v626
        %v2775 = vadd.f32 %v2774, %v642
        %v2776 = vadd.f32 %v2775, %v658
        %v2777 = vrot.slane %v2776, 4
        %v2778 = vadd.f32 %v2776, %v2777
        %v2779 = vrot.slane %v2778, 2
        %v2780 = vadd.f32 %v2778, %v2779
        %v2781 = vrot.slane %v2780, 1
        %v2782 = vadd.f32 %v2780, %v2781
        %v2783 = vadd.f32 %v419, %v435
        %v2784 = vadd.f32 %v2783, %v451
        %v2785 = vadd.f32 %v2784, %v467
        %v2786 = vadd.f32 %v2785, %v483
        %v2787 = vadd.f32 %v2786, %v499
        %v2788 = vadd.f32 %v2787, %v515
        %v2789 = vadd.f32 %v2788, %v531
        %v2790 = vadd.f32 %v2789, %v547
        %v2791 = vadd.f32 %v2790, %v563
        %v2792 = vadd.f32 %v2791, %v579
        %v2793 = vadd.f32 %v2792, %v595
        %v2794 = vadd.f32 %v2793, %v611
        %v2795 = vadd.f32 %v2794, %v627
        %v2796 = vadd.f32 %v2795, %v643
        %v2797 = vadd.f32 %v2796, %v659
        %v2798 = vrot.slane %v2797, 4
        %v2799 = vadd.f32 %v2797, %v2798
        %v2800 = vrot.slane %v2799, 2
        %v2801 = vadd.f32 %v2799, %v2800
        %v2802 = vrot.slane %v2801, 1
        %v2803 = vadd.f32 %v2801, %v2802
        %v2804 = vadd.f32 %v660, %v676
        %v2805 = vadd.f32 %v2804, %v692
        %v2806 = vadd.f32 %v2805, %v708
        %v2807 = vadd.f32 %v2806, %v724
        %v2808 = vadd.f32 %v2807, %v740
        %v2809 = vadd.f32 %v2808, %v756
        %v2810 = vadd.f32 %v2809, %v772
        %v2811 = vadd.f32 %v2810, %v788
        %v2812 = vadd.f32 %v2811, %v804
        %v2813 = vadd.f32 %v2812, %v820
        %v2814 = vadd.f32 %v2813, %v836
        %v2815 = vadd.f32 %v2814, %v852
        %v2816 = vadd.f32 %v2815, %v868
        %v2817 = vadd.f32 %v2816, %v884
        %v2818 = vadd.f32 %v2817, %v900
        %v2819 = vrot.slane %v2818, 4
        %v2820 = vadd.f32 %v2818, %v2819
        %v2821 = vrot.slane %v2820, 2
        %v2822 = vadd.f32 %v2820, %v2821
        %v2823 = vrot.slane %v2822, 1
        %v2824 = vadd.f32 %v2822, %v2823
        %v2825 = vadd.f32 %v661, %v677
        %v2826 = vadd.f32 %v2825, %v693
        %v2827 = vadd.f32 %v2826, %v709
        %v2828 = vadd.f32 %v2827, %v725
        %v2829 = vadd.f32 %v2828, %v741
        %v2830 = vadd.f32 %v2829, %v757
        %v2831 = vadd.f32 %v2830, %v773
        %v2832 = vadd.f32 %v2831, %v789
        %v2833 = vadd.f32 %v2832, %v805
        %v2834 = vadd.f32 %v2833, %v821
        %v2835 = vadd.f32 %v2834, %v837
        %v2836 = vadd.f32 %v2835, %v853
        %v2837 = vadd.f32 %v2836, %v869
        %v2838 = vadd.f32 %v2837, %v885
        %v2839 = vadd.f32 %v2838, %v901
        %v2840 = vrot.slane %v2839, 4
        %v2841 = vadd.f32 %v2839, %v2840
        %v2842 = vrot.slane %v2841, 2
        %v2843 = vadd.f32 %v2841, %v2842
        %v2844 = vrot.slane %v2843, 1
        %v2845 = vadd.f32 %v2843, %v2844
        %v2846 = vadd.f32 %v662, %v678
        %v2847 = vadd.f32 %v2846, %v694
        %v2848 = vadd.f32 %v2847, %v710
        %v2849 = vadd.f32 %v2848, %v726
        %v2850 = vadd.f32 %v2849, %v742
        %v2851 = vadd.f32 %v2850, %v758
        %v2852 = vadd.f32 %v2851, %v774
        %v2853 = vadd.f32 %v2852, %v790
        %v2854 = vadd.f32 %v2853, %v806
        %v2855 = vadd.f32 %v2854, %v822
        %v2856 = vadd.f32 %v2855, %v838
        %v2857 = vadd.f32 %v2856, %v854
        %v2858 = vadd.f32 %v2857, %v870
        %v2859 = vadd.f32 %v2858, %v886
        %v2860 = vadd.f32 %v2859, %v902
        %v2861 = vrot.slane %v2860, 4
        %v2862 = vadd.f32 %v2860, %v2861
        %v2863 = vrot.slane %v2862, 2
        %v2864 = vadd.f32 %v2862, %v2863
        %v2865 = vrot.slane %v2864, 1
        %v2866 = vadd.f32 %v2864, %v2865
        %v2867 = vadd.f32 %v663, %v679
        %v2868 = vadd.f32 %v2867, %v695
        %v2869 = vadd.f32 %v2868, %v711
        %v2870 = vadd.f32 %v2869, %v727
        %v2871 = vadd.f32 %v2870, %v743
        %v2872 = vadd.f32 %v2871, %v759
        %v2873 = vadd.f32 %v2872, %v775
        %v2874 = vadd.f32 %v2873, %v791
        %v2875 = vadd.f32 %v2874, %v807
        %v2876 = vadd.f32 %v2875, %v823
        %v2877 = vadd.f32 %v2876, %v839
        %v2878 = vadd.f32 %v2877, %v855
        %v2879 = vadd.f32 %v2878, %v871
        %v2880 = vadd.f32 %v2879, %v887
        %v2881 = vadd.f32 %v2880, %v903
        %v2882 = vrot.slane %v2881, 4
        %v2883 = vadd.f32 %v2881, %v2882
        %v2884 = vrot.slane %v2883, 2
        %v2885 = vadd.f32 %v2883, %v2884
        %v2886 = vrot.slane %v2885, 1
        %v2887 = vadd.f32 %v2885, %v2886
        %v2888 = vadd.f32 %v664, %v680
        %v2889 = vadd.f32 %v2888, %v696
        %v2890 = vadd.f32 %v2889, %v712
        %v2891 = vadd.f32 %v2890, %v728
        %v2892 = vadd.f32 %v2891, %v744
        %v2893 = vadd.f32 %v2892, %v760
        %v2894 = vadd.f32 %v2893, %v776
        %v2895 = vadd.f32 %v2894, %v792
        %v2896 = vadd.f32 %v2895, %v808
        %v2897 = vadd.f32 %v2896, %v824
        %v2898 = vadd.f32 %v2897, %v840
        %v2899 = vadd.f32 %v2898, %v856
        %v2900 = vadd.f32 %v2899, %v872
        %v2901 = vadd.f32 %v2900, %v888
        %v2902 = vadd.f32 %v2901, %v904
        %v2903 = vrot.slane %v2902, 4
        %v2904 = vadd.f32 %v2902, %v2903
        %v2905 = vrot.slane %v2904, 2
        %v2906 = vadd.f32 %v2904, %v2905
        %v2907 = vrot.slane %v2906, 1
        %v2908 = vadd.f32 %v2906, %v2907
        %v2909 = vadd.f32 %v665, %v681
        %v2910 = vadd.f32 %v2909, %v697
        %v2911 = vadd.f32 %v2910, %v713
        %v2912 = vadd.f32 %v2911, %v729
        %v2913 = vadd.f32 %v2912, %v745
        %v2914 = vadd.f32 %v2913, %v761
        %v2915 = vadd.f32 %v2914, %v777
        %v2916 = vadd.f32 %v2915, %v793
        %v2917 = vadd.f32 %v2916, %v809
        %v2918 = vadd.f32 %v2917, %v825
        %v2919 = vadd.f32 %v2918, %v841
        %v2920 = vadd.f32 %v2919, %v857
        %v2921 = vadd.f32 %v2920, %v873
        %v2922 = vadd.f32 %v2921, %v889
        %v2923 = vadd.f32 %v2922, %v905
        %v2924 = vrot.slane %v2923, 4
        %v2925 = vadd.f32 %v2923, %v2924
        %v2926 = vrot.slane %v2925, 2
        %v2927 = vadd.f32 %v2925, %v2926
        %v2928 = vrot.slane %v2927, 1
        %v2929 = vadd.f32 %v2927, %v2928
        %v2930 = vadd.f32 %v666, %v682
        %v2931 = vadd.f32 %v2930, %v698
        %v2932 = vadd.f32 %v2931, %v714
        %v2933 = vadd.f32 %v2932, %v730
        %v2934 = vadd.f32 %v2933, %v746
        %v2935 = vadd.f32 %v2934, %v762
        %v2936 = vadd.f32 %v2935, %v778
        %v2937 = vadd.f32 %v2936, %v794
        %v2938 = vadd.f32 %v2937, %v810
        %v2939 = vadd.f32 %v2938, %v826
        %v2940 = vadd.f32 %v2939, %v842
        %v2941 = vadd.f32 %v2940, %v858
        %v2942 = vadd.f32 %v2941, %v874
        %v2943 = vadd.f32 %v2942, %v890
        %v2944 = vadd.f32 %v2943, %v906
        %v2945 = vrot.slane %v2944, 4
        %v2946 = vadd.f32 %v2944, %v2945
        %v2947 = vrot.slane %v2946, 2
        %v2948 = vadd.f32 %v2946, %v2947
        %v2949 = vrot.slane %v2948, 1
        %v2950 = vadd.f32 %v2948, %v2949
        %v2951 = vadd.f32 %v667, %v683
        %v2952 = vadd.f32 %v2951, %v699
        %v2953 = vadd.f32 %v2952, %v715
        %v2954 = vadd.f32 %v2953, %v731
        %v2955 = vadd.f32 %v2954, %v747
        %v2956 = vadd.f32 %v2955, %v763
        %v2957 = vadd.f32 %v2956, %v779
        %v2958 = vadd.f32 %v2957, %v795
        %v2959 = vadd.f32 %v2958, %v811
        %v2960 = vadd.f32 %v2959, %v827
        %v2961 = vadd.f32 %v2960, %v843
        %v2962 = vadd.f32 %v2961, %v859
        %v2963 = vadd.f32 %v2962, %v875
        %v2964 = vadd.f32 %v2963, %v891
        %v2965 = vadd.f32 %v2964, %v907
        %v2966 = vrot.slane %v2965, 4
        %v2967 = vadd.f32 %v2965, %v2966
        %v2968 = vrot.slane %v2967, 2
        %v2969 = vadd.f32 %v2967, %v2968
        %v2970 = vrot.slane %v2969, 1
        %v2971 = vadd.f32 %v2969, %v2970
        %v2972 = vadd.f32 %v668, %v684
        %v2973 = vadd.f32 %v2972, %v700
        %v2974 = vadd.f32 %v2973, %v716
        %v2975 = vadd.f32 %v2974, %v732
        %v2976 = vadd.f32 %v2975, %v748
        %v2977 = vadd.f32 %v2976, %v764
        %v2978 = vadd.f32 %v2977, %v780
        %v2979 = vadd.f32 %v2978, %v796
        %v2980 = vadd.f32 %v2979, %v812
        %v2981 = vadd.f32 %v2980, %v828
        %v2982 = vadd.f32 %v2981, %v844
        %v2983 = vadd.f32 %v2982, %v860
        %v2984 = vadd.f32 %v2983, %v876
        %v2985 = vadd.f32 %v2984, %v892
        %v2986 = vadd.f32 %v2985, %v908
        %v2987 = vrot.slane %v2986, 4
        %v2988 = vadd.f32 %v2986, %v2987
        %v2989 = vrot.slane %v2988, 2
        %v2990 = vadd.f32 %v2988, %v2989
        %v2991 = vrot.slane %v2990, 1
        %v2992 = vadd.f32 %v2990, %v2991
        %v2993 = vadd.f32 %v669, %v685
        %v2994 = vadd.f32 %v2993, %v701
        %v2995 = vadd.f32 %v2994, %v717
        %v2996 = vadd.f32 %v2995, %v733
        %v2997 = vadd.f32 %v2996, %v749
        %v2998 = vadd.f32 %v2997, %v765
        %v2999 = vadd.f32 %v2998, %v781
        %v3000 = vadd.f32 %v2999, %v797
        %v3001 = vadd.f32 %v3000, %v813
        %v3002 = vadd.f32 %v3001, %v829
        %v3003 = vadd.f32 %v3002, %v845
        %v3004 = vadd.f32 %v3003, %v861
        %v3005 = vadd.f32 %v3004, %v877
        %v3006 = vadd.f32 %v3005, %v893
        %v3007 = vadd.f32 %v3006, %v909
        %v3008 = vrot.slane %v3007, 4
        %v3009 = vadd.f32 %v3007, %v3008
        %v3010 = vrot.slane %v3009, 2
        %v3011 = vadd.f32 %v3009, %v3010
        %v3012 = vrot.slane %v3011, 1
        %v3013 = vadd.f32 %v3011, %v3012
        %v3014 = vadd.f32 %v670, %v686
        %v3015 = vadd.f32 %v3014, %v702
        %v3016 = vadd.f32 %v3015, %v718
        %v3017 = vadd.f32 %v3016, %v734
        %v3018 = vadd.f32 %v3017, %v750
        %v3019 = vadd.f32 %v3018, %v766
        %v3020 = vadd.f32 %v3019, %v782
        %v3021 = vadd.f32 %v3020, %v798
        %v3022 = vadd.f32 %v3021, %v814
        %v3023 = vadd.f32 %v3022, %v830
        %v3024 = vadd.f32 %v3023, %v846
        %v3025 = vadd.f32 %v3024, %v862
        %v3026 = vadd.f32 %v3025, %v878
        %v3027 = vadd.f32 %v3026, %v894
        %v3028 = vadd.f32 %v3027, %v910
        %v3029 = vrot.slane %v3028, 4
        %v3030 = vadd.f32 %v3028, %v3029
        %v3031 = vrot.slane %v3030, 2
        %v3032 = vadd.f32 %v3030, %v3031
        %v3033 = vrot.slane %v3032, 1
        %v3034 = vadd.f32 %v3032, %v3033
        %v3035 = vadd.f32 %v671, %v687
        %v3036 = vadd.f32 %v3035, %v703
        %v3037 = vadd.f32 %v3036, %v719
        %v3038 = vadd.f32 %v3037, %v735
        %v3039 = vadd.f32 %v3038, %v751
        %v3040 = vadd.f32 %v3039, %v767
        %v3041 = vadd.f32 %v3040, %v783
        %v3042 = vadd.f32 %v3041, %v799
        %v3043 = vadd.f32 %v3042, %v815
        %v3044 = vadd.f32 %v3043, %v831
        %v3045 = vadd.f32 %v3044, %v847
        %v3046 = vadd.f32 %v3045, %v863
        %v3047 = vadd.f32 %v3046, %v879
        %v3048 = vadd.f32 %v3047, %v895
        %v3049 = vadd.f32 %v3048, %v911
        %v3050 = vrot.slane %v3049, 4
        %v3051 = vadd.f32 %v3049, %v3050
        %v3052 = vrot.slane %v3051, 2
        %v3053 = vadd.f32 %v3051, %v3052
        %v3054 = vrot.slane %v3053, 1
        %v3055 = vadd.f32 %v3053, %v3054
        %v3056 = vadd.f32 %v672, %v688
        %v3057 = vadd.f32 %v3056, %v704
        %v3058 = vadd.f32 %v3057, %v720
        %v3059 = vadd.f32 %v3058, %v736
        %v3060 = vadd.f32 %v3059, %v752
        %v3061 = vadd.f32 %v3060, %v768
        %v3062 = vadd.f32 %v3061, %v784
        %v3063 = vadd.f32 %v3062, %v800
        %v3064 = vadd.f32 %v3063, %v816
        %v3065 = vadd.f32 %v3064, %v832
        %v3066 = vadd.f32 %v3065, %v848
        %v3067 = vadd.f32 %v3066, %v864
        %v3068 = vadd.f32 %v3067, %v880
        %v3069 = vadd.f32 %v3068, %v896
        %v3070 = vadd.f32 %v3069, %v912
        %v3071 = vrot.slane %v3070, 4
        %v3072 = vadd.f32 %v3070, %v3071
        %v3073 = vrot.slane %v3072, 2
        %v3074 = vadd.f32 %v3072, %v3073
        %v3075 = vrot.slane %v3074, 1
        %v3076 = vadd.f32 %v3074, %v3075
        %v3077 = vadd.f32 %v673, %v689
        %v3078 = vadd.f32 %v3077, %v705
        %v3079 = vadd.f32 %v3078, %v721
        %v3080 = vadd.f32 %v3079, %v737
        %v3081 = vadd.f32 %v3080, %v753
        %v3082 = vadd.f32 %v3081, %v769
        %v3083 = vadd.f32 %v3082, %v785
        %v3084 = vadd.f32 %v3083, %v801
        %v3085 = vadd.f32 %v3084, %v817
        %v3086 = vadd.f32 %v3085, %v833
        %v3087 = vadd.f32 %v3086, %v849
        %v3088 = vadd.f32 %v3087, %v865
        %v3089 = vadd.f32 %v3088, %v881
        %v3090 = vadd.f32 %v3089, %v897
        %v3091 = vadd.f32 %v3090, %v913
        %v3092 = vrot.slane %v3091, 4
        %v3093 = vadd.f32 %v3091, %v3092
        %v3094 = vrot.slane %v3093, 2
        %v3095 = vadd.f32 %v3093, %v3094
        %v3096 = vrot.slane %v3095, 1
        %v3097 = vadd.f32 %v3095, %v3096
        %v3098 = vadd.f32 %v674, %v690
        %v3099 = vadd.f32 %v3098, %v706
        %v3100 = vadd.f32 %v3099, %v722
        %v3101 = vadd.f32 %v3100, %v738
        %v3102 = vadd.f32 %v3101, %v754
        %v3103 = vadd.f32 %v3102, %v770
        %v3104 = vadd.f32 %v3103, %v786
        %v3105 = vadd.f32 %v3104, %v802
        %v3106 = vadd.f32 %v3105, %v818
        %v3107 = vadd.f32 %v3106, %v834
        %v3108 = vadd.f32 %v3107, %v850
        %v3109 = vadd.f32 %v3108, %v866
        %v3110 = vadd.f32 %v3109, %v882
        %v3111 = vadd.f32 %v3110, %v898
        %v3112 = vadd.f32 %v3111, %v914
        %v3113 = vrot.slane %v3112, 4
        %v3114 = vadd.f32 %v3112, %v3113
        %v3115 = vrot.slane %v3114, 2
        %v3116 = vadd.f32 %v3114, %v3115
        %v3117 = vrot.slane %v3116, 1
        %v3118 = vadd.f32 %v3116, %v3117
        %v3119 = vadd.f32 %v675, %v691
        %v3120 = vadd.f32 %v3119, %v707
        %v3121 = vadd.f32 %v3120, %v723
        %v3122 = vadd.f32 %v3121, %v739
        %v3123 = vadd.f32 %v3122, %v755
        %v3124 = vadd.f32 %v3123, %v771
        %v3125 = vadd.f32 %v3124, %v787
        %v3126 = vadd.f32 %v3125, %v803
        %v3127 = vadd.f32 %v3126, %v819
        %v3128 = vadd.f32 %v3127, %v835
        %v3129 = vadd.f32 %v3128, %v851
        %v3130 = vadd.f32 %v3129, %v867
        %v3131 = vadd.f32 %v3130, %v883
        %v3132 = vadd.f32 %v3131, %v899
        %v3133 = vadd.f32 %v3132, %v915
        %v3134 = vrot.slane %v3133, 4
        %v3135 = vadd.f32 %v3133, %v3134
        %v3136 = vrot.slane %v3135, 2
        %v3137 = vadd.f32 %v3135, %v3136
        %v3138 = vrot.slane %v3137, 1
        %v3139 = vadd.f32 %v3137, %v3138
        %v3140 = vadd.f32 %v916, %v932
        %v3141 = vadd.f32 %v3140, %v948
        %v3142 = vadd.f32 %v3141, %v964
        %v3143 = vadd.f32 %v3142, %v980
        %v3144 = vadd.f32 %v3143, %v996
        %v3145 = vadd.f32 %v3144, %v1012
        %v3146 = vadd.f32 %v3145, %v1028
        %v3147 = vadd.f32 %v3146, %v1044
        %v3148 = vadd.f32 %v3147, %v1060
        %v3149 = vadd.f32 %v3148, %v1076
        %v3150 = vadd.f32 %v3149, %v1092
        %v3151 = vadd.f32 %v3150, %v1108
        %v3152 = vadd.f32 %v3151, %v1124
        %v3153 = vadd.f32 %v3152, %v1140
        %v3154 = vadd.f32 %v3153, %v1156
        %v3155 = vrot.slane %v3154, 4
        %v3156 = vadd.f32 %v3154, %v3155
        %v3157 = vrot.slane %v3156, 2
        %v3158 = vadd.f32 %v3156, %v3157
        %v3159 = vrot.slane %v3158, 1
        %v3160 = vadd.f32 %v3158, %v3159
        %v3161 = vadd.f32 %v917, %v933
        %v3162 = vadd.f32 %v3161, %v949
        %v3163 = vadd.f32 %v3162, %v965
        %v3164 = vadd.f32 %v3163, %v981
        %v3165 = vadd.f32 %v3164, %v997
        %v3166 = vadd.f32 %v3165, %v1013
        %v3167 = vadd.f32 %v3166, %v1029
        %v3168 = vadd.f32 %v3167, %v1045
        %v3169 = vadd.f32 %v3168, %v1061
        %v3170 = vadd.f32 %v3169, %v1077
        %v3171 = vadd.f32 %v3170, %v1093
        %v3172 = vadd.f32 %v3171, %v1109
        %v3173 = vadd.f32 %v3172, %v1125
        %v3174 = vadd.f32 %v3173, %v1141
        %v3175 = vadd.f32 %v3174, %v1157
        %v3176 = vrot.slane %v3175, 4
        %v3177 = vadd.f32 %v3175, %v3176
        %v3178 = vrot.slane %v3177, 2
        %v3179 = vadd.f32 %v3177, %v3178
        %v3180 = vrot.slane %v3179, 1
        %v3181 = vadd.f32 %v3179, %v3180
        %v3182 = vadd.f32 %v918, %v934
        %v3183 = vadd.f32 %v3182, %v950
        %v3184 = vadd.f32 %v3183, %v966
        %v3185 = vadd.f32 %v3184, %v982
        %v3186 = vadd.f32 %v3185, %v998
        %v3187 = vadd.f32 %v3186, %v1014
        %v3188 = vadd.f32 %v3187, %v1030
        %v3189 = vadd.f32 %v3188, %v1046
        %v3190 = vadd.f32 %v3189, %v1062
        %v3191 = vadd.f32 %v3190, %v1078
        %v3192 = vadd.f32 %v3191, %v1094
        %v3193 = vadd.f32 %v3192, %v1110
        %v3194 = vadd.f32 %v3193, %v1126
        %v3195 = vadd.f32 %v3194, %v1142
        %v3196 = vadd.f32 %v3195, %v1158
        %v3197 = vrot.slane %v3196, 4
        %v3198 = vadd.f32 %v3196, %v3197
        %v3199 = vrot.slane %v3198, 2
        %v3200 = vadd.f32 %v3198, %v3199
        %v3201 = vrot.slane %v3200, 1
        %v3202 = vadd.f32 %v3200, %v3201
        %v3203 = vadd.f32 %v919, %v935
        %v3204 = vadd.f32 %v3203, %v951
        %v3205 = vadd.f32 %v3204, %v967
        %v3206 = vadd.f32 %v3205, %v983
        %v3207 = vadd.f32 %v3206, %v999
        %v3208 = vadd.f32 %v3207, %v1015
        %v3209 = vadd.f32 %v3208, %v1031
        %v3210 = vadd.f32 %v3209, %v1047
        %v3211 = vadd.f32 %v3210, %v1063
        %v3212 = vadd.f32 %v3211, %v1079
        %v3213 = vadd.f32 %v3212, %v1095
        %v3214 = vadd.f32 %v3213, %v1111
        %v3215 = vadd.f32 %v3214, %v1127
        %v3216 = vadd.f32 %v3215, %v1143
        %v3217 = vadd.f32 %v3216, %v1159
        %v3218 = vrot.slane %v3217, 4
        %v3219 = vadd.f32 %v3217, %v3218
        %v3220 = vrot.slane %v3219, 2
        %v3221 = vadd.f32 %v3219, %v3220
        %v3222 = vrot.slane %v3221, 1
        %v3223 = vadd.f32 %v3221, %v3222
        %v3224 = vadd.f32 %v920, %v936
        %v3225 = vadd.f32 %v3224, %v952
        %v3226 = vadd.f32 %v3225, %v968
        %v3227 = vadd.f32 %v3226, %v984
        %v3228 = vadd.f32 %v3227, %v1000
        %v3229 = vadd.f32 %v3228, %v1016
        %v3230 = vadd.f32 %v3229, %v1032
        %v3231 = vadd.f32 %v3230, %v1048
        %v3232 = vadd.f32 %v3231, %v1064
        %v3233 = vadd.f32 %v3232, %v1080
        %v3234 = vadd.f32 %v3233, %v1096
        %v3235 = vadd.f32 %v3234, %v1112
        %v3236 = vadd.f32 %v3235, %v1128
        %v3237 = vadd.f32 %v3236, %v1144
        %v3238 = vadd.f32 %v3237, %v1160
        %v3239 = vrot.slane %v3238, 4
        %v3240 = vadd.f32 %v3238, %v3239
        %v3241 = vrot.slane %v3240, 2
        %v3242 = vadd.f32 %v3240, %v3241
        %v3243 = vrot.slane %v3242, 1
        %v3244 = vadd.f32 %v3242, %v3243
        %v3245 = vadd.f32 %v921, %v937
        %v3246 = vadd.f32 %v3245, %v953
        %v3247 = vadd.f32 %v3246, %v969
        %v3248 = vadd.f32 %v3247, %v985
        %v3249 = vadd.f32 %v3248, %v1001
        %v3250 = vadd.f32 %v3249, %v1017
        %v3251 = vadd.f32 %v3250, %v1033
        %v3252 = vadd.f32 %v3251, %v1049
        %v3253 = vadd.f32 %v3252, %v1065
        %v3254 = vadd.f32 %v3253, %v1081
        %v3255 = vadd.f32 %v3254, %v1097
        %v3256 = vadd.f32 %v3255, %v1113
        %v3257 = vadd.f32 %v3256, %v1129
        %v3258 = vadd.f32 %v3257, %v1145
        %v3259 = vadd.f32 %v3258, %v1161
        %v3260 = vrot.slane %v3259, 4
        %v3261 = vadd.f32 %v3259, %v3260
        %v3262 = vrot.slane %v3261, 2
        %v3263 = vadd.f32 %v3261, %v3262
        %v3264 = vrot.slane %v3263, 1
        %v3265 = vadd.f32 %v3263, %v3264
        %v3266 = vadd.f32 %v922, %v938
        %v3267 = vadd.f32 %v3266, %v954
        %v3268 = vadd.f32 %v3267, %v970
        %v3269 = vadd.f32 %v3268, %v986
        %v3270 = vadd.f32 %v3269, %v1002
        %v3271 = vadd.f32 %v3270, %v1018
        %v3272 = vadd.f32 %v3271, %v1034
        %v3273 = vadd.f32 %v3272, %v1050
        %v3274 = vadd.f32 %v3273, %v1066
        %v3275 = vadd.f32 %v3274, %v1082
        %v3276 = vadd.f32 %v3275, %v1098
        %v3277 = vadd.f32 %v3276, %v1114
        %v3278 = vadd.f32 %v3277, %v1130
        %v3279 = vadd.f32 %v3278, %v1146
        %v3280 = vadd.f32 %v3279, %v1162
        %v3281 = vrot.slane %v3280, 4
        %v3282 = vadd.f32 %v3280, %v3281
        %v3283 = vrot.slane %v3282, 2
        %v3284 = vadd.f32 %v3282, %v3283
        %v3285 = vrot.slane %v3284, 1
        %v3286 = vadd.f32 %v3284, %v3285
        %v3287 = vadd.f32 %v923, %v939
        %v3288 = vadd.f32 %v3287, %v955
        %v3289 = vadd.f32 %v3288, %v971
        %v3290 = vadd.f32 %v3289, %v987
        %v3291 = vadd.f32 %v3290, %v1003
        %v3292 = vadd.f32 %v3291, %v1019
        %v3293 = vadd.f32 %v3292, %v1035
        %v3294 = vadd.f32 %v3293, %v1051
        %v3295 = vadd.f32 %v3294, %v1067
        %v3296 = vadd.f32 %v3295, %v1083
        %v3297 = vadd.f32 %v3296, %v1099
        %v3298 = vadd.f32 %v3297, %v1115
        %v3299 = vadd.f32 %v3298, %v1131
        %v3300 = vadd.f32 %v3299, %v1147
        %v3301 = vadd.f32 %v3300, %v1163
        %v3302 = vrot.slane %v3301, 4
        %v3303 = vadd.f32 %v3301, %v3302
        %v3304 = vrot.slane %v3303, 2
        %v3305 = vadd.f32 %v3303, %v3304
        %v3306 = vrot.slane %v3305, 1
        %v3307 = vadd.f32 %v3305, %v3306
        %v3308 = vadd.f32 %v924, %v940
        %v3309 = vadd.f32 %v3308, %v956
        %v3310 = vadd.f32 %v3309, %v972
        %v3311 = vadd.f32 %v3310, %v988
        %v3312 = vadd.f32 %v3311, %v1004
        %v3313 = vadd.f32 %v3312, %v1020
        %v3314 = vadd.f32 %v3313, %v1036
        %v3315 = vadd.f32 %v3314, %v1052
        %v3316 = vadd.f32 %v3315, %v1068
        %v3317 = vadd.f32 %v3316, %v1084
        %v3318 = vadd.f32 %v3317, %v1100
        %v3319 = vadd.f32 %v3318, %v1116
        %v3320 = vadd.f32 %v3319, %v1132
        %v3321 = vadd.f32 %v3320, %v1148
        %v3322 = vadd.f32 %v3321, %v1164
        %v3323 = vrot.slane %v3322, 4
        %v3324 = vadd.f32 %v3322, %v3323
        %v3325 = vrot.slane %v3324, 2
        %v3326 = vadd.f32 %v3324, %v3325
        %v3327 = vrot.slane %v3326, 1
        %v3328 = vadd.f32 %v3326, %v3327
        %v3329 = vadd.f32 %v925, %v941
        %v3330 = vadd.f32 %v3329, %v957
        %v3331 = vadd.f32 %v3330, %v973
        %v3332 = vadd.f32 %v3331, %v989
        %v3333 = vadd.f32 %v3332, %v1005
        %v3334 = vadd.f32 %v3333, %v1021
        %v3335 = vadd.f32 %v3334, %v1037
        %v3336 = vadd.f32 %v3335, %v1053
        %v3337 = vadd.f32 %v3336, %v1069
        %v3338 = vadd.f32 %v3337, %v1085
        %v3339 = vadd.f32 %v3338, %v1101
        %v3340 = vadd.f32 %v3339, %v1117
        %v3341 = vadd.f32 %v3340, %v1133
        %v3342 = vadd.f32 %v3341, %v1149
        %v3343 = vadd.f32 %v3342, %v1165
        %v3344 = vrot.slane %v3343, 4
        %v3345 = vadd.f32 %v3343, %v3344
        %v3346 = vrot.slane %v3345, 2
        %v3347 = vadd.f32 %v3345, %v3346
        %v3348 = vrot.slane %v3347, 1
        %v3349 = vadd.f32 %v3347, %v3348
        %v3350 = vadd.f32 %v926, %v942
        %v3351 = vadd.f32 %v3350, %v958
        %v3352 = vadd.f32 %v3351, %v974
        %v3353 = vadd.f32 %v3352, %v990
        %v3354 = vadd.f32 %v3353, %v1006
        %v3355 = vadd.f32 %v3354, %v1022
        %v3356 = vadd.f32 %v3355, %v1038
        %v3357 = vadd.f32 %v3356, %v1054
        %v3358 = vadd.f32 %v3357, %v1070
        %v3359 = vadd.f32 %v3358, %v1086
        %v3360 = vadd.f32 %v3359, %v1102
        %v3361 = vadd.f32 %v3360, %v1118
        %v3362 = vadd.f32 %v3361, %v1134
        %v3363 = vadd.f32 %v3362, %v1150
        %v3364 = vadd.f32 %v3363, %v1166
        %v3365 = vrot.slane %v3364, 4
        %v3366 = vadd.f32 %v3364, %v3365
        %v3367 = vrot.slane %v3366, 2
        %v3368 = vadd.f32 %v3366, %v3367
        %v3369 = vrot.slane %v3368, 1
        %v3370 = vadd.f32 %v3368, %v3369
        %v3371 = vadd.f32 %v927, %v943
        %v3372 = vadd.f32 %v3371, %v959
        %v3373 = vadd.f32 %v3372, %v975
        %v3374 = vadd.f32 %v3373, %v991
        %v3375 = vadd.f32 %v3374, %v1007
        %v3376 = vadd.f32 %v3375, %v1023
        %v3377 = vadd.f32 %v3376, %v1039
        %v3378 = vadd.f32 %v3377, %v1055
        %v3379 = vadd.f32 %v3378, %v1071
        %v3380 = vadd.f32 %v3379, %v1087
        %v3381 = vadd.f32 %v3380, %v1103
        %v3382 = vadd.f32 %v3381, %v1119
        %v3383 = vadd.f32 %v3382, %v1135
        %v3384 = vadd.f32 %v3383, %v1151
        %v3385 = vadd.f32 %v3384, %v1167
        %v3386 = vrot.slane %v3385, 4
        %v3387 = vadd.f32 %v3385, %v3386
        %v3388 = vrot.slane %v3387, 2
        %v3389 = vadd.f32 %v3387, %v3388
        %v3390 = vrot.slane %v3389, 1
        %v3391 = vadd.f32 %v3389, %v3390
        %v3392 = vadd.f32 %v928, %v944
        %v3393 = vadd.f32 %v3392, %v960
        %v3394 = vadd.f32 %v3393, %v976
        %v3395 = vadd.f32 %v3394, %v992
        %v3396 = vadd.f32 %v3395, %v1008
        %v3397 = vadd.f32 %v3396, %v1024
        %v3398 = vadd.f32 %v3397, %v1040
        %v3399 = vadd.f32 %v3398, %v1056
        %v3400 = vadd.f32 %v3399, %v1072
        %v3401 = vadd.f32 %v3400, %v1088
        %v3402 = vadd.f32 %v3401, %v1104
        %v3403 = vadd.f32 %v3402, %v1120
        %v3404 = vadd.f32 %v3403, %v1136
        %v3405 = vadd.f32 %v3404, %v1152
        %v3406 = vadd.f32 %v3405, %v1168
        %v3407 = vrot.slane %v3406, 4
        %v3408 = vadd.f32 %v3406, %v3407
        %v3409 = vrot.slane %v3408, 2
        %v3410 = vadd.f32 %v3408, %v3409
        %v3411 = vrot.slane %v3410, 1
        %v3412 = vadd.f32 %v3410, %v3411
        %v3413 = vadd.f32 %v929, %v945
        %v3414 = vadd.f32 %v3413, %v961
        %v3415 = vadd.f32 %v3414, %v977
        %v3416 = vadd.f32 %v3415, %v993
        %v3417 = vadd.f32 %v3416, %v1009
        %v3418 = vadd.f32 %v3417, %v1025
        %v3419 = vadd.f32 %v3418, %v1041
        %v3420 = vadd.f32 %v3419, %v1057
        %v3421 = vadd.f32 %v3420, %v1073
        %v3422 = vadd.f32 %v3421, %v1089
        %v3423 = vadd.f32 %v3422, %v1105
        %v3424 = vadd.f32 %v3423, %v1121
        %v3425 = vadd.f32 %v3424, %v1137
        %v3426 = vadd.f32 %v3425, %v1153
        %v3427 = vadd.f32 %v3426, %v1169
        %v3428 = vrot.slane %v3427, 4
        %v3429 = vadd.f32 %v3427, %v3428
        %v3430 = vrot.slane %v3429, 2
        %v3431 = vadd.f32 %v3429, %v3430
        %v3432 = vrot.slane %v3431, 1
        %v3433 = vadd.f32 %v3431, %v3432
        %v3434 = vadd.f32 %v930, %v946
        %v3435 = vadd.f32 %v3434, %v962
        %v3436 = vadd.f32 %v3435, %v978
        %v3437 = vadd.f32 %v3436, %v994
        %v3438 = vadd.f32 %v3437, %v1010
        %v3439 = vadd.f32 %v3438, %v1026
        %v3440 = vadd.f32 %v3439, %v1042
        %v3441 = vadd.f32 %v3440, %v1058
        %v3442 = vadd.f32 %v3441, %v1074
        %v3443 = vadd.f32 %v3442, %v1090
        %v3444 = vadd.f32 %v3443, %v1106
        %v3445 = vadd.f32 %v3444, %v1122
        %v3446 = vadd.f32 %v3445, %v1138
        %v3447 = vadd.f32 %v3446, %v1154
        %v3448 = vadd.f32 %v3447, %v1170
        %v3449 = vrot.slane %v3448, 4
        %v3450 = vadd.f32 %v3448, %v3449
        %v3451 = vrot.slane %v3450, 2
        %v3452 = vadd.f32 %v3450, %v3451
        %v3453 = vrot.slane %v3452, 1
        %v3454 = vadd.f32 %v3452, %v3453
        %v3455 = vadd.f32 %v931, %v947
        %v3456 = vadd.f32 %v3455, %v963
        %v3457 = vadd.f32 %v3456, %v979
        %v3458 = vadd.f32 %v3457, %v995
        %v3459 = vadd.f32 %v3458, %v1011
        %v3460 = vadd.f32 %v3459, %v1027
        %v3461 = vadd.f32 %v3460, %v1043
        %v3462 = vadd.f32 %v3461, %v1059
        %v3463 = vadd.f32 %v3462, %v1075
        %v3464 = vadd.f32 %v3463, %v1091
        %v3465 = vadd.f32 %v3464, %v1107
        %v3466 = vadd.f32 %v3465, %v1123
        %v3467 = vadd.f32 %v3466, %v1139
        %v3468 = vadd.f32 %v3467, %v1155
        %v3469 = vadd.f32 %v3468, %v1171
        %v3470 = vrot.slane %v3469, 4
        %v3471 = vadd.f32 %v3469, %v3470
        %v3472 = vrot.slane %v3471, 2
        %v3473 = vadd.f32 %v3471, %v3472
        %v3474 = vrot.slane %v3473, 1
        %v3475 = vadd.f32 %v3473, %v3474
        %v3476 = vadd.f32 %v1172, %v1188
        %v3477 = vadd.f32 %v3476, %v1204
        %v3478 = vadd.f32 %v3477, %v1220
        %v3479 = vadd.f32 %v3478, %v1236
        %v3480 = vadd.f32 %v3479, %v1252
        %v3481 = vadd.f32 %v3480, %v1268
        %v3482 = vadd.f32 %v3481, %v1284
        %v3483 = vadd.f32 %v3482, %v1300
        %v3484 = vadd.f32 %v3483, %v1316
        %v3485 = vadd.f32 %v3484, %v1332
        %v3486 = vadd.f32 %v3485, %v1348
        %v3487 = vadd.f32 %v3486, %v1364
        %v3488 = vadd.f32 %v3487, %v1380
        %v3489 = vadd.f32 %v3488, %v1396
        %v3490 = vadd.f32 %v3489, %v1412
        %v3491 = vrot.slane %v3490, 4
        %v3492 = vadd.f32 %v3490, %v3491
        %v3493 = vrot.slane %v3492, 2
        %v3494 = vadd.f32 %v3492, %v3493
        %v3495 = vrot.slane %v3494, 1
        %v3496 = vadd.f32 %v3494, %v3495
        %v3497 = vadd.f32 %v1173, %v1189
        %v3498 = vadd.f32 %v3497, %v1205
        %v3499 = vadd.f32 %v3498, %v1221
        %v3500 = vadd.f32 %v3499, %v1237
        %v3501 = vadd.f32 %v3500, %v1253
        %v3502 = vadd.f32 %v3501, %v1269
        %v3503 = vadd.f32 %v3502, %v1285
        %v3504 = vadd.f32 %v3503, %v1301
        %v3505 = vadd.f32 %v3504, %v1317
        %v3506 = vadd.f32 %v3505, %v1333
        %v3507 = vadd.f32 %v3506, %v1349
        %v3508 = vadd.f32 %v3507, %v1365
        %v3509 = vadd.f32 %v3508, %v1381
        %v3510 = vadd.f32 %v3509, %v1397
        %v3511 = vadd.f32 %v3510, %v1413
        %v3512 = vrot.slane %v3511, 4
        %v3513 = vadd.f32 %v3511, %v3512
        %v3514 = vrot.slane %v3513, 2
        %v3515 = vadd.f32 %v3513, %v3514
        %v3516 = vrot.slane %v3515, 1
        %v3517 = vadd.f32 %v3515, %v3516
        %v3518 = vadd.f32 %v1174, %v1190
        %v3519 = vadd.f32 %v3518, %v1206
        %v3520 = vadd.f32 %v3519, %v1222
        %v3521 = vadd.f32 %v3520, %v1238
        %v3522 = vadd.f32 %v3521, %v1254
        %v3523 = vadd.f32 %v3522, %v1270
        %v3524 = vadd.f32 %v3523, %v1286
        %v3525 = vadd.f32 %v3524, %v1302
        %v3526 = vadd.f32 %v3525, %v1318
        %v3527 = vadd.f32 %v3526, %v1334
        %v3528 = vadd.f32 %v3527, %v1350
        %v3529 = vadd.f32 %v3528, %v1366
        %v3530 = vadd.f32 %v3529, %v1382
        %v3531 = vadd.f32 %v3530, %v1398
        %v3532 = vadd.f32 %v3531, %v1414
        %v3533 = vrot.slane %v3532, 4
        %v3534 = vadd.f32 %v3532, %v3533
        %v3535 = vrot.slane %v3534, 2
        %v3536 = vadd.f32 %v3534, %v3535
        %v3537 = vrot.slane %v3536, 1
        %v3538 = vadd.f32 %v3536, %v3537
        %v3539 = vadd.f32 %v1175, %v1191
        %v3540 = vadd.f32 %v3539, %v1207
        %v3541 = vadd.f32 %v3540, %v1223
        %v3542 = vadd.f32 %v3541, %v1239
        %v3543 = vadd.f32 %v3542, %v1255
        %v3544 = vadd.f32 %v3543, %v1271
        %v3545 = vadd.f32 %v3544, %v1287
        %v3546 = vadd.f32 %v3545, %v1303
        %v3547 = vadd.f32 %v3546, %v1319
        %v3548 = vadd.f32 %v3547, %v1335
        %v3549 = vadd.f32 %v3548, %v1351
        %v3550 = vadd.f32 %v3549, %v1367
        %v3551 = vadd.f32 %v3550, %v1383
        %v3552 = vadd.f32 %v3551, %v1399
        %v3553 = vadd.f32 %v3552, %v1415
        %v3554 = vrot.slane %v3553, 4
        %v3555 = vadd.f32 %v3553, %v3554
        %v3556 = vrot.slane %v3555, 2
        %v3557 = vadd.f32 %v3555, %v3556
        %v3558 = vrot.slane %v3557, 1
        %v3559 = vadd.f32 %v3557, %v3558
        %v3560 = vadd.f32 %v1176, %v1192
        %v3561 = vadd.f32 %v3560, %v1208
        %v3562 = vadd.f32 %v3561, %v1224
        %v3563 = vadd.f32 %v3562, %v1240
        %v3564 = vadd.f32 %v3563, %v1256
        %v3565 = vadd.f32 %v3564, %v1272
        %v3566 = vadd.f32 %v3565, %v1288
        %v3567 = vadd.f32 %v3566, %v1304
        %v3568 = vadd.f32 %v3567, %v1320
        %v3569 = vadd.f32 %v3568, %v1336
        %v3570 = vadd.f32 %v3569, %v1352
        %v3571 = vadd.f32 %v3570, %v1368
        %v3572 = vadd.f32 %v3571, %v1384
        %v3573 = vadd.f32 %v3572, %v1400
        %v3574 = vadd.f32 %v3573, %v1416
        %v3575 = vrot.slane %v3574, 4
        %v3576 = vadd.f32 %v3574, %v3575
        %v3577 = vrot.slane %v3576, 2
        %v3578 = vadd.f32 %v3576, %v3577
        %v3579 = vrot.slane %v3578, 1
        %v3580 = vadd.f32 %v3578, %v3579
        %v3581 = vadd.f32 %v1177, %v1193
        %v3582 = vadd.f32 %v3581, %v1209
        %v3583 = vadd.f32 %v3582, %v1225
        %v3584 = vadd.f32 %v3583, %v1241
        %v3585 = vadd.f32 %v3584, %v1257
        %v3586 = vadd.f32 %v3585, %v1273
        %v3587 = vadd.f32 %v3586, %v1289
        %v3588 = vadd.f32 %v3587, %v1305
        %v3589 = vadd.f32 %v3588, %v1321
        %v3590 = vadd.f32 %v3589, %v1337
        %v3591 = vadd.f32 %v3590, %v1353
        %v3592 = vadd.f32 %v3591, %v1369
        %v3593 = vadd.f32 %v3592, %v1385
        %v3594 = vadd.f32 %v3593, %v1401
        %v3595 = vadd.f32 %v3594, %v1417
        %v3596 = vrot.slane %v3595, 4
        %v3597 = vadd.f32 %v3595, %v3596
        %v3598 = vrot.slane %v3597, 2
        %v3599 = vadd.f32 %v3597, %v3598
        %v3600 = vrot.slane %v3599, 1
        %v3601 = vadd.f32 %v3599, %v3600
        %v3602 = vadd.f32 %v1178, %v1194
        %v3603 = vadd.f32 %v3602, %v1210
        %v3604 = vadd.f32 %v3603, %v1226
        %v3605 = vadd.f32 %v3604, %v1242
        %v3606 = vadd.f32 %v3605, %v1258
        %v3607 = vadd.f32 %v3606, %v1274
        %v3608 = vadd.f32 %v3607, %v1290
        %v3609 = vadd.f32 %v3608, %v1306
        %v3610 = vadd.f32 %v3609, %v1322
        %v3611 = vadd.f32 %v3610, %v1338
        %v3612 = vadd.f32 %v3611, %v1354
        %v3613 = vadd.f32 %v3612, %v1370
        %v3614 = vadd.f32 %v3613, %v1386
        %v3615 = vadd.f32 %v3614, %v1402
        %v3616 = vadd.f32 %v3615, %v1418
        %v3617 = vrot.slane %v3616, 4
        %v3618 = vadd.f32 %v3616, %v3617
        %v3619 = vrot.slane %v3618, 2
        %v3620 = vadd.f32 %v3618, %v3619
        %v3621 = vrot.slane %v3620, 1
        %v3622 = vadd.f32 %v3620, %v3621
        %v3623 = vadd.f32 %v1179, %v1195
        %v3624 = vadd.f32 %v3623, %v1211
        %v3625 = vadd.f32 %v3624, %v1227
        %v3626 = vadd.f32 %v3625, %v1243
        %v3627 = vadd.f32 %v3626, %v1259
        %v3628 = vadd.f32 %v3627, %v1275
        %v3629 = vadd.f32 %v3628, %v1291
        %v3630 = vadd.f32 %v3629, %v1307
        %v3631 = vadd.f32 %v3630, %v1323
        %v3632 = vadd.f32 %v3631, %v1339
        %v3633 = vadd.f32 %v3632, %v1355
        %v3634 = vadd.f32 %v3633, %v1371
        %v3635 = vadd.f32 %v3634, %v1387
        %v3636 = vadd.f32 %v3635, %v1403
        %v3637 = vadd.f32 %v3636, %v1419
        %v3638 = vrot.slane %v3637, 4
        %v3639 = vadd.f32 %v3637, %v3638
        %v3640 = vrot.slane %v3639, 2
        %v3641 = vadd.f32 %v3639, %v3640
        %v3642 = vrot.slane %v3641, 1
        %v3643 = vadd.f32 %v3641, %v3642
        %v3644 = vadd.f32 %v1180, %v1196
        %v3645 = vadd.f32 %v3644, %v1212
        %v3646 = vadd.f32 %v3645, %v1228
        %v3647 = vadd.f32 %v3646, %v1244
        %v3648 = vadd.f32 %v3647, %v1260
        %v3649 = vadd.f32 %v3648, %v1276
        %v3650 = vadd.f32 %v3649, %v1292
        %v3651 = vadd.f32 %v3650, %v1308
        %v3652 = vadd.f32 %v3651, %v1324
        %v3653 = vadd.f32 %v3652, %v1340
        %v3654 = vadd.f32 %v3653, %v1356
        %v3655 = vadd.f32 %v3654, %v1372
        %v3656 = vadd.f32 %v3655, %v1388
        %v3657 = vadd.f32 %v3656, %v1404
        %v3658 = vadd.f32 %v3657, %v1420
        %v3659 = vrot.slane %v3658, 4
        %v3660 = vadd.f32 %v3658, %v3659
        %v3661 = vrot.slane %v3660, 2
        %v3662 = vadd.f32 %v3660, %v3661
        %v3663 = vrot.slane %v3662, 1
        %v3664 = vadd.f32 %v3662, %v3663
        %v3665 = vadd.f32 %v1181, %v1197
        %v3666 = vadd.f32 %v3665, %v1213
        %v3667 = vadd.f32 %v3666, %v1229
        %v3668 = vadd.f32 %v3667, %v1245
        %v3669 = vadd.f32 %v3668, %v1261
        %v3670 = vadd.f32 %v3669, %v1277
        %v3671 = vadd.f32 %v3670, %v1293
        %v3672 = vadd.f32 %v3671, %v1309
        %v3673 = vadd.f32 %v3672, %v1325
        %v3674 = vadd.f32 %v3673, %v1341
        %v3675 = vadd.f32 %v3674, %v1357
        %v3676 = vadd.f32 %v3675, %v1373
        %v3677 = vadd.f32 %v3676, %v1389
        %v3678 = vadd.f32 %v3677, %v1405
        %v3679 = vadd.f32 %v3678, %v1421
        %v3680 = vrot.slane %v3679, 4
        %v3681 = vadd.f32 %v3679, %v3680
        %v3682 = vrot.slane %v3681, 2
        %v3683 = vadd.f32 %v3681, %v3682
        %v3684 = vrot.slane %v3683, 1
        %v3685 = vadd.f32 %v3683, %v3684
        %v3686 = vadd.f32 %v1182, %v1198
        %v3687 = vadd.f32 %v3686, %v1214
        %v3688 = vadd.f32 %v3687, %v1230
        %v3689 = vadd.f32 %v3688, %v1246
        %v3690 = vadd.f32 %v3689, %v1262
        %v3691 = vadd.f32 %v3690, %v1278
        %v3692 = vadd.f32 %v3691, %v1294
        %v3693 = vadd.f32 %v3692, %v1310
        %v3694 = vadd.f32 %v3693, %v1326
        %v3695 = vadd.f32 %v3694, %v1342
        %v3696 = vadd.f32 %v3695, %v1358
        %v3697 = vadd.f32 %v3696, %v1374
        %v3698 = vadd.f32 %v3697, %v1390
        %v3699 = vadd.f32 %v3698, %v1406
        %v3700 = vadd.f32 %v3699, %v1422
        %v3701 = vrot.slane %v3700, 4
        %v3702 = vadd.f32 %v3700, %v3701
        %v3703 = vrot.slane %v3702, 2
        %v3704 = vadd.f32 %v3702, %v3703
        %v3705 = vrot.slane %v3704, 1
        %v3706 = vadd.f32 %v3704, %v3705
        %v3707 = vadd.f32 %v1183, %v1199
        %v3708 = vadd.f32 %v3707, %v1215
        %v3709 = vadd.f32 %v3708, %v1231
        %v3710 = vadd.f32 %v3709, %v1247
        %v3711 = vadd.f32 %v3710, %v1263
        %v3712 = vadd.f32 %v3711, %v1279
        %v3713 = vadd.f32 %v3712, %v1295
        %v3714 = vadd.f32 %v3713, %v1311
        %v3715 = vadd.f32 %v3714, %v1327
        %v3716 = vadd.f32 %v3715, %v1343
        %v3717 = vadd.f32 %v3716, %v1359
        %v3718 = vadd.f32 %v3717, %v1375
        %v3719 = vadd.f32 %v3718, %v1391
        %v3720 = vadd.f32 %v3719, %v1407
        %v3721 = vadd.f32 %v3720, %v1423
        %v3722 = vrot.slane %v3721, 4
        %v3723 = vadd.f32 %v3721, %v3722
        %v3724 = vrot.slane %v3723, 2
        %v3725 = vadd.f32 %v3723, %v3724
        %v3726 = vrot.slane %v3725, 1
        %v3727 = vadd.f32 %v3725, %v3726
        %v3728 = vadd.f32 %v1184, %v1200
        %v3729 = vadd.f32 %v3728, %v1216
        %v3730 = vadd.f32 %v3729, %v1232
        %v3731 = vadd.f32 %v3730, %v1248
        %v3732 = vadd.f32 %v3731, %v1264
        %v3733 = vadd.f32 %v3732, %v1280
        %v3734 = vadd.f32 %v3733, %v1296
        %v3735 = vadd.f32 %v3734, %v1312
        %v3736 = vadd.f32 %v3735, %v1328
        %v3737 = vadd.f32 %v3736, %v1344
        %v3738 = vadd.f32 %v3737, %v1360
        %v3739 = vadd.f32 %v3738, %v1376
        %v3740 = vadd.f32 %v3739, %v1392
        %v3741 = vadd.f32 %v3740, %v1408
        %v3742 = vadd.f32 %v3741, %v1424
        %v3743 = vrot.slane %v3742, 4
        %v3744 = vadd.f32 %v3742, %v3743
        %v3745 = vrot.slane %v3744, 2
        %v3746 = vadd.f32 %v3744, %v3745
        %v3747 = vrot.slane %v3746, 1
        %v3748 = vadd.f32 %v3746, %v3747
        %v3749 = vadd.f32 %v1185, %v1201
        %v3750 = vadd.f32 %v3749, %v1217
        %v3751 = vadd.f32 %v3750, %v1233
        %v3752 = vadd.f32 %v3751, %v1249
        %v3753 = vadd.f32 %v3752, %v1265
        %v3754 = vadd.f32 %v3753, %v1281
        %v3755 = vadd.f32 %v3754, %v1297
        %v3756 = vadd.f32 %v3755, %v1313
        %v3757 = vadd.f32 %v3756, %v1329
        %v3758 = vadd.f32 %v3757, %v1345
        %v3759 = vadd.f32 %v3758, %v1361
        %v3760 = vadd.f32 %v3759, %v1377
        %v3761 = vadd.f32 %v3760, %v1393
        %v3762 = vadd.f32 %v3761, %v1409
        %v3763 = vadd.f32 %v3762, %v1425
        %v3764 = vrot.slane %v3763, 4
        %v3765 = vadd.f32 %v3763, %v3764
        %v3766 = vrot.slane %v3765, 2
        %v3767 = vadd.f32 %v3765, %v3766
        %v3768 = vrot.slane %v3767, 1
        %v3769 = vadd.f32 %v3767, %v3768
        %v3770 = vadd.f32 %v1186, %v1202
        %v3771 = vadd.f32 %v3770, %v1218
        %v3772 = vadd.f32 %v3771, %v1234
        %v3773 = vadd.f32 %v3772, %v1250
        %v3774 = vadd.f32 %v3773, %v1266
        %v3775 = vadd.f32 %v3774, %v1282
        %v3776 = vadd.f32 %v3775, %v1298
        %v3777 = vadd.f32 %v3776, %v1314
        %v3778 = vadd.f32 %v3777, %v1330
        %v3779 = vadd.f32 %v3778, %v1346
        %v3780 = vadd.f32 %v3779, %v1362
        %v3781 = vadd.f32 %v3780, %v1378
        %v3782 = vadd.f32 %v3781, %v1394
        %v3783 = vadd.f32 %v3782, %v1410
        %v3784 = vadd.f32 %v3783, %v1426
        %v3785 = vrot.slane %v3784, 4
        %v3786 = vadd.f32 %v3784, %v3785
        %v3787 = vrot.slane %v3786, 2
        %v3788 = vadd.f32 %v3786, %v3787
        %v3789 = vrot.slane %v3788, 1
        %v3790 = vadd.f32 %v3788, %v3789
        %v3791 = vadd.f32 %v1187, %v1203
        %v3792 = vadd.f32 %v3791, %v1219
        %v3793 = vadd.f32 %v3792, %v1235
        %v3794 = vadd.f32 %v3793, %v1251
        %v3795 = vadd.f32 %v3794, %v1267
        %v3796 = vadd.f32 %v3795, %v1283
        %v3797 = vadd.f32 %v3796, %v1299
        %v3798 = vadd.f32 %v3797, %v1315
        %v3799 = vadd.f32 %v3798, %v1331
        %v3800 = vadd.f32 %v3799, %v1347
        %v3801 = vadd.f32 %v3800, %v1363
        %v3802 = vadd.f32 %v3801, %v1379
        %v3803 = vadd.f32 %v3802, %v1395
        %v3804 = vadd.f32 %v3803, %v1411
        %v3805 = vadd.f32 %v3804, %v1427
        %v3806 = vrot.slane %v3805, 4
        %v3807 = vadd.f32 %v3805, %v3806
        %v3808 = vrot.slane %v3807, 2
        %v3809 = vadd.f32 %v3807, %v3808
        %v3810 = vrot.slane %v3809, 1
        %v3811 = vadd.f32 %v3809, %v3810
        %v3812 = vadd.f32 %v1428, %v1444
        %v3813 = vadd.f32 %v3812, %v1460
        %v3814 = vadd.f32 %v3813, %v1476
        %v3815 = vadd.f32 %v3814, %v1492
        %v3816 = vadd.f32 %v3815, %v1508
        %v3817 = vadd.f32 %v3816, %v1524
        %v3818 = vadd.f32 %v3817, %v1540
        %v3819 = vadd.f32 %v3818, %v1556
        %v3820 = vadd.f32 %v3819, %v1572
        %v3821 = vadd.f32 %v3820, %v1588
        %v3822 = vadd.f32 %v3821, %v1604
        %v3823 = vadd.f32 %v3822, %v1620
        %v3824 = vadd.f32 %v3823, %v1636
        %v3825 = vadd.f32 %v3824, %v1652
        %v3826 = vadd.f32 %v3825, %v1668
        %v3827 = vrot.slane %v3826, 4
        %v3828 = vadd.f32 %v3826, %v3827
        %v3829 = vrot.slane %v3828, 2
        %v3830 = vadd.f32 %v3828, %v3829
        %v3831 = vrot.slane %v3830, 1
        %v3832 = vadd.f32 %v3830, %v3831
        %v3833 = vadd.f32 %v1429, %v1445
        %v3834 = vadd.f32 %v3833, %v1461
        %v3835 = vadd.f32 %v3834, %v1477
        %v3836 = vadd.f32 %v3835, %v1493
        %v3837 = vadd.f32 %v3836, %v1509
        %v3838 = vadd.f32 %v3837, %v1525
        %v3839 = vadd.f32 %v3838, %v1541
        %v3840 = vadd.f32 %v3839, %v1557
        %v3841 = vadd.f32 %v3840, %v1573
        %v3842 = vadd.f32 %v3841, %v1589
        %v3843 = vadd.f32 %v3842, %v1605
        %v3844 = vadd.f32 %v3843, %v1621
        %v3845 = vadd.f32 %v3844, %v1637
        %v3846 = vadd.f32 %v3845, %v1653
        %v3847 = vadd.f32 %v3846, %v1669
        %v3848 = vrot.slane %v3847, 4
        %v3849 = vadd.f32 %v3847, %v3848
        %v3850 = vrot.slane %v3849, 2
        %v3851 = vadd.f32 %v3849, %v3850
        %v3852 = vrot.slane %v3851, 1
        %v3853 = vadd.f32 %v3851, %v3852
        %v3854 = vadd.f32 %v1430, %v1446
        %v3855 = vadd.f32 %v3854, %v1462
        %v3856 = vadd.f32 %v3855, %v1478
        %v3857 = vadd.f32 %v3856, %v1494
        %v3858 = vadd.f32 %v3857, %v1510
        %v3859 = vadd.f32 %v3858, %v1526
        %v3860 = vadd.f32 %v3859, %v1542
        %v3861 = vadd.f32 %v3860, %v1558
        %v3862 = vadd.f32 %v3861, %v1574
        %v3863 = vadd.f32 %v3862, %v1590
        %v3864 = vadd.f32 %v3863, %v1606
        %v3865 = vadd.f32 %v3864, %v1622
        %v3866 = vadd.f32 %v3865, %v1638
        %v3867 = vadd.f32 %v3866, %v1654
        %v3868 = vadd.f32 %v3867, %v1670
        %v3869 = vrot.slane %v3868, 4
        %v3870 = vadd.f32 %v3868, %v3869
        %v3871 = vrot.slane %v3870, 2
        %v3872 = vadd.f32 %v3870, %v3871
        %v3873 = vrot.slane %v3872, 1
        %v3874 = vadd.f32 %v3872, %v3873
        %v3875 = vadd.f32 %v1431, %v1447
        %v3876 = vadd.f32 %v3875, %v1463
        %v3877 = vadd.f32 %v3876, %v1479
        %v3878 = vadd.f32 %v3877, %v1495
        %v3879 = vadd.f32 %v3878, %v1511
        %v3880 = vadd.f32 %v3879, %v1527
        %v3881 = vadd.f32 %v3880, %v1543
        %v3882 = vadd.f32 %v3881, %v1559
        %v3883 = vadd.f32 %v3882, %v1575
        %v3884 = vadd.f32 %v3883, %v1591
        %v3885 = vadd.f32 %v3884, %v1607
        %v3886 = vadd.f32 %v3885, %v1623
        %v3887 = vadd.f32 %v3886, %v1639
        %v3888 = vadd.f32 %v3887, %v1655
        %v3889 = vadd.f32 %v3888, %v1671
        %v3890 = vrot.slane %v3889, 4
        %v3891 = vadd.f32 %v3889, %v3890
        %v3892 = vrot.slane %v3891, 2
        %v3893 = vadd.f32 %v3891, %v3892
        %v3894 = vrot.slane %v3893, 1
        %v3895 = vadd.f32 %v3893, %v3894
        %v3896 = vadd.f32 %v1432, %v1448
        %v3897 = vadd.f32 %v3896, %v1464
        %v3898 = vadd.f32 %v3897, %v1480
        %v3899 = vadd.f32 %v3898, %v1496
        %v3900 = vadd.f32 %v3899, %v1512
        %v3901 = vadd.f32 %v3900, %v1528
        %v3902 = vadd.f32 %v3901, %v1544
        %v3903 = vadd.f32 %v3902, %v1560
        %v3904 = vadd.f32 %v3903, %v1576
        %v3905 = vadd.f32 %v3904, %v1592
        %v3906 = vadd.f32 %v3905, %v1608
        %v3907 = vadd.f32 %v3906, %v1624
        %v3908 = vadd.f32 %v3907, %v1640
        %v3909 = vadd.f32 %v3908, %v1656
        %v3910 = vadd.f32 %v3909, %v1672
        %v3911 = vrot.slane %v3910, 4
        %v3912 = vadd.f32 %v3910, %v3911
        %v3913 = vrot.slane %v3912, 2
        %v3914 = vadd.f32 %v3912, %v3913
        %v3915 = vrot.slane %v3914, 1
        %v3916 = vadd.f32 %v3914, %v3915
        %v3917 = vadd.f32 %v1433, %v1449
        %v3918 = vadd.f32 %v3917, %v1465
        %v3919 = vadd.f32 %v3918, %v1481
        %v3920 = vadd.f32 %v3919, %v1497
        %v3921 = vadd.f32 %v3920, %v1513
        %v3922 = vadd.f32 %v3921, %v1529
        %v3923 = vadd.f32 %v3922, %v1545
        %v3924 = vadd.f32 %v3923, %v1561
        %v3925 = vadd.f32 %v3924, %v1577
        %v3926 = vadd.f32 %v3925, %v1593
        %v3927 = vadd.f32 %v3926, %v1609
        %v3928 = vadd.f32 %v3927, %v1625
        %v3929 = vadd.f32 %v3928, %v1641
        %v3930 = vadd.f32 %v3929, %v1657
        %v3931 = vadd.f32 %v3930, %v1673
        %v3932 = vrot.slane %v3931, 4
        %v3933 = vadd.f32 %v3931, %v3932
        %v3934 = vrot.slane %v3933, 2
        %v3935 = vadd.f32 %v3933, %v3934
        %v3936 = vrot.slane %v3935, 1
        %v3937 = vadd.f32 %v3935, %v3936
        %v3938 = vadd.f32 %v1434, %v1450
        %v3939 = vadd.f32 %v3938, %v1466
        %v3940 = vadd.f32 %v3939, %v1482
        %v3941 = vadd.f32 %v3940, %v1498
        %v3942 = vadd.f32 %v3941, %v1514
        %v3943 = vadd.f32 %v3942, %v1530
        %v3944 = vadd.f32 %v3943, %v1546
        %v3945 = vadd.f32 %v3944, %v1562
        %v3946 = vadd.f32 %v3945, %v1578
        %v3947 = vadd.f32 %v3946, %v1594
        %v3948 = vadd.f32 %v3947, %v1610
        %v3949 = vadd.f32 %v3948, %v1626
        %v3950 = vadd.f32 %v3949, %v1642
        %v3951 = vadd.f32 %v3950, %v1658
        %v3952 = vadd.f32 %v3951, %v1674
        %v3953 = vrot.slane %v3952, 4
        %v3954 = vadd.f32 %v3952, %v3953
        %v3955 = vrot.slane %v3954, 2
        %v3956 = vadd.f32 %v3954, %v3955
        %v3957 = vrot.slane %v3956, 1
        %v3958 = vadd.f32 %v3956, %v3957
        %v3959 = vadd.f32 %v1435, %v1451
        %v3960 = vadd.f32 %v3959, %v1467
        %v3961 = vadd.f32 %v3960, %v1483
        %v3962 = vadd.f32 %v3961, %v1499
        %v3963 = vadd.f32 %v3962, %v1515
        %v3964 = vadd.f32 %v3963, %v1531
        %v3965 = vadd.f32 %v3964, %v1547
        %v3966 = vadd.f32 %v3965, %v1563
        %v3967 = vadd.f32 %v3966, %v1579
        %v3968 = vadd.f32 %v3967, %v1595
        %v3969 = vadd.f32 %v3968, %v1611
        %v3970 = vadd.f32 %v3969, %v1627
        %v3971 = vadd.f32 %v3970, %v1643
        %v3972 = vadd.f32 %v3971, %v1659
        %v3973 = vadd.f32 %v3972, %v1675
        %v3974 = vrot.slane %v3973, 4
        %v3975 = vadd.f32 %v3973, %v3974
        %v3976 = vrot.slane %v3975, 2
        %v3977 = vadd.f32 %v3975, %v3976
        %v3978 = vrot.slane %v3977, 1
        %v3979 = vadd.f32 %v3977, %v3978
        %v3980 = vadd.f32 %v1436, %v1452
        %v3981 = vadd.f32 %v3980, %v1468
        %v3982 = vadd.f32 %v3981, %v1484
        %v3983 = vadd.f32 %v3982, %v1500
        %v3984 = vadd.f32 %v3983, %v1516
        %v3985 = vadd.f32 %v3984, %v1532
        %v3986 = vadd.f32 %v3985, %v1548
        %v3987 = vadd.f32 %v3986, %v1564
        %v3988 = vadd.f32 %v3987, %v1580
        %v3989 = vadd.f32 %v3988, %v1596
        %v3990 = vadd.f32 %v3989, %v1612
        %v3991 = vadd.f32 %v3990, %v1628
        %v3992 = vadd.f32 %v3991, %v1644
        %v3993 = vadd.f32 %v3992, %v1660
        %v3994 = vadd.f32 %v3993, %v1676
        %v3995 = vrot.slane %v3994, 4
        %v3996 = vadd.f32 %v3994, %v3995
        %v3997 = vrot.slane %v3996, 2
        %v3998 = vadd.f32 %v3996, %v3997
        %v3999 = vrot.slane %v3998, 1
        %v4000 = vadd.f32 %v3998, %v3999
        %v4001 = vadd.f32 %v1437, %v1453
        %v4002 = vadd.f32 %v4001, %v1469
        %v4003 = vadd.f32 %v4002, %v1485
        %v4004 = vadd.f32 %v4003, %v1501
        %v4005 = vadd.f32 %v4004, %v1517
        %v4006 = vadd.f32 %v4005, %v1533
        %v4007 = vadd.f32 %v4006, %v1549
        %v4008 = vadd.f32 %v4007, %v1565
        %v4009 = vadd.f32 %v4008, %v1581
        %v4010 = vadd.f32 %v4009, %v1597
        %v4011 = vadd.f32 %v4010, %v1613
        %v4012 = vadd.f32 %v4011, %v1629
        %v4013 = vadd.f32 %v4012, %v1645
        %v4014 = vadd.f32 %v4013, %v1661
        %v4015 = vadd.f32 %v4014, %v1677
        %v4016 = vrot.slane %v4015, 4
        %v4017 = vadd.f32 %v4015, %v4016
        %v4018 = vrot.slane %v4017, 2
        %v4019 = vadd.f32 %v4017, %v4018
        %v4020 = vrot.slane %v4019, 1
        %v4021 = vadd.f32 %v4019, %v4020
        %v4022 = vadd.f32 %v1438, %v1454
        %v4023 = vadd.f32 %v4022, %v1470
        %v4024 = vadd.f32 %v4023, %v1486
        %v4025 = vadd.f32 %v4024, %v1502
        %v4026 = vadd.f32 %v4025, %v1518
        %v4027 = vadd.f32 %v4026, %v1534
        %v4028 = vadd.f32 %v4027, %v1550
        %v4029 = vadd.f32 %v4028, %v1566
        %v4030 = vadd.f32 %v4029, %v1582
        %v4031 = vadd.f32 %v4030, %v1598
        %v4032 = vadd.f32 %v4031, %v1614
        %v4033 = vadd.f32 %v4032, %v1630
        %v4034 = vadd.f32 %v4033, %v1646
        %v4035 = vadd.f32 %v4034, %v1662
        %v4036 = vadd.f32 %v4035, %v1678
        %v4037 = vrot.slane %v4036, 4
        %v4038 = vadd.f32 %v4036, %v4037
        %v4039 = vrot.slane %v4038, 2
        %v4040 = vadd.f32 %v4038, %v4039
        %v4041 = vrot.slane %v4040, 1
        %v4042 = vadd.f32 %v4040, %v4041
        %v4043 = vadd.f32 %v1439, %v1455
        %v4044 = vadd.f32 %v4043, %v1471
        %v4045 = vadd.f32 %v4044, %v1487
        %v4046 = vadd.f32 %v4045, %v1503
        %v4047 = vadd.f32 %v4046, %v1519
        %v4048 = vadd.f32 %v4047, %v1535
        %v4049 = vadd.f32 %v4048, %v1551
        %v4050 = vadd.f32 %v4049, %v1567
        %v4051 = vadd.f32 %v4050, %v1583
        %v4052 = vadd.f32 %v4051, %v1599
        %v4053 = vadd.f32 %v4052, %v1615
        %v4054 = vadd.f32 %v4053, %v1631
        %v4055 = vadd.f32 %v4054, %v1647
        %v4056 = vadd.f32 %v4055, %v1663
        %v4057 = vadd.f32 %v4056, %v1679
        %v4058 = vrot.slane %v4057, 4
        %v4059 = vadd.f32 %v4057, %v4058
        %v4060 = vrot.slane %v4059, 2
        %v4061 = vadd.f32 %v4059, %v4060
        %v4062 = vrot.slane %v4061, 1
        %v4063 = vadd.f32 %v4061, %v4062
        %v4064 = vadd.f32 %v1440, %v1456
        %v4065 = vadd.f32 %v4064, %v1472
        %v4066 = vadd.f32 %v4065, %v1488
        %v4067 = vadd.f32 %v4066, %v1504
        %v4068 = vadd.f32 %v4067, %v1520
        %v4069 = vadd.f32 %v4068, %v1536
        %v4070 = vadd.f32 %v4069, %v1552
        %v4071 = vadd.f32 %v4070, %v1568
        %v4072 = vadd.f32 %v4071, %v1584
        %v4073 = vadd.f32 %v4072, %v1600
        %v4074 = vadd.f32 %v4073, %v1616
        %v4075 = vadd.f32 %v4074, %v1632
        %v4076 = vadd.f32 %v4075, %v1648
        %v4077 = vadd.f32 %v4076, %v1664
        %v4078 = vadd.f32 %v4077, %v1680
        %v4079 = vrot.slane %v4078, 4
        %v4080 = vadd.f32 %v4078, %v4079
        %v4081 = vrot.slane %v4080, 2
        %v4082 = vadd.f32 %v4080, %v4081
        %v4083 = vrot.slane %v4082, 1
        %v4084 = vadd.f32 %v4082, %v4083
        %v4085 = vadd.f32 %v1441, %v1457
        %v4086 = vadd.f32 %v4085, %v1473
        %v4087 = vadd.f32 %v4086, %v1489
        %v4088 = vadd.f32 %v4087, %v1505
        %v4089 = vadd.f32 %v4088, %v1521
        %v4090 = vadd.f32 %v4089, %v1537
        %v4091 = vadd.f32 %v4090, %v1553
        %v4092 = vadd.f32 %v4091, %v1569
        %v4093 = vadd.f32 %v4092, %v1585
        %v4094 = vadd.f32 %v4093, %v1601
        %v4095 = vadd.f32 %v4094, %v1617
        %v4096 = vadd.f32 %v4095, %v1633
        %v4097 = vadd.f32 %v4096, %v1649
        %v4098 = vadd.f32 %v4097, %v1665
        %v4099 = vadd.f32 %v4098, %v1681
        %v4100 = vrot.slane %v4099, 4
        %v4101 = vadd.f32 %v4099, %v4100
        %v4102 = vrot.slane %v4101, 2
        %v4103 = vadd.f32 %v4101, %v4102
        %v4104 = vrot.slane %v4103, 1
        %v4105 = vadd.f32 %v4103, %v4104
        %v4106 = vadd.f32 %v1442, %v1458
        %v4107 = vadd.f32 %v4106, %v1474
        %v4108 = vadd.f32 %v4107, %v1490
        %v4109 = vadd.f32 %v4108, %v1506
        %v4110 = vadd.f32 %v4109, %v1522
        %v4111 = vadd.f32 %v4110, %v1538
        %v4112 = vadd.f32 %v4111, %v1554
        %v4113 = vadd.f32 %v4112, %v1570
        %v4114 = vadd.f32 %v4113, %v1586
        %v4115 = vadd.f32 %v4114, %v1602
        %v4116 = vadd.f32 %v4115, %v1618
        %v4117 = vadd.f32 %v4116, %v1634
        %v4118 = vadd.f32 %v4117, %v1650
        %v4119 = vadd.f32 %v4118, %v1666
        %v4120 = vadd.f32 %v4119, %v1682
        %v4121 = vrot.slane %v4120, 4
        %v4122 = vadd.f32 %v4120, %v4121
        %v4123 = vrot.slane %v4122, 2
        %v4124 = vadd.f32 %v4122, %v4123
        %v4125 = vrot.slane %v4124, 1
        %v4126 = vadd.f32 %v4124, %v4125
        %v4127 = vadd.f32 %v1443, %v1459
        %v4128 = vadd.f32 %v4127, %v1475
        %v4129 = vadd.f32 %v4128, %v1491
        %v4130 = vadd.f32 %v4129, %v1507
        %v4131 = vadd.f32 %v4130, %v1523
        %v4132 = vadd.f32 %v4131, %v1539
        %v4133 = vadd.f32 %v4132, %v1555
        %v4134 = vadd.f32 %v4133, %v1571
        %v4135 = vadd.f32 %v4134, %v1587
        %v4136 = vadd.f32 %v4135, %v1603
        %v4137 = vadd.f32 %v4136, %v1619
        %v4138 = vadd.f32 %v4137, %v1635
        %v4139 = vadd.f32 %v4138, %v1651
        %v4140 = vadd.f32 %v4139, %v1667
        %v4141 = vadd.f32 %v4140, %v1683
        %v4142 = vrot.slane %v4141, 4
        %v4143 = vadd.f32 %v4141, %v4142
        %v4144 = vrot.slane %v4143, 2
        %v4145 = vadd.f32 %v4143, %v4144
        %v4146 = vrot.slane %v4145, 1
        %v4147 = vadd.f32 %v4145, %v4146
        %v4148 = vadd.f32 %v1684, %v1700
        %v4149 = vadd.f32 %v4148, %v1716
        %v4150 = vadd.f32 %v4149, %v1732
        %v4151 = vadd.f32 %v4150, %v1748
        %v4152 = vadd.f32 %v4151, %v1764
        %v4153 = vadd.f32 %v4152, %v1780
        %v4154 = vadd.f32 %v4153, %v1796
        %v4155 = vadd.f32 %v4154, %v1812
        %v4156 = vadd.f32 %v4155, %v1828
        %v4157 = vadd.f32 %v4156, %v1844
        %v4158 = vadd.f32 %v4157, %v1860
        %v4159 = vadd.f32 %v4158, %v1876
        %v4160 = vadd.f32 %v4159, %v1892
        %v4161 = vadd.f32 %v4160, %v1908
        %v4162 = vadd.f32 %v4161, %v1924
        %v4163 = vrot.slane %v4162, 4
        %v4164 = vadd.f32 %v4162, %v4163
        %v4165 = vrot.slane %v4164, 2
        %v4166 = vadd.f32 %v4164, %v4165
        %v4167 = vrot.slane %v4166, 1
        %v4168 = vadd.f32 %v4166, %v4167
        %v4169 = vadd.f32 %v1685, %v1701
        %v4170 = vadd.f32 %v4169, %v1717
        %v4171 = vadd.f32 %v4170, %v1733
        %v4172 = vadd.f32 %v4171, %v1749
        %v4173 = vadd.f32 %v4172, %v1765
        %v4174 = vadd.f32 %v4173, %v1781
        %v4175 = vadd.f32 %v4174, %v1797
        %v4176 = vadd.f32 %v4175, %v1813
        %v4177 = vadd.f32 %v4176, %v1829
        %v4178 = vadd.f32 %v4177, %v1845
        %v4179 = vadd.f32 %v4178, %v1861
        %v4180 = vadd.f32 %v4179, %v1877
        %v4181 = vadd.f32 %v4180, %v1893
        %v4182 = vadd.f32 %v4181, %v1909
        %v4183 = vadd.f32 %v4182, %v1925
        %v4184 = vrot.slane %v4183, 4
        %v4185 = vadd.f32 %v4183, %v4184
        %v4186 = vrot.slane %v4185, 2
        %v4187 = vadd.f32 %v4185, %v4186
        %v4188 = vrot.slane %v4187, 1
        %v4189 = vadd.f32 %v4187, %v4188
        %v4190 = vadd.f32 %v1686, %v1702
        %v4191 = vadd.f32 %v4190, %v1718
        %v4192 = vadd.f32 %v4191, %v1734
        %v4193 = vadd.f32 %v4192, %v1750
        %v4194 = vadd.f32 %v4193, %v1766
        %v4195 = vadd.f32 %v4194, %v1782
        %v4196 = vadd.f32 %v4195, %v1798
        %v4197 = vadd.f32 %v4196, %v1814
        %v4198 = vadd.f32 %v4197, %v1830
        %v4199 = vadd.f32 %v4198, %v1846
        %v4200 = vadd.f32 %v4199, %v1862
        %v4201 = vadd.f32 %v4200, %v1878
        %v4202 = vadd.f32 %v4201, %v1894
        %v4203 = vadd.f32 %v4202, %v1910
        %v4204 = vadd.f32 %v4203, %v1926
        %v4205 = vrot.slane %v4204, 4
        %v4206 = vadd.f32 %v4204, %v4205
        %v4207 = vrot.slane %v4206, 2
        %v4208 = vadd.f32 %v4206, %v4207
        %v4209 = vrot.slane %v4208, 1
        %v4210 = vadd.f32 %v4208, %v4209
        %v4211 = vadd.f32 %v1687, %v1703
        %v4212 = vadd.f32 %v4211, %v1719
        %v4213 = vadd.f32 %v4212, %v1735
        %v4214 = vadd.f32 %v4213, %v1751
        %v4215 = vadd.f32 %v4214, %v1767
        %v4216 = vadd.f32 %v4215, %v1783
        %v4217 = vadd.f32 %v4216, %v1799
        %v4218 = vadd.f32 %v4217, %v1815
        %v4219 = vadd.f32 %v4218, %v1831
        %v4220 = vadd.f32 %v4219, %v1847
        %v4221 = vadd.f32 %v4220, %v1863
        %v4222 = vadd.f32 %v4221, %v1879
        %v4223 = vadd.f32 %v4222, %v1895
        %v4224 = vadd.f32 %v4223, %v1911
        %v4225 = vadd.f32 %v4224, %v1927
        %v4226 = vrot.slane %v4225, 4
        %v4227 = vadd.f32 %v4225, %v4226
        %v4228 = vrot.slane %v4227, 2
        %v4229 = vadd.f32 %v4227, %v4228
        %v4230 = vrot.slane %v4229, 1
        %v4231 = vadd.f32 %v4229, %v4230
        %v4232 = vadd.f32 %v1688, %v1704
        %v4233 = vadd.f32 %v4232, %v1720
        %v4234 = vadd.f32 %v4233, %v1736
        %v4235 = vadd.f32 %v4234, %v1752
        %v4236 = vadd.f32 %v4235, %v1768
        %v4237 = vadd.f32 %v4236, %v1784
        %v4238 = vadd.f32 %v4237, %v1800
        %v4239 = vadd.f32 %v4238, %v1816
        %v4240 = vadd.f32 %v4239, %v1832
        %v4241 = vadd.f32 %v4240, %v1848
        %v4242 = vadd.f32 %v4241, %v1864
        %v4243 = vadd.f32 %v4242, %v1880
        %v4244 = vadd.f32 %v4243, %v1896
        %v4245 = vadd.f32 %v4244, %v1912
        %v4246 = vadd.f32 %v4245, %v1928
        %v4247 = vrot.slane %v4246, 4
        %v4248 = vadd.f32 %v4246, %v4247
        %v4249 = vrot.slane %v4248, 2
        %v4250 = vadd.f32 %v4248, %v4249
        %v4251 = vrot.slane %v4250, 1
        %v4252 = vadd.f32 %v4250, %v4251
        %v4253 = vadd.f32 %v1689, %v1705
        %v4254 = vadd.f32 %v4253, %v1721
        %v4255 = vadd.f32 %v4254, %v1737
        %v4256 = vadd.f32 %v4255, %v1753
        %v4257 = vadd.f32 %v4256, %v1769
        %v4258 = vadd.f32 %v4257, %v1785
        %v4259 = vadd.f32 %v4258, %v1801
        %v4260 = vadd.f32 %v4259, %v1817
        %v4261 = vadd.f32 %v4260, %v1833
        %v4262 = vadd.f32 %v4261, %v1849
        %v4263 = vadd.f32 %v4262, %v1865
        %v4264 = vadd.f32 %v4263, %v1881
        %v4265 = vadd.f32 %v4264, %v1897
        %v4266 = vadd.f32 %v4265, %v1913
        %v4267 = vadd.f32 %v4266, %v1929
        %v4268 = vrot.slane %v4267, 4
        %v4269 = vadd.f32 %v4267, %v4268
        %v4270 = vrot.slane %v4269, 2
        %v4271 = vadd.f32 %v4269, %v4270
        %v4272 = vrot.slane %v4271, 1
        %v4273 = vadd.f32 %v4271, %v4272
        %v4274 = vadd.f32 %v1690, %v1706
        %v4275 = vadd.f32 %v4274, %v1722
        %v4276 = vadd.f32 %v4275, %v1738
        %v4277 = vadd.f32 %v4276, %v1754
        %v4278 = vadd.f32 %v4277, %v1770
        %v4279 = vadd.f32 %v4278, %v1786
        %v4280 = vadd.f32 %v4279, %v1802
        %v4281 = vadd.f32 %v4280, %v1818
        %v4282 = vadd.f32 %v4281, %v1834
        %v4283 = vadd.f32 %v4282, %v1850
        %v4284 = vadd.f32 %v4283, %v1866
        %v4285 = vadd.f32 %v4284, %v1882
        %v4286 = vadd.f32 %v4285, %v1898
        %v4287 = vadd.f32 %v4286, %v1914
        %v4288 = vadd.f32 %v4287, %v1930
        %v4289 = vrot.slane %v4288, 4
        %v4290 = vadd.f32 %v4288, %v4289
        %v4291 = vrot.slane %v4290, 2
        %v4292 = vadd.f32 %v4290, %v4291
        %v4293 = vrot.slane %v4292, 1
        %v4294 = vadd.f32 %v4292, %v4293
        %v4295 = vadd.f32 %v1691, %v1707
        %v4296 = vadd.f32 %v4295, %v1723
        %v4297 = vadd.f32 %v4296, %v1739
        %v4298 = vadd.f32 %v4297, %v1755
        %v4299 = vadd.f32 %v4298, %v1771
        %v4300 = vadd.f32 %v4299, %v1787
        %v4301 = vadd.f32 %v4300, %v1803
        %v4302 = vadd.f32 %v4301, %v1819
        %v4303 = vadd.f32 %v4302, %v1835
        %v4304 = vadd.f32 %v4303, %v1851
        %v4305 = vadd.f32 %v4304, %v1867
        %v4306 = vadd.f32 %v4305, %v1883
        %v4307 = vadd.f32 %v4306, %v1899
        %v4308 = vadd.f32 %v4307, %v1915
        %v4309 = vadd.f32 %v4308, %v1931
        %v4310 = vrot.slane %v4309, 4
        %v4311 = vadd.f32 %v4309, %v4310
        %v4312 = vrot.slane %v4311, 2
        %v4313 = vadd.f32 %v4311, %v4312
        %v4314 = vrot.slane %v4313, 1
        %v4315 = vadd.f32 %v4313, %v4314
        %v4316 = vadd.f32 %v1692, %v1708
        %v4317 = vadd.f32 %v4316, %v1724
        %v4318 = vadd.f32 %v4317, %v1740
        %v4319 = vadd.f32 %v4318, %v1756
        %v4320 = vadd.f32 %v4319, %v1772
        %v4321 = vadd.f32 %v4320, %v1788
        %v4322 = vadd.f32 %v4321, %v1804
        %v4323 = vadd.f32 %v4322, %v1820
        %v4324 = vadd.f32 %v4323, %v1836
        %v4325 = vadd.f32 %v4324, %v1852
        %v4326 = vadd.f32 %v4325, %v1868
        %v4327 = vadd.f32 %v4326, %v1884
        %v4328 = vadd.f32 %v4327, %v1900
        %v4329 = vadd.f32 %v4328, %v1916
        %v4330 = vadd.f32 %v4329, %v1932
        %v4331 = vrot.slane %v4330, 4
        %v4332 = vadd.f32 %v4330, %v4331
        %v4333 = vrot.slane %v4332, 2
        %v4334 = vadd.f32 %v4332, %v4333
        %v4335 = vrot.slane %v4334, 1
        %v4336 = vadd.f32 %v4334, %v4335
        %v4337 = vadd.f32 %v1693, %v1709
        %v4338 = vadd.f32 %v4337, %v1725
        %v4339 = vadd.f32 %v4338, %v1741
        %v4340 = vadd.f32 %v4339, %v1757
        %v4341 = vadd.f32 %v4340, %v1773
        %v4342 = vadd.f32 %v4341, %v1789
        %v4343 = vadd.f32 %v4342, %v1805
        %v4344 = vadd.f32 %v4343, %v1821
        %v4345 = vadd.f32 %v4344, %v1837
        %v4346 = vadd.f32 %v4345, %v1853
        %v4347 = vadd.f32 %v4346, %v1869
        %v4348 = vadd.f32 %v4347, %v1885
        %v4349 = vadd.f32 %v4348, %v1901
        %v4350 = vadd.f32 %v4349, %v1917
        %v4351 = vadd.f32 %v4350, %v1933
        %v4352 = vrot.slane %v4351, 4
        %v4353 = vadd.f32 %v4351, %v4352
        %v4354 = vrot.slane %v4353, 2
        %v4355 = vadd.f32 %v4353, %v4354
        %v4356 = vrot.slane %v4355, 1
        %v4357 = vadd.f32 %v4355, %v4356
        %v4358 = vadd.f32 %v1694, %v1710
        %v4359 = vadd.f32 %v4358, %v1726
        %v4360 = vadd.f32 %v4359, %v1742
        %v4361 = vadd.f32 %v4360, %v1758
        %v4362 = vadd.f32 %v4361, %v1774
        %v4363 = vadd.f32 %v4362, %v1790
        %v4364 = vadd.f32 %v4363, %v1806
        %v4365 = vadd.f32 %v4364, %v1822
        %v4366 = vadd.f32 %v4365, %v1838
        %v4367 = vadd.f32 %v4366, %v1854
        %v4368 = vadd.f32 %v4367, %v1870
        %v4369 = vadd.f32 %v4368, %v1886
        %v4370 = vadd.f32 %v4369, %v1902
        %v4371 = vadd.f32 %v4370, %v1918
        %v4372 = vadd.f32 %v4371, %v1934
        %v4373 = vrot.slane %v4372, 4
        %v4374 = vadd.f32 %v4372, %v4373
        %v4375 = vrot.slane %v4374, 2
        %v4376 = vadd.f32 %v4374, %v4375
        %v4377 = vrot.slane %v4376, 1
        %v4378 = vadd.f32 %v4376, %v4377
        %v4379 = vadd.f32 %v1695, %v1711
        %v4380 = vadd.f32 %v4379, %v1727
        %v4381 = vadd.f32 %v4380, %v1743
        %v4382 = vadd.f32 %v4381, %v1759
        %v4383 = vadd.f32 %v4382, %v1775
        %v4384 = vadd.f32 %v4383, %v1791
        %v4385 = vadd.f32 %v4384, %v1807
        %v4386 = vadd.f32 %v4385, %v1823
        %v4387 = vadd.f32 %v4386, %v1839
        %v4388 = vadd.f32 %v4387, %v1855
        %v4389 = vadd.f32 %v4388, %v1871
        %v4390 = vadd.f32 %v4389, %v1887
        %v4391 = vadd.f32 %v4390, %v1903
        %v4392 = vadd.f32 %v4391, %v1919
        %v4393 = vadd.f32 %v4392, %v1935
        %v4394 = vrot.slane %v4393, 4
        %v4395 = vadd.f32 %v4393, %v4394
        %v4396 = vrot.slane %v4395, 2
        %v4397 = vadd.f32 %v4395, %v4396
        %v4398 = vrot.slane %v4397, 1
        %v4399 = vadd.f32 %v4397, %v4398
        %v4400 = vadd.f32 %v1696, %v1712
        %v4401 = vadd.f32 %v4400, %v1728
        %v4402 = vadd.f32 %v4401, %v1744
        %v4403 = vadd.f32 %v4402, %v1760
        %v4404 = vadd.f32 %v4403, %v1776
        %v4405 = vadd.f32 %v4404, %v1792
        %v4406 = vadd.f32 %v4405, %v1808
        %v4407 = vadd.f32 %v4406, %v1824
        %v4408 = vadd.f32 %v4407, %v1840
        %v4409 = vadd.f32 %v4408, %v1856
        %v4410 = vadd.f32 %v4409, %v1872
        %v4411 = vadd.f32 %v4410, %v1888
        %v4412 = vadd.f32 %v4411, %v1904
        %v4413 = vadd.f32 %v4412, %v1920
        %v4414 = vadd.f32 %v4413, %v1936
        %v4415 = vrot.slane %v4414, 4
        %v4416 = vadd.f32 %v4414, %v4415
        %v4417 = vrot.slane %v4416, 2
        %v4418 = vadd.f32 %v4416, %v4417
        %v4419 = vrot.slane %v4418, 1
        %v4420 = vadd.f32 %v4418, %v4419
        %v4421 = vadd.f32 %v1697, %v1713
        %v4422 = vadd.f32 %v4421, %v1729
        %v4423 = vadd.f32 %v4422, %v1745
        %v4424 = vadd.f32 %v4423, %v1761
        %v4425 = vadd.f32 %v4424, %v1777
        %v4426 = vadd.f32 %v4425, %v1793
        %v4427 = vadd.f32 %v4426, %v1809
        %v4428 = vadd.f32 %v4427, %v1825
        %v4429 = vadd.f32 %v4428, %v1841
        %v4430 = vadd.f32 %v4429, %v1857
        %v4431 = vadd.f32 %v4430, %v1873
        %v4432 = vadd.f32 %v4431, %v1889
        %v4433 = vadd.f32 %v4432, %v1905
        %v4434 = vadd.f32 %v4433, %v1921
        %v4435 = vadd.f32 %v4434, %v1937
        %v4436 = vrot.slane %v4435, 4
        %v4437 = vadd.f32 %v4435, %v4436
        %v4438 = vrot.slane %v4437, 2
        %v4439 = vadd.f32 %v4437, %v4438
        %v4440 = vrot.slane %v4439, 1
        %v4441 = vadd.f32 %v4439, %v4440
        %v4442 = vadd.f32 %v1698, %v1714
        %v4443 = vadd.f32 %v4442, %v1730
        %v4444 = vadd.f32 %v4443, %v1746
        %v4445 = vadd.f32 %v4444, %v1762
        %v4446 = vadd.f32 %v4445, %v1778
        %v4447 = vadd.f32 %v4446, %v1794
        %v4448 = vadd.f32 %v4447, %v1810
        %v4449 = vadd.f32 %v4448, %v1826
        %v4450 = vadd.f32 %v4449, %v1842
        %v4451 = vadd.f32 %v4450, %v1858
        %v4452 = vadd.f32 %v4451, %v1874
        %v4453 = vadd.f32 %v4452, %v1890
        %v4454 = vadd.f32 %v4453, %v1906
        %v4455 = vadd.f32 %v4454, %v1922
        %v4456 = vadd.f32 %v4455, %v1938
        %v4457 = vrot.slane %v4456, 4
        %v4458 = vadd.f32 %v4456, %v4457
        %v4459 = vrot.slane %v4458, 2
        %v4460 = vadd.f32 %v4458, %v4459
        %v4461 = vrot.slane %v4460, 1
        %v4462 = vadd.f32 %v4460, %v4461
        %v4463 = vadd.f32 %v1699, %v1715
        %v4464 = vadd.f32 %v4463, %v1731
        %v4465 = vadd.f32 %v4464, %v1747
        %v4466 = vadd.f32 %v4465, %v1763
        %v4467 = vadd.f32 %v4466, %v1779
        %v4468 = vadd.f32 %v4467, %v1795
        %v4469 = vadd.f32 %v4468, %v1811
        %v4470 = vadd.f32 %v4469, %v1827
        %v4471 = vadd.f32 %v4470, %v1843
        %v4472 = vadd.f32 %v4471, %v1859
        %v4473 = vadd.f32 %v4472, %v1875
        %v4474 = vadd.f32 %v4473, %v1891
        %v4475 = vadd.f32 %v4474, %v1907
        %v4476 = vadd.f32 %v4475, %v1923
        %v4477 = vadd.f32 %v4476, %v1939
        %v4478 = vrot.slane %v4477, 4
        %v4479 = vadd.f32 %v4477, %v4478
        %v4480 = vrot.slane %v4479, 2
        %v4481 = vadd.f32 %v4479, %v4480
        %v4482 = vrot.slane %v4481, 1
        %v4483 = vadd.f32 %v4481, %v4482
        %v4484 = vadd.f32 %v1940, %v1956
        %v4485 = vadd.f32 %v4484, %v1972
        %v4486 = vadd.f32 %v4485, %v1988
        %v4487 = vadd.f32 %v4486, %v2004
        %v4488 = vadd.f32 %v4487, %v2020
        %v4489 = vadd.f32 %v4488, %v2036
        %v4490 = vadd.f32 %v4489, %v2052
        %v4491 = vadd.f32 %v4490, %v2068
        %v4492 = vadd.f32 %v4491, %v2084
        %v4493 = vadd.f32 %v4492, %v2100
        %v4494 = vadd.f32 %v4493, %v2116
        %v4495 = vadd.f32 %v4494, %v2132
        %v4496 = vadd.f32 %v4495, %v2148
        %v4497 = vadd.f32 %v4496, %v2164
        %v4498 = vadd.f32 %v4497, %v2180
        %v4499 = vrot.slane %v4498, 4
        %v4500 = vadd.f32 %v4498, %v4499
        %v4501 = vrot.slane %v4500, 2
        %v4502 = vadd.f32 %v4500, %v4501
        %v4503 = vrot.slane %v4502, 1
        %v4504 = vadd.f32 %v4502, %v4503
        %v4505 = vadd.f32 %v1941, %v1957
        %v4506 = vadd.f32 %v4505, %v1973
        %v4507 = vadd.f32 %v4506, %v1989
        %v4508 = vadd.f32 %v4507, %v2005
        %v4509 = vadd.f32 %v4508, %v2021
        %v4510 = vadd.f32 %v4509, %v2037
        %v4511 = vadd.f32 %v4510, %v2053
        %v4512 = vadd.f32 %v4511, %v2069
        %v4513 = vadd.f32 %v4512, %v2085
        %v4514 = vadd.f32 %v4513, %v2101
        %v4515 = vadd.f32 %v4514, %v2117
        %v4516 = vadd.f32 %v4515, %v2133
        %v4517 = vadd.f32 %v4516, %v2149
        %v4518 = vadd.f32 %v4517, %v2165
        %v4519 = vadd.f32 %v4518, %v2181
        %v4520 = vrot.slane %v4519, 4
        %v4521 = vadd.f32 %v4519, %v4520
        %v4522 = vrot.slane %v4521, 2
        %v4523 = vadd.f32 %v4521, %v4522
        %v4524 = vrot.slane %v4523, 1
        %v4525 = vadd.f32 %v4523, %v4524
        %v4526 = vadd.f32 %v1942, %v1958
        %v4527 = vadd.f32 %v4526, %v1974
        %v4528 = vadd.f32 %v4527, %v1990
        %v4529 = vadd.f32 %v4528, %v2006
        %v4530 = vadd.f32 %v4529, %v2022
        %v4531 = vadd.f32 %v4530, %v2038
        %v4532 = vadd.f32 %v4531, %v2054
        %v4533 = vadd.f32 %v4532, %v2070
        %v4534 = vadd.f32 %v4533, %v2086
        %v4535 = vadd.f32 %v4534, %v2102
        %v4536 = vadd.f32 %v4535, %v2118
        %v4537 = vadd.f32 %v4536, %v2134
        %v4538 = vadd.f32 %v4537, %v2150
        %v4539 = vadd.f32 %v4538, %v2166
        %v4540 = vadd.f32 %v4539, %v2182
        %v4541 = vrot.slane %v4540, 4
        %v4542 = vadd.f32 %v4540, %v4541
        %v4543 = vrot.slane %v4542, 2
        %v4544 = vadd.f32 %v4542, %v4543
        %v4545 = vrot.slane %v4544, 1
        %v4546 = vadd.f32 %v4544, %v4545
        %v4547 = vadd.f32 %v1943, %v1959
        %v4548 = vadd.f32 %v4547, %v1975
        %v4549 = vadd.f32 %v4548, %v1991
        %v4550 = vadd.f32 %v4549, %v2007
        %v4551 = vadd.f32 %v4550, %v2023
        %v4552 = vadd.f32 %v4551, %v2039
        %v4553 = vadd.f32 %v4552, %v2055
        %v4554 = vadd.f32 %v4553, %v2071
        %v4555 = vadd.f32 %v4554, %v2087
        %v4556 = vadd.f32 %v4555, %v2103
        %v4557 = vadd.f32 %v4556, %v2119
        %v4558 = vadd.f32 %v4557, %v2135
        %v4559 = vadd.f32 %v4558, %v2151
        %v4560 = vadd.f32 %v4559, %v2167
        %v4561 = vadd.f32 %v4560, %v2183
        %v4562 = vrot.slane %v4561, 4
        %v4563 = vadd.f32 %v4561, %v4562
        %v4564 = vrot.slane %v4563, 2
        %v4565 = vadd.f32 %v4563, %v4564
        %v4566 = vrot.slane %v4565, 1
        %v4567 = vadd.f32 %v4565, %v4566
        %v4568 = vadd.f32 %v1944, %v1960
        %v4569 = vadd.f32 %v4568, %v1976
        %v4570 = vadd.f32 %v4569, %v1992
        %v4571 = vadd.f32 %v4570, %v2008
        %v4572 = vadd.f32 %v4571, %v2024
        %v4573 = vadd.f32 %v4572, %v2040
        %v4574 = vadd.f32 %v4573, %v2056
        %v4575 = vadd.f32 %v4574, %v2072
        %v4576 = vadd.f32 %v4575, %v2088
        %v4577 = vadd.f32 %v4576, %v2104
        %v4578 = vadd.f32 %v4577, %v2120
        %v4579 = vadd.f32 %v4578, %v2136
        %v4580 = vadd.f32 %v4579, %v2152
        %v4581 = vadd.f32 %v4580, %v2168
        %v4582 = vadd.f32 %v4581, %v2184
        %v4583 = vrot.slane %v4582, 4
        %v4584 = vadd.f32 %v4582, %v4583
        %v4585 = vrot.slane %v4584, 2
        %v4586 = vadd.f32 %v4584, %v4585
        %v4587 = vrot.slane %v4586, 1
        %v4588 = vadd.f32 %v4586, %v4587
        %v4589 = vadd.f32 %v1945, %v1961
        %v4590 = vadd.f32 %v4589, %v1977
        %v4591 = vadd.f32 %v4590, %v1993
        %v4592 = vadd.f32 %v4591, %v2009
        %v4593 = vadd.f32 %v4592, %v2025
        %v4594 = vadd.f32 %v4593, %v2041
        %v4595 = vadd.f32 %v4594, %v2057
        %v4596 = vadd.f32 %v4595, %v2073
        %v4597 = vadd.f32 %v4596, %v2089
        %v4598 = vadd.f32 %v4597, %v2105
        %v4599 = vadd.f32 %v4598, %v2121
        %v4600 = vadd.f32 %v4599, %v2137
        %v4601 = vadd.f32 %v4600, %v2153
        %v4602 = vadd.f32 %v4601, %v2169
        %v4603 = vadd.f32 %v4602, %v2185
        %v4604 = vrot.slane %v4603, 4
        %v4605 = vadd.f32 %v4603, %v4604
        %v4606 = vrot.slane %v4605, 2
        %v4607 = vadd.f32 %v4605, %v4606
        %v4608 = vrot.slane %v4607, 1
        %v4609 = vadd.f32 %v4607, %v4608
        %v4610 = vadd.f32 %v1946, %v1962
        %v4611 = vadd.f32 %v4610, %v1978
        %v4612 = vadd.f32 %v4611, %v1994
        %v4613 = vadd.f32 %v4612, %v2010
        %v4614 = vadd.f32 %v4613, %v2026
        %v4615 = vadd.f32 %v4614, %v2042
        %v4616 = vadd.f32 %v4615, %v2058
        %v4617 = vadd.f32 %v4616, %v2074
        %v4618 = vadd.f32 %v4617, %v2090
        %v4619 = vadd.f32 %v4618, %v2106
        %v4620 = vadd.f32 %v4619, %v2122
        %v4621 = vadd.f32 %v4620, %v2138
        %v4622 = vadd.f32 %v4621, %v2154
        %v4623 = vadd.f32 %v4622, %v2170
        %v4624 = vadd.f32 %v4623, %v2186
        %v4625 = vrot.slane %v4624, 4
        %v4626 = vadd.f32 %v4624, %v4625
        %v4627 = vrot.slane %v4626, 2
        %v4628 = vadd.f32 %v4626, %v4627
        %v4629 = vrot.slane %v4628, 1
        %v4630 = vadd.f32 %v4628, %v4629
        %v4631 = vadd.f32 %v1947, %v1963
        %v4632 = vadd.f32 %v4631, %v1979
        %v4633 = vadd.f32 %v4632, %v1995
        %v4634 = vadd.f32 %v4633, %v2011
        %v4635 = vadd.f32 %v4634, %v2027
        %v4636 = vadd.f32 %v4635, %v2043
        %v4637 = vadd.f32 %v4636, %v2059
        %v4638 = vadd.f32 %v4637, %v2075
        %v4639 = vadd.f32 %v4638, %v2091
        %v4640 = vadd.f32 %v4639, %v2107
        %v4641 = vadd.f32 %v4640, %v2123
        %v4642 = vadd.f32 %v4641, %v2139
        %v4643 = vadd.f32 %v4642, %v2155
        %v4644 = vadd.f32 %v4643, %v2171
        %v4645 = vadd.f32 %v4644, %v2187
        %v4646 = vrot.slane %v4645, 4
        %v4647 = vadd.f32 %v4645, %v4646
        %v4648 = vrot.slane %v4647, 2
        %v4649 = vadd.f32 %v4647, %v4648
        %v4650 = vrot.slane %v4649, 1
        %v4651 = vadd.f32 %v4649, %v4650
        %v4652 = vadd.f32 %v1948, %v1964
        %v4653 = vadd.f32 %v4652, %v1980
        %v4654 = vadd.f32 %v4653, %v1996
        %v4655 = vadd.f32 %v4654, %v2012
        %v4656 = vadd.f32 %v4655, %v2028
        %v4657 = vadd.f32 %v4656, %v2044
        %v4658 = vadd.f32 %v4657, %v2060
        %v4659 = vadd.f32 %v4658, %v2076
        %v4660 = vadd.f32 %v4659, %v2092
        %v4661 = vadd.f32 %v4660, %v2108
        %v4662 = vadd.f32 %v4661, %v2124
        %v4663 = vadd.f32 %v4662, %v2140
        %v4664 = vadd.f32 %v4663, %v2156
        %v4665 = vadd.f32 %v4664, %v2172
        %v4666 = vadd.f32 %v4665, %v2188
        %v4667 = vrot.slane %v4666, 4
        %v4668 = vadd.f32 %v4666, %v4667
        %v4669 = vrot.slane %v4668, 2
        %v4670 = vadd.f32 %v4668, %v4669
        %v4671 = vrot.slane %v4670, 1
        %v4672 = vadd.f32 %v4670, %v4671
        %v4673 = vadd.f32 %v1949, %v1965
        %v4674 = vadd.f32 %v4673, %v1981
        %v4675 = vadd.f32 %v4674, %v1997
        %v4676 = vadd.f32 %v4675, %v2013
        %v4677 = vadd.f32 %v4676, %v2029
        %v4678 = vadd.f32 %v4677, %v2045
        %v4679 = vadd.f32 %v4678, %v2061
        %v4680 = vadd.f32 %v4679, %v2077
        %v4681 = vadd.f32 %v4680, %v2093
        %v4682 = vadd.f32 %v4681, %v2109
        %v4683 = vadd.f32 %v4682, %v2125
        %v4684 = vadd.f32 %v4683, %v2141
        %v4685 = vadd.f32 %v4684, %v2157
        %v4686 = vadd.f32 %v4685, %v2173
        %v4687 = vadd.f32 %v4686, %v2189
        %v4688 = vrot.slane %v4687, 4
        %v4689 = vadd.f32 %v4687, %v4688
        %v4690 = vrot.slane %v4689, 2
        %v4691 = vadd.f32 %v4689, %v4690
        %v4692 = vrot.slane %v4691, 1
        %v4693 = vadd.f32 %v4691, %v4692
        %v4694 = vadd.f32 %v1950, %v1966
        %v4695 = vadd.f32 %v4694, %v1982
        %v4696 = vadd.f32 %v4695, %v1998
        %v4697 = vadd.f32 %v4696, %v2014
        %v4698 = vadd.f32 %v4697, %v2030
        %v4699 = vadd.f32 %v4698, %v2046
        %v4700 = vadd.f32 %v4699, %v2062
        %v4701 = vadd.f32 %v4700, %v2078
        %v4702 = vadd.f32 %v4701, %v2094
        %v4703 = vadd.f32 %v4702, %v2110
        %v4704 = vadd.f32 %v4703, %v2126
        %v4705 = vadd.f32 %v4704, %v2142
        %v4706 = vadd.f32 %v4705, %v2158
        %v4707 = vadd.f32 %v4706, %v2174
        %v4708 = vadd.f32 %v4707, %v2190
        %v4709 = vrot.slane %v4708, 4
        %v4710 = vadd.f32 %v4708, %v4709
        %v4711 = vrot.slane %v4710, 2
        %v4712 = vadd.f32 %v4710, %v4711
        %v4713 = vrot.slane %v4712, 1
        %v4714 = vadd.f32 %v4712, %v4713
        %v4715 = vadd.f32 %v1951, %v1967
        %v4716 = vadd.f32 %v4715, %v1983
        %v4717 = vadd.f32 %v4716, %v1999
        %v4718 = vadd.f32 %v4717, %v2015
        %v4719 = vadd.f32 %v4718, %v2031
        %v4720 = vadd.f32 %v4719, %v2047
        %v4721 = vadd.f32 %v4720, %v2063
        %v4722 = vadd.f32 %v4721, %v2079
        %v4723 = vadd.f32 %v4722, %v2095
        %v4724 = vadd.f32 %v4723, %v2111
        %v4725 = vadd.f32 %v4724, %v2127
        %v4726 = vadd.f32 %v4725, %v2143
        %v4727 = vadd.f32 %v4726, %v2159
        %v4728 = vadd.f32 %v4727, %v2175
        %v4729 = vadd.f32 %v4728, %v2191
        %v4730 = vrot.slane %v4729, 4
        %v4731 = vadd.f32 %v4729, %v4730
        %v4732 = vrot.slane %v4731, 2
        %v4733 = vadd.f32 %v4731, %v4732
        %v4734 = vrot.slane %v4733, 1
        %v4735 = vadd.f32 %v4733, %v4734
        %v4736 = vadd.f32 %v1952, %v1968
        %v4737 = vadd.f32 %v4736, %v1984
        %v4738 = vadd.f32 %v4737, %v2000
        %v4739 = vadd.f32 %v4738, %v2016
        %v4740 = vadd.f32 %v4739, %v2032
        %v4741 = vadd.f32 %v4740, %v2048
        %v4742 = vadd.f32 %v4741, %v2064
        %v4743 = vadd.f32 %v4742, %v2080
        %v4744 = vadd.f32 %v4743, %v2096
        %v4745 = vadd.f32 %v4744, %v2112
        %v4746 = vadd.f32 %v4745, %v2128
        %v4747 = vadd.f32 %v4746, %v2144
        %v4748 = vadd.f32 %v4747, %v2160
        %v4749 = vadd.f32 %v4748, %v2176
        %v4750 = vadd.f32 %v4749, %v2192
        %v4751 = vrot.slane %v4750, 4
        %v4752 = vadd.f32 %v4750, %v4751
        %v4753 = vrot.slane %v4752, 2
        %v4754 = vadd.f32 %v4752, %v4753
        %v4755 = vrot.slane %v4754, 1
        %v4756 = vadd.f32 %v4754, %v4755
        %v4757 = vadd.f32 %v1953, %v1969
        %v4758 = vadd.f32 %v4757, %v1985
        %v4759 = vadd.f32 %v4758, %v2001
        %v4760 = vadd.f32 %v4759, %v2017
        %v4761 = vadd.f32 %v4760, %v2033
        %v4762 = vadd.f32 %v4761, %v2049
        %v4763 = vadd.f32 %v4762, %v2065
        %v4764 = vadd.f32 %v4763, %v2081
        %v4765 = vadd.f32 %v4764, %v2097
        %v4766 = vadd.f32 %v4765, %v2113
        %v4767 = vadd.f32 %v4766, %v2129
        %v4768 = vadd.f32 %v4767, %v2145
        %v4769 = vadd.f32 %v4768, %v2161
        %v4770 = vadd.f32 %v4769, %v2177
        %v4771 = vadd.f32 %v4770, %v2193
        %v4772 = vrot.slane %v4771, 4
        %v4773 = vadd.f32 %v4771, %v4772
        %v4774 = vrot.slane %v4773, 2
        %v4775 = vadd.f32 %v4773, %v4774
        %v4776 = vrot.slane %v4775, 1
        %v4777 = vadd.f32 %v4775, %v4776
        %v4778 = vadd.f32 %v1954, %v1970
        %v4779 = vadd.f32 %v4778, %v1986
        %v4780 = vadd.f32 %v4779, %v2002
        %v4781 = vadd.f32 %v4780, %v2018
        %v4782 = vadd.f32 %v4781, %v2034
        %v4783 = vadd.f32 %v4782, %v2050
        %v4784 = vadd.f32 %v4783, %v2066
        %v4785 = vadd.f32 %v4784, %v2082
        %v4786 = vadd.f32 %v4785, %v2098
        %v4787 = vadd.f32 %v4786, %v2114
        %v4788 = vadd.f32 %v4787, %v2130
        %v4789 = vadd.f32 %v4788, %v2146
        %v4790 = vadd.f32 %v4789, %v2162
        %v4791 = vadd.f32 %v4790, %v2178
        %v4792 = vadd.f32 %v4791, %v2194
        %v4793 = vrot.slane %v4792, 4
        %v4794 = vadd.f32 %v4792, %v4793
        %v4795 = vrot.slane %v4794, 2
        %v4796 = vadd.f32 %v4794, %v4795
        %v4797 = vrot.slane %v4796, 1
        %v4798 = vadd.f32 %v4796, %v4797
        %v4799 = vadd.f32 %v1955, %v1971
        %v4800 = vadd.f32 %v4799, %v1987
        %v4801 = vadd.f32 %v4800, %v2003
        %v4802 = vadd.f32 %v4801, %v2019
        %v4803 = vadd.f32 %v4802, %v2035
        %v4804 = vadd.f32 %v4803, %v2051
        %v4805 = vadd.f32 %v4804, %v2067
        %v4806 = vadd.f32 %v4805, %v2083
        %v4807 = vadd.f32 %v4806, %v2099
        %v4808 = vadd.f32 %v4807, %v2115
        %v4809 = vadd.f32 %v4808, %v2131
        %v4810 = vadd.f32 %v4809, %v2147
        %v4811 = vadd.f32 %v4810, %v2163
        %v4812 = vadd.f32 %v4811, %v2179
        %v4813 = vadd.f32 %v4812, %v2195
        %v4814 = vrot.slane %v4813, 4
        %v4815 = vadd.f32 %v4813, %v4814
        %v4816 = vrot.slane %v4815, 2
        %v4817 = vadd.f32 %v4815, %v4816
        %v4818 = vrot.slane %v4817, 1
        %v4819 = vadd.f32 %v4817, %v4818
        %v4820 = vadd.f32 %v2196, %v2212
        %v4821 = vadd.f32 %v4820, %v2228
        %v4822 = vadd.f32 %v4821, %v2244
        %v4823 = vadd.f32 %v4822, %v2260
        %v4824 = vadd.f32 %v4823, %v2276
        %v4825 = vadd.f32 %v4824, %v2292
        %v4826 = vadd.f32 %v4825, %v2308
        %v4827 = vadd.f32 %v4826, %v2324
        %v4828 = vadd.f32 %v4827, %v2340
        %v4829 = vadd.f32 %v4828, %v2356
        %v4830 = vadd.f32 %v4829, %v2372
        %v4831 = vadd.f32 %v4830, %v2388
        %v4832 = vadd.f32 %v4831, %v2404
        %v4833 = vadd.f32 %v4832, %v2420
        %v4834 = vadd.f32 %v4833, %v2436
        %v4835 = vrot.slane %v4834, 4
        %v4836 = vadd.f32 %v4834, %v4835
        %v4837 = vrot.slane %v4836, 2
        %v4838 = vadd.f32 %v4836, %v4837
        %v4839 = vrot.slane %v4838, 1
        %v4840 = vadd.f32 %v4838, %v4839
        %v4841 = vadd.f32 %v2197, %v2213
        %v4842 = vadd.f32 %v4841, %v2229
        %v4843 = vadd.f32 %v4842, %v2245
        %v4844 = vadd.f32 %v4843, %v2261
        %v4845 = vadd.f32 %v4844, %v2277
        %v4846 = vadd.f32 %v4845, %v2293
        %v4847 = vadd.f32 %v4846, %v2309
        %v4848 = vadd.f32 %v4847, %v2325
        %v4849 = vadd.f32 %v4848, %v2341
        %v4850 = vadd.f32 %v4849, %v2357
        %v4851 = vadd.f32 %v4850, %v2373
        %v4852 = vadd.f32 %v4851, %v2389
        %v4853 = vadd.f32 %v4852, %v2405
        %v4854 = vadd.f32 %v4853, %v2421
        %v4855 = vadd.f32 %v4854, %v2437
        %v4856 = vrot.slane %v4855, 4
        %v4857 = vadd.f32 %v4855, %v4856
        %v4858 = vrot.slane %v4857, 2
        %v4859 = vadd.f32 %v4857, %v4858
        %v4860 = vrot.slane %v4859, 1
        %v4861 = vadd.f32 %v4859, %v4860
        %v4862 = vadd.f32 %v2198, %v2214
        %v4863 = vadd.f32 %v4862, %v2230
        %v4864 = vadd.f32 %v4863, %v2246
        %v4865 = vadd.f32 %v4864, %v2262
        %v4866 = vadd.f32 %v4865, %v2278
        %v4867 = vadd.f32 %v4866, %v2294
        %v4868 = vadd.f32 %v4867, %v2310
        %v4869 = vadd.f32 %v4868, %v2326
        %v4870 = vadd.f32 %v4869, %v2342
        %v4871 = vadd.f32 %v4870, %v2358
        %v4872 = vadd.f32 %v4871, %v2374
        %v4873 = vadd.f32 %v4872, %v2390
        %v4874 = vadd.f32 %v4873, %v2406
        %v4875 = vadd.f32 %v4874, %v2422
        %v4876 = vadd.f32 %v4875, %v2438
        %v4877 = vrot.slane %v4876, 4
        %v4878 = vadd.f32 %v4876, %v4877
        %v4879 = vrot.slane %v4878, 2
        %v4880 = vadd.f32 %v4878, %v4879
        %v4881 = vrot.slane %v4880, 1
        %v4882 = vadd.f32 %v4880, %v4881
        %v4883 = vadd.f32 %v2199, %v2215
        %v4884 = vadd.f32 %v4883, %v2231
        %v4885 = vadd.f32 %v4884, %v2247
        %v4886 = vadd.f32 %v4885, %v2263
        %v4887 = vadd.f32 %v4886, %v2279
        %v4888 = vadd.f32 %v4887, %v2295
        %v4889 = vadd.f32 %v4888, %v2311
        %v4890 = vadd.f32 %v4889, %v2327
        %v4891 = vadd.f32 %v4890, %v2343
        %v4892 = vadd.f32 %v4891, %v2359
        %v4893 = vadd.f32 %v4892, %v2375
        %v4894 = vadd.f32 %v4893, %v2391
        %v4895 = vadd.f32 %v4894, %v2407
        %v4896 = vadd.f32 %v4895, %v2423
        %v4897 = vadd.f32 %v4896, %v2439
        %v4898 = vrot.slane %v4897, 4
        %v4899 = vadd.f32 %v4897, %v4898
        %v4900 = vrot.slane %v4899, 2
        %v4901 = vadd.f32 %v4899, %v4900
        %v4902 = vrot.slane %v4901, 1
        %v4903 = vadd.f32 %v4901, %v4902
        %v4904 = vadd.f32 %v2200, %v2216
        %v4905 = vadd.f32 %v4904, %v2232
        %v4906 = vadd.f32 %v4905, %v2248
        %v4907 = vadd.f32 %v4906, %v2264
        %v4908 = vadd.f32 %v4907, %v2280
        %v4909 = vadd.f32 %v4908, %v2296
        %v4910 = vadd.f32 %v4909, %v2312
        %v4911 = vadd.f32 %v4910, %v2328
        %v4912 = vadd.f32 %v4911, %v2344
        %v4913 = vadd.f32 %v4912, %v2360
        %v4914 = vadd.f32 %v4913, %v2376
        %v4915 = vadd.f32 %v4914, %v2392
        %v4916 = vadd.f32 %v4915, %v2408
        %v4917 = vadd.f32 %v4916, %v2424
        %v4918 = vadd.f32 %v4917, %v2440
        %v4919 = vrot.slane %v4918, 4
        %v4920 = vadd.f32 %v4918, %v4919
        %v4921 = vrot.slane %v4920, 2
        %v4922 = vadd.f32 %v4920, %v4921
        %v4923 = vrot.slane %v4922, 1
        %v4924 = vadd.f32 %v4922, %v4923
        %v4925 = vadd.f32 %v2201, %v2217
        %v4926 = vadd.f32 %v4925, %v2233
        %v4927 = vadd.f32 %v4926, %v2249
        %v4928 = vadd.f32 %v4927, %v2265
        %v4929 = vadd.f32 %v4928, %v2281
        %v4930 = vadd.f32 %v4929, %v2297
        %v4931 = vadd.f32 %v4930, %v2313
        %v4932 = vadd.f32 %v4931, %v2329
        %v4933 = vadd.f32 %v4932, %v2345
        %v4934 = vadd.f32 %v4933, %v2361
        %v4935 = vadd.f32 %v4934, %v2377
        %v4936 = vadd.f32 %v4935, %v2393
        %v4937 = vadd.f32 %v4936, %v2409
        %v4938 = vadd.f32 %v4937, %v2425
        %v4939 = vadd.f32 %v4938, %v2441
        %v4940 = vrot.slane %v4939, 4
        %v4941 = vadd.f32 %v4939, %v4940
        %v4942 = vrot.slane %v4941, 2
        %v4943 = vadd.f32 %v4941, %v4942
        %v4944 = vrot.slane %v4943, 1
        %v4945 = vadd.f32 %v4943, %v4944
        %v4946 = vadd.f32 %v2202, %v2218
        %v4947 = vadd.f32 %v4946, %v2234
        %v4948 = vadd.f32 %v4947, %v2250
        %v4949 = vadd.f32 %v4948, %v2266
        %v4950 = vadd.f32 %v4949, %v2282
        %v4951 = vadd.f32 %v4950, %v2298
        %v4952 = vadd.f32 %v4951, %v2314
        %v4953 = vadd.f32 %v4952, %v2330
        %v4954 = vadd.f32 %v4953, %v2346
        %v4955 = vadd.f32 %v4954, %v2362
        %v4956 = vadd.f32 %v4955, %v2378
        %v4957 = vadd.f32 %v4956, %v2394
        %v4958 = vadd.f32 %v4957, %v2410
        %v4959 = vadd.f32 %v4958, %v2426
        %v4960 = vadd.f32 %v4959, %v2442
        %v4961 = vrot.slane %v4960, 4
        %v4962 = vadd.f32 %v4960, %v4961
        %v4963 = vrot.slane %v4962, 2
        %v4964 = vadd.f32 %v4962, %v4963
        %v4965 = vrot.slane %v4964, 1
        %v4966 = vadd.f32 %v4964, %v4965
        %v4967 = vadd.f32 %v2203, %v2219
        %v4968 = vadd.f32 %v4967, %v2235
        %v4969 = vadd.f32 %v4968, %v2251
        %v4970 = vadd.f32 %v4969, %v2267
        %v4971 = vadd.f32 %v4970, %v2283
        %v4972 = vadd.f32 %v4971, %v2299
        %v4973 = vadd.f32 %v4972, %v2315
        %v4974 = vadd.f32 %v4973, %v2331
        %v4975 = vadd.f32 %v4974, %v2347
        %v4976 = vadd.f32 %v4975, %v2363
        %v4977 = vadd.f32 %v4976, %v2379
        %v4978 = vadd.f32 %v4977, %v2395
        %v4979 = vadd.f32 %v4978, %v2411
        %v4980 = vadd.f32 %v4979, %v2427
        %v4981 = vadd.f32 %v4980, %v2443
        %v4982 = vrot.slane %v4981, 4
        %v4983 = vadd.f32 %v4981, %v4982
        %v4984 = vrot.slane %v4983, 2
        %v4985 = vadd.f32 %v4983, %v4984
        %v4986 = vrot.slane %v4985, 1
        %v4987 = vadd.f32 %v4985, %v4986
        %v4988 = vadd.f32 %v2204, %v2220
        %v4989 = vadd.f32 %v4988, %v2236
        %v4990 = vadd.f32 %v4989, %v2252
        %v4991 = vadd.f32 %v4990, %v2268
        %v4992 = vadd.f32 %v4991, %v2284
        %v4993 = vadd.f32 %v4992, %v2300
        %v4994 = vadd.f32 %v4993, %v2316
        %v4995 = vadd.f32 %v4994, %v2332
        %v4996 = vadd.f32 %v4995, %v2348
        %v4997 = vadd.f32 %v4996, %v2364
        %v4998 = vadd.f32 %v4997, %v2380
        %v4999 = vadd.f32 %v4998, %v2396
        %v5000 = vadd.f32 %v4999, %v2412
        %v5001 = vadd.f32 %v5000, %v2428
        %v5002 = vadd.f32 %v5001, %v2444
        %v5003 = vrot.slane %v5002, 4
        %v5004 = vadd.f32 %v5002, %v5003
        %v5005 = vrot.slane %v5004, 2
        %v5006 = vadd.f32 %v5004, %v5005
        %v5007 = vrot.slane %v5006, 1
        %v5008 = vadd.f32 %v5006, %v5007
        %v5009 = vadd.f32 %v2205, %v2221
        %v5010 = vadd.f32 %v5009, %v2237
        %v5011 = vadd.f32 %v5010, %v2253
        %v5012 = vadd.f32 %v5011, %v2269
        %v5013 = vadd.f32 %v5012, %v2285
        %v5014 = vadd.f32 %v5013, %v2301
        %v5015 = vadd.f32 %v5014, %v2317
        %v5016 = vadd.f32 %v5015, %v2333
        %v5017 = vadd.f32 %v5016, %v2349
        %v5018 = vadd.f32 %v5017, %v2365
        %v5019 = vadd.f32 %v5018, %v2381
        %v5020 = vadd.f32 %v5019, %v2397
        %v5021 = vadd.f32 %v5020, %v2413
        %v5022 = vadd.f32 %v5021, %v2429
        %v5023 = vadd.f32 %v5022, %v2445
        %v5024 = vrot.slane %v5023, 4
        %v5025 = vadd.f32 %v5023, %v5024
        %v5026 = vrot.slane %v5025, 2
        %v5027 = vadd.f32 %v5025, %v5026
        %v5028 = vrot.slane %v5027, 1
        %v5029 = vadd.f32 %v5027, %v5028
        %v5030 = vadd.f32 %v2206, %v2222
        %v5031 = vadd.f32 %v5030, %v2238
        %v5032 = vadd.f32 %v5031, %v2254
        %v5033 = vadd.f32 %v5032, %v2270
        %v5034 = vadd.f32 %v5033, %v2286
        %v5035 = vadd.f32 %v5034, %v2302
        %v5036 = vadd.f32 %v5035, %v2318
        %v5037 = vadd.f32 %v5036, %v2334
        %v5038 = vadd.f32 %v5037, %v2350
        %v5039 = vadd.f32 %v5038, %v2366
        %v5040 = vadd.f32 %v5039, %v2382
        %v5041 = vadd.f32 %v5040, %v2398
        %v5042 = vadd.f32 %v5041, %v2414
        %v5043 = vadd.f32 %v5042, %v2430
        %v5044 = vadd.f32 %v5043, %v2446
        %v5045 = vrot.slane %v5044, 4
        %v5046 = vadd.f32 %v5044, %v5045
        %v5047 = vrot.slane %v5046, 2
        %v5048 = vadd.f32 %v5046, %v5047
        %v5049 = vrot.slane %v5048, 1
        %v5050 = vadd.f32 %v5048, %v5049
        %v5051 = vadd.f32 %v2207, %v2223
        %v5052 = vadd.f32 %v5051, %v2239
        %v5053 = vadd.f32 %v5052, %v2255
        %v5054 = vadd.f32 %v5053, %v2271
        %v5055 = vadd.f32 %v5054, %v2287
        %v5056 = vadd.f32 %v5055, %v2303
        %v5057 = vadd.f32 %v5056, %v2319
        %v5058 = vadd.f32 %v5057, %v2335
        %v5059 = vadd.f32 %v5058, %v2351
        %v5060 = vadd.f32 %v5059, %v2367
        %v5061 = vadd.f32 %v5060, %v2383
        %v5062 = vadd.f32 %v5061, %v2399
        %v5063 = vadd.f32 %v5062, %v2415
        %v5064 = vadd.f32 %v5063, %v2431
        %v5065 = vadd.f32 %v5064, %v2447
        %v5066 = vrot.slane %v5065, 4
        %v5067 = vadd.f32 %v5065, %v5066
        %v5068 = vrot.slane %v5067, 2
        %v5069 = vadd.f32 %v5067, %v5068
        %v5070 = vrot.slane %v5069, 1
        %v5071 = vadd.f32 %v5069, %v5070
        %v5072 = vadd.f32 %v2208, %v2224
        %v5073 = vadd.f32 %v5072, %v2240
        %v5074 = vadd.f32 %v5073, %v2256
        %v5075 = vadd.f32 %v5074, %v2272
        %v5076 = vadd.f32 %v5075, %v2288
        %v5077 = vadd.f32 %v5076, %v2304
        %v5078 = vadd.f32 %v5077, %v2320
        %v5079 = vadd.f32 %v5078, %v2336
        %v5080 = vadd.f32 %v5079, %v2352
        %v5081 = vadd.f32 %v5080, %v2368
        %v5082 = vadd.f32 %v5081, %v2384
        %v5083 = vadd.f32 %v5082, %v2400
        %v5084 = vadd.f32 %v5083, %v2416
        %v5085 = vadd.f32 %v5084, %v2432
        %v5086 = vadd.f32 %v5085, %v2448
        %v5087 = vrot.slane %v5086, 4
        %v5088 = vadd.f32 %v5086, %v5087
        %v5089 = vrot.slane %v5088, 2
        %v5090 = vadd.f32 %v5088, %v5089
        %v5091 = vrot.slane %v5090, 1
        %v5092 = vadd.f32 %v5090, %v5091
        %v5093 = vadd.f32 %v2209, %v2225
        %v5094 = vadd.f32 %v5093, %v2241
        %v5095 = vadd.f32 %v5094, %v2257
        %v5096 = vadd.f32 %v5095, %v2273
        %v5097 = vadd.f32 %v5096, %v2289
        %v5098 = vadd.f32 %v5097, %v2305
        %v5099 = vadd.f32 %v5098, %v2321
        %v5100 = vadd.f32 %v5099, %v2337
        %v5101 = vadd.f32 %v5100, %v2353
        %v5102 = vadd.f32 %v5101, %v2369
        %v5103 = vadd.f32 %v5102, %v2385
        %v5104 = vadd.f32 %v5103, %v2401
        %v5105 = vadd.f32 %v5104, %v2417
        %v5106 = vadd.f32 %v5105, %v2433
        %v5107 = vadd.f32 %v5106, %v2449
        %v5108 = vrot.slane %v5107, 4
        %v5109 = vadd.f32 %v5107, %v5108
        %v5110 = vrot.slane %v5109, 2
        %v5111 = vadd.f32 %v5109, %v5110
        %v5112 = vrot.slane %v5111, 1
        %v5113 = vadd.f32 %v5111, %v5112
        %v5114 = vadd.f32 %v2210, %v2226
        %v5115 = vadd.f32 %v5114, %v2242
        %v5116 = vadd.f32 %v5115, %v2258
        %v5117 = vadd.f32 %v5116, %v2274
        %v5118 = vadd.f32 %v5117, %v2290
        %v5119 = vadd.f32 %v5118, %v2306
        %v5120 = vadd.f32 %v5119, %v2322
        %v5121 = vadd.f32 %v5120, %v2338
        %v5122 = vadd.f32 %v5121, %v2354
        %v5123 = vadd.f32 %v5122, %v2370
        %v5124 = vadd.f32 %v5123, %v2386
        %v5125 = vadd.f32 %v5124, %v2402
        %v5126 = vadd.f32 %v5125, %v2418
        %v5127 = vadd.f32 %v5126, %v2434
        %v5128 = vadd.f32 %v5127, %v2450
        %v5129 = vrot.slane %v5128, 4
        %v5130 = vadd.f32 %v5128, %v5129
        %v5131 = vrot.slane %v5130, 2
        %v5132 = vadd.f32 %v5130, %v5131
        %v5133 = vrot.slane %v5132, 1
        %v5134 = vadd.f32 %v5132, %v5133
        %v5135 = vadd.f32 %v2211, %v2227
        %v5136 = vadd.f32 %v5135, %v2243
        %v5137 = vadd.f32 %v5136, %v2259
        %v5138 = vadd.f32 %v5137, %v2275
        %v5139 = vadd.f32 %v5138, %v2291
        %v5140 = vadd.f32 %v5139, %v2307
        %v5141 = vadd.f32 %v5140, %v2323
        %v5142 = vadd.f32 %v5141, %v2339
        %v5143 = vadd.f32 %v5142, %v2355
        %v5144 = vadd.f32 %v5143, %v2371
        %v5145 = vadd.f32 %v5144, %v2387
        %v5146 = vadd.f32 %v5145, %v2403
        %v5147 = vadd.f32 %v5146, %v2419
        %v5148 = vadd.f32 %v5147, %v2435
        %v5149 = vadd.f32 %v5148, %v2451
        %v5150 = vrot.slane %v5149, 4
        %v5151 = vadd.f32 %v5149, %v5150
        %v5152 = vrot.slane %v5151, 2
        %v5153 = vadd.f32 %v5151, %v5152
        %v5154 = vrot.slane %v5153, 1
        %v5155 = vadd.f32 %v5153, %v5154
        %vm5284 = vcmask 1041409
        %v5285 = vsel %vm5284, %v2824, %v2488
        %vm5286 = vcmask 1042434
        %v5287 = vsel %vm5286, %v3160, %v5285
        %vm5288 = vcmask 1043459
        %v5289 = vsel %vm5288, %v3496, %v5287
        %vm5290 = vcmask 1044484
        %v5291 = vsel %vm5290, %v3832, %v5289
        %vm5292 = vcmask 1045509
        %v5293 = vsel %vm5292, %v4168, %v5291
        %vm5294 = vcmask 1046534
        %v5295 = vsel %vm5294, %v4504, %v5293
        %vm5296 = vcmask 1047559
        %v5297 = vsel %vm5296, %v4840, %v5295
        %v5298 = vsel %vm5284, %v2845, %v2509
        %v5299 = vsel %vm5286, %v3181, %v5298
        %v5300 = vsel %vm5288, %v3517, %v5299
        %v5301 = vsel %vm5290, %v3853, %v5300
        %v5302 = vsel %vm5292, %v4189, %v5301
        %v5303 = vsel %vm5294, %v4525, %v5302
        %v5304 = vsel %vm5296, %v4861, %v5303
        %v5305 = vsel %vm5284, %v2866, %v2530
        %v5306 = vsel %vm5286, %v3202, %v5305
        %v5307 = vsel %vm5288, %v3538, %v5306
        %v5308 = vsel %vm5290, %v3874, %v5307
        %v5309 = vsel %vm5292, %v4210, %v5308
        %v5310 = vsel %vm5294, %v4546, %v5309
        %v5311 = vsel %vm5296, %v4882, %v5310
        %v5312 = vsel %vm5284, %v2887, %v2551
        %v5313 = vsel %vm5286, %v3223, %v5312
        %v5314 = vsel %vm5288, %v3559, %v5313
        %v5315 = vsel %vm5290, %v3895, %v5314
        %v5316 = vsel %vm5292, %v4231, %v5315
        %v5317 = vsel %vm5294, %v4567, %v5316
        %v5318 = vsel %vm5296, %v4903, %v5317
        %v5319 = vsel %vm5284, %v2908, %v2572
        %v5320 = vsel %vm5286, %v3244, %v5319
        %v5321 = vsel %vm5288, %v3580, %v5320
        %v5322 = vsel %vm5290, %v3916, %v5321
        %v5323 = vsel %vm5292, %v4252, %v5322
        %v5324 = vsel %vm5294, %v4588, %v5323
        %v5325 = vsel %vm5296, %v4924, %v5324
        %v5326 = vsel %vm5284, %v2929, %v2593
        %v5327 = vsel %vm5286, %v3265, %v5326
        %v5328 = vsel %vm5288, %v3601, %v5327
        %v5329 = vsel %vm5290, %v3937, %v5328
        %v5330 = vsel %vm5292, %v4273, %v5329
        %v5331 = vsel %vm5294, %v4609, %v5330
        %v5332 = vsel %vm5296, %v4945, %v5331
        %v5333 = vsel %vm5284, %v2950, %v2614
        %v5334 = vsel %vm5286, %v3286, %v5333
        %v5335 = vsel %vm5288, %v3622, %v5334
        %v5336 = vsel %vm5290, %v3958, %v5335
        %v5337 = vsel %vm5292, %v4294, %v5336
        %v5338 = vsel %vm5294, %v4630, %v5337
        %v5339 = vsel %vm5296, %v4966, %v5338
        %v5340 = vsel %vm5284, %v2971, %v2635
        %v5341 = vsel %vm5286, %v3307, %v5340
        %v5342 = vsel %vm5288, %v3643, %v5341
        %v5343 = vsel %vm5290, %v3979, %v5342
        %v5344 = vsel %vm5292, %v4315, %v5343
        %v5345 = vsel %vm5294, %v4651, %v5344
        %v5346 = vsel %vm5296, %v4987, %v5345
        %v5347 = vsel %vm5284, %v2992, %v2656
        %v5348 = vsel %vm5286, %v3328, %v5347
        %v5349 = vsel %vm5288, %v3664, %v5348
        %v5350 = vsel %vm5290, %v4000, %v5349
        %v5351 = vsel %vm5292, %v4336, %v5350
        %v5352 = vsel %vm5294, %v4672, %v5351
        %v5353 = vsel %vm5296, %v5008, %v5352
        %v5354 = vsel %vm5284, %v3013, %v2677
        %v5355 = vsel %vm5286, %v3349, %v5354
        %v5356 = vsel %vm5288, %v3685, %v5355
        %v5357 = vsel %vm5290, %v4021, %v5356
        %v5358 = vsel %vm5292, %v4357, %v5357
        %v5359 = vsel %vm5294, %v4693, %v5358
        %v5360 = vsel %vm5296, %v5029, %v5359
        %v5361 = vsel %vm5284, %v3034, %v2698
        %v5362 = vsel %vm5286, %v3370, %v5361
        %v5363 = vsel %vm5288, %v3706, %v5362
        %v5364 = vsel %vm5290, %v4042, %v5363
        %v5365 = vsel %vm5292, %v4378, %v5364
        %v5366 = vsel %vm5294, %v4714, %v5365
        %v5367 = vsel %vm5296, %v5050, %v5366
        %v5368 = vsel %vm5284, %v3055, %v2719
        %v5369 = vsel %vm5286, %v3391, %v5368
        %v5370 = vsel %vm5288, %v3727, %v5369
        %v5371 = vsel %vm5290, %v4063, %v5370
        %v5372 = vsel %vm5292, %v4399, %v5371
        %v5373 = vsel %vm5294, %v4735, %v5372
        %v5374 = vsel %vm5296, %v5071, %v5373
        %v5375 = vsel %vm5284, %v3076, %v2740
        %v5376 = vsel %vm5286, %v3412, %v5375
        %v5377 = vsel %vm5288, %v3748, %v5376
        %v5378 = vsel %vm5290, %v4084, %v5377
        %v5379 = vsel %vm5292, %v4420, %v5378
        %v5380 = vsel %vm5294, %v4756, %v5379
        %v5381 = vsel %vm5296, %v5092, %v5380
        %v5382 = vsel %vm5284, %v3097, %v2761
        %v5383 = vsel %vm5286, %v3433, %v5382
        %v5384 = vsel %vm5288, %v3769, %v5383
        %v5385 = vsel %vm5290, %v4105, %v5384
        %v5386 = vsel %vm5292, %v4441, %v5385
        %v5387 = vsel %vm5294, %v4777, %v5386
        %v5388 = vsel %vm5296, %v5113, %v5387
        %v5389 = vsel %vm5284, %v3118, %v2782
        %v5390 = vsel %vm5286, %v3454, %v5389
        %v5391 = vsel %vm5288, %v3790, %v5390
        %v5392 = vsel %vm5290, %v4126, %v5391
        %v5393 = vsel %vm5292, %v4462, %v5392
        %v5394 = vsel %vm5294, %v4798, %v5393
        %v5395 = vsel %vm5296, %v5134, %v5394
        %v5396 = vsel %vm5284, %v3139, %v2803
        %v5397 = vsel %vm5286, %v3475, %v5396
        %v5398 = vsel %vm5288, %v3811, %v5397
        %v5399 = vsel %vm5290, %v4147, %v5398
        %v5400 = vsel %vm5292, %v4483, %v5399
        %v5401 = vsel %vm5294, %v4819, %v5400
        %v5402 = vsel %vm5296, %v5155, %v5401
        %v5419 = vadd.f32 %v2452, %v5297
        %v5420 = vadd.f32 %v2453, %v5304
        %v5421 = vadd.f32 %v2454, %v5311
        %v5422 = vadd.f32 %v2455, %v5318
        %v5423 = vadd.f32 %v2456, %v5325
        %v5424 = vadd.f32 %v2457, %v5332
        %v5425 = vadd.f32 %v2458, %v5339
        %v5426 = vadd.f32 %v2459, %v5346
        %v5427 = vadd.f32 %v2460, %v5353
        %v5428 = vadd.f32 %v2461, %v5360
        %v5429 = vadd.f32 %v2462, %v5367
        %v5430 = vadd.f32 %v2463, %v5374
        %v5431 = vadd.f32 %v2464, %v5381
        %v5432 = vadd.f32 %v2465, %v5388
        %v5433 = vadd.f32 %v2466, %v5395
        %v5434 = vadd.f32 %v2467, %v5402
        %5435 = vst [vmem:[#allocation2] sm:$0xff] %v5419
        %5436 = vst [vmem:[#allocation2 + $0x8] sm:$0xff] %v5420
        %5437 = vst [vmem:[#allocation2 + $0x10] sm:$0xff] %v5421
        %5438 = vst [vmem:[#allocation2 + $0x18] sm:$0xff] %v5422
        %5439 = vst [vmem:[#allocation2 + $0x20] sm:$0xff] %v5423
        %5440 = vst [vmem:[#allocation2 + $0x28] sm:$0xff] %v5424
        %5441 = vst [vmem:[#allocation2 + $0x30] sm:$0xff] %v5425
        %5442 = vst [vmem:[#allocation2 + $0x38] sm:$0xff] %v5426
        %5443 = vst [vmem:[#allocation2 + $0x40] sm:$0xff] %v5427
        %5444 = vst [vmem:[#allocation2 + $0x48] sm:$0xff] %v5428
        %5445 = vst [vmem:[#allocation2 + $0x50] sm:$0xff] %v5429
        %5446 = vst [vmem:[#allocation2 + $0x58] sm:$0xff] %v5430
        %5447 = vst [vmem:[#allocation2 + $0x60] sm:$0xff] %v5431
        %5448 = vst [vmem:[#allocation2 + $0x68] sm:$0xff] %v5432
        %5449 = vst [vmem:[#allocation2 + $0x70] sm:$0xff] %v5433
        %5450 = vst [vmem:[#allocation2 + $0x78] sm:$0xff] %v5434
        %p5451 = scmp.eq.s32.totalorder %s28, 3
        // Predicated region
        $region57: #{baseline_head.1} parent=47 // pred_check
          %p5452 = pneg %p5451
        $region58: #{baseline_head.1} parent=47 // pred_check_branch
          %5454 = sbr.rel (%p5452) target = $region60
        $region59: #{baseline_head.1} parent=47 // pred_region
          %v5455 = vld [vmem:[#allocation2] sm:$0xff]
          %v5456 = vld [vmem:[#allocation2 + $0x8] sm:$0xff]
          %v5457 = vld [vmem:[#allocation2 + $0x10] sm:$0xff]
          %v5458 = vld [vmem:[#allocation2 + $0x18] sm:$0xff]
          %v5459 = vld [vmem:[#allocation2 + $0x20] sm:$0xff]
          %v5460 = vld [vmem:[#allocation2 + $0x28] sm:$0xff]
          %v5461 = vld [vmem:[#allocation2 + $0x30] sm:$0xff]
          %v5462 = vld [vmem:[#allocation2 + $0x38] sm:$0xff]
          %v5463 = vld [vmem:[#allocation2 + $0x40] sm:$0xff]
          %v5464 = vld [vmem:[#allocation2 + $0x48] sm:$0xff]
          %v5465 = vld [vmem:[#allocation2 + $0x50] sm:$0xff]
          %v5466 = vld [vmem:[#allocation2 + $0x58] sm:$0xff]
          %v5467 = vld [vmem:[#allocation2 + $0x60] sm:$0xff]
          %v5468 = vld [vmem:[#allocation2 + $0x68] sm:$0xff]
          %v5469 = vld [vmem:[#allocation2 + $0x70] sm:$0xff]
          %v5470 = vld [vmem:[#allocation2 + $0x78] sm:$0xff]
          %v5471 = vld [vmem:[%s1] sm:$0xff]
          %v5472 = vld [vmem:[%s1 + $0x8] sm:$0xff]
          %v5473 = vld [vmem:[%s1 + $0x10] sm:$0xff]
          %v5474 = vld [vmem:[%s1 + $0x18] sm:$0xff]
          %v5475 = vld [vmem:[%s1 + $0x20] sm:$0xff]
          %v5476 = vld [vmem:[%s1 + $0x28] sm:$0xff]
          %v5477 = vld [vmem:[%s1 + $0x30] sm:$0xff]
          %v5478 = vld [vmem:[%s1 + $0x38] sm:$0xff]
          %v5479 = vld [vmem:[%s1 + $0x40] sm:$0xff]
          %v5480 = vld [vmem:[%s1 + $0x48] sm:$0xff]
          %v5481 = vld [vmem:[%s1 + $0x50] sm:$0xff]
          %v5482 = vld [vmem:[%s1 + $0x58] sm:$0xff]
          %v5483 = vld [vmem:[%s1 + $0x60] sm:$0xff]
          %v5484 = vld [vmem:[%s1 + $0x68] sm:$0xff]
          %v5485 = vld [vmem:[%s1 + $0x70] sm:$0xff]
          %v5486 = vld [vmem:[%s1 + $0x78] sm:$0xff]
          %v5487 = vld [vmem:[%s1 + $0x80] sm:$0xff]
          %v5488 = vld [vmem:[%s1 + $0x88] sm:$0xff]
          %v5489 = vld [vmem:[%s1 + $0x90] sm:$0xff]
          %v5490 = vld [vmem:[%s1 + $0x98] sm:$0xff]
          %v5491 = vld [vmem:[%s1 + $0xa0] sm:$0xff]
          %v5492 = vld [vmem:[%s1 + $0xa8] sm:$0xff]
          %v5493 = vld [vmem:[%s1 + $0xb0] sm:$0xff]
          %v5494 = vld [vmem:[%s1 + $0xb8] sm:$0xff]
          %v5495 = vld [vmem:[%s1 + $0xc0] sm:$0xff]
          %v5496 = vld [vmem:[%s1 + $0xc8] sm:$0xff]
          %v5497 = vld [vmem:[%s1 + $0xd0] sm:$0xff]
          %v5498 = vld [vmem:[%s1 + $0xd8] sm:$0xff]
          %v5499 = vld [vmem:[%s1 + $0xe0] sm:$0xff]
          %v5500 = vld [vmem:[%s1 + $0xe8] sm:$0xff]
          %v5501 = vld [vmem:[%s1 + $0xf0] sm:$0xff]
          %v5502 = vld [vmem:[%s1 + $0xf8] sm:$0xff]
          %v5503 = vld [vmem:[%s1 + $0x100] sm:$0xff]
          %v5504 = vld [vmem:[%s1 + $0x108] sm:$0xff]
          %v5505 = vld [vmem:[%s1 + $0x110] sm:$0xff]
          %v5506 = vld [vmem:[%s1 + $0x118] sm:$0xff]
          %v5507 = vld [vmem:[%s1 + $0x120] sm:$0xff]
          %v5508 = vld [vmem:[%s1 + $0x128] sm:$0xff]
          %v5509 = vld [vmem:[%s1 + $0x130] sm:$0xff]
          %v5510 = vld [vmem:[%s1 + $0x138] sm:$0xff]
          %v5511 = vld [vmem:[%s1 + $0x140] sm:$0xff]
          %v5512 = vld [vmem:[%s1 + $0x148] sm:$0xff]
          %v5513 = vld [vmem:[%s1 + $0x150] sm:$0xff]
          %v5514 = vld [vmem:[%s1 + $0x158] sm:$0xff]
          %v5515 = vld [vmem:[%s1 + $0x160] sm:$0xff]
          %v5516 = vld [vmem:[%s1 + $0x168] sm:$0xff]
          %v5517 = vld [vmem:[%s1 + $0x170] sm:$0xff]
          %v5518 = vld [vmem:[%s1 + $0x178] sm:$0xff]
          %v5519 = vld [vmem:[%s1 + $0x180] sm:$0xff]
          %v5520 = vld [vmem:[%s1 + $0x188] sm:$0xff]
          %v5521 = vld [vmem:[%s1 + $0x190] sm:$0xff]
          %v5522 = vld [vmem:[%s1 + $0x198] sm:$0xff]
          %v5523 = vld [vmem:[%s1 + $0x1a0] sm:$0xff]
          %v5524 = vld [vmem:[%s1 + $0x1a8] sm:$0xff]
          %v5525 = vld [vmem:[%s1 + $0x1b0] sm:$0xff]
          %v5526 = vld [vmem:[%s1 + $0x1b8] sm:$0xff]
          %v5527 = vld [vmem:[%s1 + $0x1c0] sm:$0xff]
          %v5528 = vld [vmem:[%s1 + $0x1c8] sm:$0xff]
          %v5529 = vld [vmem:[%s1 + $0x1d0] sm:$0xff]
          %v5530 = vld [vmem:[%s1 + $0x1d8] sm:$0xff]
          %v5531 = vld [vmem:[%s1 + $0x1e0] sm:$0xff]
          %v5532 = vld [vmem:[%s1 + $0x1e8] sm:$0xff]
          %v5533 = vld [vmem:[%s1 + $0x1f0] sm:$0xff]
          %v5534 = vld [vmem:[%s1 + $0x1f8] sm:$0xff]
          %v5535 = vld [vmem:[%s1 + $0x200] sm:$0xff]
          %v5536 = vld [vmem:[%s1 + $0x208] sm:$0xff]
          %v5537 = vld [vmem:[%s1 + $0x210] sm:$0xff]
          %v5538 = vld [vmem:[%s1 + $0x218] sm:$0xff]
          %v5539 = vld [vmem:[%s1 + $0x220] sm:$0xff]
          %v5540 = vld [vmem:[%s1 + $0x228] sm:$0xff]
          %v5541 = vld [vmem:[%s1 + $0x230] sm:$0xff]
          %v5542 = vld [vmem:[%s1 + $0x238] sm:$0xff]
          %v5543 = vld [vmem:[%s1 + $0x240] sm:$0xff]
          %v5544 = vld [vmem:[%s1 + $0x248] sm:$0xff]
          %v5545 = vld [vmem:[%s1 + $0x250] sm:$0xff]
          %v5546 = vld [vmem:[%s1 + $0x258] sm:$0xff]
          %v5547 = vld [vmem:[%s1 + $0x260] sm:$0xff]
          %v5548 = vld [vmem:[%s1 + $0x268] sm:$0xff]
          %v5549 = vld [vmem:[%s1 + $0x270] sm:$0xff]
          %v5550 = vld [vmem:[%s1 + $0x278] sm:$0xff]
          %v5551 = vld [vmem:[%s1 + $0x280] sm:$0xff]
          %v5552 = vld [vmem:[%s1 + $0x288] sm:$0xff]
          %v5553 = vld [vmem:[%s1 + $0x290] sm:$0xff]
          %v5554 = vld [vmem:[%s1 + $0x298] sm:$0xff]
          %v5555 = vld [vmem:[%s1 + $0x2a0] sm:$0xff]
          %v5556 = vld [vmem:[%s1 + $0x2a8] sm:$0xff]
          %v5557 = vld [vmem:[%s1 + $0x2b0] sm:$0xff]
          %v5558 = vld [vmem:[%s1 + $0x2b8] sm:$0xff]
          %v5559 = vld [vmem:[%s1 + $0x2c0] sm:$0xff]
          %v5560 = vld [vmem:[%s1 + $0x2c8] sm:$0xff]
          %v5561 = vld [vmem:[%s1 + $0x2d0] sm:$0xff]
          %v5562 = vld [vmem:[%s1 + $0x2d8] sm:$0xff]
          %v5563 = vld [vmem:[%s1 + $0x2e0] sm:$0xff]
          %v5564 = vld [vmem:[%s1 + $0x2e8] sm:$0xff]
          %v5565 = vld [vmem:[%s1 + $0x2f0] sm:$0xff]
          %v5566 = vld [vmem:[%s1 + $0x2f8] sm:$0xff]
          %v5567 = vld [vmem:[%s1 + $0x300] sm:$0xff]
          %v5568 = vld [vmem:[%s1 + $0x308] sm:$0xff]
          %v5569 = vld [vmem:[%s1 + $0x310] sm:$0xff]
          %v5570 = vld [vmem:[%s1 + $0x318] sm:$0xff]
          %v5571 = vld [vmem:[%s1 + $0x320] sm:$0xff]
          %v5572 = vld [vmem:[%s1 + $0x328] sm:$0xff]
          %v5573 = vld [vmem:[%s1 + $0x330] sm:$0xff]
          %v5574 = vld [vmem:[%s1 + $0x338] sm:$0xff]
          %v5575 = vld [vmem:[%s1 + $0x340] sm:$0xff]
          %v5576 = vld [vmem:[%s1 + $0x348] sm:$0xff]
          %v5577 = vld [vmem:[%s1 + $0x350] sm:$0xff]
          %v5578 = vld [vmem:[%s1 + $0x358] sm:$0xff]
          %v5579 = vld [vmem:[%s1 + $0x360] sm:$0xff]
          %v5580 = vld [vmem:[%s1 + $0x368] sm:$0xff]
          %v5581 = vld [vmem:[%s1 + $0x370] sm:$0xff]
          %v5582 = vld [vmem:[%s1 + $0x378] sm:$0xff]
          %v5583 = vld [vmem:[%s1 + $0x380] sm:$0xff]
          %v5584 = vld [vmem:[%s1 + $0x388] sm:$0xff]
          %v5585 = vld [vmem:[%s1 + $0x390] sm:$0xff]
          %v5586 = vld [vmem:[%s1 + $0x398] sm:$0xff]
          %v5587 = vld [vmem:[%s1 + $0x3a0] sm:$0xff]
          %v5588 = vld [vmem:[%s1 + $0x3a8] sm:$0xff]
          %v5589 = vld [vmem:[%s1 + $0x3b0] sm:$0xff]
          %v5590 = vld [vmem:[%s1 + $0x3b8] sm:$0xff]
          %v5591 = vld [vmem:[%s1 + $0x3c0] sm:$0xff]
          %v5592 = vld [vmem:[%s1 + $0x3c8] sm:$0xff]
          %v5593 = vld [vmem:[%s1 + $0x3d0] sm:$0xff]
          %v5594 = vld [vmem:[%s1 + $0x3d8] sm:$0xff]
          %v5595 = vld [vmem:[%s1 + $0x3e0] sm:$0xff]
          %v5596 = vld [vmem:[%s1 + $0x3e8] sm:$0xff]
          %v5597 = vld [vmem:[%s1 + $0x3f0] sm:$0xff]
          %v5598 = vld [vmem:[%s1 + $0x3f8] sm:$0xff]
          %v5599 = vld [vmem:[%s1 + $0x400] sm:$0xff]
          %v5600 = vld [vmem:[%s1 + $0x408] sm:$0xff]
          %v5601 = vld [vmem:[%s1 + $0x410] sm:$0xff]
          %v5602 = vld [vmem:[%s1 + $0x418] sm:$0xff]
          %v5603 = vld [vmem:[%s1 + $0x420] sm:$0xff]
          %v5604 = vld [vmem:[%s1 + $0x428] sm:$0xff]
          %v5605 = vld [vmem:[%s1 + $0x430] sm:$0xff]
          %v5606 = vld [vmem:[%s1 + $0x438] sm:$0xff]
          %v5607 = vld [vmem:[%s1 + $0x440] sm:$0xff]
          %v5608 = vld [vmem:[%s1 + $0x448] sm:$0xff]
          %v5609 = vld [vmem:[%s1 + $0x450] sm:$0xff]
          %v5610 = vld [vmem:[%s1 + $0x458] sm:$0xff]
          %v5611 = vld [vmem:[%s1 + $0x460] sm:$0xff]
          %v5612 = vld [vmem:[%s1 + $0x468] sm:$0xff]
          %v5613 = vld [vmem:[%s1 + $0x470] sm:$0xff]
          %v5614 = vld [vmem:[%s1 + $0x478] sm:$0xff]
          %v5615 = vld [vmem:[%s1 + $0x480] sm:$0xff]
          %v5616 = vld [vmem:[%s1 + $0x488] sm:$0xff]
          %v5617 = vld [vmem:[%s1 + $0x490] sm:$0xff]
          %v5618 = vld [vmem:[%s1 + $0x498] sm:$0xff]
          %v5619 = vld [vmem:[%s1 + $0x4a0] sm:$0xff]
          %v5620 = vld [vmem:[%s1 + $0x4a8] sm:$0xff]
          %v5621 = vld [vmem:[%s1 + $0x4b0] sm:$0xff]
          %v5622 = vld [vmem:[%s1 + $0x4b8] sm:$0xff]
          %v5623 = vld [vmem:[%s1 + $0x4c0] sm:$0xff]
          %v5624 = vld [vmem:[%s1 + $0x4c8] sm:$0xff]
          %v5625 = vld [vmem:[%s1 + $0x4d0] sm:$0xff]
          %v5626 = vld [vmem:[%s1 + $0x4d8] sm:$0xff]
          %v5627 = vld [vmem:[%s1 + $0x4e0] sm:$0xff]
          %v5628 = vld [vmem:[%s1 + $0x4e8] sm:$0xff]
          %v5629 = vld [vmem:[%s1 + $0x4f0] sm:$0xff]
          %v5630 = vld [vmem:[%s1 + $0x4f8] sm:$0xff]
          %v5631 = vld [vmem:[%s1 + $0x500] sm:$0xff]
          %v5632 = vld [vmem:[%s1 + $0x508] sm:$0xff]
          %v5633 = vld [vmem:[%s1 + $0x510] sm:$0xff]
          %v5634 = vld [vmem:[%s1 + $0x518] sm:$0xff]
          %v5635 = vld [vmem:[%s1 + $0x520] sm:$0xff]
          %v5636 = vld [vmem:[%s1 + $0x528] sm:$0xff]
          %v5637 = vld [vmem:[%s1 + $0x530] sm:$0xff]
          %v5638 = vld [vmem:[%s1 + $0x538] sm:$0xff]
          %v5639 = vld [vmem:[%s1 + $0x540] sm:$0xff]
          %v5640 = vld [vmem:[%s1 + $0x548] sm:$0xff]
          %v5641 = vld [vmem:[%s1 + $0x550] sm:$0xff]
          %v5642 = vld [vmem:[%s1 + $0x558] sm:$0xff]
          %v5643 = vld [vmem:[%s1 + $0x560] sm:$0xff]
          %v5644 = vld [vmem:[%s1 + $0x568] sm:$0xff]
          %v5645 = vld [vmem:[%s1 + $0x570] sm:$0xff]
          %v5646 = vld [vmem:[%s1 + $0x578] sm:$0xff]
          %v5647 = vld [vmem:[%s1 + $0x580] sm:$0xff]
          %v5648 = vld [vmem:[%s1 + $0x588] sm:$0xff]
          %v5649 = vld [vmem:[%s1 + $0x590] sm:$0xff]
          %v5650 = vld [vmem:[%s1 + $0x598] sm:$0xff]
          %v5651 = vld [vmem:[%s1 + $0x5a0] sm:$0xff]
          %v5652 = vld [vmem:[%s1 + $0x5a8] sm:$0xff]
          %v5653 = vld [vmem:[%s1 + $0x5b0] sm:$0xff]
          %v5654 = vld [vmem:[%s1 + $0x5b8] sm:$0xff]
          %v5655 = vld [vmem:[%s1 + $0x5c0] sm:$0xff]
          %v5656 = vld [vmem:[%s1 + $0x5c8] sm:$0xff]
          %v5657 = vld [vmem:[%s1 + $0x5d0] sm:$0xff]
          %v5658 = vld [vmem:[%s1 + $0x5d8] sm:$0xff]
          %v5659 = vld [vmem:[%s1 + $0x5e0] sm:$0xff]
          %v5660 = vld [vmem:[%s1 + $0x5e8] sm:$0xff]
          %v5661 = vld [vmem:[%s1 + $0x5f0] sm:$0xff]
          %v5662 = vld [vmem:[%s1 + $0x5f8] sm:$0xff]
          %v5663 = vld [vmem:[%s1 + $0x600] sm:$0xff]
          %v5664 = vld [vmem:[%s1 + $0x608] sm:$0xff]
          %v5665 = vld [vmem:[%s1 + $0x610] sm:$0xff]
          %v5666 = vld [vmem:[%s1 + $0x618] sm:$0xff]
          %v5667 = vld [vmem:[%s1 + $0x620] sm:$0xff]
          %v5668 = vld [vmem:[%s1 + $0x628] sm:$0xff]
          %v5669 = vld [vmem:[%s1 + $0x630] sm:$0xff]
          %v5670 = vld [vmem:[%s1 + $0x638] sm:$0xff]
          %v5671 = vld [vmem:[%s1 + $0x640] sm:$0xff]
          %v5672 = vld [vmem:[%s1 + $0x648] sm:$0xff]
          %v5673 = vld [vmem:[%s1 + $0x650] sm:$0xff]
          %v5674 = vld [vmem:[%s1 + $0x658] sm:$0xff]
          %v5675 = vld [vmem:[%s1 + $0x660] sm:$0xff]
          %v5676 = vld [vmem:[%s1 + $0x668] sm:$0xff]
          %v5677 = vld [vmem:[%s1 + $0x670] sm:$0xff]
          %v5678 = vld [vmem:[%s1 + $0x678] sm:$0xff]
          %v5679 = vld [vmem:[%s1 + $0x680] sm:$0xff]
          %v5680 = vld [vmem:[%s1 + $0x688] sm:$0xff]
          %v5681 = vld [vmem:[%s1 + $0x690] sm:$0xff]
          %v5682 = vld [vmem:[%s1 + $0x698] sm:$0xff]
          %v5683 = vld [vmem:[%s1 + $0x6a0] sm:$0xff]
          %v5684 = vld [vmem:[%s1 + $0x6a8] sm:$0xff]
          %v5685 = vld [vmem:[%s1 + $0x6b0] sm:$0xff]
          %v5686 = vld [vmem:[%s1 + $0x6b8] sm:$0xff]
          %v5687 = vld [vmem:[%s1 + $0x6c0] sm:$0xff]
          %v5688 = vld [vmem:[%s1 + $0x6c8] sm:$0xff]
          %v5689 = vld [vmem:[%s1 + $0x6d0] sm:$0xff]
          %v5690 = vld [vmem:[%s1 + $0x6d8] sm:$0xff]
          %v5691 = vld [vmem:[%s1 + $0x6e0] sm:$0xff]
          %v5692 = vld [vmem:[%s1 + $0x6e8] sm:$0xff]
          %v5693 = vld [vmem:[%s1 + $0x6f0] sm:$0xff]
          %v5694 = vld [vmem:[%s1 + $0x6f8] sm:$0xff]
          %v5695 = vld [vmem:[%s1 + $0x700] sm:$0xff]
          %v5696 = vld [vmem:[%s1 + $0x708] sm:$0xff]
          %v5697 = vld [vmem:[%s1 + $0x710] sm:$0xff]
          %v5698 = vld [vmem:[%s1 + $0x718] sm:$0xff]
          %v5699 = vld [vmem:[%s1 + $0x720] sm:$0xff]
          %v5700 = vld [vmem:[%s1 + $0x728] sm:$0xff]
          %v5701 = vld [vmem:[%s1 + $0x730] sm:$0xff]
          %v5702 = vld [vmem:[%s1 + $0x738] sm:$0xff]
          %v5703 = vld [vmem:[%s1 + $0x740] sm:$0xff]
          %v5704 = vld [vmem:[%s1 + $0x748] sm:$0xff]
          %v5705 = vld [vmem:[%s1 + $0x750] sm:$0xff]
          %v5706 = vld [vmem:[%s1 + $0x758] sm:$0xff]
          %v5707 = vld [vmem:[%s1 + $0x760] sm:$0xff]
          %v5708 = vld [vmem:[%s1 + $0x768] sm:$0xff]
          %v5709 = vld [vmem:[%s1 + $0x770] sm:$0xff]
          %v5710 = vld [vmem:[%s1 + $0x778] sm:$0xff]
          %v5711 = vld [vmem:[%s1 + $0x780] sm:$0xff]
          %v5712 = vld [vmem:[%s1 + $0x788] sm:$0xff]
          %v5713 = vld [vmem:[%s1 + $0x790] sm:$0xff]
          %v5714 = vld [vmem:[%s1 + $0x798] sm:$0xff]
          %v5715 = vld [vmem:[%s1 + $0x7a0] sm:$0xff]
          %v5716 = vld [vmem:[%s1 + $0x7a8] sm:$0xff]
          %v5717 = vld [vmem:[%s1 + $0x7b0] sm:$0xff]
          %v5718 = vld [vmem:[%s1 + $0x7b8] sm:$0xff]
          %v5719 = vld [vmem:[%s1 + $0x7c0] sm:$0xff]
          %v5720 = vld [vmem:[%s1 + $0x7c8] sm:$0xff]
          %v5721 = vld [vmem:[%s1 + $0x7d0] sm:$0xff]
          %v5722 = vld [vmem:[%s1 + $0x7d8] sm:$0xff]
          %v5723 = vld [vmem:[%s1 + $0x7e0] sm:$0xff]
          %v5724 = vld [vmem:[%s1 + $0x7e8] sm:$0xff]
          %v5725 = vld [vmem:[%s1 + $0x7f0] sm:$0xff]
          %v5726 = vld [vmem:[%s1 + $0x7f8] sm:$0xff]
          %v5727 = vld [vmem:[%s2] sm:$0x1]
          %v5729 = vlaneseq
          %v5730 = vshrl.u32 %v5729, 7
          %v5731 = vsub.s32 0, %v5730
          %v5732 = vrot.slane %v5727, %v5731
          %5734 = vmatprep.subr.mxu0 0.0
          %5735 = vmatpush1.msra.mxu0 %v5471
          %5736 = vmatprep.subr.mxu0 0.0
          %5737 = vmatpush1.msra.mxu0 %v5472
          %5738 = vmatprep.subr.mxu0 0.0
          %5739 = vmatpush1.msra.mxu0 %v5473
          %5740 = vmatprep.subr.mxu0 0.0
          %5741 = vmatpush1.msra.mxu0 %v5474
          %5742 = vmatprep.subr.mxu0 0.0
          %5743 = vmatpush1.msra.mxu0 %v5475
          %5744 = vmatprep.subr.mxu0 0.0
          %5745 = vmatpush1.msra.mxu0 %v5476
          %5746 = vmatprep.subr.mxu0 0.0
          %5747 = vmatpush1.msra.mxu0 %v5477
          %5748 = vmatprep.subr.mxu0 0.0
          %5749 = vmatpush1.msra.mxu0 %v5478
          %5750 = vmatprep.subr.mxu0 0.0
          %5751 = vmatpush1.msra.mxu0 %v5479
          %5752 = vmatprep.subr.mxu0 0.0
          %5753 = vmatpush1.msra.mxu0 %v5480
          %5754 = vmatprep.subr.mxu0 0.0
          %5755 = vmatpush1.msra.mxu0 %v5481
          %5756 = vmatprep.subr.mxu0 0.0
          %5757 = vmatpush1.msra.mxu0 %v5482
          %5758 = vmatprep.subr.mxu0 0.0
          %5759 = vmatpush1.msra.mxu0 %v5483
          %5760 = vmatprep.subr.mxu0 0.0
          %5761 = vmatpush1.msra.mxu0 %v5484
          %5762 = vmatprep.subr.mxu0 0.0
          %5763 = vmatpush1.msra.mxu0 %v5485
          %5764 = vmatprep.subr.mxu0 0.0
          %5765 = vmatpush1.msra.mxu0 %v5486
          %5766 = vmatprep.subr.mxu0 0.0
          %5767 = vmatpush1.msra.mxu0 %v5487
          %5768 = vmatprep.subr.mxu0 0.0
          %5769 = vmatpush1.msra.mxu0 %v5488
          %5770 = vmatprep.subr.mxu0 0.0
          %5771 = vmatpush1.msra.mxu0 %v5489
          %5772 = vmatprep.subr.mxu0 0.0
          %5773 = vmatpush1.msra.mxu0 %v5490
          %5774 = vmatprep.subr.mxu0 0.0
          %5775 = vmatpush1.msra.mxu0 %v5491
          %5776 = vmatprep.subr.mxu0 0.0
          %5777 = vmatpush1.msra.mxu0 %v5492
          %5778 = vmatprep.subr.mxu0 0.0
          %5779 = vmatpush1.msra.mxu0 %v5493
          %5780 = vmatprep.subr.mxu0 0.0
          %5781 = vmatpush1.msra.mxu0 %v5494
          %5782 = vmatprep.subr.mxu0 0.0
          %5783 = vmatpush1.msra.mxu0 %v5495
          %5784 = vmatprep.subr.mxu0 0.0
          %5785 = vmatpush1.msra.mxu0 %v5496
          %5786 = vmatprep.subr.mxu0 0.0
          %5787 = vmatpush1.msra.mxu0 %v5497
          %5788 = vmatprep.subr.mxu0 0.0
          %5789 = vmatpush1.msra.mxu0 %v5498
          %5790 = vmatprep.subr.mxu0 0.0
          %5791 = vmatpush1.msra.mxu0 %v5499
          %5792 = vmatprep.subr.mxu0 0.0
          %5793 = vmatpush1.msra.mxu0 %v5500
          %5794 = vmatprep.subr.mxu0 0.0
          %5795 = vmatpush1.msra.mxu0 %v5501
          %5796 = vmatprep.subr.mxu0 0.0
          %5797 = vmatpush1.msra.mxu0 %v5502
          %5798 = vmatprep.mubr.f32.mxu0 %v5456
          %5799 = vmatmul.mubr.f32.gmra.mrb[0].mxu0 %v5455
          %v5800 = vpop.f32.mrb[0].mxu0
          %v5801 = vadd.f32 %v5732, %v5800
          %v5802 = vpop.f32.mrb[0].mxu0
          %5803 = vdwg.mxu0
          %5804 = vmatprep.subr.mxu0 0.0
          %5805 = vmatpush1.msra.mxu0 %v5503
          %5806 = vmatprep.subr.mxu0 0.0
          %5807 = vmatpush1.msra.mxu0 %v5504
          %5808 = vmatprep.subr.mxu0 0.0
          %5809 = vmatpush1.msra.mxu0 %v5505
          %5810 = vmatprep.subr.mxu0 0.0
          %5811 = vmatpush1.msra.mxu0 %v5506
          %5812 = vmatprep.subr.mxu0 0.0
          %5813 = vmatpush1.msra.mxu0 %v5507
          %5814 = vmatprep.subr.mxu0 0.0
          %5815 = vmatpush1.msra.mxu0 %v5508
          %5816 = vmatprep.subr.mxu0 0.0
          %5817 = vmatpush1.msra.mxu0 %v5509
          %5818 = vmatprep.subr.mxu0 0.0
          %5819 = vmatpush1.msra.mxu0 %v5510
          %5820 = vmatprep.subr.mxu0 0.0
          %5821 = vmatpush1.msra.mxu0 %v5511
          %5822 = vmatprep.subr.mxu0 0.0
          %5823 = vmatpush1.msra.mxu0 %v5512
          %5824 = vmatprep.subr.mxu0 0.0
          %5825 = vmatpush1.msra.mxu0 %v5513
          %5826 = vmatprep.subr.mxu0 0.0
          %5827 = vmatpush1.msra.mxu0 %v5514
          %5828 = vmatprep.subr.mxu0 0.0
          %5829 = vmatpush1.msra.mxu0 %v5515
          %5830 = vmatprep.subr.mxu0 0.0
          %5831 = vmatpush1.msra.mxu0 %v5516
          %5832 = vmatprep.subr.mxu0 0.0
          %5833 = vmatpush1.msra.mxu0 %v5517
          %5834 = vmatprep.subr.mxu0 0.0
          %5835 = vmatpush1.msra.mxu0 %v5518
          %5836 = vmatprep.subr.mxu0 0.0
          %5837 = vmatpush1.msra.mxu0 %v5519
          %5838 = vmatprep.subr.mxu0 0.0
          %5839 = vmatpush1.msra.mxu0 %v5520
          %5840 = vmatprep.subr.mxu0 0.0
          %5841 = vmatpush1.msra.mxu0 %v5521
          %5842 = vmatprep.subr.mxu0 0.0
          %5843 = vmatpush1.msra.mxu0 %v5522
          %5844 = vmatprep.subr.mxu0 0.0
          %5845 = vmatpush1.msra.mxu0 %v5523
          %5846 = vmatprep.subr.mxu0 0.0
          %5847 = vmatpush1.msra.mxu0 %v5524
          %5848 = vmatprep.subr.mxu0 0.0
          %5849 = vmatpush1.msra.mxu0 %v5525
          %5850 = vmatprep.subr.mxu0 0.0
          %5851 = vmatpush1.msra.mxu0 %v5526
          %5852 = vmatprep.subr.mxu0 0.0
          %5853 = vmatpush1.msra.mxu0 %v5527
          %5854 = vmatprep.subr.mxu0 0.0
          %5855 = vmatpush1.msra.mxu0 %v5528
          %5856 = vmatprep.subr.mxu0 0.0
          %5857 = vmatpush1.msra.mxu0 %v5529
          %5858 = vmatprep.subr.mxu0 0.0
          %5859 = vmatpush1.msra.mxu0 %v5530
          %5860 = vmatprep.subr.mxu0 0.0
          %5861 = vmatpush1.msra.mxu0 %v5531
          %5862 = vmatprep.subr.mxu0 0.0
          %5863 = vmatpush1.msra.mxu0 %v5532
          %5864 = vmatprep.subr.mxu0 0.0
          %5865 = vmatpush1.msra.mxu0 %v5533
          %5866 = vmatprep.subr.mxu0 0.0
          %5867 = vmatpush1.msra.mxu0 %v5534
          %5868 = vmatprep.mubr.f32.mxu0 %v5458
          %5869 = vmatmul.mubr.f32.gmra.mrb[0].mxu0 %v5457
          %v5870 = vpop.f32.mrb[0].mxu0
          %v5871 = vadd.f32 %v5801, %v5870
          %v5872 = vpop.f32.mrb[0].mxu0
          %5873 = vdwg.mxu0
          %5874 = vmatprep.subr.mxu0 0.0
          %5875 = vmatpush1.msra.mxu0 %v5535
          %5876 = vmatprep.subr.mxu0 0.0
          %5877 = vmatpush1.msra.mxu0 %v5536
          %5878 = vmatprep.subr.mxu0 0.0
          %5879 = vmatpush1.msra.mxu0 %v5537
          %5880 = vmatprep.subr.mxu0 0.0
          %5881 = vmatpush1.msra.mxu0 %v5538
          %5882 = vmatprep.subr.mxu0 0.0
          %5883 = vmatpush1.msra.mxu0 %v5539
          %5884 = vmatprep.subr.mxu0 0.0
          %5885 = vmatpush1.msra.mxu0 %v5540
          %5886 = vmatprep.subr.mxu0 0.0
          %5887 = vmatpush1.msra.mxu0 %v5541
          %5888 = vmatprep.subr.mxu0 0.0
          %5889 = vmatpush1.msra.mxu0 %v5542
          %5890 = vmatprep.subr.mxu0 0.0
          %5891 = vmatpush1.msra.mxu0 %v5543
          %5892 = vmatprep.subr.mxu0 0.0
          %5893 = vmatpush1.msra.mxu0 %v5544
          %5894 = vmatprep.subr.mxu0 0.0
          %5895 = vmatpush1.msra.mxu0 %v5545
          %5896 = vmatprep.subr.mxu0 0.0
          %5897 = vmatpush1.msra.mxu0 %v5546
          %5898 = vmatprep.subr.mxu0 0.0
          %5899 = vmatpush1.msra.mxu0 %v5547
          %5900 = vmatprep.subr.mxu0 0.0
          %5901 = vmatpush1.msra.mxu0 %v5548
          %5902 = vmatprep.subr.mxu0 0.0
          %5903 = vmatpush1.msra.mxu0 %v5549
          %5904 = vmatprep.subr.mxu0 0.0
          %5905 = vmatpush1.msra.mxu0 %v5550
          %5906 = vmatprep.subr.mxu0 0.0
          %5907 = vmatpush1.msra.mxu0 %v5551
          %5908 = vmatprep.subr.mxu0 0.0
          %5909 = vmatpush1.msra.mxu0 %v5552
          %5910 = vmatprep.subr.mxu0 0.0
          %5911 = vmatpush1.msra.mxu0 %v5553
          %5912 = vmatprep.subr.mxu0 0.0
          %5913 = vmatpush1.msra.mxu0 %v5554
          %5914 = vmatprep.subr.mxu0 0.0
          %5915 = vmatpush1.msra.mxu0 %v5555
          %5916 = vmatprep.subr.mxu0 0.0
          %5917 = vmatpush1.msra.mxu0 %v5556
          %5918 = vmatprep.subr.mxu0 0.0
          %5919 = vmatpush1.msra.mxu0 %v5557
          %5920 = vmatprep.subr.mxu0 0.0
          %5921 = vmatpush1.msra.mxu0 %v5558
          %5922 = vmatprep.subr.mxu0 0.0
          %5923 = vmatpush1.msra.mxu0 %v5559
          %5924 = vmatprep.subr.mxu0 0.0
          %5925 = vmatpush1.msra.mxu0 %v5560
          %5926 = vmatprep.subr.mxu0 0.0
          %5927 = vmatpush1.msra.mxu0 %v5561
          %5928 = vmatprep.subr.mxu0 0.0
          %5929 = vmatpush1.msra.mxu0 %v5562
          %5930 = vmatprep.subr.mxu0 0.0
          %5931 = vmatpush1.msra.mxu0 %v5563
          %5932 = vmatprep.subr.mxu0 0.0
          %5933 = vmatpush1.msra.mxu0 %v5564
          %5934 = vmatprep.subr.mxu0 0.0
          %5935 = vmatpush1.msra.mxu0 %v5565
          %5936 = vmatprep.subr.mxu0 0.0
          %5937 = vmatpush1.msra.mxu0 %v5566
          %5938 = vmatprep.mubr.f32.mxu0 %v5460
          %5939 = vmatmul.mubr.f32.gmra.mrb[0].mxu0 %v5459
          %v5940 = vpop.f32.mrb[0].mxu0
          %v5941 = vadd.f32 %v5871, %v5940
          %v5942 = vpop.f32.mrb[0].mxu0
          %5943 = vdwg.mxu0
          %5944 = vmatprep.subr.mxu0 0.0
          %5945 = vmatpush1.msra.mxu0 %v5567
          %5946 = vmatprep.subr.mxu0 0.0
          %5947 = vmatpush1.msra.mxu0 %v5568
          %5948 = vmatprep.subr.mxu0 0.0
          %5949 = vmatpush1.msra.mxu0 %v5569
          %5950 = vmatprep.subr.mxu0 0.0
          %5951 = vmatpush1.msra.mxu0 %v5570
          %5952 = vmatprep.subr.mxu0 0.0
          %5953 = vmatpush1.msra.mxu0 %v5571
          %5954 = vmatprep.subr.mxu0 0.0
          %5955 = vmatpush1.msra.mxu0 %v5572
          %5956 = vmatprep.subr.mxu0 0.0
          %5957 = vmatpush1.msra.mxu0 %v5573
          %5958 = vmatprep.subr.mxu0 0.0
          %5959 = vmatpush1.msra.mxu0 %v5574
          %5960 = vmatprep.subr.mxu0 0.0
          %5961 = vmatpush1.msra.mxu0 %v5575
          %5962 = vmatprep.subr.mxu0 0.0
          %5963 = vmatpush1.msra.mxu0 %v5576
          %5964 = vmatprep.subr.mxu0 0.0
          %5965 = vmatpush1.msra.mxu0 %v5577
          %5966 = vmatprep.subr.mxu0 0.0
          %5967 = vmatpush1.msra.mxu0 %v5578
          %5968 = vmatprep.subr.mxu0 0.0
          %5969 = vmatpush1.msra.mxu0 %v5579
          %5970 = vmatprep.subr.mxu0 0.0
          %5971 = vmatpush1.msra.mxu0 %v5580
          %5972 = vmatprep.subr.mxu0 0.0
          %5973 = vmatpush1.msra.mxu0 %v5581
          %5974 = vmatprep.subr.mxu0 0.0
          %5975 = vmatpush1.msra.mxu0 %v5582
          %5976 = vmatprep.subr.mxu0 0.0
          %5977 = vmatpush1.msra.mxu0 %v5583
          %5978 = vmatprep.subr.mxu0 0.0
          %5979 = vmatpush1.msra.mxu0 %v5584
          %5980 = vmatprep.subr.mxu0 0.0
          %5981 = vmatpush1.msra.mxu0 %v5585
          %5982 = vmatprep.subr.mxu0 0.0
          %5983 = vmatpush1.msra.mxu0 %v5586
          %5984 = vmatprep.subr.mxu0 0.0
          %5985 = vmatpush1.msra.mxu0 %v5587
          %5986 = vmatprep.subr.mxu0 0.0
          %5987 = vmatpush1.msra.mxu0 %v5588
          %5988 = vmatprep.subr.mxu0 0.0
          %5989 = vmatpush1.msra.mxu0 %v5589
          %5990 = vmatprep.subr.mxu0 0.0
          %5991 = vmatpush1.msra.mxu0 %v5590
          %5992 = vmatprep.subr.mxu0 0.0
          %5993 = vmatpush1.msra.mxu0 %v5591
          %5994 = vmatprep.subr.mxu0 0.0
          %5995 = vmatpush1.msra.mxu0 %v5592
          %5996 = vmatprep.subr.mxu0 0.0
          %5997 = vmatpush1.msra.mxu0 %v5593
          %5998 = vmatprep.subr.mxu0 0.0
          %5999 = vmatpush1.msra.mxu0 %v5594
          %6000 = vmatprep.subr.mxu0 0.0
          %6001 = vmatpush1.msra.mxu0 %v5595
          %6002 = vmatprep.subr.mxu0 0.0
          %6003 = vmatpush1.msra.mxu0 %v5596
          %6004 = vmatprep.subr.mxu0 0.0
          %6005 = vmatpush1.msra.mxu0 %v5597
          %6006 = vmatprep.subr.mxu0 0.0
          %6007 = vmatpush1.msra.mxu0 %v5598
          %6008 = vmatprep.mubr.f32.mxu0 %v5462
          %6009 = vmatmul.mubr.f32.gmra.mrb[0].mxu0 %v5461
          %v6010 = vpop.f32.mrb[0].mxu0
          %v6011 = vadd.f32 %v5941, %v6010
          %v6012 = vpop.f32.mrb[0].mxu0
          %6013 = vdwg.mxu0
          %6014 = vmatprep.subr.mxu0 0.0
          %6015 = vmatpush1.msra.mxu0 %v5599
          %6016 = vmatprep.subr.mxu0 0.0
          %6017 = vmatpush1.msra.mxu0 %v5600
          %6018 = vmatprep.subr.mxu0 0.0
          %6019 = vmatpush1.msra.mxu0 %v5601
          %6020 = vmatprep.subr.mxu0 0.0
          %6021 = vmatpush1.msra.mxu0 %v5602
          %6022 = vmatprep.subr.mxu0 0.0
          %6023 = vmatpush1.msra.mxu0 %v5603
          %6024 = vmatprep.subr.mxu0 0.0
          %6025 = vmatpush1.msra.mxu0 %v5604
          %6026 = vmatprep.subr.mxu0 0.0
          %6027 = vmatpush1.msra.mxu0 %v5605
          %6028 = vmatprep.subr.mxu0 0.0
          %6029 = vmatpush1.msra.mxu0 %v5606
          %6030 = vmatprep.subr.mxu0 0.0
          %6031 = vmatpush1.msra.mxu0 %v5607
          %6032 = vmatprep.subr.mxu0 0.0
          %6033 = vmatpush1.msra.mxu0 %v5608
          %6034 = vmatprep.subr.mxu0 0.0
          %6035 = vmatpush1.msra.mxu0 %v5609
          %6036 = vmatprep.subr.mxu0 0.0
          %6037 = vmatpush1.msra.mxu0 %v5610
          %6038 = vmatprep.subr.mxu0 0.0
          %6039 = vmatpush1.msra.mxu0 %v5611
          %6040 = vmatprep.subr.mxu0 0.0
          %6041 = vmatpush1.msra.mxu0 %v5612
          %6042 = vmatprep.subr.mxu0 0.0
          %6043 = vmatpush1.msra.mxu0 %v5613
          %6044 = vmatprep.subr.mxu0 0.0
          %6045 = vmatpush1.msra.mxu0 %v5614
          %6046 = vmatprep.subr.mxu0 0.0
          %6047 = vmatpush1.msra.mxu0 %v5615
          %6048 = vmatprep.subr.mxu0 0.0
          %6049 = vmatpush1.msra.mxu0 %v5616
          %6050 = vmatprep.subr.mxu0 0.0
          %6051 = vmatpush1.msra.mxu0 %v5617
          %6052 = vmatprep.subr.mxu0 0.0
          %6053 = vmatpush1.msra.mxu0 %v5618
          %6054 = vmatprep.subr.mxu0 0.0
          %6055 = vmatpush1.msra.mxu0 %v5619
          %6056 = vmatprep.subr.mxu0 0.0
          %6057 = vmatpush1.msra.mxu0 %v5620
          %6058 = vmatprep.subr.mxu0 0.0
          %6059 = vmatpush1.msra.mxu0 %v5621
          %6060 = vmatprep.subr.mxu0 0.0
          %6061 = vmatpush1.msra.mxu0 %v5622
          %6062 = vmatprep.subr.mxu0 0.0
          %6063 = vmatpush1.msra.mxu0 %v5623
          %6064 = vmatprep.subr.mxu0 0.0
          %6065 = vmatpush1.msra.mxu0 %v5624
          %6066 = vmatprep.subr.mxu0 0.0
          %6067 = vmatpush1.msra.mxu0 %v5625
          %6068 = vmatprep.subr.mxu0 0.0
          %6069 = vmatpush1.msra.mxu0 %v5626
          %6070 = vmatprep.subr.mxu0 0.0
          %6071 = vmatpush1.msra.mxu0 %v5627
          %6072 = vmatprep.subr.mxu0 0.0
          %6073 = vmatpush1.msra.mxu0 %v5628
          %6074 = vmatprep.subr.mxu0 0.0
          %6075 = vmatpush1.msra.mxu0 %v5629
          %6076 = vmatprep.subr.mxu0 0.0
          %6077 = vmatpush1.msra.mxu0 %v5630
          %6078 = vmatprep.mubr.f32.mxu0 %v5464
          %6079 = vmatmul.mubr.f32.gmra.mrb[0].mxu0 %v5463
          %v6080 = vpop.f32.mrb[0].mxu0
          %v6081 = vadd.f32 %v6011, %v6080
          %v6082 = vpop.f32.mrb[0].mxu0
          %6083 = vdwg.mxu0
          %6084 = vmatprep.subr.mxu0 0.0
          %6085 = vmatpush1.msra.mxu0 %v5631
          %6086 = vmatprep.subr.mxu0 0.0
          %6087 = vmatpush1.msra.mxu0 %v5632
          %6088 = vmatprep.subr.mxu0 0.0
          %6089 = vmatpush1.msra.mxu0 %v5633
          %6090 = vmatprep.subr.mxu0 0.0
          %6091 = vmatpush1.msra.mxu0 %v5634
          %6092 = vmatprep.subr.mxu0 0.0
          %6093 = vmatpush1.msra.mxu0 %v5635
          %6094 = vmatprep.subr.mxu0 0.0
          %6095 = vmatpush1.msra.mxu0 %v5636
          %6096 = vmatprep.subr.mxu0 0.0
          %6097 = vmatpush1.msra.mxu0 %v5637
          %6098 = vmatprep.subr.mxu0 0.0
          %6099 = vmatpush1.msra.mxu0 %v5638
          %6100 = vmatprep.subr.mxu0 0.0
          %6101 = vmatpush1.msra.mxu0 %v5639
          %6102 = vmatprep.subr.mxu0 0.0
          %6103 = vmatpush1.msra.mxu0 %v5640
          %6104 = vmatprep.subr.mxu0 0.0
          %6105 = vmatpush1.msra.mxu0 %v5641
          %6106 = vmatprep.subr.mxu0 0.0
          %6107 = vmatpush1.msra.mxu0 %v5642
          %6108 = vmatprep.subr.mxu0 0.0
          %6109 = vmatpush1.msra.mxu0 %v5643
          %6110 = vmatprep.subr.mxu0 0.0
          %6111 = vmatpush1.msra.mxu0 %v5644
          %6112 = vmatprep.subr.mxu0 0.0
          %6113 = vmatpush1.msra.mxu0 %v5645
          %6114 = vmatprep.subr.mxu0 0.0
          %6115 = vmatpush1.msra.mxu0 %v5646
          %6116 = vmatprep.subr.mxu0 0.0
          %6117 = vmatpush1.msra.mxu0 %v5647
          %6118 = vmatprep.subr.mxu0 0.0
          %6119 = vmatpush1.msra.mxu0 %v5648
          %6120 = vmatprep.subr.mxu0 0.0
          %6121 = vmatpush1.msra.mxu0 %v5649
          %6122 = vmatprep.subr.mxu0 0.0
          %6123 = vmatpush1.msra.mxu0 %v5650
          %6124 = vmatprep.subr.mxu0 0.0
          %6125 = vmatpush1.msra.mxu0 %v5651
          %6126 = vmatprep.subr.mxu0 0.0
          %6127 = vmatpush1.msra.mxu0 %v5652
          %6128 = vmatprep.subr.mxu0 0.0
          %6129 = vmatpush1.msra.mxu0 %v5653
          %6130 = vmatprep.subr.mxu0 0.0
          %6131 = vmatpush1.msra.mxu0 %v5654
          %6132 = vmatprep.subr.mxu0 0.0
          %6133 = vmatpush1.msra.mxu0 %v5655
          %6134 = vmatprep.subr.mxu0 0.0
          %6135 = vmatpush1.msra.mxu0 %v5656
          %6136 = vmatprep.subr.mxu0 0.0
          %6137 = vmatpush1.msra.mxu0 %v5657
          %6138 = vmatprep.subr.mxu0 0.0
          %6139 = vmatpush1.msra.mxu0 %v5658
          %6140 = vmatprep.subr.mxu0 0.0
          %6141 = vmatpush1.msra.mxu0 %v5659
          %6142 = vmatprep.subr.mxu0 0.0
          %6143 = vmatpush1.msra.mxu0 %v5660
          %6144 = vmatprep.subr.mxu0 0.0
          %6145 = vmatpush1.msra.mxu0 %v5661
          %6146 = vmatprep.subr.mxu0 0.0
          %6147 = vmatpush1.msra.mxu0 %v5662
          %6148 = vmatprep.mubr.f32.mxu0 %v5466
          %6149 = vmatmul.mubr.f32.gmra.mrb[0].mxu0 %v5465
          %v6150 = vpop.f32.mrb[0].mxu0
          %v6151 = vadd.f32 %v6081, %v6150
          %v6152 = vpop.f32.mrb[0].mxu0
          %6153 = vdwg.mxu0
          %6154 = vmatprep.subr.mxu0 0.0
          %6155 = vmatpush1.msra.mxu0 %v5663
          %6156 = vmatprep.subr.mxu0 0.0
          %6157 = vmatpush1.msra.mxu0 %v5664
          %6158 = vmatprep.subr.mxu0 0.0
          %6159 = vmatpush1.msra.mxu0 %v5665
          %6160 = vmatprep.subr.mxu0 0.0
          %6161 = vmatpush1.msra.mxu0 %v5666
          %6162 = vmatprep.subr.mxu0 0.0
          %6163 = vmatpush1.msra.mxu0 %v5667
          %6164 = vmatprep.subr.mxu0 0.0
          %6165 = vmatpush1.msra.mxu0 %v5668
          %6166 = vmatprep.subr.mxu0 0.0
          %6167 = vmatpush1.msra.mxu0 %v5669
          %6168 = vmatprep.subr.mxu0 0.0
          %6169 = vmatpush1.msra.mxu0 %v5670
          %6170 = vmatprep.subr.mxu0 0.0
          %6171 = vmatpush1.msra.mxu0 %v5671
          %6172 = vmatprep.subr.mxu0 0.0
          %6173 = vmatpush1.msra.mxu0 %v5672
          %6174 = vmatprep.subr.mxu0 0.0
          %6175 = vmatpush1.msra.mxu0 %v5673
          %6176 = vmatprep.subr.mxu0 0.0
          %6177 = vmatpush1.msra.mxu0 %v5674
          %6178 = vmatprep.subr.mxu0 0.0
          %6179 = vmatpush1.msra.mxu0 %v5675
          %6180 = vmatprep.subr.mxu0 0.0
          %6181 = vmatpush1.msra.mxu0 %v5676
          %6182 = vmatprep.subr.mxu0 0.0
          %6183 = vmatpush1.msra.mxu0 %v5677
          %6184 = vmatprep.subr.mxu0 0.0
          %6185 = vmatpush1.msra.mxu0 %v5678
          %6186 = vmatprep.subr.mxu0 0.0
          %6187 = vmatpush1.msra.mxu0 %v5679
          %6188 = vmatprep.subr.mxu0 0.0
          %6189 = vmatpush1.msra.mxu0 %v5680
          %6190 = vmatprep.subr.mxu0 0.0
          %6191 = vmatpush1.msra.mxu0 %v5681
          %6192 = vmatprep.subr.mxu0 0.0
          %6193 = vmatpush1.msra.mxu0 %v5682
          %6194 = vmatprep.subr.mxu0 0.0
          %6195 = vmatpush1.msra.mxu0 %v5683
          %6196 = vmatprep.subr.mxu0 0.0
          %6197 = vmatpush1.msra.mxu0 %v5684
          %6198 = vmatprep.subr.mxu0 0.0
          %6199 = vmatpush1.msra.mxu0 %v5685
          %6200 = vmatprep.subr.mxu0 0.0
          %6201 = vmatpush1.msra.mxu0 %v5686
          %6202 = vmatprep.subr.mxu0 0.0
          %6203 = vmatpush1.msra.mxu0 %v5687
          %6204 = vmatprep.subr.mxu0 0.0
          %6205 = vmatpush1.msra.mxu0 %v5688
          %6206 = vmatprep.subr.mxu0 0.0
          %6207 = vmatpush1.msra.mxu0 %v5689
          %6208 = vmatprep.subr.mxu0 0.0
          %6209 = vmatpush1.msra.mxu0 %v5690
          %6210 = vmatprep.subr.mxu0 0.0
          %6211 = vmatpush1.msra.mxu0 %v5691
          %6212 = vmatprep.subr.mxu0 0.0
          %6213 = vmatpush1.msra.mxu0 %v5692
          %6214 = vmatprep.subr.mxu0 0.0
          %6215 = vmatpush1.msra.mxu0 %v5693
          %6216 = vmatprep.subr.mxu0 0.0
          %6217 = vmatpush1.msra.mxu0 %v5694
          %6218 = vmatprep.mubr.f32.mxu0 %v5468
          %6219 = vmatmul.mubr.f32.gmra.mrb[0].mxu0 %v5467
          %v6220 = vpop.f32.mrb[0].mxu0
          %v6221 = vadd.f32 %v6151, %v6220
          %v6222 = vpop.f32.mrb[0].mxu0
          %6223 = vdwg.mxu0
          %6224 = vmatprep.subr.mxu0 0.0
          %6225 = vmatpush1.msra.mxu0 %v5695
          %6226 = vmatprep.subr.mxu0 0.0
          %6227 = vmatpush1.msra.mxu0 %v5696
          %6228 = vmatprep.subr.mxu0 0.0
          %6229 = vmatpush1.msra.mxu0 %v5697
          %6230 = vmatprep.subr.mxu0 0.0
          %6231 = vmatpush1.msra.mxu0 %v5698
          %6232 = vmatprep.subr.mxu0 0.0
          %6233 = vmatpush1.msra.mxu0 %v5699
          %6234 = vmatprep.subr.mxu0 0.0
          %6235 = vmatpush1.msra.mxu0 %v5700
          %6236 = vmatprep.subr.mxu0 0.0
          %6237 = vmatpush1.msra.mxu0 %v5701
          %6238 = vmatprep.subr.mxu0 0.0
          %6239 = vmatpush1.msra.mxu0 %v5702
          %6240 = vmatprep.subr.mxu0 0.0
          %6241 = vmatpush1.msra.mxu0 %v5703
          %6242 = vmatprep.subr.mxu0 0.0
          %6243 = vmatpush1.msra.mxu0 %v5704
          %6244 = vmatprep.subr.mxu0 0.0
          %6245 = vmatpush1.msra.mxu0 %v5705
          %6246 = vmatprep.subr.mxu0 0.0
          %6247 = vmatpush1.msra.mxu0 %v5706
          %6248 = vmatprep.subr.mxu0 0.0
          %6249 = vmatpush1.msra.mxu0 %v5707
          %6250 = vmatprep.subr.mxu0 0.0
          %6251 = vmatpush1.msra.mxu0 %v5708
          %6252 = vmatprep.subr.mxu0 0.0
          %6253 = vmatpush1.msra.mxu0 %v5709
          %6254 = vmatprep.subr.mxu0 0.0
          %6255 = vmatpush1.msra.mxu0 %v5710
          %6256 = vmatprep.subr.mxu0 0.0
          %6257 = vmatpush1.msra.mxu0 %v5711
          %6258 = vmatprep.subr.mxu0 0.0
          %6259 = vmatpush1.msra.mxu0 %v5712
          %6260 = vmatprep.subr.mxu0 0.0
          %6261 = vmatpush1.msra.mxu0 %v5713
          %6262 = vmatprep.subr.mxu0 0.0
          %6263 = vmatpush1.msra.mxu0 %v5714
          %6264 = vmatprep.subr.mxu0 0.0
          %6265 = vmatpush1.msra.mxu0 %v5715
          %6266 = vmatprep.subr.mxu0 0.0
          %6267 = vmatpush1.msra.mxu0 %v5716
          %6268 = vmatprep.subr.mxu0 0.0
          %6269 = vmatpush1.msra.mxu0 %v5717
          %6270 = vmatprep.subr.mxu0 0.0
          %6271 = vmatpush1.msra.mxu0 %v5718
          %6272 = vmatprep.subr.mxu0 0.0
          %6273 = vmatpush1.msra.mxu0 %v5719
          %6274 = vmatprep.subr.mxu0 0.0
          %6275 = vmatpush1.msra.mxu0 %v5720
          %6276 = vmatprep.subr.mxu0 0.0
          %6277 = vmatpush1.msra.mxu0 %v5721
          %6278 = vmatprep.subr.mxu0 0.0
          %6279 = vmatpush1.msra.mxu0 %v5722
          %6280 = vmatprep.subr.mxu0 0.0
          %6281 = vmatpush1.msra.mxu0 %v5723
          %6282 = vmatprep.subr.mxu0 0.0
          %6283 = vmatpush1.msra.mxu0 %v5724
          %6284 = vmatprep.subr.mxu0 0.0
          %6285 = vmatpush1.msra.mxu0 %v5725
          %6286 = vmatprep.subr.mxu0 0.0
          %6287 = vmatpush1.msra.mxu0 %v5726
          %6288 = vmatprep.mubr.f32.mxu0 %v5470
          %6289 = vmatmul.mubr.f32.gmra.mrb[0].mxu0 %v5469
          %v6290 = vpop.f32.mrb[0].mxu0
          %v6291 = vadd.f32 %v6221, %v6290
          %v6292 = vpop.f32.mrb[0].mxu0
          %6293 = vdwg.mxu0
          %v6294 = vmax.f32 %v6291, 0.0
          %v6295 = vld [vmem:[%s3] sm:$0xff]
          %v6296 = vld [vmem:[%s3 + $0x8] sm:$0xff]
          %v6297 = vld [vmem:[%s3 + $0x10] sm:$0xff]
          %v6298 = vld [vmem:[%s3 + $0x18] sm:$0xff]
          %v6299 = vld [vmem:[%s3 + $0x20] sm:$0xff]
          %v6300 = vld [vmem:[%s3 + $0x28] sm:$0xff]
          %v6301 = vld [vmem:[%s3 + $0x30] sm:$0xff]
          %v6302 = vld [vmem:[%s3 + $0x38] sm:$0xff]
          %v6303 = vld [vmem:[%s3 + $0x40] sm:$0xff]
          %v6304 = vld [vmem:[%s3 + $0x48] sm:$0xff]
          %v6305 = vld [vmem:[%s3 + $0x50] sm:$0xff]
          %v6306 = vld [vmem:[%s3 + $0x58] sm:$0xff]
          %v6307 = vld [vmem:[%s3 + $0x60] sm:$0xff]
          %v6308 = vld [vmem:[%s3 + $0x68] sm:$0xff]
          %v6309 = vld [vmem:[%s3 + $0x70] sm:$0xff]
          %v6310 = vld [vmem:[%s3 + $0x78] sm:$0xff]
          %v6311 = vld [vmem:[%s3 + $0x80] sm:$0xff]
          %v6312 = vld [vmem:[%s3 + $0x88] sm:$0xff]
          %v6313 = vld [vmem:[%s3 + $0x90] sm:$0xff]
          %v6314 = vld [vmem:[%s3 + $0x98] sm:$0xff]
          %v6315 = vld [vmem:[%s3 + $0xa0] sm:$0xff]
          %v6316 = vld [vmem:[%s3 + $0xa8] sm:$0xff]
          %v6317 = vld [vmem:[%s3 + $0xb0] sm:$0xff]
          %v6318 = vld [vmem:[%s3 + $0xb8] sm:$0xff]
          %v6319 = vld [vmem:[%s3 + $0xc0] sm:$0xff]
          %v6320 = vld [vmem:[%s3 + $0xc8] sm:$0xff]
          %v6321 = vld [vmem:[%s3 + $0xd0] sm:$0xff]
          %v6322 = vld [vmem:[%s3 + $0xd8] sm:$0xff]
          %v6323 = vld [vmem:[%s3 + $0xe0] sm:$0xff]
          %v6324 = vld [vmem:[%s3 + $0xe8] sm:$0xff]
          %v6325 = vld [vmem:[%s3 + $0xf0] sm:$0xff]
          %v6326 = vld [vmem:[%s3 + $0xf8] sm:$0xff]
          %v6327 = vld [vmem:[%s3 + $0x100] sm:$0xff]
          %v6328 = vld [vmem:[%s3 + $0x108] sm:$0xff]
          %v6329 = vld [vmem:[%s3 + $0x110] sm:$0xff]
          %v6330 = vld [vmem:[%s3 + $0x118] sm:$0xff]
          %v6331 = vld [vmem:[%s3 + $0x120] sm:$0xff]
          %v6332 = vld [vmem:[%s3 + $0x128] sm:$0xff]
          %v6333 = vld [vmem:[%s3 + $0x130] sm:$0xff]
          %v6334 = vld [vmem:[%s3 + $0x138] sm:$0xff]
          %v6335 = vld [vmem:[%s3 + $0x140] sm:$0xff]
          %v6336 = vld [vmem:[%s3 + $0x148] sm:$0xff]
          %v6337 = vld [vmem:[%s3 + $0x150] sm:$0xff]
          %v6338 = vld [vmem:[%s3 + $0x158] sm:$0xff]
          %v6339 = vld [vmem:[%s3 + $0x160] sm:$0xff]
          %v6340 = vld [vmem:[%s3 + $0x168] sm:$0xff]
          %v6341 = vld [vmem:[%s3 + $0x170] sm:$0xff]
          %v6342 = vld [vmem:[%s3 + $0x178] sm:$0xff]
          %v6343 = vld [vmem:[%s3 + $0x180] sm:$0xff]
          %v6344 = vld [vmem:[%s3 + $0x188] sm:$0xff]
          %v6345 = vld [vmem:[%s3 + $0x190] sm:$0xff]
          %v6346 = vld [vmem:[%s3 + $0x198] sm:$0xff]
          %v6347 = vld [vmem:[%s3 + $0x1a0] sm:$0xff]
          %v6348 = vld [vmem:[%s3 + $0x1a8] sm:$0xff]
          %v6349 = vld [vmem:[%s3 + $0x1b0] sm:$0xff]
          %v6350 = vld [vmem:[%s3 + $0x1b8] sm:$0xff]
          %v6351 = vld [vmem:[%s3 + $0x1c0] sm:$0xff]
          %v6352 = vld [vmem:[%s3 + $0x1c8] sm:$0xff]
          %v6353 = vld [vmem:[%s3 + $0x1d0] sm:$0xff]
          %v6354 = vld [vmem:[%s3 + $0x1d8] sm:$0xff]
          %v6355 = vld [vmem:[%s3 + $0x1e0] sm:$0xff]
          %v6356 = vld [vmem:[%s3 + $0x1e8] sm:$0xff]
          %v6357 = vld [vmem:[%s3 + $0x1f0] sm:$0xff]
          %v6358 = vld [vmem:[%s3 + $0x1f8] sm:$0xff]
          %v6359 = vld [vmem:[%s3 + $0x200] sm:$0xff]
          %v6360 = vld [vmem:[%s3 + $0x208] sm:$0xff]
          %v6361 = vld [vmem:[%s3 + $0x210] sm:$0xff]
          %v6362 = vld [vmem:[%s3 + $0x218] sm:$0xff]
          %v6363 = vld [vmem:[%s3 + $0x220] sm:$0xff]
          %v6364 = vld [vmem:[%s3 + $0x228] sm:$0xff]
          %v6365 = vld [vmem:[%s3 + $0x230] sm:$0xff]
          %v6366 = vld [vmem:[%s3 + $0x238] sm:$0xff]
          %v6367 = vld [vmem:[%s3 + $0x240] sm:$0xff]
          %v6368 = vld [vmem:[%s3 + $0x248] sm:$0xff]
          %v6369 = vld [vmem:[%s3 + $0x250] sm:$0xff]
          %v6370 = vld [vmem:[%s3 + $0x258] sm:$0xff]
          %v6371 = vld [vmem:[%s3 + $0x260] sm:$0xff]
          %v6372 = vld [vmem:[%s3 + $0x268] sm:$0xff]
          %v6373 = vld [vmem:[%s3 + $0x270] sm:$0xff]
          %v6374 = vld [vmem:[%s3 + $0x278] sm:$0xff]
          %v6375 = vld [vmem:[%s3 + $0x280] sm:$0xff]
          %v6376 = vld [vmem:[%s3 + $0x288] sm:$0xff]
          %v6377 = vld [vmem:[%s3 + $0x290] sm:$0xff]
          %v6378 = vld [vmem:[%s3 + $0x298] sm:$0xff]
          %v6379 = vld [vmem:[%s3 + $0x2a0] sm:$0xff]
          %v6380 = vld [vmem:[%s3 + $0x2a8] sm:$0xff]
          %v6381 = vld [vmem:[%s3 + $0x2b0] sm:$0xff]
          %v6382 = vld [vmem:[%s3 + $0x2b8] sm:$0xff]
          %v6383 = vld [vmem:[%s3 + $0x2c0] sm:$0xff]
          %v6384 = vld [vmem:[%s3 + $0x2c8] sm:$0xff]
          %v6385 = vld [vmem:[%s3 + $0x2d0] sm:$0xff]
          %v6386 = vld [vmem:[%s3 + $0x2d8] sm:$0xff]
          %v6387 = vld [vmem:[%s3 + $0x2e0] sm:$0xff]
          %v6388 = vld [vmem:[%s3 + $0x2e8] sm:$0xff]
          %v6389 = vld [vmem:[%s3 + $0x2f0] sm:$0xff]
          %v6390 = vld [vmem:[%s3 + $0x2f8] sm:$0xff]
          %v6391 = vld [vmem:[%s3 + $0x300] sm:$0xff]
          %v6392 = vld [vmem:[%s3 + $0x308] sm:$0xff]
          %v6393 = vld [vmem:[%s3 + $0x310] sm:$0xff]
          %v6394 = vld [vmem:[%s3 + $0x318] sm:$0xff]
          %v6395 = vld [vmem:[%s3 + $0x320] sm:$0xff]
          %v6396 = vld [vmem:[%s3 + $0x328] sm:$0xff]
          %v6397 = vld [vmem:[%s3 + $0x330] sm:$0xff]
          %v6398 = vld [vmem:[%s3 + $0x338] sm:$0xff]
          %v6399 = vld [vmem:[%s3 + $0x340] sm:$0xff]
          %v6400 = vld [vmem:[%s3 + $0x348] sm:$0xff]
          %v6401 = vld [vmem:[%s3 + $0x350] sm:$0xff]
          %v6402 = vld [vmem:[%s3 + $0x358] sm:$0xff]
          %v6403 = vld [vmem:[%s3 + $0x360] sm:$0xff]
          %v6404 = vld [vmem:[%s3 + $0x368] sm:$0xff]
          %v6405 = vld [vmem:[%s3 + $0x370] sm:$0xff]
          %v6406 = vld [vmem:[%s3 + $0x378] sm:$0xff]
          %v6407 = vld [vmem:[%s3 + $0x380] sm:$0xff]
          %v6408 = vld [vmem:[%s3 + $0x388] sm:$0xff]
          %v6409 = vld [vmem:[%s3 + $0x390] sm:$0xff]
          %v6410 = vld [vmem:[%s3 + $0x398] sm:$0xff]
          %v6411 = vld [vmem:[%s3 + $0x3a0] sm:$0xff]
          %v6412 = vld [vmem:[%s3 + $0x3a8] sm:$0xff]
          %v6413 = vld [vmem:[%s3 + $0x3b0] sm:$0xff]
          %v6414 = vld [vmem:[%s3 + $0x3b8] sm:$0xff]
          %v6415 = vld [vmem:[%s3 + $0x3c0] sm:$0xff]
          %v6416 = vld [vmem:[%s3 + $0x3c8] sm:$0xff]
          %v6417 = vld [vmem:[%s3 + $0x3d0] sm:$0xff]
          %v6418 = vld [vmem:[%s3 + $0x3d8] sm:$0xff]
          %v6419 = vld [vmem:[%s3 + $0x3e0] sm:$0xff]
          %v6420 = vld [vmem:[%s3 + $0x3e8] sm:$0xff]
          %v6421 = vld [vmem:[%s3 + $0x3f0] sm:$0xff]
          %v6422 = vld [vmem:[%s3 + $0x3f8] sm:$0xff]
          %v6423 = vld [vmem:[%s3 + $0x400] sm:$0xff]
          %v6424 = vld [vmem:[%s3 + $0x408] sm:$0xff]
          %v6425 = vld [vmem:[%s3 + $0x410] sm:$0xff]
          %v6426 = vld [vmem:[%s3 + $0x418] sm:$0xff]
          %v6427 = vld [vmem:[%s3 + $0x420] sm:$0xff]
          %v6428 = vld [vmem:[%s3 + $0x428] sm:$0xff]
          %v6429 = vld [vmem:[%s3 + $0x430] sm:$0xff]
          %v6430 = vld [vmem:[%s3 + $0x438] sm:$0xff]
          %v6431 = vld [vmem:[%s3 + $0x440] sm:$0xff]
          %v6432 = vld [vmem:[%s3 + $0x448] sm:$0xff]
          %v6433 = vld [vmem:[%s3 + $0x450] sm:$0xff]
          %v6434 = vld [vmem:[%s3 + $0x458] sm:$0xff]
          %v6435 = vld [vmem:[%s3 + $0x460] sm:$0xff]
          %v6436 = vld [vmem:[%s3 + $0x468] sm:$0xff]
          %v6437 = vld [vmem:[%s3 + $0x470] sm:$0xff]
          %v6438 = vld [vmem:[%s3 + $0x478] sm:$0xff]
          %v6439 = vld [vmem:[%s3 + $0x480] sm:$0xff]
          %v6440 = vld [vmem:[%s3 + $0x488] sm:$0xff]
          %v6441 = vld [vmem:[%s3 + $0x490] sm:$0xff]
          %v6442 = vld [vmem:[%s3 + $0x498] sm:$0xff]
          %v6443 = vld [vmem:[%s3 + $0x4a0] sm:$0xff]
          %v6444 = vld [vmem:[%s3 + $0x4a8] sm:$0xff]
          %v6445 = vld [vmem:[%s3 + $0x4b0] sm:$0xff]
          %v6446 = vld [vmem:[%s3 + $0x4b8] sm:$0xff]
          %v6447 = vld [vmem:[%s3 + $0x4c0] sm:$0xff]
          %v6448 = vld [vmem:[%s3 + $0x4c8] sm:$0xff]
          %v6449 = vld [vmem:[%s3 + $0x4d0] sm:$0xff]
          %v6450 = vld [vmem:[%s3 + $0x4d8] sm:$0xff]
          %v6451 = vld [vmem:[%s3 + $0x4e0] sm:$0xff]
          %v6452 = vld [vmem:[%s3 + $0x4e8] sm:$0xff]
          %v6453 = vld [vmem:[%s3 + $0x4f0] sm:$0xff]
          %v6454 = vld [vmem:[%s3 + $0x4f8] sm:$0xff]
          %v6455 = vld [vmem:[%s3 + $0x500] sm:$0xff]
          %v6456 = vld [vmem:[%s3 + $0x508] sm:$0xff]
          %v6457 = vld [vmem:[%s3 + $0x510] sm:$0xff]
          %v6458 = vld [vmem:[%s3 + $0x518] sm:$0xff]
          %v6459 = vld [vmem:[%s3 + $0x520] sm:$0xff]
          %v6460 = vld [vmem:[%s3 + $0x528] sm:$0xff]
          %v6461 = vld [vmem:[%s3 + $0x530] sm:$0xff]
          %v6462 = vld [vmem:[%s3 + $0x538] sm:$0xff]
          %v6463 = vld [vmem:[%s3 + $0x540] sm:$0xff]
          %v6464 = vld [vmem:[%s3 + $0x548] sm:$0xff]
          %v6465 = vld [vmem:[%s3 + $0x550] sm:$0xff]
          %v6466 = vld [vmem:[%s3 + $0x558] sm:$0xff]
          %v6467 = vld [vmem:[%s3 + $0x560] sm:$0xff]
          %v6468 = vld [vmem:[%s3 + $0x568] sm:$0xff]
          %v6469 = vld [vmem:[%s3 + $0x570] sm:$0xff]
          %v6470 = vld [vmem:[%s3 + $0x578] sm:$0xff]
          %v6471 = vld [vmem:[%s3 + $0x580] sm:$0xff]
          %v6472 = vld [vmem:[%s3 + $0x588] sm:$0xff]
          %v6473 = vld [vmem:[%s3 + $0x590] sm:$0xff]
          %v6474 = vld [vmem:[%s3 + $0x598] sm:$0xff]
          %v6475 = vld [vmem:[%s3 + $0x5a0] sm:$0xff]
          %v6476 = vld [vmem:[%s3 + $0x5a8] sm:$0xff]
          %v6477 = vld [vmem:[%s3 + $0x5b0] sm:$0xff]
          %v6478 = vld [vmem:[%s3 + $0x5b8] sm:$0xff]
          %v6479 = vld [vmem:[%s3 + $0x5c0] sm:$0xff]
          %v6480 = vld [vmem:[%s3 + $0x5c8] sm:$0xff]
          %v6481 = vld [vmem:[%s3 + $0x5d0] sm:$0xff]
          %v6482 = vld [vmem:[%s3 + $0x5d8] sm:$0xff]
          %v6483 = vld [vmem:[%s3 + $0x5e0] sm:$0xff]
          %v6484 = vld [vmem:[%s3 + $0x5e8] sm:$0xff]
          %v6485 = vld [vmem:[%s3 + $0x5f0] sm:$0xff]
          %v6486 = vld [vmem:[%s3 + $0x5f8] sm:$0xff]
          %v6487 = vld [vmem:[%s3 + $0x600] sm:$0xff]
          %v6488 = vld [vmem:[%s3 + $0x608] sm:$0xff]
          %v6489 = vld [vmem:[%s3 + $0x610] sm:$0xff]
          %v6490 = vld [vmem:[%s3 + $0x618] sm:$0xff]
          %v6491 = vld [vmem:[%s3 + $0x620] sm:$0xff]
          %v6492 = vld [vmem:[%s3 + $0x628] sm:$0xff]
          %v6493 = vld [vmem:[%s3 + $0x630] sm:$0xff]
          %v6494 = vld [vmem:[%s3 + $0x638] sm:$0xff]
          %v6495 = vld [vmem:[%s3 + $0x640] sm:$0xff]
          %v6496 = vld [vmem:[%s3 + $0x648] sm:$0xff]
          %v6497 = vld [vmem:[%s3 + $0x650] sm:$0xff]
          %v6498 = vld [vmem:[%s3 + $0x658] sm:$0xff]
          %v6499 = vld [vmem:[%s3 + $0x660] sm:$0xff]
          %v6500 = vld [vmem:[%s3 + $0x668] sm:$0xff]
          %v6501 = vld [vmem:[%s3 + $0x670] sm:$0xff]
          %v6502 = vld [vmem:[%s3 + $0x678] sm:$0xff]
          %v6503 = vld [vmem:[%s3 + $0x680] sm:$0xff]
          %v6504 = vld [vmem:[%s3 + $0x688] sm:$0xff]
          %v6505 = vld [vmem:[%s3 + $0x690] sm:$0xff]
          %v6506 = vld [vmem:[%s3 + $0x698] sm:$0xff]
          %v6507 = vld [vmem:[%s3 + $0x6a0] sm:$0xff]
          %v6508 = vld [vmem:[%s3 + $0x6a8] sm:$0xff]
          %v6509 = vld [vmem:[%s3 + $0x6b0] sm:$0xff]
          %v6510 = vld [vmem:[%s3 + $0x6b8] sm:$0xff]
          %v6511 = vld [vmem:[%s3 + $0x6c0] sm:$0xff]
          %v6512 = vld [vmem:[%s3 + $0x6c8] sm:$0xff]
          %v6513 = vld [vmem:[%s3 + $0x6d0] sm:$0xff]
          %v6514 = vld [vmem:[%s3 + $0x6d8] sm:$0xff]
          %v6515 = vld [vmem:[%s3 + $0x6e0] sm:$0xff]
          %v6516 = vld [vmem:[%s3 + $0x6e8] sm:$0xff]
          %v6517 = vld [vmem:[%s3 + $0x6f0] sm:$0xff]
          %v6518 = vld [vmem:[%s3 + $0x6f8] sm:$0xff]
          %v6519 = vld [vmem:[%s3 + $0x700] sm:$0xff]
          %v6520 = vld [vmem:[%s3 + $0x708] sm:$0xff]
          %v6521 = vld [vmem:[%s3 + $0x710] sm:$0xff]
          %v6522 = vld [vmem:[%s3 + $0x718] sm:$0xff]
          %v6523 = vld [vmem:[%s3 + $0x720] sm:$0xff]
          %v6524 = vld [vmem:[%s3 + $0x728] sm:$0xff]
          %v6525 = vld [vmem:[%s3 + $0x730] sm:$0xff]
          %v6526 = vld [vmem:[%s3 + $0x738] sm:$0xff]
          %v6527 = vld [vmem:[%s3 + $0x740] sm:$0xff]
          %v6528 = vld [vmem:[%s3 + $0x748] sm:$0xff]
          %v6529 = vld [vmem:[%s3 + $0x750] sm:$0xff]
          %v6530 = vld [vmem:[%s3 + $0x758] sm:$0xff]
          %v6531 = vld [vmem:[%s3 + $0x760] sm:$0xff]
          %v6532 = vld [vmem:[%s3 + $0x768] sm:$0xff]
          %v6533 = vld [vmem:[%s3 + $0x770] sm:$0xff]
          %v6534 = vld [vmem:[%s3 + $0x778] sm:$0xff]
          %v6535 = vld [vmem:[%s3 + $0x780] sm:$0xff]
          %v6536 = vld [vmem:[%s3 + $0x788] sm:$0xff]
          %v6537 = vld [vmem:[%s3 + $0x790] sm:$0xff]
          %v6538 = vld [vmem:[%s3 + $0x798] sm:$0xff]
          %v6539 = vld [vmem:[%s3 + $0x7a0] sm:$0xff]
          %v6540 = vld [vmem:[%s3 + $0x7a8] sm:$0xff]
          %v6541 = vld [vmem:[%s3 + $0x7b0] sm:$0xff]
          %v6542 = vld [vmem:[%s3 + $0x7b8] sm:$0xff]
          %v6543 = vld [vmem:[%s3 + $0x7c0] sm:$0xff]
          %v6544 = vld [vmem:[%s3 + $0x7c8] sm:$0xff]
          %v6545 = vld [vmem:[%s3 + $0x7d0] sm:$0xff]
          %v6546 = vld [vmem:[%s3 + $0x7d8] sm:$0xff]
          %v6547 = vld [vmem:[%s3 + $0x7e0] sm:$0xff]
          %v6548 = vld [vmem:[%s3 + $0x7e8] sm:$0xff]
          %v6549 = vld [vmem:[%s3 + $0x7f0] sm:$0xff]
          %v6550 = vld [vmem:[%s3 + $0x7f8] sm:$0xff]
          %v6551 = vld [vmem:[%s4] sm:$0xff]
          %v6552 = vld [vmem:[%s4 + $0x8] sm:$0xff]
          %v6555 = vlaneseq
          %v6556 = vshrl.u32 %v6555, 7
          %v6557 = vsub.s32 0, %v6556
          %v6558 = vrot.slane %v6551, %v6557
          %v6559 = vlaneseq
          %v6560 = vshrl.u32 %v6559, 7
          %v6561 = vsub.s32 1, %v6560
          %v6562 = vrot.slane %v6551, %v6561
          %v6563 = vlaneseq
          %v6564 = vshrl.u32 %v6563, 7
          %v6565 = vsub.s32 2, %v6564
          %v6566 = vrot.slane %v6551, %v6565
          %v6567 = vlaneseq
          %v6568 = vshrl.u32 %v6567, 7
          %v6569 = vsub.s32 3, %v6568
          %v6570 = vrot.slane %v6551, %v6569
          %v6571 = vlaneseq
          %v6572 = vshrl.u32 %v6571, 7
          %v6573 = vsub.s32 4, %v6572
          %v6574 = vrot.slane %v6551, %v6573
          %v6575 = vlaneseq
          %v6576 = vshrl.u32 %v6575, 7
          %v6577 = vsub.s32 5, %v6576
          %v6578 = vrot.slane %v6551, %v6577
          %v6579 = vlaneseq
          %v6580 = vshrl.u32 %v6579, 7
          %v6581 = vsub.s32 6, %v6580
          %v6582 = vrot.slane %v6551, %v6581
          %v6583 = vlaneseq
          %v6584 = vshrl.u32 %v6583, 7
          %v6585 = vsub.s32 7, %v6584
          %v6586 = vrot.slane %v6551, %v6585
          %v6587 = vlaneseq
          %v6588 = vshrl.u32 %v6587, 7
          %v6589 = vsub.s32 0, %v6588
          %v6590 = vrot.slane %v6552, %v6589
          %v6591 = vlaneseq
          %v6592 = vshrl.u32 %v6591, 7
          %v6593 = vsub.s32 1, %v6592
          %v6594 = vrot.slane %v6552, %v6593
          %v6595 = vlaneseq
          %v6596 = vshrl.u32 %v6595, 7
          %v6597 = vsub.s32 2, %v6596
          %v6598 = vrot.slane %v6552, %v6597
          %v6599 = vlaneseq
          %v6600 = vshrl.u32 %v6599, 7
          %v6601 = vsub.s32 3, %v6600
          %v6602 = vrot.slane %v6552, %v6601
          %v6603 = vlaneseq
          %v6604 = vshrl.u32 %v6603, 7
          %v6605 = vsub.s32 4, %v6604
          %v6606 = vrot.slane %v6552, %v6605
          %v6607 = vlaneseq
          %v6608 = vshrl.u32 %v6607, 7
          %v6609 = vsub.s32 5, %v6608
          %v6610 = vrot.slane %v6552, %v6609
          %v6611 = vlaneseq
          %v6612 = vshrl.u32 %v6611, 7
          %v6613 = vsub.s32 6, %v6612
          %v6614 = vrot.slane %v6552, %v6613
          %v6615 = vlaneseq
          %v6616 = vshrl.u32 %v6615, 7
          %v6617 = vsub.s32 7, %v6616
          %v6618 = vrot.slane %v6552, %v6617
          %6635 = vmatprep.subr.mxu0 %v6296
          %6636 = vmatpush1.msra.mxu0 %v6295
          %6637 = vmatprep.subr.mxu0 %v6312
          %6638 = vmatpush1.msra.mxu0 %v6311
          %6639 = vmatprep.subr.mxu0 %v6328
          %6640 = vmatpush1.msra.mxu0 %v6327
          %6641 = vmatprep.subr.mxu0 %v6344
          %6642 = vmatpush1.msra.mxu0 %v6343
          %6643 = vmatprep.subr.mxu0 %v6360
          %6644 = vmatpush1.msra.mxu0 %v6359
          %6645 = vmatprep.subr.mxu0 %v6376
          %6646 = vmatpush1.msra.mxu0 %v6375
          %6647 = vmatprep.subr.mxu0 %v6392
          %6648 = vmatpush1.msra.mxu0 %v6391
          %6649 = vmatprep.subr.mxu0 %v6408
          %6650 = vmatpush1.msra.mxu0 %v6407
          %6651 = vmatprep.subr.mxu0 %v6424
          %6652 = vmatpush1.msra.mxu0 %v6423
          %6653 = vmatprep.subr.mxu0 %v6440
          %6654 = vmatpush1.msra.mxu0 %v6439
          %6655 = vmatprep.subr.mxu0 %v6456
          %6656 = vmatpush1.msra.mxu0 %v6455
          %6657 = vmatprep.subr.mxu0 %v6472
          %6658 = vmatpush1.msra.mxu0 %v6471
          %6659 = vmatprep.subr.mxu0 %v6488
          %6660 = vmatpush1.msra.mxu0 %v6487
          %6661 = vmatprep.subr.mxu0 %v6504
          %6662 = vmatpush1.msra.mxu0 %v6503
          %6663 = vmatprep.subr.mxu0 %v6520
          %6664 = vmatpush1.msra.mxu0 %v6519
          %6665 = vmatprep.subr.mxu0 %v6536
          %6666 = vmatpush1.msra.mxu0 %v6535
          %6667 = vmatprep.subr.mxu0 0.0
          %6668 = vmatpush1.msra.mxu0 0.0
          %6669 = vmatprep.subr.mxu0 0.0
          %6670 = vmatpush1.msra.mxu0 0.0
          %6671 = vmatprep.subr.mxu0 0.0
          %6672 = vmatpush1.msra.mxu0 0.0
          %6673 = vmatprep.subr.mxu0 0.0
          %6674 = vmatpush1.msra.mxu0 0.0
          %6675 = vmatprep.subr.mxu0 0.0
          %6676 = vmatpush1.msra.mxu0 0.0
          %6677 = vmatprep.subr.mxu0 0.0
          %6678 = vmatpush1.msra.mxu0 0.0
          %6679 = vmatprep.subr.mxu0 0.0
          %6680 = vmatpush1.msra.mxu0 0.0
          %6681 = vmatprep.subr.mxu0 0.0
          %6682 = vmatpush1.msra.mxu0 0.0
          %6683 = vmatprep.subr.mxu0 0.0
          %6684 = vmatpush1.msra.mxu0 0.0
          %6685 = vmatprep.subr.mxu0 0.0
          %6686 = vmatpush1.msra.mxu0 0.0
          %6687 = vmatprep.subr.mxu0 0.0
          %6688 = vmatpush1.msra.mxu0 0.0
          %6689 = vmatprep.subr.mxu0 0.0
          %6690 = vmatpush1.msra.mxu0 0.0
          %6691 = vmatprep.subr.mxu0 0.0
          %6692 = vmatpush1.msra.mxu0 0.0
          %6693 = vmatprep.subr.mxu0 0.0
          %6694 = vmatpush1.msra.mxu0 0.0
          %6695 = vmatprep.subr.mxu0 0.0
          %6696 = vmatpush1.msra.mxu0 0.0
          %6697 = vmatprep.subr.mxu0 0.0
          %6698 = vmatpush1.msra.mxu0 0.0
          %6699 = vmatprep.mubr.f32.mxu0 0.0
          %6700 = vmatmul.mubr.f32.gmra.mrb[0].mxu0 %v6294
          %v6701 = vpop.f32.mrb[0].mxu0
          %v6702 = vadd.f32 %v6558, %v6701
          %v6703 = vpop.f32.mrb[0].mxu0
          %v6704 = vadd.f32 %v6562, %v6703
          %6705 = vdwg.mxu0
          %6706 = vmatprep.subr.mxu0 %v6298
          %6707 = vmatpush1.msra.mxu0 %v6297
          %6708 = vmatprep.subr.mxu0 %v6314
          %6709 = vmatpush1.msra.mxu0 %v6313
          %6710 = vmatprep.subr.mxu0 %v6330
          %6711 = vmatpush1.msra.mxu0 %v6329
          %6712 = vmatprep.subr.mxu0 %v6346
          %6713 = vmatpush1.msra.mxu0 %v6345
          %6714 = vmatprep.subr.mxu0 %v6362
          %6715 = vmatpush1.msra.mxu0 %v6361
          %6716 = vmatprep.subr.mxu0 %v6378
          %6717 = vmatpush1.msra.mxu0 %v6377
          %6718 = vmatprep.subr.mxu0 %v6394
          %6719 = vmatpush1.msra.mxu0 %v6393
          %6720 = vmatprep.subr.mxu0 %v6410
          %6721 = vmatpush1.msra.mxu0 %v6409
          %6722 = vmatprep.subr.mxu0 %v6426
          %6723 = vmatpush1.msra.mxu0 %v6425
          %6724 = vmatprep.subr.mxu0 %v6442
          %6725 = vmatpush1.msra.mxu0 %v6441
          %6726 = vmatprep.subr.mxu0 %v6458
          %6727 = vmatpush1.msra.mxu0 %v6457
          %6728 = vmatprep.subr.mxu0 %v6474
          %6729 = vmatpush1.msra.mxu0 %v6473
          %6730 = vmatprep.subr.mxu0 %v6490
          %6731 = vmatpush1.msra.mxu0 %v6489
          %6732 = vmatprep.subr.mxu0 %v6506
          %6733 = vmatpush1.msra.mxu0 %v6505
          %6734 = vmatprep.subr.mxu0 %v6522
          %6735 = vmatpush1.msra.mxu0 %v6521
          %6736 = vmatprep.subr.mxu0 %v6538
          %6737 = vmatpush1.msra.mxu0 %v6537
          %6738 = vmatprep.subr.mxu0 0.0
          %6739 = vmatpush1.msra.mxu0 0.0
          %6740 = vmatprep.subr.mxu0 0.0
          %6741 = vmatpush1.msra.mxu0 0.0
          %6742 = vmatprep.subr.mxu0 0.0
          %6743 = vmatpush1.msra.mxu0 0.0
          %6744 = vmatprep.subr.mxu0 0.0
          %6745 = vmatpush1.msra.mxu0 0.0
          %6746 = vmatprep.subr.mxu0 0.0
          %6747 = vmatpush1.msra.mxu0 0.0
          %6748 = vmatprep.subr.mxu0 0.0
          %6749 = vmatpush1.msra.mxu0 0.0
          %6750 = vmatprep.subr.mxu0 0.0
          %6751 = vmatpush1.msra.mxu0 0.0
          %6752 = vmatprep.subr.mxu0 0.0
          %6753 = vmatpush1.msra.mxu0 0.0
          %6754 = vmatprep.subr.mxu0 0.0
          %6755 = vmatpush1.msra.mxu0 0.0
          %6756 = vmatprep.subr.mxu0 0.0
          %6757 = vmatpush1.msra.mxu0 0.0
          %6758 = vmatprep.subr.mxu0 0.0
          %6759 = vmatpush1.msra.mxu0 0.0
          %6760 = vmatprep.subr.mxu0 0.0
          %6761 = vmatpush1.msra.mxu0 0.0
          %6762 = vmatprep.subr.mxu0 0.0
          %6763 = vmatpush1.msra.mxu0 0.0
          %6764 = vmatprep.subr.mxu0 0.0
          %6765 = vmatpush1.msra.mxu0 0.0
          %6766 = vmatprep.subr.mxu0 0.0
          %6767 = vmatpush1.msra.mxu0 0.0
          %6768 = vmatprep.subr.mxu0 0.0
          %6769 = vmatpush1.msra.mxu0 0.0
          %6770 = vmatprep.mubr.f32.mxu0 0.0
          %6771 = vmatmul.mubr.f32.gmra.mrb[0].mxu0 %v6294
          %v6772 = vpop.f32.mrb[0].mxu0
          %v6773 = vadd.f32 %v6566, %v6772
          %v6774 = vpop.f32.mrb[0].mxu0
          %v6775 = vadd.f32 %v6570, %v6774
          %6776 = vdwg.mxu0
          %6777 = vmatprep.subr.mxu0 %v6300
          %6778 = vmatpush1.msra.mxu0 %v6299
          %6779 = vmatprep.subr.mxu0 %v6316
          %6780 = vmatpush1.msra.mxu0 %v6315
          %6781 = vmatprep.subr.mxu0 %v6332
          %6782 = vmatpush1.msra.mxu0 %v6331
          %6783 = vmatprep.subr.mxu0 %v6348
          %6784 = vmatpush1.msra.mxu0 %v6347
          %6785 = vmatprep.subr.mxu0 %v6364
          %6786 = vmatpush1.msra.mxu0 %v6363
          %6787 = vmatprep.subr.mxu0 %v6380
          %6788 = vmatpush1.msra.mxu0 %v6379
          %6789 = vmatprep.subr.mxu0 %v6396
          %6790 = vmatpush1.msra.mxu0 %v6395
          %6791 = vmatprep.subr.mxu0 %v6412
          %6792 = vmatpush1.msra.mxu0 %v6411
          %6793 = vmatprep.subr.mxu0 %v6428
          %6794 = vmatpush1.msra.mxu0 %v6427
          %6795 = vmatprep.subr.mxu0 %v6444
          %6796 = vmatpush1.msra.mxu0 %v6443
          %6797 = vmatprep.subr.mxu0 %v6460
          %6798 = vmatpush1.msra.mxu0 %v6459
          %6799 = vmatprep.subr.mxu0 %v6476
          %6800 = vmatpush1.msra.mxu0 %v6475
          %6801 = vmatprep.subr.mxu0 %v6492
          %6802 = vmatpush1.msra.mxu0 %v6491
          %6803 = vmatprep.subr.mxu0 %v6508
          %6804 = vmatpush1.msra.mxu0 %v6507
          %6805 = vmatprep.subr.mxu0 %v6524
          %6806 = vmatpush1.msra.mxu0 %v6523
          %6807 = vmatprep.subr.mxu0 %v6540
          %6808 = vmatpush1.msra.mxu0 %v6539
          %6809 = vmatprep.subr.mxu0 0.0
          %6810 = vmatpush1.msra.mxu0 0.0
          %6811 = vmatprep.subr.mxu0 0.0
          %6812 = vmatpush1.msra.mxu0 0.0
          %6813 = vmatprep.subr.mxu0 0.0
          %6814 = vmatpush1.msra.mxu0 0.0
          %6815 = vmatprep.subr.mxu0 0.0
          %6816 = vmatpush1.msra.mxu0 0.0
          %6817 = vmatprep.subr.mxu0 0.0
          %6818 = vmatpush1.msra.mxu0 0.0
          %6819 = vmatprep.subr.mxu0 0.0
          %6820 = vmatpush1.msra.mxu0 0.0
          %6821 = vmatprep.subr.mxu0 0.0
          %6822 = vmatpush1.msra.mxu0 0.0
          %6823 = vmatprep.subr.mxu0 0.0
          %6824 = vmatpush1.msra.mxu0 0.0
          %6825 = vmatprep.subr.mxu0 0.0
          %6826 = vmatpush1.msra.mxu0 0.0
          %6827 = vmatprep.subr.mxu0 0.0
          %6828 = vmatpush1.msra.mxu0 0.0
          %6829 = vmatprep.subr.mxu0 0.0
          %6830 = vmatpush1.msra.mxu0 0.0
          %6831 = vmatprep.subr.mxu0 0.0
          %6832 = vmatpush1.msra.mxu0 0.0
          %6833 = vmatprep.subr.mxu0 0.0
          %6834 = vmatpush1.msra.mxu0 0.0
          %6835 = vmatprep.subr.mxu0 0.0
          %6836 = vmatpush1.msra.mxu0 0.0
          %6837 = vmatprep.subr.mxu0 0.0
          %6838 = vmatpush1.msra.mxu0 0.0
          %6839 = vmatprep.subr.mxu0 0.0
          %6840 = vmatpush1.msra.mxu0 0.0
          %6841 = vmatprep.mubr.f32.mxu0 0.0
          %6842 = vmatmul.mubr.f32.gmra.mrb[0].mxu0 %v6294
          %v6843 = vpop.f32.mrb[0].mxu0
          %v6844 = vadd.f32 %v6574, %v6843
          %v6845 = vpop.f32.mrb[0].mxu0
          %v6846 = vadd.f32 %v6578, %v6845
          %6847 = vdwg.mxu0
          %6848 = vmatprep.subr.mxu0 %v6302
          %6849 = vmatpush1.msra.mxu0 %v6301
          %6850 = vmatprep.subr.mxu0 %v6318
          %6851 = vmatpush1.msra.mxu0 %v6317
          %6852 = vmatprep.subr.mxu0 %v6334
          %6853 = vmatpush1.msra.mxu0 %v6333
          %6854 = vmatprep.subr.mxu0 %v6350
          %6855 = vmatpush1.msra.mxu0 %v6349
          %6856 = vmatprep.subr.mxu0 %v6366
          %6857 = vmatpush1.msra.mxu0 %v6365
          %6858 = vmatprep.subr.mxu0 %v6382
          %6859 = vmatpush1.msra.mxu0 %v6381
          %6860 = vmatprep.subr.mxu0 %v6398
          %6861 = vmatpush1.msra.mxu0 %v6397
          %6862 = vmatprep.subr.mxu0 %v6414
          %6863 = vmatpush1.msra.mxu0 %v6413
          %6864 = vmatprep.subr.mxu0 %v6430
          %6865 = vmatpush1.msra.mxu0 %v6429
          %6866 = vmatprep.subr.mxu0 %v6446
          %6867 = vmatpush1.msra.mxu0 %v6445
          %6868 = vmatprep.subr.mxu0 %v6462
          %6869 = vmatpush1.msra.mxu0 %v6461
          %6870 = vmatprep.subr.mxu0 %v6478
          %6871 = vmatpush1.msra.mxu0 %v6477
          %6872 = vmatprep.subr.mxu0 %v6494
          %6873 = vmatpush1.msra.mxu0 %v6493
          %6874 = vmatprep.subr.mxu0 %v6510
          %6875 = vmatpush1.msra.mxu0 %v6509
          %6876 = vmatprep.subr.mxu0 %v6526
          %6877 = vmatpush1.msra.mxu0 %v6525
          %6878 = vmatprep.subr.mxu0 %v6542
          %6879 = vmatpush1.msra.mxu0 %v6541
          %6880 = vmatprep.subr.mxu0 0.0
          %6881 = vmatpush1.msra.mxu0 0.0
          %6882 = vmatprep.subr.mxu0 0.0
          %6883 = vmatpush1.msra.mxu0 0.0
          %6884 = vmatprep.subr.mxu0 0.0
          %6885 = vmatpush1.msra.mxu0 0.0
          %6886 = vmatprep.subr.mxu0 0.0
          %6887 = vmatpush1.msra.mxu0 0.0
          %6888 = vmatprep.subr.mxu0 0.0
          %6889 = vmatpush1.msra.mxu0 0.0
          %6890 = vmatprep.subr.mxu0 0.0
          %6891 = vmatpush1.msra.mxu0 0.0
          %6892 = vmatprep.subr.mxu0 0.0
          %6893 = vmatpush1.msra.mxu0 0.0
          %6894 = vmatprep.subr.mxu0 0.0
          %6895 = vmatpush1.msra.mxu0 0.0
          %6896 = vmatprep.subr.mxu0 0.0
          %6897 = vmatpush1.msra.mxu0 0.0
          %6898 = vmatprep.subr.mxu0 0.0
          %6899 = vmatpush1.msra.mxu0 0.0
          %6900 = vmatprep.subr.mxu0 0.0
          %6901 = vmatpush1.msra.mxu0 0.0
          %6902 = vmatprep.subr.mxu0 0.0
          %6903 = vmatpush1.msra.mxu0 0.0
          %6904 = vmatprep.subr.mxu0 0.0
          %6905 = vmatpush1.msra.mxu0 0.0
          %6906 = vmatprep.subr.mxu0 0.0
          %6907 = vmatpush1.msra.mxu0 0.0
          %6908 = vmatprep.subr.mxu0 0.0
          %6909 = vmatpush1.msra.mxu0 0.0
          %6910 = vmatprep.subr.mxu0 0.0
          %6911 = vmatpush1.msra.mxu0 0.0
          %6912 = vmatprep.mubr.f32.mxu0 0.0
          %6913 = vmatmul.mubr.f32.gmra.mrb[0].mxu0 %v6294
          %v6914 = vpop.f32.mrb[0].mxu0
          %v6915 = vadd.f32 %v6582, %v6914
          %v6916 = vpop.f32.mrb[0].mxu0
          %v6917 = vadd.f32 %v6586, %v6916
          %6918 = vdwg.mxu0
          %6919 = vmatprep.subr.mxu0 %v6304
          %6920 = vmatpush1.msra.mxu0 %v6303
          %6921 = vmatprep.subr.mxu0 %v6320
          %6922 = vmatpush1.msra.mxu0 %v6319
          %6923 = vmatprep.subr.mxu0 %v6336
          %6924 = vmatpush1.msra.mxu0 %v6335
          %6925 = vmatprep.subr.mxu0 %v6352
          %6926 = vmatpush1.msra.mxu0 %v6351
          %6927 = vmatprep.subr.mxu0 %v6368
          %6928 = vmatpush1.msra.mxu0 %v6367
          %6929 = vmatprep.subr.mxu0 %v6384
          %6930 = vmatpush1.msra.mxu0 %v6383
          %6931 = vmatprep.subr.mxu0 %v6400
          %6932 = vmatpush1.msra.mxu0 %v6399
          %6933 = vmatprep.subr.mxu0 %v6416
          %6934 = vmatpush1.msra.mxu0 %v6415
          %6935 = vmatprep.subr.mxu0 %v6432
          %6936 = vmatpush1.msra.mxu0 %v6431
          %6937 = vmatprep.subr.mxu0 %v6448
          %6938 = vmatpush1.msra.mxu0 %v6447
          %6939 = vmatprep.subr.mxu0 %v6464
          %6940 = vmatpush1.msra.mxu0 %v6463
          %6941 = vmatprep.subr.mxu0 %v6480
          %6942 = vmatpush1.msra.mxu0 %v6479
          %6943 = vmatprep.subr.mxu0 %v6496
          %6944 = vmatpush1.msra.mxu0 %v6495
          %6945 = vmatprep.subr.mxu0 %v6512
          %6946 = vmatpush1.msra.mxu0 %v6511
          %6947 = vmatprep.subr.mxu0 %v6528
          %6948 = vmatpush1.msra.mxu0 %v6527
          %6949 = vmatprep.subr.mxu0 %v6544
          %6950 = vmatpush1.msra.mxu0 %v6543
          %6951 = vmatprep.subr.mxu0 0.0
          %6952 = vmatpush1.msra.mxu0 0.0
          %6953 = vmatprep.subr.mxu0 0.0
          %6954 = vmatpush1.msra.mxu0 0.0
          %6955 = vmatprep.subr.mxu0 0.0
          %6956 = vmatpush1.msra.mxu0 0.0
          %6957 = vmatprep.subr.mxu0 0.0
          %6958 = vmatpush1.msra.mxu0 0.0
          %6959 = vmatprep.subr.mxu0 0.0
          %6960 = vmatpush1.msra.mxu0 0.0
          %6961 = vmatprep.subr.mxu0 0.0
          %6962 = vmatpush1.msra.mxu0 0.0
          %6963 = vmatprep.subr.mxu0 0.0
          %6964 = vmatpush1.msra.mxu0 0.0
          %6965 = vmatprep.subr.mxu0 0.0
          %6966 = vmatpush1.msra.mxu0 0.0
          %6967 = vmatprep.subr.mxu0 0.0
          %6968 = vmatpush1.msra.mxu0 0.0
          %6969 = vmatprep.subr.mxu0 0.0
          %6970 = vmatpush1.msra.mxu0 0.0
          %6971 = vmatprep.subr.mxu0 0.0
          %6972 = vmatpush1.msra.mxu0 0.0
          %6973 = vmatprep.subr.mxu0 0.0
          %6974 = vmatpush1.msra.mxu0 0.0
          %6975 = vmatprep.subr.mxu0 0.0
          %6976 = vmatpush1.msra.mxu0 0.0
          %6977 = vmatprep.subr.mxu0 0.0
          %6978 = vmatpush1.msra.mxu0 0.0
          %6979 = vmatprep.subr.mxu0 0.0
          %6980 = vmatpush1.msra.mxu0 0.0
          %6981 = vmatprep.subr.mxu0 0.0
          %6982 = vmatpush1.msra.mxu0 0.0
          %6983 = vmatprep.mubr.f32.mxu0 0.0
          %6984 = vmatmul.mubr.f32.gmra.mrb[0].mxu0 %v6294
          %v6985 = vpop.f32.mrb[0].mxu0
          %v6986 = vadd.f32 %v6590, %v6985
          %v6987 = vpop.f32.mrb[0].mxu0
          %v6988 = vadd.f32 %v6594, %v6987
          %6989 = vdwg.mxu0
          %6990 = vmatprep.subr.mxu0 %v6306
          %6991 = vmatpush1.msra.mxu0 %v6305
          %6992 = vmatprep.subr.mxu0 %v6322
          %6993 = vmatpush1.msra.mxu0 %v6321
          %6994 = vmatprep.subr.mxu0 %v6338
          %6995 = vmatpush1.msra.mxu0 %v6337
          %6996 = vmatprep.subr.mxu0 %v6354
          %6997 = vmatpush1.msra.mxu0 %v6353
          %6998 = vmatprep.subr.mxu0 %v6370
          %6999 = vmatpush1.msra.mxu0 %v6369
          %7000 = vmatprep.subr.mxu0 %v6386
          %7001 = vmatpush1.msra.mxu0 %v6385
          %7002 = vmatprep.subr.mxu0 %v6402
          %7003 = vmatpush1.msra.mxu0 %v6401
          %7004 = vmatprep.subr.mxu0 %v6418
          %7005 = vmatpush1.msra.mxu0 %v6417
          %7006 = vmatprep.subr.mxu0 %v6434
          %7007 = vmatpush1.msra.mxu0 %v6433
          %7008 = vmatprep.subr.mxu0 %v6450
          %7009 = vmatpush1.msra.mxu0 %v6449
          %7010 = vmatprep.subr.mxu0 %v6466
          %7011 = vmatpush1.msra.mxu0 %v6465
          %7012 = vmatprep.subr.mxu0 %v6482
          %7013 = vmatpush1.msra.mxu0 %v6481
          %7014 = vmatprep.subr.mxu0 %v6498
          %7015 = vmatpush1.msra.mxu0 %v6497
          %7016 = vmatprep.subr.mxu0 %v6514
          %7017 = vmatpush1.msra.mxu0 %v6513
          %7018 = vmatprep.subr.mxu0 %v6530
          %7019 = vmatpush1.msra.mxu0 %v6529
          %7020 = vmatprep.subr.mxu0 %v6546
          %7021 = vmatpush1.msra.mxu0 %v6545
          %7022 = vmatprep.subr.mxu0 0.0
          %7023 = vmatpush1.msra.mxu0 0.0
          %7024 = vmatprep.subr.mxu0 0.0
          %7025 = vmatpush1.msra.mxu0 0.0
          %7026 = vmatprep.subr.mxu0 0.0
          %7027 = vmatpush1.msra.mxu0 0.0
          %7028 = vmatprep.subr.mxu0 0.0
          %7029 = vmatpush1.msra.mxu0 0.0
          %7030 = vmatprep.subr.mxu0 0.0
          %7031 = vmatpush1.msra.mxu0 0.0
          %7032 = vmatprep.subr.mxu0 0.0
          %7033 = vmatpush1.msra.mxu0 0.0
          %7034 = vmatprep.subr.mxu0 0.0
          %7035 = vmatpush1.msra.mxu0 0.0
          %7036 = vmatprep.subr.mxu0 0.0
          %7037 = vmatpush1.msra.mxu0 0.0
          %7038 = vmatprep.subr.mxu0 0.0
          %7039 = vmatpush1.msra.mxu0 0.0
          %7040 = vmatprep.subr.mxu0 0.0
          %7041 = vmatpush1.msra.mxu0 0.0
          %7042 = vmatprep.subr.mxu0 0.0
          %7043 = vmatpush1.msra.mxu0 0.0
          %7044 = vmatprep.subr.mxu0 0.0
          %7045 = vmatpush1.msra.mxu0 0.0
          %7046 = vmatprep.subr.mxu0 0.0
          %7047 = vmatpush1.msra.mxu0 0.0
          %7048 = vmatprep.subr.mxu0 0.0
          %7049 = vmatpush1.msra.mxu0 0.0
          %7050 = vmatprep.subr.mxu0 0.0
          %7051 = vmatpush1.msra.mxu0 0.0
          %7052 = vmatprep.subr.mxu0 0.0
          %7053 = vmatpush1.msra.mxu0 0.0
          %7054 = vmatprep.mubr.f32.mxu0 0.0
          %7055 = vmatmul.mubr.f32.gmra.mrb[0].mxu0 %v6294
          %v7056 = vpop.f32.mrb[0].mxu0
          %v7057 = vadd.f32 %v6598, %v7056
          %v7058 = vpop.f32.mrb[0].mxu0
          %v7059 = vadd.f32 %v6602, %v7058
          %7060 = vdwg.mxu0
          %7061 = vmatprep.subr.mxu0 %v6308
          %7062 = vmatpush1.msra.mxu0 %v6307
          %7063 = vmatprep.subr.mxu0 %v6324
          %7064 = vmatpush1.msra.mxu0 %v6323
          %7065 = vmatprep.subr.mxu0 %v6340
          %7066 = vmatpush1.msra.mxu0 %v6339
          %7067 = vmatprep.subr.mxu0 %v6356
          %7068 = vmatpush1.msra.mxu0 %v6355
          %7069 = vmatprep.subr.mxu0 %v6372
          %7070 = vmatpush1.msra.mxu0 %v6371
          %7071 = vmatprep.subr.mxu0 %v6388
          %7072 = vmatpush1.msra.mxu0 %v6387
          %7073 = vmatprep.subr.mxu0 %v6404
          %7074 = vmatpush1.msra.mxu0 %v6403
          %7075 = vmatprep.subr.mxu0 %v6420
          %7076 = vmatpush1.msra.mxu0 %v6419
          %7077 = vmatprep.subr.mxu0 %v6436
          %7078 = vmatpush1.msra.mxu0 %v6435
          %7079 = vmatprep.subr.mxu0 %v6452
          %7080 = vmatpush1.msra.mxu0 %v6451
          %7081 = vmatprep.subr.mxu0 %v6468
          %7082 = vmatpush1.msra.mxu0 %v6467
          %7083 = vmatprep.subr.mxu0 %v6484
          %7084 = vmatpush1.msra.mxu0 %v6483
          %7085 = vmatprep.subr.mxu0 %v6500
          %7086 = vmatpush1.msra.mxu0 %v6499
          %7087 = vmatprep.subr.mxu0 %v6516
          %7088 = vmatpush1.msra.mxu0 %v6515
          %7089 = vmatprep.subr.mxu0 %v6532
          %7090 = vmatpush1.msra.mxu0 %v6531
          %7091 = vmatprep.subr.mxu0 %v6548
          %7092 = vmatpush1.msra.mxu0 %v6547
          %7093 = vmatprep.subr.mxu0 0.0
          %7094 = vmatpush1.msra.mxu0 0.0
          %7095 = vmatprep.subr.mxu0 0.0
          %7096 = vmatpush1.msra.mxu0 0.0
          %7097 = vmatprep.subr.mxu0 0.0
          %7098 = vmatpush1.msra.mxu0 0.0
          %7099 = vmatprep.subr.mxu0 0.0
          %7100 = vmatpush1.msra.mxu0 0.0
          %7101 = vmatprep.subr.mxu0 0.0
          %7102 = vmatpush1.msra.mxu0 0.0
          %7103 = vmatprep.subr.mxu0 0.0
          %7104 = vmatpush1.msra.mxu0 0.0
          %7105 = vmatprep.subr.mxu0 0.0
          %7106 = vmatpush1.msra.mxu0 0.0
          %7107 = vmatprep.subr.mxu0 0.0
          %7108 = vmatpush1.msra.mxu0 0.0
          %7109 = vmatprep.subr.mxu0 0.0
          %7110 = vmatpush1.msra.mxu0 0.0
          %7111 = vmatprep.subr.mxu0 0.0
          %7112 = vmatpush1.msra.mxu0 0.0
          %7113 = vmatprep.subr.mxu0 0.0
          %7114 = vmatpush1.msra.mxu0 0.0
          %7115 = vmatprep.subr.mxu0 0.0
          %7116 = vmatpush1.msra.mxu0 0.0
          %7117 = vmatprep.subr.mxu0 0.0
          %7118 = vmatpush1.msra.mxu0 0.0
          %7119 = vmatprep.subr.mxu0 0.0
          %7120 = vmatpush1.msra.mxu0 0.0
          %7121 = vmatprep.subr.mxu0 0.0
          %7122 = vmatpush1.msra.mxu0 0.0
          %7123 = vmatprep.subr.mxu0 0.0
          %7124 = vmatpush1.msra.mxu0 0.0
          %7125 = vmatprep.mubr.f32.mxu0 0.0
          %7126 = vmatmul.mubr.f32.gmra.mrb[0].mxu0 %v6294
          %v7127 = vpop.f32.mrb[0].mxu0
          %v7128 = vadd.f32 %v6606, %v7127
          %v7129 = vpop.f32.mrb[0].mxu0
          %v7130 = vadd.f32 %v6610, %v7129
          %7131 = vdwg.mxu0
          %7132 = vmatprep.subr.mxu0 %v6310
          %7133 = vmatpush1.msra.mxu0 %v6309
          %7134 = vmatprep.subr.mxu0 %v6326
          %7135 = vmatpush1.msra.mxu0 %v6325
          %7136 = vmatprep.subr.mxu0 %v6342
          %7137 = vmatpush1.msra.mxu0 %v6341
          %7138 = vmatprep.subr.mxu0 %v6358
          %7139 = vmatpush1.msra.mxu0 %v6357
          %7140 = vmatprep.subr.mxu0 %v6374
          %7141 = vmatpush1.msra.mxu0 %v6373
          %7142 = vmatprep.subr.mxu0 %v6390
          %7143 = vmatpush1.msra.mxu0 %v6389
          %7144 = vmatprep.subr.mxu0 %v6406
          %7145 = vmatpush1.msra.mxu0 %v6405
          %7146 = vmatprep.subr.mxu0 %v6422
          %7147 = vmatpush1.msra.mxu0 %v6421
          %7148 = vmatprep.subr.mxu0 %v6438
          %7149 = vmatpush1.msra.mxu0 %v6437
          %7150 = vmatprep.subr.mxu0 %v6454
          %7151 = vmatpush1.msra.mxu0 %v6453
          %7152 = vmatprep.subr.mxu0 %v6470
          %7153 = vmatpush1.msra.mxu0 %v6469
          %7154 = vmatprep.subr.mxu0 %v6486
          %7155 = vmatpush1.msra.mxu0 %v6485
          %7156 = vmatprep.subr.mxu0 %v6502
          %7157 = vmatpush1.msra.mxu0 %v6501
          %7158 = vmatprep.subr.mxu0 %v6518
          %7159 = vmatpush1.msra.mxu0 %v6517
          %7160 = vmatprep.subr.mxu0 %v6534
          %7161 = vmatpush1.msra.mxu0 %v6533
          %7162 = vmatprep.subr.mxu0 %v6550
          %7163 = vmatpush1.msra.mxu0 %v6549
          %7164 = vmatprep.subr.mxu0 0.0
          %7165 = vmatpush1.msra.mxu0 0.0
          %7166 = vmatprep.subr.mxu0 0.0
          %7167 = vmatpush1.msra.mxu0 0.0
          %7168 = vmatprep.subr.mxu0 0.0
          %7169 = vmatpush1.msra.mxu0 0.0
          %7170 = vmatprep.subr.mxu0 0.0
          %7171 = vmatpush1.msra.mxu0 0.0
          %7172 = vmatprep.subr.mxu0 0.0
          %7173 = vmatpush1.msra.mxu0 0.0
          %7174 = vmatprep.subr.mxu0 0.0
          %7175 = vmatpush1.msra.mxu0 0.0
          %7176 = vmatprep.subr.mxu0 0.0
          %7177 = vmatpush1.msra.mxu0 0.0
          %7178 = vmatprep.subr.mxu0 0.0
          %7179 = vmatpush1.msra.mxu0 0.0
          %7180 = vmatprep.subr.mxu0 0.0
          %7181 = vmatpush1.msra.mxu0 0.0
          %7182 = vmatprep.subr.mxu0 0.0
          %7183 = vmatpush1.msra.mxu0 0.0
          %7184 = vmatprep.subr.mxu0 0.0
          %7185 = vmatpush1.msra.mxu0 0.0
          %7186 = vmatprep.subr.mxu0 0.0
          %7187 = vmatpush1.msra.mxu0 0.0
          %7188 = vmatprep.subr.mxu0 0.0
          %7189 = vmatpush1.msra.mxu0 0.0
          %7190 = vmatprep.subr.mxu0 0.0
          %7191 = vmatpush1.msra.mxu0 0.0
          %7192 = vmatprep.subr.mxu0 0.0
          %7193 = vmatpush1.msra.mxu0 0.0
          %7194 = vmatprep.subr.mxu0 0.0
          %7195 = vmatpush1.msra.mxu0 0.0
          %7196 = vmatprep.mubr.f32.mxu0 0.0
          %7197 = vmatmul.mubr.f32.gmra.mrb[0].mxu0 %v6294
          %v7198 = vpop.f32.mrb[0].mxu0
          %v7199 = vadd.f32 %v6614, %v7198
          %v7200 = vpop.f32.mrb[0].mxu0
          %v7201 = vadd.f32 %v6618, %v7200
          %7202 = vdwg.mxu0
          %v7203 = vxor.u32 %v6702, 2147483648
          %v7204 = vxor.u32 %v6704, 2147483648
          %v7205 = vxor.u32 %v6773, 2147483648
          %v7206 = vxor.u32 %v6775, 2147483648
          %v7207 = vxor.u32 %v6844, 2147483648
          %v7208 = vxor.u32 %v6846, 2147483648
          %v7209 = vxor.u32 %v6915, 2147483648
          %v7210 = vxor.u32 %v6917, 2147483648
          %v7211 = vxor.u32 %v6986, 2147483648
          %v7212 = vxor.u32 %v6988, 2147483648
          %v7213 = vxor.u32 %v7057, 2147483648
          %v7214 = vxor.u32 %v7059, 2147483648
          %v7215 = vxor.u32 %v7128, 2147483648
          %v7216 = vxor.u32 %v7130, 2147483648
          %v7217 = vxor.u32 %v7199, 2147483648
          %v7218 = vxor.u32 %v7201, 2147483648
          %v7219 = vmul.f32 %v7203, 1.442695
          %v7220 = vpow.pop %v7219
          %v7221 = vmul.f32 %v7204, 1.442695
          %v7222 = vpow.pop %v7221
          %v7223 = vmul.f32 %v7205, 1.442695
          %v7224 = vpow.pop %v7223
          %v7225 = vmul.f32 %v7206, 1.442695
          %v7226 = vpow.pop %v7225
          %v7227 = vmul.f32 %v7207, 1.442695
          %v7228 = vpow.pop %v7227
          %v7229 = vmul.f32 %v7208, 1.442695
          %v7230 = vpow.pop %v7229
          %v7231 = vmul.f32 %v7209, 1.442695
          %v7232 = vpow.pop %v7231
          %v7233 = vmul.f32 %v7210, 1.442695
          %v7234 = vpow.pop %v7233
          %v7235 = vmul.f32 %v7211, 1.442695
          %v7236 = vpow.pop %v7235
          %v7237 = vmul.f32 %v7212, 1.442695
          %v7238 = vpow.pop %v7237
          %v7239 = vmul.f32 %v7213, 1.442695
          %v7240 = vpow.pop %v7239
          %v7241 = vmul.f32 %v7214, 1.442695
          %v7242 = vpow.pop %v7241
          %v7243 = vmul.f32 %v7215, 1.442695
          %v7244 = vpow.pop %v7243
          %v7245 = vmul.f32 %v7216, 1.442695
          %v7246 = vpow.pop %v7245
          %v7247 = vmul.f32 %v7217, 1.442695
          %v7248 = vpow.pop %v7247
          %v7249 = vmul.f32 %v7218, 1.442695
          %v7250 = vpow.pop %v7249
          %v7251 = vadd.f32 %v7220, 1.0
          %v7252 = vadd.f32 %v7222, 1.0
          %v7253 = vadd.f32 %v7224, 1.0
          %v7254 = vadd.f32 %v7226, 1.0
          %v7255 = vadd.f32 %v7228, 1.0
          %v7256 = vadd.f32 %v7230, 1.0
          %v7257 = vadd.f32 %v7232, 1.0
          %v7258 = vadd.f32 %v7234, 1.0
          %v7259 = vadd.f32 %v7236, 1.0
          %v7260 = vadd.f32 %v7238, 1.0
          %v7261 = vadd.f32 %v7240, 1.0
          %v7262 = vadd.f32 %v7242, 1.0
          %v7263 = vadd.f32 %v7244, 1.0
          %v7264 = vadd.f32 %v7246, 1.0
          %v7265 = vadd.f32 %v7248, 1.0
          %v7266 = vadd.f32 %v7250, 1.0
          %v7267 = vrcp.pop %v7251
          %v7268 = vmul.f32 1.0, %v7267
          %v7269 = vrcp.pop %v7252
          %v7270 = vmul.f32 1.0, %v7269
          %v7271 = vrcp.pop %v7253
          %v7272 = vmul.f32 1.0, %v7271
          %v7273 = vrcp.pop %v7254
          %v7274 = vmul.f32 1.0, %v7273
          %v7275 = vrcp.pop %v7255
          %v7276 = vmul.f32 1.0, %v7275
          %v7277 = vrcp.pop %v7256
          %v7278 = vmul.f32 1.0, %v7277
          %v7279 = vrcp.pop %v7257
          %v7280 = vmul.f32 1.0, %v7279
          %v7281 = vrcp.pop %v7258
          %v7282 = vmul.f32 1.0, %v7281
          %v7283 = vrcp.pop %v7259
          %v7284 = vmul.f32 1.0, %v7283
          %v7285 = vrcp.pop %v7260
          %v7286 = vmul.f32 1.0, %v7285
          %v7287 = vrcp.pop %v7261
          %v7288 = vmul.f32 1.0, %v7287
          %v7289 = vrcp.pop %v7262
          %v7290 = vmul.f32 1.0, %v7289
          %v7291 = vrcp.pop %v7263
          %v7292 = vmul.f32 1.0, %v7291
          %v7293 = vrcp.pop %v7264
          %v7294 = vmul.f32 1.0, %v7293
          %v7295 = vrcp.pop %v7265
          %v7296 = vmul.f32 1.0, %v7295
          %v7297 = vrcp.pop %v7266
          %v7298 = vmul.f32 1.0, %v7297
          %v7299 = vld [vmem:[%s5] sm:$0xff]
          %v7300 = vld [vmem:[%s5 + $0x8] sm:$0xff]
          %v7301 = vld [vmem:[%s6] sm:$0xff]
          %v7302 = vld [vmem:[%s6 + $0x8] sm:$0xff]
          %v7303 = vadd.f32 %v7268, 1.0
          %v7304 = vadd.f32 %v7270, 1.0
          %v7305 = vadd.f32 %v7272, 1.0
          %v7306 = vadd.f32 %v7274, 1.0
          %v7307 = vadd.f32 %v7276, 1.0
          %v7308 = vadd.f32 %v7278, 1.0
          %v7309 = vadd.f32 %v7280, 1.0
          %v7310 = vadd.f32 %v7282, 1.0
          %v7311 = vadd.f32 %v7284, 1.0
          %v7312 = vadd.f32 %v7286, 1.0
          %v7313 = vadd.f32 %v7288, 1.0
          %v7314 = vadd.f32 %v7290, 1.0
          %v7315 = vadd.f32 %v7292, 1.0
          %v7316 = vadd.f32 %v7294, 1.0
          %v7317 = vadd.f32 %v7296, 1.0
          %v7318 = vadd.f32 %v7298, 1.0
          %v7319 = vmul.f32 %v5455, %v7303
          %v7320 = vmul.f32 %v5456, %v7304
          %v7321 = vmul.f32 %v5457, %v7305
          %v7322 = vmul.f32 %v5458, %v7306
          %v7323 = vmul.f32 %v5459, %v7307
          %v7324 = vmul.f32 %v5460, %v7308
          %v7325 = vmul.f32 %v5461, %v7309
          %v7326 = vmul.f32 %v5462, %v7310
          %v7327 = vmul.f32 %v5463, %v7311
          %v7328 = vmul.f32 %v5464, %v7312
          %v7329 = vmul.f32 %v5465, %v7313
          %v7330 = vmul.f32 %v5466, %v7314
          %v7331 = vmul.f32 %v5467, %v7315
          %v7332 = vmul.f32 %v5468, %v7316
          %v7333 = vmul.f32 %v5469, %v7317
          %v7334 = vmul.f32 %v5470, %v7318
          %v7337 = vlaneseq
          %v7338 = vshrl.u32 %v7337, 7
          %v7339 = vsub.s32 0, %v7338
          %v7340 = vrot.slane %v7299, %v7339
          %v7341 = vlaneseq
          %v7342 = vshrl.u32 %v7341, 7
          %v7343 = vsub.s32 1, %v7342
          %v7344 = vrot.slane %v7299, %v7343
          %v7345 = vlaneseq
          %v7346 = vshrl.u32 %v7345, 7
          %v7347 = vsub.s32 2, %v7346
          %v7348 = vrot.slane %v7299, %v7347
          %v7349 = vlaneseq
          %v7350 = vshrl.u32 %v7349, 7
          %v7351 = vsub.s32 3, %v7350
          %v7352 = vrot.slane %v7299, %v7351
          %v7353 = vlaneseq
          %v7354 = vshrl.u32 %v7353, 7
          %v7355 = vsub.s32 4, %v7354
          %v7356 = vrot.slane %v7299, %v7355
          %v7357 = vlaneseq
          %v7358 = vshrl.u32 %v7357, 7
          %v7359 = vsub.s32 5, %v7358
          %v7360 = vrot.slane %v7299, %v7359
          %v7361 = vlaneseq
          %v7362 = vshrl.u32 %v7361, 7
          %v7363 = vsub.s32 6, %v7362
          %v7364 = vrot.slane %v7299, %v7363
          %v7365 = vlaneseq
          %v7366 = vshrl.u32 %v7365, 7
          %v7367 = vsub.s32 7, %v7366
          %v7368 = vrot.slane %v7299, %v7367
          %v7369 = vlaneseq
          %v7370 = vshrl.u32 %v7369, 7
          %v7371 = vsub.s32 0, %v7370
          %v7372 = vrot.slane %v7300, %v7371
          %v7373 = vlaneseq
          %v7374 = vshrl.u32 %v7373, 7
          %v7375 = vsub.s32 1, %v7374
          %v7376 = vrot.slane %v7300, %v7375
          %v7377 = vlaneseq
          %v7378 = vshrl.u32 %v7377, 7
          %v7379 = vsub.s32 2, %v7378
          %v7380 = vrot.slane %v7300, %v7379
          %v7381 = vlaneseq
          %v7382 = vshrl.u32 %v7381, 7
          %v7383 = vsub.s32 3, %v7382
          %v7384 = vrot.slane %v7300, %v7383
          %v7385 = vlaneseq
          %v7386 = vshrl.u32 %v7385, 7
          %v7387 = vsub.s32 4, %v7386
          %v7388 = vrot.slane %v7300, %v7387
          %v7389 = vlaneseq
          %v7390 = vshrl.u32 %v7389, 7
          %v7391 = vsub.s32 5, %v7390
          %v7392 = vrot.slane %v7300, %v7391
          %v7393 = vlaneseq
          %v7394 = vshrl.u32 %v7393, 7
          %v7395 = vsub.s32 6, %v7394
          %v7396 = vrot.slane %v7300, %v7395
          %v7397 = vlaneseq
          %v7398 = vshrl.u32 %v7397, 7
          %v7399 = vsub.s32 7, %v7398
          %v7400 = vrot.slane %v7300, %v7399
          %v7417 = vmul.f32 %v7319, %v7340
          %v7418 = vmul.f32 %v7320, %v7344
          %v7419 = vmul.f32 %v7321, %v7348
          %v7420 = vmul.f32 %v7322, %v7352
          %v7421 = vmul.f32 %v7323, %v7356
          %v7422 = vmul.f32 %v7324, %v7360
          %v7423 = vmul.f32 %v7325, %v7364
          %v7424 = vmul.f32 %v7326, %v7368
          %v7425 = vmul.f32 %v7327, %v7372
          %v7426 = vmul.f32 %v7328, %v7376
          %v7427 = vmul.f32 %v7329, %v7380
          %v7428 = vmul.f32 %v7330, %v7384
          %v7429 = vmul.f32 %v7331, %v7388
          %v7430 = vmul.f32 %v7332, %v7392
          %v7431 = vmul.f32 %v7333, %v7396
          %v7432 = vmul.f32 %v7334, %v7400
          %v7435 = vlaneseq
          %v7436 = vshrl.u32 %v7435, 7
          %v7437 = vsub.s32 0, %v7436
          %v7438 = vrot.slane %v7301, %v7437
          %v7439 = vlaneseq
          %v7440 = vshrl.u32 %v7439, 7
          %v7441 = vsub.s32 1, %v7440
          %v7442 = vrot.slane %v7301, %v7441
          %v7443 = vlaneseq
          %v7444 = vshrl.u32 %v7443, 7
          %v7445 = vsub.s32 2, %v7444
          %v7446 = vrot.slane %v7301, %v7445
          %v7447 = vlaneseq
          %v7448 = vshrl.u32 %v7447, 7
          %v7449 = vsub.s32 3, %v7448
          %v7450 = vrot.slane %v7301, %v7449
          %v7451 = vlaneseq
          %v7452 = vshrl.u32 %v7451, 7
          %v7453 = vsub.s32 4, %v7452
          %v7454 = vrot.slane %v7301, %v7453
          %v7455 = vlaneseq
          %v7456 = vshrl.u32 %v7455, 7
          %v7457 = vsub.s32 5, %v7456
          %v7458 = vrot.slane %v7301, %v7457
          %v7459 = vlaneseq
          %v7460 = vshrl.u32 %v7459, 7
          %v7461 = vsub.s32 6, %v7460
          %v7462 = vrot.slane %v7301, %v7461
          %v7463 = vlaneseq
          %v7464 = vshrl.u32 %v7463, 7
          %v7465 = vsub.s32 7, %v7464
          %v7466 = vrot.slane %v7301, %v7465
          %v7467 = vlaneseq
          %v7468 = vshrl.u32 %v7467, 7
          %v7469 = vsub.s32 0, %v7468
          %v7470 = vrot.slane %v7302, %v7469
          %v7471 = vlaneseq
          %v7472 = vshrl.u32 %v7471, 7
          %v7473 = vsub.s32 1, %v7472
          %v7474 = vrot.slane %v7302, %v7473
          %v7475 = vlaneseq
          %v7476 = vshrl.u32 %v7475, 7
          %v7477 = vsub.s32 2, %v7476
          %v7478 = vrot.slane %v7302, %v7477
          %v7479 = vlaneseq
          %v7480 = vshrl.u32 %v7479, 7
          %v7481 = vsub.s32 3, %v7480
          %v7482 = vrot.slane %v7302, %v7481
          %v7483 = vlaneseq
          %v7484 = vshrl.u32 %v7483, 7
          %v7485 = vsub.s32 4, %v7484
          %v7486 = vrot.slane %v7302, %v7485
          %v7487 = vlaneseq
          %v7488 = vshrl.u32 %v7487, 7
          %v7489 = vsub.s32 5, %v7488
          %v7490 = vrot.slane %v7302, %v7489
          %v7491 = vlaneseq
          %v7492 = vshrl.u32 %v7491, 7
          %v7493 = vsub.s32 6, %v7492
          %v7494 = vrot.slane %v7302, %v7493
          %v7495 = vlaneseq
          %v7496 = vshrl.u32 %v7495, 7
          %v7497 = vsub.s32 7, %v7496
          %v7498 = vrot.slane %v7302, %v7497
          %v7515 = vadd.f32 %v7417, %v7438
          %v7516 = vadd.f32 %v7418, %v7442
          %v7517 = vadd.f32 %v7419, %v7446
          %v7518 = vadd.f32 %v7420, %v7450
          %v7519 = vadd.f32 %v7421, %v7454
          %v7520 = vadd.f32 %v7422, %v7458
          %v7521 = vadd.f32 %v7423, %v7462
          %v7522 = vadd.f32 %v7424, %v7466
          %v7523 = vadd.f32 %v7425, %v7470
          %v7524 = vadd.f32 %v7426, %v7474
          %v7525 = vadd.f32 %v7427, %v7478
          %v7526 = vadd.f32 %v7428, %v7482
          %v7527 = vadd.f32 %v7429, %v7486
          %v7528 = vadd.f32 %v7430, %v7490
          %v7529 = vadd.f32 %v7431, %v7494
          %v7530 = vadd.f32 %v7432, %v7498
          %7531 = vst [vmem:[%s378] sm:$0xff] %v7515
          %7532 = vst [vmem:[%s378 + $0x8] sm:$0xff] %v7516
          %7533 = vst [vmem:[%s378 + $0x10] sm:$0xff] %v7517
          %7534 = vst [vmem:[%s378 + $0x18] sm:$0xff] %v7518
          %7535 = vst [vmem:[%s378 + $0x20] sm:$0xff] %v7519
          %7536 = vst [vmem:[%s378 + $0x28] sm:$0xff] %v7520
          %7537 = vst [vmem:[%s378 + $0x30] sm:$0xff] %v7521
          %7538 = vst [vmem:[%s378 + $0x38] sm:$0xff] %v7522
          %7539 = vst [vmem:[%s378 + $0x40] sm:$0xff] %v7523
          %7540 = vst [vmem:[%s378 + $0x48] sm:$0xff] %v7524
          %7541 = vst [vmem:[%s378 + $0x50] sm:$0xff] %v7525
          %7542 = vst [vmem:[%s378 + $0x58] sm:$0xff] %v7526
          %7543 = vst [vmem:[%s378 + $0x60] sm:$0xff] %v7527
          %7544 = vst [vmem:[%s378 + $0x68] sm:$0xff] %v7528
          %7545 = vst [vmem:[%s378 + $0x70] sm:$0xff] %v7529
          %7546 = vst [vmem:[%s378 + $0x78] sm:$0xff] %v7530
          %v7547 = vsub.f32 1.0, %v7268
          %v7548 = vsub.f32 1.0, %v7270
          %v7549 = vsub.f32 1.0, %v7272
          %v7550 = vsub.f32 1.0, %v7274
          %v7551 = vsub.f32 1.0, %v7276
          %v7552 = vsub.f32 1.0, %v7278
          %v7553 = vsub.f32 1.0, %v7280
          %v7554 = vsub.f32 1.0, %v7282
          %v7555 = vsub.f32 1.0, %v7284
          %v7556 = vsub.f32 1.0, %v7286
          %v7557 = vsub.f32 1.0, %v7288
          %v7558 = vsub.f32 1.0, %v7290
          %v7559 = vsub.f32 1.0, %v7292
          %v7560 = vsub.f32 1.0, %v7294
          %v7561 = vsub.f32 1.0, %v7296
          %v7562 = vsub.f32 1.0, %v7298
          %v7563 = vmul.f32 %v5455, %v7547
          %v7564 = vmul.f32 %v5456, %v7548
          %v7565 = vmul.f32 %v5457, %v7549
          %v7566 = vmul.f32 %v5458, %v7550
          %v7567 = vmul.f32 %v5459, %v7551
          %v7568 = vmul.f32 %v5460, %v7552
          %v7569 = vmul.f32 %v5461, %v7553
          %v7570 = vmul.f32 %v5462, %v7554
          %v7571 = vmul.f32 %v5463, %v7555
          %v7572 = vmul.f32 %v5464, %v7556
          %v7573 = vmul.f32 %v5465, %v7557
          %v7574 = vmul.f32 %v5466, %v7558
          %v7575 = vmul.f32 %v5467, %v7559
          %v7576 = vmul.f32 %v5468, %v7560
          %v7577 = vmul.f32 %v5469, %v7561
          %v7578 = vmul.f32 %v5470, %v7562
          %v7579 = vmul.f32 %v7563, %v7340
          %v7580 = vmul.f32 %v7564, %v7344
          %v7581 = vmul.f32 %v7565, %v7348
          %v7582 = vmul.f32 %v7566, %v7352
          %v7583 = vmul.f32 %v7567, %v7356
          %v7584 = vmul.f32 %v7568, %v7360
          %v7585 = vmul.f32 %v7569, %v7364
          %v7586 = vmul.f32 %v7570, %v7368
          %v7587 = vmul.f32 %v7571, %v7372
          %v7588 = vmul.f32 %v7572, %v7376
          %v7589 = vmul.f32 %v7573, %v7380
          %v7590 = vmul.f32 %v7574, %v7384
          %v7591 = vmul.f32 %v7575, %v7388
          %v7592 = vmul.f32 %v7576, %v7392
          %v7593 = vmul.f32 %v7577, %v7396
          %v7594 = vmul.f32 %v7578, %v7400
          %v7595 = vadd.f32 %v7579, %v7438
          %v7596 = vadd.f32 %v7580, %v7442
          %v7597 = vadd.f32 %v7581, %v7446
          %v7598 = vadd.f32 %v7582, %v7450
          %v7599 = vadd.f32 %v7583, %v7454
          %v7600 = vadd.f32 %v7584, %v7458
          %v7601 = vadd.f32 %v7585, %v7462
          %v7602 = vadd.f32 %v7586, %v7466
          %v7603 = vadd.f32 %v7587, %v7470
          %v7604 = vadd.f32 %v7588, %v7474
          %v7605 = vadd.f32 %v7589, %v7478
          %v7606 = vadd.f32 %v7590, %v7482
          %v7607 = vadd.f32 %v7591, %v7486
          %v7608 = vadd.f32 %v7592, %v7490
          %v7609 = vadd.f32 %v7593, %v7494
          %v7610 = vadd.f32 %v7594, %v7498
          %7611 = vst [vmem:[%s383] sm:$0xff] %v7595
          %7612 = vst [vmem:[%s383 + $0x8] sm:$0xff] %v7596
          %7613 = vst [vmem:[%s383 + $0x10] sm:$0xff] %v7597
          %7614 = vst [vmem:[%s383 + $0x18] sm:$0xff] %v7598
          %7615 = vst [vmem:[%s383 + $0x20] sm:$0xff] %v7599
          %7616 = vst [vmem:[%s383 + $0x28] sm:$0xff] %v7600
          %7617 = vst [vmem:[%s383 + $0x30] sm:$0xff] %v7601
          %7618 = vst [vmem:[%s383 + $0x38] sm:$0xff] %v7602
          %7619 = vst [vmem:[%s383 + $0x40] sm:$0xff] %v7603
          %7620 = vst [vmem:[%s383 + $0x48] sm:$0xff] %v7604
          %7621 = vst [vmem:[%s383 + $0x50] sm:$0xff] %v7605
          %7622 = vst [vmem:[%s383 + $0x58] sm:$0xff] %v7606
          %7623 = vst [vmem:[%s383 + $0x60] sm:$0xff] %v7607
          %7624 = vst [vmem:[%s383 + $0x68] sm:$0xff] %v7608
          %7625 = vst [vmem:[%s383 + $0x70] sm:$0xff] %v7609
          %7626 = vst [vmem:[%s383 + $0x78] sm:$0xff] %v7610
        $region60: #{baseline_head.1} parent=47 // pred_fallthru
          _
        %p7627 = scmp.lt.s32.totalorder %s27, 0
        %s7628 = scalar_select %p7627, %s27, 0
        %s7629 = smul.addr %s7628, 16
        %s7630 = smul.addr %s7629, 8
        %s7631 = scalar_lea.vmem %s7, %s7630
        %p7632 = scmp.lt.s32.totalorder %s27, 0
        %s7633 = scalar_select %p7632, %s27, 0
        %s7634 = smul.addr %s7633, 16
        %s7635 = smul.addr %s7634, 8
        %s7636 = scalar_lea.vmem %s8, %s7635
        // Predicated region
        $region61: #{baseline_head.1} parent=47 // pred_check
          %p7637 = pneg %p207
        $region62: #{baseline_head.1} parent=47 // pred_check_branch
          %7639 = sbr.rel (%p7637) target = $region64
        $region63: #{baseline_head.1} parent=47 // pred_region
          _
        $region64: #{baseline_head.1} parent=47 // pred_fallthru
          _
        // Predicated region
        $region65: #{baseline_head.1} parent=47 // pred_check
          %p7640 = pneg %p233
        $region66: #{baseline_head.1} parent=47 // pred_check_branch
          %7642 = sbr.rel (%p7640) target = $region68
        $region67: #{baseline_head.1} parent=47 // pred_region
          _
        $region68: #{baseline_head.1} parent=47 // pred_fallthru
          _
        // Predicated region
        $region69: #{baseline_head.1} parent=47 // pred_check
          %p7643 = pneg %p207
        $region70: #{baseline_head.1} parent=47 // pred_check_branch
          %7645 = sbr.rel (%p7643) target = $region72
        $region71: #{baseline_head.1} parent=47 // pred_region
          %p7646 = scmp.lt.s32.totalorder %s27, 0
          %s7647 = scalar_select %p7646, %s27, 0
          %s7648 = smul.addr %s7647, 16
          %s7649 = smul.addr %s7648, 8
          %s7650 = scalar_lea.vmem %s7, %s7649
        $region72: #{baseline_head.1} parent=47 // pred_fallthru
          _
        // Predicated region
        $region73: #{baseline_head.1} parent=47 // pred_check
          %p7651 = pneg %p233
        $region74: #{baseline_head.1} parent=47 // pred_check_branch
          %7653 = sbr.rel (%p7651) target = $region76
        $region75: #{baseline_head.1} parent=47 // pred_region
          %p7654 = scmp.lt.s32.totalorder %s27, 0
          %s7655 = scalar_select %p7654, %s27, 0
          %s7656 = smul.addr %s7655, 16
          %s7657 = smul.addr %s7656, 8
          %s7658 = scalar_lea.vmem %s8, %s7657
        $region76: #{baseline_head.1} parent=47 // pred_fallthru
          _
      $region48: #{baseline_head.1} parent=5 // pred_fallthru
        _
      %p7659 = scmp.le.s32.totalorder 2, %s18
      // Predicated region
      $region77: #{baseline_head.1} parent=5 // pred_check
        %p7660 = pneg %p7659
      $region78: #{baseline_head.1} parent=5 // pred_check_branch
        %7662 = sbr.rel (%p7660) target = $region80
      $region79: #{baseline_head.1} parent=5 // pred_region
        %s7663 = ssub.s32 %s18, 2
      $region80: #{baseline_head.1} parent=5 // pred_fallthru
        _
    $region6: #{baseline_head.1} parent=1 // loop_footer
      %s22 = sadd.s32 1, %s18
    $region7: #{baseline_head.1} parent=1 // loop_footer_branch
      %17 = sbr.rel target = $region3
    $region8: #{baseline_head.1} parent=1 // loop_exit
      _
    %7664 = vsyncpa [#allocation4], 1
    %s7665 = scalar_lea.sflag [#allocation4], 1
    %7666 = vsyncpa %s7665, 1

</llo_original>
